<compile_context>
chip_gen: v6e
topology: v6e:2x2x1
jax: 0.10.0
libtpu: 0.0.40
codegen_flags: <defaults>
</compile_context>

<pallas_src>
import jax
import jax.numpy as jnp
from jax import lax
from jax.experimental import pallas as pl
from jax.experimental.pallas import tpu as pltpu

EPS = 1e-5


# --------------------------------------------------------------------------
# Kernel 1: per-batch degree feature + pairwise (negative squared) distances
# --------------------------------------------------------------------------
def _graph_feature_kernel(x_ref, d_ref, pdist_ref):
    # x_ref block: (1, N, C)  -- points on sublanes, channels (128) on lanes
    x = x_ref[0]                                              # (N, C)
    N = x.shape[0]

    # L2-normalise over the channel (lane) axis
    sq = jnp.sum(x * x, axis=1, keepdims=True)                # (N, 1) = ||x_i||^2
    xn = x / (jnp.sqrt(sq) + EPS)

    # A_ij = xn_i . xn_j  (contract lanes)
    A = lax.dot_general(xn, xn, (((1,), (1,)), ((), ())),
                        preferred_element_type=jnp.float32)   # (N, N)

    # D_p = (sum_q A_pq - 1) / N  (A symmetric -> row/col sums identical,
    # matches torch.sum(A - eye, dim=1) / N)
    d_col = jnp.maximum(jnp.tanh((jnp.sum(A, axis=1, keepdims=True) - 1.0)
                                 / float(N)), 0.0)            # (N, 1)
    d_row = jnp.maximum(jnp.tanh((jnp.sum(A, axis=0, keepdims=True) - 1.0)
                                 / float(N)), 0.0)            # (1, N) same values
    d_ref[0] = d_col

    # Gram of the full feature f = [x, d]:  Gf_ij = x_i.x_j + d_i*d_j
    G = lax.dot_general(x, x, (((1,), (1,)), ((), ())),
                        preferred_element_type=jnp.float32)   # (N, N)
    Gf = G + d_col * d_row

    # squared norms: column reuses sq, row from the Gram diagonal (one masked
    # reduction, no transposes)
    xx_col = sq + d_col * d_col                               # (N, 1) ||f_i||^2
    ii = lax.broadcasted_iota(jnp.int32, (N, N), 0)
    jj = lax.broadcasted_iota(jnp.int32, (N, N), 1)
    xx_row = jnp.sum(jnp.where(ii == jj, Gf, 0.0), axis=0,
                     keepdims=True)                           # (1, N) ||f_j||^2

    # pdist_ij = -||f_i - f_j||^2 = 2*Gf_ij - ||f_i||^2 - ||f_j||^2
    pdist_ref[0] = 2.0 * Gf - xx_col - xx_row


def pallas_graph_feature(x_t):
    """x_t: (B, N, C) channels-last.  Returns d (B, N, 1) and pdist (B, N, N)."""
    B, N, C = x_t.shape
    # NOTE: the (1, N, N) pdist block is tiny at N=64; if N grows past ~1024
    # tile it (or raise vmem_limit_bytes) to stay inside v7x's scoped VMEM.
    return pl.pallas_call(
        _graph_feature_kernel,
        out_shape=(jax.ShapeDtypeStruct((B, N, 1), jnp.float32),
                   jax.ShapeDtypeStruct((B, N, N), jnp.float32)),
        grid=(B,),
        in_specs=[pl.BlockSpec((1, N, C), lambda b: (b, 0, 0))],
        out_specs=(pl.BlockSpec((1, N, 1), lambda b: (b, 0, 0)),
                   pl.BlockSpec((1, N, N), lambda b: (b, 0, 0))),
        compiler_params=pltpu.CompilerParams(
            dimension_semantics=("parallel",)),
    )(x_t)


# --------------------------------------------------------------------------
# Kernel 2: fused conv0 (+ in-kernel neighbour gather) + BN + ReLU +
#           max-pool(k) + 4 ResNet blocks + linear
# --------------------------------------------------------------------------
def _fused_tail_kernel(xt_ref, d_ref, idx_ref,
                       wcx_ref, wcd_ref, wbx_ref, wbd_ref,
                       c0b_ref, c0g_ref, c0be_ref,
                       rw_ref, rb_ref, rg_ref, rbe_ref,
                       lw_ref, lb_ref,
                       logit_ref):
    B, N, C = xt_ref.shape
    NK = idx_ref.shape[1]
    K = NK // N
    BN = B * N

    def mm(a2, w, b=None):                       # (rows, C) @ (C, C) [+ (1, C)]
        y = jnp.dot(a2, w, preferred_element_type=jnp.float32)
        return y if b is None else y + b

    def inorm(a3):                               # InstanceNorm over points per (b, c)
        m = jnp.mean(a3, axis=1, keepdims=True)
        v = jnp.maximum(jnp.mean(a3 * a3, axis=1, keepdims=True) - m * m, 0.0)
        return (a3 - m) * lax.rsqrt(v + EPS)

    def bnorm(a3, g, be):                        # BatchNorm over (B, N) per channel
        a2 = a3.reshape(BN, C)
        m = jnp.mean(a2, axis=0, keepdims=True)
        v = jnp.maximum(jnp.mean(a2 * a2, axis=0, keepdims=True) - m * m, 0.0)
        return (a3 - m) * lax.rsqrt(v + EPS) * g + be

    x2 = xt_ref[...].reshape(BN, C)
    d = d_ref[...]                                                 # (B, N, 1)

    # ---------- conv0 (split form): edge@W + b = c@(Wt+Wb) + b - gather(n@Wb) ----
    center = mm(x2, wcx_ref[...], c0b_ref[...])
    center = center.reshape(B, N, C) + d * wcd_ref[...]            # (B, N, C)
    z = mm(x2, wbx_ref[...])
    z = z.reshape(B, N, C) + d * wbd_ref[...]                      # (B, N, C)

    # In-kernel neighbour gather: one-hot(idx) @ z  (exact 0/1 rows, gather is
    # linear so the per-point projection z is computed once, not once per k).
    onehot = (idx_ref[...] ==
              lax.broadcasted_iota(jnp.int32, (B, NK, N), 2)
              ).astype(jnp.float32)                                # (B, N*K, N)
    nbt = jnp.einsum('bmj,bjc->bmc', onehot, z,
                     preferred_element_type=jnp.float32)           # (B, N*K, C)
    nbt = nbt.reshape(B, N, K, C)

    pre = center[:, :, None, :] - nbt                              # (B, N, K, C)

    # BatchNorm over (B, N, K) per channel + ReLU + max-pool over neighbours
    p2 = pre.reshape(BN * K, C)
    m0 = jnp.mean(p2, axis=0, keepdims=True)
    v0 = jnp.maximum(jnp.mean(p2 * p2, axis=0, keepdims=True) - m0 * m0, 0.0)
    h = jnp.maximum((pre - m0) * lax.rsqrt(v0 + EPS) * c0g_ref[...]
                    + c0be_ref[...], 0.0)
    h = jnp.max(h, axis=2)                                         # (B, N, C)

    # ---------- 4 residual blocks, fully resident in VMEM ----------
    for i in range(4):
        t = mm(h.reshape(BN, C), rw_ref[2 * i], rb_ref[2 * i]).reshape(B, N, C)
        t = jnp.maximum(bnorm(inorm(t), rg_ref[2 * i], rbe_ref[2 * i]), 0.0)
        t = mm(t.reshape(BN, C), rw_ref[2 * i + 1],
               rb_ref[2 * i + 1]).reshape(B, N, C)
        t = bnorm(inorm(t), rg_ref[2 * i + 1], rbe_ref[2 * i + 1])
        h = jnp.maximum(t + h, 0.0)              # pre=False -> identity shortcut

    # ---------- final 128 -> 1 projection as a lane reduction ----------
    logit_ref[...] = jnp.sum(h * lw_ref[...], axis=-1) + lb_ref[...]


def pallas_fused_tail(x_t, d, idx_flat, wcx, wcd, wbx, wbd,
                      c0b, c0g, c0be, rw, rb, rg, rbe, lw, lb):
    B, N, _ = x_t.shape
    # Single invocation: activations + all weight matrices (< 2 MiB) stay in
    # VMEM for the whole tail; no intermediate HBM round trips or launches.
    # TODO(synk): if B*N grows, split rows over a leading "parallel" grid axis
    # (needs a cross-core pass for BatchNorm statistics) to use v7x's 2 TCs.
    return pl.pallas_call(
        _fused_tail_kernel,
        out_shape=jax.ShapeDtypeStruct((B, N), jnp.float32),
    )(x_t, d, idx_flat, wcx, wcd, wbx, wbd, c0b, c0g, c0be,
      rw, rb, rg, rbe, lw, lb)


# --------------------------------------------------------------------------
# Full forward (JAX glue: transpose, knn top-k; gather now lives in-kernel)
# --------------------------------------------------------------------------
def nm_net_forward(x, params, k=8):
    B, C, N = x.shape
    C1 = C + 1

    x_t = jnp.transpose(x, (0, 2, 1))                  # (B, N, C) channels-last
    d, pdist = pallas_graph_feature(x_t)               # (B, N, 1), (B, N, N)

    # knn: k nearest neighbours (self is the per-row argmax -> dropped)
    # TODO(synk): top-k stays in XLA; no sort/top-k primitive lowers in Mosaic.
    _, idx = lax.top_k(pdist, k + 1)                   # (B, N, k+1)
    idx = idx[:, :, 1:]                                # (B, N, k)
    idx_flat = idx.reshape(B, N * k, 1).astype(jnp.int32)   # lane-broadcastable

    # conv0 algebra: edge@W = center@(W_top + W_bot) - nb@W_bot,
    # with [x, d] @ M = x @ M[:C] + d * M[C]
    w0 = params['conv0_w']                             # (2*(C+1), 128)
    w_top, w_bot = w0[:C1], w0[C1:]
    w_c = w_top + w_bot
    wcx, wcd = w_c[:C], w_c[C:]                        # (C, C), (1, C)
    wbx, wbd = w_bot[:C], w_bot[C:]

    c0b = params['conv0_b'].reshape(1, C)
    c0g = params['conv0_g'].reshape(1, C)
    c0be = params['conv0_be'].reshape(1, C)

    # stack resnet params: index 2*i -> first conv of block i, 2*i+1 -> second
    rw = jnp.stack([params[f'res{i}'][n] for i in range(1, 5) for n in ('w1', 'w2')])
    rb = jnp.stack([params[f'res{i}'][n] for i in range(1, 5)
                    for n in ('b1', 'b2')]).reshape(8, 1, C)
    rg = jnp.stack([params[f'res{i}'][n] for i in range(1, 5)
                    for n in ('g1', 'g2')]).reshape(8, 1, C)
    rbe = jnp.stack([params[f'res{i}'][n] for i in range(1, 5)
                     for n in ('be1', 'be2')]).reshape(8, 1, C)

    lw = params['lin_w'].reshape(1, C)
    lb = params['lin_b'].reshape(1, 1)

    return pallas_fused_tail(x_t, d, idx_flat, wcx, wcd, wbx, wbd,
                             c0b, c0g, c0be, rw, rb, rg, rbe, lw, lb)


# --------------------------------------------------------------------------
# Deterministic parameter init (shapes from NM_block(k_n=8).__init__)
# --------------------------------------------------------------------------
def init_params(key):
    C = 128
    Cin0 = (C + 1) * 2
    ks = list(jax.random.split(key, 16))

    def nrm(k, shape, scale=0.05):
        return scale * jax.random.normal(k, shape, dtype=jnp.float32)

    params = {
        'conv0_w': nrm(ks[0], (Cin0, C)),
        'conv0_b': nrm(ks[1], (C,)),
        'conv0_g': jnp.ones((C,), jnp.float32),
        'conv0_be': jnp.zeros((C,), jnp.float32),
        'lin_w': nrm(ks[2], (C, 1)),
        'lin_b': nrm(ks[3], (1,)),
    }
    for i in range(1, 5):
        k1, k2, k3, k4 = jax.random.split(ks[3 + i], 4)
        params[f'res{i}'] = {
            'w1': nrm(k1, (C, C)), 'b1': nrm(k2, (C,)),
            'g1': jnp.ones((C,), jnp.float32), 'be1': jnp.zeros((C,), jnp.float32),
            'w2': nrm(k3, (C, C)), 'b2': nrm(k4, (C,)),
            'g2': jnp.ones((C,), jnp.float32), 'be2': jnp.zeros((C,), jnp.float32),
        }
    return params


if __name__ == "__main__":
    key = jax.random.PRNGKey(0)
    kx, kp = jax.random.split(key)

    B, C, N = 2, 128, 64          # C=128 is fixed by the module's conv shapes
    x = jax.random.normal(kx, (B, C, N), dtype=jnp.float32)
    params = init_params(kp)

    fwd = jax.jit(lambda xx: nm_net_forward(xx, params, k=8))
    logit = fwd(x)
    jax.block_until_ready(logit)

    assert logit.shape == (B, N)
    assert jnp.all(jnp.isfinite(logit))
    print("KERNEL_OK")
</pallas_src>

<mosaic_0001>
module attributes {stable_mosaic.version = 11 : i64} {
  func.func @_graph_feature_kernel(%arg0: i32, %arg1: memref<1x64x128xf32, #tpu.memory_space<vmem>>, %arg2: memref<1x64x1xf32, #tpu.memory_space<vmem>>, %arg3: memref<1x64x64xf32, #tpu.memory_space<vmem>>) attributes {dimension_semantics = [#tpu.dimension_semantics<parallel>], iteration_bounds = array<i64: 2>, scalar_prefetch = 0 : i64, scratch_operands = 0 : i64, tpu.core_type = #tpu.core_type<tc>, window_params = [{transform_indices = @transform_0, window_bounds = array<i64: 1, 64, 128>}, {transform_indices = @transform_1, window_bounds = array<i64: 1, 64, 1>}, {transform_indices = @transform_2, window_bounds = array<i64: 1, 64, 64>}]} {
    %c0 = arith.constant 0 : index
    %c0_0 = arith.constant 0 : index
    %c0_1 = arith.constant 0 : index
    %0 = vector.load %arg1[%c0, %c0_0, %c0_1] : memref<1x64x128xf32, #tpu.memory_space<vmem>>, vector<1x64x128xf32>
    %1 = vector.shape_cast %0 : vector<1x64x128xf32> to vector<64x128xf32>
    %2 = arith.mulf %1, %1 : vector<64x128xf32>
    %cst = arith.constant dense<0.000000e+00> : vector<64xf32>
    %3 = vector.multi_reduction <add>, %2, %cst [1] : vector<64x128xf32> to vector<64xf32>
    %4 = vector.shape_cast %3 : vector<64xf32> to vector<64x1xf32>
    %5 = math.sqrt %4 : vector<64x1xf32>
    %cst_2 = arith.constant 9.99999974E-6 : f32
    %6 = vector.broadcast %cst_2 : f32 to vector<64x1xf32>
    %7 = arith.addf %5, %6 : vector<64x1xf32>
    %8 = vector.broadcast %7 : vector<64x1xf32> to vector<64x128xf32>
    %9 = arith.divf %1, %8 : vector<64x128xf32>
    %cst_3 = arith.constant dense<0.000000e+00> : vector<64x64xf32>
    %10 = tpu.matmul %9, %9, %cst_3 {dimension_numbers = #tpu.dot_dimension_numbers<[1], [1], [0], [0], [0, 0, 1, 0], [], []>} : vector<64x128xf32>, vector<64x128xf32>, vector<64x64xf32> -> vector<64x64xf32>
    %cst_4 = arith.constant dense<0.000000e+00> : vector<64xf32>
    %11 = vector.multi_reduction <add>, %10, %cst_4 [1] : vector<64x64xf32> to vector<64xf32>
    %12 = vector.shape_cast %11 : vector<64xf32> to vector<64x1xf32>
    %cst_5 = arith.constant 1.000000e+00 : f32
    %13 = vector.broadcast %cst_5 : f32 to vector<64x1xf32>
    %14 = arith.subf %12, %13 : vector<64x1xf32>
    %cst_6 = arith.constant 6.400000e+01 : f32
    %15 = vector.broadcast %cst_6 : f32 to vector<64x1xf32>
    %16 = arith.divf %14, %15 : vector<64x1xf32>
    %17 = math.tanh %16 : vector<64x1xf32>
    %cst_7 = arith.constant 0.000000e+00 : f32
    %18 = vector.broadcast %cst_7 : f32 to vector<64x1xf32>
    %19 = arith.maximumf %17, %18 : vector<64x1xf32>
    %cst_8 = arith.constant dense<0.000000e+00> : vector<64xf32>
    %20 = vector.multi_reduction <add>, %10, %cst_8 [0] : vector<64x64xf32> to vector<64xf32>
    %21 = vector.shape_cast %20 : vector<64xf32> to vector<1x64xf32>
    %cst_9 = arith.constant 1.000000e+00 : f32
    %22 = vector.broadcast %cst_9 : f32 to vector<1x64xf32>
    %23 = arith.subf %21, %22 : vector<1x64xf32>
    %cst_10 = arith.constant 6.400000e+01 : f32
    %24 = vector.broadcast %cst_10 : f32 to vector<1x64xf32>
    %25 = arith.divf %23, %24 : vector<1x64xf32>
    %26 = math.tanh %25 : vector<1x64xf32>
    %cst_11 = arith.constant 0.000000e+00 : f32
    %27 = vector.broadcast %cst_11 : f32 to vector<1x64xf32>
    %28 = arith.maximumf %26, %27 : vector<1x64xf32>
    %c0_12 = arith.constant 0 : index
    %c0_13 = arith.constant 0 : index
    %c0_14 = arith.constant 0 : index
    %29 = vector.load %arg2[%c0_12, %c0_13, %c0_14] : memref<1x64x1xf32, #tpu.memory_space<vmem>>, vector<1x64x1xf32>
    %30 = vector.shape_cast %29 : vector<1x64x1xf32> to vector<64x1xf32>
    %31 = vector.shape_cast %19 : vector<64x1xf32> to vector<1x64x1xf32>
    tpu.vector_store %arg2[%c0_12, %c0_13, %c0_14], %31 {strides = array<i32>} : memref<1x64x1xf32, #tpu.memory_space<vmem>>, vector<1x64x1xf32>,
    %cst_15 = arith.constant dense<0.000000e+00> : vector<64x64xf32>
    %32 = tpu.matmul %1, %1, %cst_15 {dimension_numbers = #tpu.dot_dimension_numbers<[1], [1], [0], [0], [0, 0, 1, 0], [], []>} : vector<64x128xf32>, vector<64x128xf32>, vector<64x64xf32> -> vector<64x64xf32>
    %33 = vector.broadcast %19 : vector<64x1xf32> to vector<64x64xf32>
    %34 = vector.broadcast %28 : vector<1x64xf32> to vector<64x64xf32>
    %35 = arith.mulf %33, %34 : vector<64x64xf32>
    %36 = arith.addf %32, %35 : vector<64x64xf32>
    %37 = arith.mulf %19, %19 : vector<64x1xf32>
    %38 = arith.addf %4, %37 : vector<64x1xf32>
    %39 = tpu.iota {dimensions = array<i32: 0>} : vector<64x64xi32>
    %40 = tpu.iota {dimensions = array<i32: 1>} : vector<64x64xi32>
    %41 = arith.cmpi eq, %39, %40 : vector<64x64xi32>
    %cst_16 = arith.constant 0.000000e+00 : f32
    %42 = vector.broadcast %cst_16 : f32 to vector<64x64xf32>
    %43 = arith.select %41, %36, %42 : vector<64x64xi1>, vector<64x64xf32>
    %cst_17 = arith.constant dense<0.000000e+00> : vector<64xf32>
    %44 = vector.multi_reduction <add>, %43, %cst_17 [0] : vector<64x64xf32> to vector<64xf32>
    %45 = vector.shape_cast %44 : vector<64xf32> to vector<1x64xf32>
    %cst_18 = arith.constant 2.000000e+00 : f32
    %46 = vector.broadcast %cst_18 : f32 to vector<64x64xf32>
    %47 = arith.mulf %46, %36 : vector<64x64xf32>
    %48 = vector.broadcast %38 : vector<64x1xf32> to vector<64x64xf32>
    %49 = arith.subf %47, %48 : vector<64x64xf32>
    %50 = vector.broadcast %45 : vector<1x64xf32> to vector<64x64xf32>
    %51 = arith.subf %49, %50 : vector<64x64xf32>
    %c0_19 = arith.constant 0 : index
    %c0_20 = arith.constant 0 : index
    %c0_21 = arith.constant 0 : index
    %52 = vector.load %arg3[%c0_19, %c0_20, %c0_21] : memref<1x64x64xf32, #tpu.memory_space<vmem>>, vector<1x64x64xf32>
    %53 = vector.shape_cast %52 : vector<1x64x64xf32> to vector<64x64xf32>
    %54 = vector.shape_cast %51 : vector<64x64xf32> to vector<1x64x64xf32>
    tpu.vector_store %arg3[%c0_19, %c0_20, %c0_21], %54 {strides = array<i32>} : memref<1x64x64xf32, #tpu.memory_space<vmem>>, vector<1x64x64xf32>,
    return
  }
  func.func @transform_0(%arg0: i32) -> (i32, i32, i32) {
    %c0_i32 = arith.constant 0 : i32
    %c0_i32_0 = arith.constant 0 : i32
    %c0_i32_1 = arith.constant 0 : i32
    return %arg0, %c0_i32, %c0_i32_0 : i32, i32, i32
  }
  func.func @transform_1(%arg0: i32) -> (i32, i32, i32) {
    %c0_i32 = arith.constant 0 : i32
    %c0_i32_0 = arith.constant 0 : i32
    %c0_i32_1 = arith.constant 0 : i32
    return %arg0, %c0_i32, %c0_i32_0 : i32, i32, i32
  }
  func.func @transform_2(%arg0: i32) -> (i32, i32, i32) {
    %c0_i32 = arith.constant 0 : i32
    %c0_i32_0 = arith.constant 0 : i32
    %c0_i32_1 = arith.constant 0 : i32
    return %arg0, %c0_i32, %c0_i32_0 : i32, i32, i32
  }
}

module attributes {stable_mosaic.version = 11 : i64} {
  func.func @_fused_tail_kernel(%arg0: memref<2x64x128xf32, #tpu.memory_space<vmem>>, %arg1: memref<2x64x1xf32, #tpu.memory_space<vmem>>, %arg2: memref<2x512x1xi32, #tpu.memory_space<vmem>>, %arg3: memref<128x128xf32, #tpu.memory_space<vmem>>, %arg4: memref<1x128xf32, #tpu.memory_space<vmem>>, %arg5: memref<128x128xf32, #tpu.memory_space<vmem>>, %arg6: memref<1x128xf32, #tpu.memory_space<vmem>>, %arg7: memref<1x128xf32, #tpu.memory_space<vmem>>, %arg8: memref<1x128xf32, #tpu.memory_space<vmem>>, %arg9: memref<1x128xf32, #tpu.memory_space<vmem>>, %arg10: memref<8x128x128xf32, #tpu.memory_space<vmem>>, %arg11: memref<8x1x128xf32, #tpu.memory_space<vmem>>, %arg12: memref<8x1x128xf32, #tpu.memory_space<vmem>>, %arg13: memref<8x1x128xf32, #tpu.memory_space<vmem>>, %arg14: memref<1x128xf32, #tpu.memory_space<vmem>>, %arg15: memref<1x1xf32, #tpu.memory_space<vmem>>, %arg16: memref<2x64xf32, #tpu.memory_space<vmem>>) attributes {dimension_semantics = [], scalar_prefetch = 0 : i64, scratch_operands = 0 : i64, tpu.core_type = #tpu.core_type<tc>} {
    %c0 = arith.constant 0 : index
    %c0_0 = arith.constant 0 : index
    %c0_1 = arith.constant 0 : index
    %0 = vector.load %arg0[%c0, %c0_0, %c0_1] : memref<2x64x128xf32, #tpu.memory_space<vmem>>, vector<2x64x128xf32>
    %1 = vector.shape_cast %0 : vector<2x64x128xf32> to vector<128x128xf32>
    %c0_2 = arith.constant 0 : index
    %c0_3 = arith.constant 0 : index
    %c0_4 = arith.constant 0 : index
    %2 = vector.load %arg1[%c0_2, %c0_3, %c0_4] : memref<2x64x1xf32, #tpu.memory_space<vmem>>, vector<2x64x1xf32>
    %c0_5 = arith.constant 0 : index
    %c0_6 = arith.constant 0 : index
    %3 = vector.load %arg3[%c0_5, %c0_6] : memref<128x128xf32, #tpu.memory_space<vmem>>, vector<128x128xf32>
    %c0_7 = arith.constant 0 : index
    %c0_8 = arith.constant 0 : index
    %4 = vector.load %arg7[%c0_7, %c0_8] : memref<1x128xf32, #tpu.memory_space<vmem>>, vector<1x128xf32>
    %cst = arith.constant dense<0.000000e+00> : vector<128x128xf32>
    %5 = tpu.matmul %1, %3, %cst {dimension_numbers = #tpu.dot_dimension_numbers<[1], [0], [0], [1], [0, 0, 1, 1], [], []>} : vector<128x128xf32>, vector<128x128xf32>, vector<128x128xf32> -> vector<128x128xf32>
    %6 = vector.broadcast %4 : vector<1x128xf32> to vector<128x128xf32>
    %7 = arith.addf %5, %6 : vector<128x128xf32>
    %8 = vector.shape_cast %7 : vector<128x128xf32> to vector<2x64x128xf32>
    %c0_9 = arith.constant 0 : index
    %c0_10 = arith.constant 0 : index
    %9 = vector.load %arg4[%c0_9, %c0_10] : memref<1x128xf32, #tpu.memory_space<vmem>>, vector<1x128xf32>
    %10 = vector.shape_cast %9 : vector<1x128xf32> to vector<1x1x128xf32>
    %11 = vector.broadcast %2 : vector<2x64x1xf32> to vector<2x64x128xf32>
    %12 = vector.broadcast %10 : vector<1x1x128xf32> to vector<2x64x128xf32>
    %13 = arith.mulf %11, %12 : vector<2x64x128xf32>
    %14 = arith.addf %8, %13 : vector<2x64x128xf32>
    %c0_11 = arith.constant 0 : index
    %c0_12 = arith.constant 0 : index
    %15 = vector.load %arg5[%c0_11, %c0_12] : memref<128x128xf32, #tpu.memory_space<vmem>>, vector<128x128xf32>
    %cst_13 = arith.constant dense<0.000000e+00> : vector<128x128xf32>
    %16 = tpu.matmul %1, %15, %cst_13 {dimension_numbers = #tpu.dot_dimension_numbers<[1], [0], [0], [1], [0, 0, 1, 1], [], []>} : vector<128x128xf32>, vector<128x128xf32>, vector<128x128xf32> -> vector<128x128xf32>
    %17 = vector.shape_cast %16 : vector<128x128xf32> to vector<2x64x128xf32>
    %c0_14 = arith.constant 0 : index
    %c0_15 = arith.constant 0 : index
    %18 = vector.load %arg6[%c0_14, %c0_15] : memref<1x128xf32, #tpu.memory_space<vmem>>, vector<1x128xf32>
    %19 = vector.shape_cast %18 : vector<1x128xf32> to vector<1x1x128xf32>
    %20 = vector.broadcast %2 : vector<2x64x1xf32> to vector<2x64x128xf32>
    %21 = vector.broadcast %19 : vector<1x1x128xf32> to vector<2x64x128xf32>
    %22 = arith.mulf %20, %21 : vector<2x64x128xf32>
    %23 = arith.addf %17, %22 : vector<2x64x128xf32>
    %c0_16 = arith.constant 0 : index
    %c0_17 = arith.constant 0 : index
    %c0_18 = arith.constant 0 : index
    %24 = vector.load %arg2[%c0_16, %c0_17, %c0_18] : memref<2x512x1xi32, #tpu.memory_space<vmem>>, vector<2x512x1xi32>
    %25 = tpu.iota {dimensions = array<i32: 2>} : vector<2x512x64xi32>
    %26 = vector.broadcast %24 : vector<2x512x1xi32> to vector<2x512x64xi32>
    %27 = arith.cmpi eq, %26, %25 : vector<2x512x64xi32>
    %28 = arith.extui %27 : vector<2x512x64xi1> to vector<2x512x64xi32>
    %29 = arith.sitofp %28 : vector<2x512x64xi32> to vector<2x512x64xf32>
    "tpu.trace_start"() <{level = 10 : i32, message = "bmj,bjc->bmc"}> : () -> ()
    %cst_19 = arith.constant dense<0.000000e+00> : vector<2x512x128xf32>
    %30 = tpu.matmul %29, %23, %cst_19 {dimension_numbers = #tpu.dot_dimension_numbers<[2], [1], [1], [2], [0, 0, 0, 1, 1, 2], [0], [0]>} : vector<2x512x64xf32>, vector<2x64x128xf32>, vector<2x512x128xf32> -> vector<2x512x128xf32>
    "tpu.trace_stop"() : () -> ()
    %31 = vector.shape_cast %30 : vector<2x512x128xf32> to vector<2x64x8x128xf32>
    %32 = vector.shape_cast %14 : vector<2x64x128xf32> to vector<2x64x1x128xf32>
    %33 = vector.broadcast %32 : vector<2x64x1x128xf32> to vector<2x64x8x128xf32>
    %34 = arith.subf %33, %31 : vector<2x64x8x128xf32>
    %35 = vector.shape_cast %34 : vector<2x64x8x128xf32> to vector<1024x128xf32>
    %cst_20 = arith.constant dense<0.000000e+00> : vector<128xf32>
    %36 = vector.multi_reduction <add>, %35, %cst_20 [0] : vector<1024x128xf32> to vector<128xf32>
    %37 = vector.shape_cast %36 : vector<128xf32> to vector<1x128xf32>
    %cst_21 = arith.constant 1.024000e+03 : f32
    %38 = vector.broadcast %cst_21 : f32 to vector<1x128xf32>
    %39 = arith.divf %37, %38 : vector<1x128xf32>
    %40 = arith.mulf %35, %35 : vector<1024x128xf32>
    %cst_22 = arith.constant dense<0.000000e+00> : vector<128xf32>
    %41 = vector.multi_reduction <add>, %40, %cst_22 [0] : vector<1024x128xf32> to vector<128xf32>
    %42 = vector.shape_cast %41 : vector<128xf32> to vector<1x128xf32>
    %cst_23 = arith.constant 1.024000e+03 : f32
    %43 = vector.broadcast %cst_23 : f32 to vector<1x128xf32>
    %44 = arith.divf %42, %43 : vector<1x128xf32>
    %45 = arith.mulf %39, %39 : vector<1x128xf32>
    %46 = arith.subf %44, %45 : vector<1x128xf32>
    %cst_24 = arith.constant 0.000000e+00 : f32
    %47 = vector.broadcast %cst_24 : f32 to vector<1x128xf32>
    %48 = arith.maximumf %46, %47 : vector<1x128xf32>
    %49 = vector.shape_cast %39 : vector<1x128xf32> to vector<1x1x1x128xf32>
    %50 = vector.broadcast %49 : vector<1x1x1x128xf32> to vector<2x64x8x128xf32>
    %51 = arith.subf %34, %50 : vector<2x64x8x128xf32>
    %cst_25 = arith.constant 9.99999974E-6 : f32
    %52 = vector.broadcast %cst_25 : f32 to vector<1x128xf32>
    %53 = arith.addf %48, %52 : vector<1x128xf32>
    %54 = math.rsqrt %53 : vector<1x128xf32>
    %55 = vector.shape_cast %54 : vector<1x128xf32> to vector<1x1x1x128xf32>
    %56 = vector.broadcast %55 : vector<1x1x1x128xf32> to vector<2x64x8x128xf32>
    %57 = arith.mulf %51, %56 : vector<2x64x8x128xf32>
    %c0_26 = arith.constant 0 : index
    %c0_27 = arith.constant 0 : index
    %58 = vector.load %arg8[%c0_26, %c0_27] : memref<1x128xf32, #tpu.memory_space<vmem>>, vector<1x128xf32>
    %59 = vector.shape_cast %58 : vector<1x128xf32> to vector<1x1x1x128xf32>
    %60 = vector.broadcast %59 : vector<1x1x1x128xf32> to vector<2x64x8x128xf32>
    %61 = arith.mulf %57, %60 : vector<2x64x8x128xf32>
    %c0_28 = arith.constant 0 : index
    %c0_29 = arith.constant 0 : index
    %62 = vector.load %arg9[%c0_28, %c0_29] : memref<1x128xf32, #tpu.memory_space<vmem>>, vector<1x128xf32>
    %63 = vector.shape_cast %62 : vector<1x128xf32> to vector<1x1x1x128xf32>
    %64 = vector.broadcast %63 : vector<1x1x1x128xf32> to vector<2x64x8x128xf32>
    %65 = arith.addf %61, %64 : vector<2x64x8x128xf32>
    %cst_30 = arith.constant 0.000000e+00 : f32
    %66 = vector.broadcast %cst_30 : f32 to vector<2x64x8x128xf32>
    %67 = arith.maximumf %65, %66 : vector<2x64x8x128xf32>
    %cst_31 = arith.constant dense<0xFF800000> : vector<2x64x128xf32>
    %68 = vector.multi_reduction <maximumf>, %67, %cst_31 [2] : vector<2x64x8x128xf32> to vector<2x64x128xf32>
    %69 = vector.shape_cast %68 : vector<2x64x128xf32> to vector<128x128xf32>
    %c0_32 = arith.constant 0 : index
    %c0_33 = arith.constant 0 : index
    %c0_34 = arith.constant 0 : index
    %70 = vector.load %arg10[%c0_32, %c0_33, %c0_34] : memref<8x128x128xf32, #tpu.memory_space<vmem>>, vector<1x128x128xf32>
    %71 = vector.shape_cast %70 : vector<1x128x128xf32> to vector<128x128xf32>
    %c0_35 = arith.constant 0 : index
    %c0_36 = arith.constant 0 : index
    %c0_37 = arith.constant 0 : index
    %72 = vector.load %arg11[%c0_35, %c0_36, %c0_37] : memref<8x1x128xf32, #tpu.memory_space<vmem>>, vector<1x1x128xf32>
    %73 = vector.shape_cast %72 : vector<1x1x128xf32> to vector<1x128xf32>
    %cst_38 = arith.constant dense<0.000000e+00> : vector<128x128xf32>
    %74 = tpu.matmul %69, %71, %cst_38 {dimension_numbers = #tpu.dot_dimension_numbers<[1], [0], [0], [1], [0, 0, 1, 1], [], []>} : vector<128x128xf32>, vector<128x128xf32>, vector<128x128xf32> -> vector<128x128xf32>
    %75 = vector.broadcast %73 : vector<1x128xf32> to vector<128x128xf32>
    %76 = arith.addf %74, %75 : vector<128x128xf32>
    %77 = vector.shape_cast %76 : vector<128x128xf32> to vector<2x64x128xf32>
    %cst_39 = arith.constant dense<0.000000e+00> : vector<2x128xf32>
    %78 = vector.multi_reduction <add>, %77, %cst_39 [1] : vector<2x64x128xf32> to vector<2x128xf32>
    %79 = vector.shape_cast %78 : vector<2x128xf32> to vector<2x1x128xf32>
    %cst_40 = arith.constant 6.400000e+01 : f32
    %80 = vector.broadcast %cst_40 : f32 to vector<2x1x128xf32>
    %81 = arith.divf %79, %80 : vector<2x1x128xf32>
    %82 = arith.mulf %77, %77 : vector<2x64x128xf32>
    %cst_41 = arith.constant dense<0.000000e+00> : vector<2x128xf32>
    %83 = vector.multi_reduction <add>, %82, %cst_41 [1] : vector<2x64x128xf32> to vector<2x128xf32>
    %84 = vector.shape_cast %83 : vector<2x128xf32> to vector<2x1x128xf32>
    %cst_42 = arith.constant 6.400000e+01 : f32
    %85 = vector.broadcast %cst_42 : f32 to vector<2x1x128xf32>
    %86 = arith.divf %84, %85 : vector<2x1x128xf32>
    %87 = arith.mulf %81, %81 : vector<2x1x128xf32>
    %88 = arith.subf %86, %87 : vector<2x1x128xf32>
    %cst_43 = arith.constant 0.000000e+00 : f32
    %89 = vector.broadcast %cst_43 : f32 to vector<2x1x128xf32>
    %90 = arith.maximumf %88, %89 : vector<2x1x128xf32>
    %91 = vector.broadcast %81 : vector<2x1x128xf32> to vector<2x64x128xf32>
    %92 = arith.subf %77, %91 : vector<2x64x128xf32>
    %cst_44 = arith.constant 9.99999974E-6 : f32
    %93 = vector.broadcast %cst_44 : f32 to vector<2x1x128xf32>
    %94 = arith.addf %90, %93 : vector<2x1x128xf32>
    %95 = math.rsqrt %94 : vector<2x1x128xf32>
    %96 = vector.broadcast %95 : vector<2x1x128xf32> to vector<2x64x128xf32>
    %97 = arith.mulf %92, %96 : vector<2x64x128xf32>
    %c0_45 = arith.constant 0 : index
    %c0_46 = arith.constant 0 : index
    %c0_47 = arith.constant 0 : index
    %98 = vector.load %arg12[%c0_45, %c0_46, %c0_47] : memref<8x1x128xf32, #tpu.memory_space<vmem>>, vector<1x1x128xf32>
    %99 = vector.shape_cast %98 : vector<1x1x128xf32> to vector<1x128xf32>
    %c0_48 = arith.constant 0 : index
    %c0_49 = arith.constant 0 : index
    %c0_50 = arith.constant 0 : index
    %100 = vector.load %arg13[%c0_48, %c0_49, %c0_50] : memref<8x1x128xf32, #tpu.memory_space<vmem>>, vector<1x1x128xf32>
    %101 = vector.shape_cast %100 : vector<1x1x128xf32> to vector<1x128xf32>
    %102 = vector.shape_cast %97 : vector<2x64x128xf32> to vector<128x128xf32>
    %cst_51 = arith.constant dense<0.000000e+00> : vector<128xf32>
    %103 = vector.multi_reduction <add>, %102, %cst_51 [0] : vector<128x128xf32> to vector<128xf32>
    %104 = vector.shape_cast %103 : vector<128xf32> to vector<1x128xf32>
    %cst_52 = arith.constant 1.280000e+02 : f32
    %105 = vector.broadcast %cst_52 : f32 to vector<1x128xf32>
    %106 = arith.divf %104, %105 : vector<1x128xf32>
    %107 = arith.mulf %102, %102 : vector<128x128xf32>
    %cst_53 = arith.constant dense<0.000000e+00> : vector<128xf32>
    %108 = vector.multi_reduction <add>, %107, %cst_53 [0] : vector<128x128xf32> to vector<128xf32>
    %109 = vector.shape_cast %108 : vector<128xf32> to vector<1x128xf32>
    %cst_54 = arith.constant 1.280000e+02 : f32
    %110 = vector.broadcast %cst_54 : f32 to vector<1x128xf32>
    %111 = arith.divf %109, %110 : vector<1x128xf32>
    %112 = arith.mulf %106, %106 : vector<1x128xf32>
    %113 = arith.subf %111, %112 : vector<1x128xf32>
    %cst_55 = arith.constant 0.000000e+00 : f32
    %114 = vector.broadcast %cst_55 : f32 to vector<1x128xf32>
    %115 = arith.maximumf %113, %114 : vector<1x128xf32>
    %116 = vector.shape_cast %106 : vector<1x128xf32> to vector<1x1x128xf32>
    %117 = vector.broadcast %116 : vector<1x1x128xf32> to vector<2x64x128xf32>
    %118 = arith.subf %97, %117 : vector<2x64x128xf32>
    %cst_56 = arith.constant 9.99999974E-6 : f32
    %119 = vector.broadcast %cst_56 : f32 to vector<1x128xf32>
    %120 = arith.addf %115, %119 : vector<1x128xf32>
    %121 = math.rsqrt %120 : vector<1x128xf32>
    %122 = vector.shape_cast %121 : vector<1x128xf32> to vector<1x1x128xf32>
    %123 = vector.broadcast %122 : vector<1x1x128xf32> to vector<2x64x128xf32>
    %124 = arith.mulf %118, %123 : vector<2x64x128xf32>
    %125 = vector.shape_cast %99 : vector<1x128xf32> to vector<1x1x128xf32>
    %126 = vector.broadcast %125 : vector<1x1x128xf32> to vector<2x64x128xf32>
    %127 = arith.mulf %124, %126 : vector<2x64x128xf32>
    %128 = vector.shape_cast %101 : vector<1x128xf32> to vector<1x1x128xf32>
    %129 = vector.broadcast %128 : vector<1x1x128xf32> to vector<2x64x128xf32>
    %130 = arith.addf %127, %129 : vector<2x64x128xf32>
    %cst_57 = arith.constant 0.000000e+00 : f32
    %131 = vector.broadcast %cst_57 : f32 to vector<2x64x128xf32>
    %132 = arith.maximumf %130, %131 : vector<2x64x128xf32>
    %133 = vector.shape_cast %132 : vector<2x64x128xf32> to vector<128x128xf32>
    %c1 = arith.constant 1 : index
    %c0_58 = arith.constant 0 : index
    %c0_59 = arith.constant 0 : index
    %134 = vector.load %arg10[%c1, %c0_58, %c0_59] : memref<8x128x128xf32, #tpu.memory_space<vmem>>, vector<1x128x128xf32>
    %135 = vector.shape_cast %134 : vector<1x128x128xf32> to vector<128x128xf32>
    %c1_60 = arith.constant 1 : index
    %c0_61 = arith.constant 0 : index
    %c0_62 = arith.constant 0 : index
    %136 = vector.load %arg11[%c1_60, %c0_61, %c0_62] : memref<8x1x128xf32, #tpu.memory_space<vmem>>, vector<1x1x128xf32>
    %137 = vector.shape_cast %136 : vector<1x1x128xf32> to vector<1x128xf32>
    %cst_63 = arith.constant dense<0.000000e+00> : vector<128x128xf32>
    %138 = tpu.matmul %133, %135, %cst_63 {dimension_numbers = #tpu.dot_dimension_numbers<[1], [0], [0], [1], [0, 0, 1, 1], [], []>} : vector<128x128xf32>, vector<128x128xf32>, vector<128x128xf32> -> vector<128x128xf32>
    %139 = vector.broadcast %137 : vector<1x128xf32> to vector<128x128xf32>
    %140 = arith.addf %138, %139 : vector<128x128xf32>
    %141 = vector.shape_cast %140 : vector<128x128xf32> to vector<2x64x128xf32>
    %cst_64 = arith.constant dense<0.000000e+00> : vector<2x128xf32>
    %142 = vector.multi_reduction <add>, %141, %cst_64 [1] : vector<2x64x128xf32> to vector<2x128xf32>
    %143 = vector.shape_cast %142 : vector<2x128xf32> to vector<2x1x128xf32>
    %cst_65 = arith.constant 6.400000e+01 : f32
    %144 = vector.broadcast %cst_65 : f32 to vector<2x1x128xf32>
    %145 = arith.divf %143, %144 : vector<2x1x128xf32>
    %146 = arith.mulf %141, %141 : vector<2x64x128xf32>
    %cst_66 = arith.constant dense<0.000000e+00> : vector<2x128xf32>
    %147 = vector.multi_reduction <add>, %146, %cst_66 [1] : vector<2x64x128xf32> to vector<2x128xf32>
    %148 = vector.shape_cast %147 : vector<2x128xf32> to vector<2x1x128xf32>
    %cst_67 = arith.constant 6.400000e+01 : f32
    %149 = vector.broadcast %cst_67 : f32 to vector<2x1x128xf32>
    %150 = arith.divf %148, %149 : vector<2x1x128xf32>
    %151 = arith.mulf %145, %145 : vector<2x1x128xf32>
    %152 = arith.subf %150, %151 : vector<2x1x128xf32>
    %cst_68 = arith.constant 0.000000e+00 : f32
    %153 = vector.broadcast %cst_68 : f32 to vector<2x1x128xf32>
    %154 = arith.maximumf %152, %153 : vector<2x1x128xf32>
    %155 = vector.broadcast %145 : vector<2x1x128xf32> to vector<2x64x128xf32>
    %156 = arith.subf %141, %155 : vector<2x64x128xf32>
    %cst_69 = arith.constant 9.99999974E-6 : f32
    %157 = vector.broadcast %cst_69 : f32 to vector<2x1x128xf32>
    %158 = arith.addf %154, %157 : vector<2x1x128xf32>
    %159 = math.rsqrt %158 : vector<2x1x128xf32>
    %160 = vector.broadcast %159 : vector<2x1x128xf32> to vector<2x64x128xf32>
    %161 = arith.mulf %156, %160 : vector<2x64x128xf32>
    %c1_70 = arith.constant 1 : index
    %c0_71 = arith.constant 0 : index
    %c0_72 = arith.constant 0 : index
    %162 = vector.load %arg12[%c1_70, %c0_71, %c0_72] : memref<8x1x128xf32, #tpu.memory_space<vmem>>, vector<1x1x128xf32>
    %163 = vector.shape_cast %162 : vector<1x1x128xf32> to vector<1x128xf32>
    %c1_73 = arith.constant 1 : index
    %c0_74 = arith.constant 0 : index
    %c0_75 = arith.constant 0 : index
    %164 = vector.load %arg13[%c1_73, %c0_74, %c0_75] : memref<8x1x128xf32, #tpu.memory_space<vmem>>, vector<1x1x128xf32>
    %165 = vector.shape_cast %164 : vector<1x1x128xf32> to vector<1x128xf32>
    %166 = vector.shape_cast %161 : vector<2x64x128xf32> to vector<128x128xf32>
    %cst_76 = arith.constant dense<0.000000e+00> : vector<128xf32>
    %167 = vector.multi_reduction <add>, %166, %cst_76 [0] : vector<128x128xf32> to vector<128xf32>
    %168 = vector.shape_cast %167 : vector<128xf32> to vector<1x128xf32>
    %cst_77 = arith.constant 1.280000e+02 : f32
    %169 = vector.broadcast %cst_77 : f32 to vector<1x128xf32>
    %170 = arith.divf %168, %169 : vector<1x128xf32>
    %171 = arith.mulf %166, %166 : vector<128x128xf32>
    %cst_78 = arith.constant dense<0.000000e+00> : vector<128xf32>
    %172 = vector.multi_reduction <add>, %171, %cst_78 [0] : vector<128x128xf32> to vector<128xf32>
    %173 = vector.shape_cast %172 : vector<128xf32> to vector<1x128xf32>
    %cst_79 = arith.constant 1.280000e+02 : f32
    %174 = vector.broadcast %cst_79 : f32 to vector<1x128xf32>
    %175 = arith.divf %173, %174 : vector<1x128xf32>
    %176 = arith.mulf %170, %170 : vector<1x128xf32>
    %177 = arith.subf %175, %176 : vector<1x128xf32>
    %cst_80 = arith.constant 0.000000e+00 : f32
    %178 = vector.broadcast %cst_80 : f32 to vector<1x128xf32>
    %179 = arith.maximumf %177, %178 : vector<1x128xf32>
    %180 = vector.shape_cast %170 : vector<1x128xf32> to vector<1x1x128xf32>
    %181 = vector.broadcast %180 : vector<1x1x128xf32> to vector<2x64x128xf32>
    %182 = arith.subf %161, %181 : vector<2x64x128xf32>
    %cst_81 = arith.constant 9.99999974E-6 : f32
    %183 = vector.broadcast %cst_81 : f32 to vector<1x128xf32>
    %184 = arith.addf %179, %183 : vector<1x128xf32>
    %185 = math.rsqrt %184 : vector<1x128xf32>
    %186 = vector.shape_cast %185 : vector<1x128xf32> to vector<1x1x128xf32>
    %187 = vector.broadcast %186 : vector<1x1x128xf32> to vector<2x64x128xf32>
    %188 = arith.mulf %182, %187 : vector<2x64x128xf32>
    %189 = vector.shape_cast %163 : vector<1x128xf32> to vector<1x1x128xf32>
    %190 = vector.broadcast %189 : vector<1x1x128xf32> to vector<2x64x128xf32>
    %191 = arith.mulf %188, %190 : vector<2x64x128xf32>
    %192 = vector.shape_cast %165 : vector<1x128xf32> to vector<1x1x128xf32>
    %193 = vector.broadcast %192 : vector<1x1x128xf32> to vector<2x64x128xf32>
    %194 = arith.addf %191, %193 : vector<2x64x128xf32>
    %195 = arith.addf %194, %68 : vector<2x64x128xf32>
    %cst_82 = arith.constant 0.000000e+00 : f32
    %196 = vector.broadcast %cst_82 : f32 to vector<2x64x128xf32>
    %197 = arith.maximumf %195, %196 : vector<2x64x128xf32>
    %198 = vector.shape_cast %197 : vector<2x64x128xf32> to vector<128x128xf32>
    %c2 = arith.constant 2 : index
    %c0_83 = arith.constant 0 : index
    %c0_84 = arith.constant 0 : index
    %199 = vector.load %arg10[%c2, %c0_83, %c0_84] : memref<8x128x128xf32, #tpu.memory_space<vmem>>, vector<1x128x128xf32>
    %200 = vector.shape_cast %199 : vector<1x128x128xf32> to vector<128x128xf32>
    %c2_85 = arith.constant 2 : index
    %c0_86 = arith.constant 0 : index
    %c0_87 = arith.constant 0 : index
    %201 = vector.load %arg11[%c2_85, %c0_86, %c0_87] : memref<8x1x128xf32, #tpu.memory_space<vmem>>, vector<1x1x128xf32>
    %202 = vector.shape_cast %201 : vector<1x1x128xf32> to vector<1x128xf32>
    %cst_88 = arith.constant dense<0.000000e+00> : vector<128x128xf32>
    %203 = tpu.matmul %198, %200, %cst_88 {dimension_numbers = #tpu.dot_dimension_numbers<[1], [0], [0], [1], [0, 0, 1, 1], [], []>} : vector<128x128xf32>, vector<128x128xf32>, vector<128x128xf32> -> vector<128x128xf32>
    %204 = vector.broadcast %202 : vector<1x128xf32> to vector<128x128xf32>
    %205 = arith.addf %203, %204 : vector<128x128xf32>
    %206 = vector.shape_cast %205 : vector<128x128xf32> to vector<2x64x128xf32>
    %cst_89 = arith.constant dense<0.000000e+00> : vector<2x128xf32>
    %207 = vector.multi_reduction <add>, %206, %cst_89 [1] : vector<2x64x128xf32> to vector<2x128xf32>
    %208 = vector.shape_cast %207 : vector<2x128xf32> to vector<2x1x128xf32>
    %cst_90 = arith.constant 6.400000e+01 : f32
    %209 = vector.broadcast %cst_90 : f32 to vector<2x1x128xf32>
    %210 = arith.divf %208, %209 : vector<2x1x128xf32>
    %211 = arith.mulf %206, %206 : vector<2x64x128xf32>
    %cst_91 = arith.constant dense<0.000000e+00> : vector<2x128xf32>
    %212 = vector.multi_reduction <add>, %211, %cst_91 [1] : vector<2x64x128xf32> to vector<2x128xf32>
    %213 = vector.shape_cast %212 : vector<2x128xf32> to vector<2x1x128xf32>
    %cst_92 = arith.constant 6.400000e+01 : f32
    %214 = vector.broadcast %cst_92 : f32 to vector<2x1x128xf32>
    %215 = arith.divf %213, %214 : vector<2x1x128xf32>
    %216 = arith.mulf %210, %210 : vector<2x1x128xf32>
    %217 = arith.subf %215, %216 : vector<2x1x128xf32>
    %cst_93 = arith.constant 0.000000e+00 : f32
    %218 = vector.broadcast %cst_93 : f32 to vector<2x1x128xf32>
    %219 = arith.maximumf %217, %218 : vector<2x1x128xf32>
    %220 = vector.broadcast %210 : vector<2x1x128xf32> to vector<2x64x128xf32>
    %221 = arith.subf %206, %220 : vector<2x64x128xf32>
    %cst_94 = arith.constant 9.99999974E-6 : f32
    %222 = vector.broadcast %cst_94 : f32 to vector<2x1x128xf32>
    %223 = arith.addf %219, %222 : vector<2x1x128xf32>
    %224 = math.rsqrt %223 : vector<2x1x128xf32>
    %225 = vector.broadcast %224 : vector<2x1x128xf32> to vector<2x64x128xf32>
    %226 = arith.mulf %221, %225 : vector<2x64x128xf32>
    %c2_95 = arith.constant 2 : index
    %c0_96 = arith.constant 0 : index
    %c0_97 = arith.constant 0 : index
    %227 = vector.load %arg12[%c2_95, %c0_96, %c0_97] : memref<8x1x128xf32, #tpu.memory_space<vmem>>, vector<1x1x128xf32>
    %228 = vector.shape_cast %227 : vector<1x1x128xf32> to vector<1x128xf32>
    %c2_98 = arith.constant 2 : index
    %c0_99 = arith.constant 0 : index
    %c0_100 = arith.constant 0 : index
    %229 = vector.load %arg13[%c2_98, %c0_99, %c0_100] : memref<8x1x128xf32, #tpu.memory_space<vmem>>, vector<1x1x128xf32>
    %230 = vector.shape_cast %229 : vector<1x1x128xf32> to vector<1x128xf32>
    %231 = vector.shape_cast %226 : vector<2x64x128xf32> to vector<128x128xf32>
    %cst_101 = arith.constant dense<0.000000e+00> : vector<128xf32>
    %232 = vector.multi_reduction <add>, %231, %cst_101 [0] : vector<128x128xf32> to vector<128xf32>
    %233 = vector.shape_cast %232 : vector<128xf32> to vector<1x128xf32>
    %cst_102 = arith.constant 1.280000e+02 : f32
    %234 = vector.broadcast %cst_102 : f32 to vector<1x128xf32>
    %235 = arith.divf %233, %234 : vector<1x128xf32>
    %236 = arith.mulf %231, %231 : vector<128x128xf32>
    %cst_103 = arith.constant dense<0.000000e+00> : vector<128xf32>
    %237 = vector.multi_reduction <add>, %236, %cst_103 [0] : vector<128x128xf32> to vector<128xf32>
    %238 = vector.shape_cast %237 : vector<128xf32> to vector<1x128xf32>
    %cst_104 = arith.constant 1.280000e+02 : f32
    %239 = vector.broadcast %cst_104 : f32 to vector<1x128xf32>
    %240 = arith.divf %238, %239 : vector<1x128xf32>
    %241 = arith.mulf %235, %235 : vector<1x128xf32>
    %242 = arith.subf %240, %241 : vector<1x128xf32>
    %cst_105 = arith.constant 0.000000e+00 : f32
    %243 = vector.broadcast %cst_105 : f32 to vector<1x128xf32>
    %244 = arith.maximumf %242, %243 : vector<1x128xf32>
    %245 = vector.shape_cast %235 : vector<1x128xf32> to vector<1x1x128xf32>
    %246 = vector.broadcast %245 : vector<1x1x128xf32> to vector<2x64x128xf32>
    %247 = arith.subf %226, %246 : vector<2x64x128xf32>
    %cst_106 = arith.constant 9.99999974E-6 : f32
    %248 = vector.broadcast %cst_106 : f32 to vector<1x128xf32>
    %249 = arith.addf %244, %248 : vector<1x128xf32>
    %250 = math.rsqrt %249 : vector<1x128xf32>
    %251 = vector.shape_cast %250 : vector<1x128xf32> to vector<1x1x128xf32>
    %252 = vector.broadcast %251 : vector<1x1x128xf32> to vector<2x64x128xf32>
    %253 = arith.mulf %247, %252 : vector<2x64x128xf32>
    %254 = vector.shape_cast %228 : vector<1x128xf32> to vector<1x1x128xf32>
    %255 = vector.broadcast %254 : vector<1x1x128xf32> to vector<2x64x128xf32>
    %256 = arith.mulf %253, %255 : vector<2x64x128xf32>
    %257 = vector.shape_cast %230 : vector<1x128xf32> to vector<1x1x128xf32>
    %258 = vector.broadcast %257 : vector<1x1x128xf32> to vector<2x64x128xf32>
    %259 = arith.addf %256, %258 : vector<2x64x128xf32>
    %cst_107 = arith.constant 0.000000e+00 : f32
    %260 = vector.broadcast %cst_107 : f32 to vector<2x64x128xf32>
    %261 = arith.maximumf %259, %260 : vector<2x64x128xf32>
    %262 = vector.shape_cast %261 : vector<2x64x128xf32> to vector<128x128xf32>
    %c3 = arith.constant 3 : index
    %c0_108 = arith.constant 0 : index
    %c0_109 = arith.constant 0 : index
    %263 = vector.load %arg10[%c3, %c0_108, %c0_109] : memref<8x128x128xf32, #tpu.memory_space<vmem>>, vector<1x128x128xf32>
    %264 = vector.shape_cast %263 : vector<1x128x128xf32> to vector<128x128xf32>
    %c3_110 = arith.constant 3 : index
    %c0_111 = arith.constant 0 : index
    %c0_112 = arith.constant 0 : index
    %265 = vector.load %arg11[%c3_110, %c0_111, %c0_112] : memref<8x1x128xf32, #tpu.memory_space<vmem>>, vector<1x1x128xf32>
    %266 = vector.shape_cast %265 : vector<1x1x128xf32> to vector<1x128xf32>
    %cst_113 = arith.constant dense<0.000000e+00> : vector<128x128xf32>
    %267 = tpu.matmul %262, %264, %cst_113 {dimension_numbers = #tpu.dot_dimension_numbers<[1], [0], [0], [1], [0, 0, 1, 1], [], []>} : vector<128x128xf32>, vector<128x128xf32>, vector<128x128xf32> -> vector<128x128xf32>
    %268 = vector.broadcast %266 : vector<1x128xf32> to vector<128x128xf32>
    %269 = arith.addf %267, %268 : vector<128x128xf32>
    %270 = vector.shape_cast %269 : vector<128x128xf32> to vector<2x64x128xf32>
    %cst_114 = arith.constant dense<0.000000e+00> : vector<2x128xf32>
    %271 = vector.multi_reduction <add>, %270, %cst_114 [1] : vector<2x64x128xf32> to vector<2x128xf32>
    %272 = vector.shape_cast %271 : vector<2x128xf32> to vector<2x1x128xf32>
    %cst_115 = arith.constant 6.400000e+01 : f32
    %273 = vector.broadcast %cst_115 : f32 to vector<2x1x128xf32>
    %274 = arith.divf %272, %273 : vector<2x1x128xf32>
    %275 = arith.mulf %270, %270 : vector<2x64x128xf32>
    %cst_116 = arith.constant dense<0.000000e+00> : vector<2x128xf32>
    %276 = vector.multi_reduction <add>, %275, %cst_116 [1] : vector<2x64x128xf32> to vector<2x128xf32>
    %277 = vector.shape_cast %276 : vector<2x128xf32> to vector<2x1x128xf32>
    %cst_117 = arith.constant 6.400000e+01 : f32
    %278 = vector.broadcast %cst_117 : f32 to vector<2x1x128xf32>
    %279 = arith.divf %277, %278 : vector<2x1x128xf32>
    %280 = arith.mulf %274, %274 : vector<2x1x128xf32>
    %281 = arith.subf %279, %280 : vector<2x1x128xf32>
    %cst_118 = arith.constant 0.000000e+00 : f32
    %282 = vector.broadcast %cst_118 : f32 to vector<2x1x128xf32>
    %283 = arith.maximumf %281, %282 : vector<2x1x128xf32>
    %284 = vector.broadcast %274 : vector<2x1x128xf32> to vector<2x64x128xf32>
    %285 = arith.subf %270, %284 : vector<2x64x128xf32>
    %cst_119 = arith.constant 9.99999974E-6 : f32
    %286 = vector.broadcast %cst_119 : f32 to vector<2x1x128xf32>
    %287 = arith.addf %283, %286 : vector<2x1x128xf32>
    %288 = math.rsqrt %287 : vector<2x1x128xf32>
    %289 = vector.broadcast %288 : vector<2x1x128xf32> to vector<2x64x128xf32>
    %290 = arith.mulf %285, %289 : vector<2x64x128xf32>
    %c3_120 = arith.constant 3 : index
    %c0_121 = arith.constant 0 : index
    %c0_122 = arith.constant 0 : index
    %291 = vector.load %arg12[%c3_120, %c0_121, %c0_122] : memref<8x1x128xf32, #tpu.memory_space<vmem>>, vector<1x1x128xf32>
    %292 = vector.shape_cast %291 : vector<1x1x128xf32> to vector<1x128xf32>
    %c3_123 = arith.constant 3 : index
    %c0_124 = arith.constant 0 : index
    %c0_125 = arith.constant 0 : index
    %293 = vector.load %arg13[%c3_123, %c0_124, %c0_125] : memref<8x1x128xf32, #tpu.memory_space<vmem>>, vector<1x1x128xf32>
    %294 = vector.shape_cast %293 : vector<1x1x128xf32> to vector<1x128xf32>
    %295 = vector.shape_cast %290 : vector<2x64x128xf32> to vector<128x128xf32>
    %cst_126 = arith.constant dense<0.000000e+00> : vector<128xf32>
    %296 = vector.multi_reduction <add>, %295, %cst_126 [0] : vector<128x128xf32> to vector<128xf32>
    %297 = vector.shape_cast %296 : vector<128xf32> to vector<1x128xf32>
    %cst_127 = arith.constant 1.280000e+02 : f32
    %298 = vector.broadcast %cst_127 : f32 to vector<1x128xf32>
    %299 = arith.divf %297, %298 : vector<1x128xf32>
    %300 = arith.mulf %295, %295 : vector<128x128xf32>
    %cst_128 = arith.constant dense<0.000000e+00> : vector<128xf32>
    %301 = vector.multi_reduction <add>, %300, %cst_128 [0] : vector<128x128xf32> to vector<128xf32>
    %302 = vector.shape_cast %301 : vector<128xf32> to vector<1x128xf32>
    %cst_129 = arith.constant 1.280000e+02 : f32
    %303 = vector.broadcast %cst_129 : f32 to vector<1x128xf32>
    %304 = arith.divf %302, %303 : vector<1x128xf32>
    %305 = arith.mulf %299, %299 : vector<1x128xf32>
    %306 = arith.subf %304, %305 : vector<1x128xf32>
    %cst_130 = arith.constant 0.000000e+00 : f32
    %307 = vector.broadcast %cst_130 : f32 to vector<1x128xf32>
    %308 = arith.maximumf %306, %307 : vector<1x128xf32>
    %309 = vector.shape_cast %299 : vector<1x128xf32> to vector<1x1x128xf32>
    %310 = vector.broadcast %309 : vector<1x1x128xf32> to vector<2x64x128xf32>
    %311 = arith.subf %290, %310 : vector<2x64x128xf32>
    %cst_131 = arith.constant 9.99999974E-6 : f32
    %312 = vector.broadcast %cst_131 : f32 to vector<1x128xf32>
    %313 = arith.addf %308, %312 : vector<1x128xf32>
    %314 = math.rsqrt %313 : vector<1x128xf32>
    %315 = vector.shape_cast %314 : vector<1x128xf32> to vector<1x1x128xf32>
    %316 = vector.broadcast %315 : vector<1x1x128xf32> to vector<2x64x128xf32>
    %317 = arith.mulf %311, %316 : vector<2x64x128xf32>
    %318 = vector.shape_cast %292 : vector<1x128xf32> to vector<1x1x128xf32>
    %319 = vector.broadcast %318 : vector<1x1x128xf32> to vector<2x64x128xf32>
    %320 = arith.mulf %317, %319 : vector<2x64x128xf32>
    %321 = vector.shape_cast %294 : vector<1x128xf32> to vector<1x1x128xf32>
    %322 = vector.broadcast %321 : vector<1x1x128xf32> to vector<2x64x128xf32>
    %323 = arith.addf %320, %322 : vector<2x64x128xf32>
    %324 = arith.addf %323, %197 : vector<2x64x128xf32>
    %cst_132 = arith.constant 0.000000e+00 : f32
    %325 = vector.broadcast %cst_132 : f32 to vector<2x64x128xf32>
    %326 = arith.maximumf %324, %325 : vector<2x64x128xf32>
    %327 = vector.shape_cast %326 : vector<2x64x128xf32> to vector<128x128xf32>
    %c4 = arith.constant 4 : index
    %c0_133 = arith.constant 0 : index
    %c0_134 = arith.constant 0 : index
    %328 = vector.load %arg10[%c4, %c0_133, %c0_134] : memref<8x128x128xf32, #tpu.memory_space<vmem>>, vector<1x128x128xf32>
    %329 = vector.shape_cast %328 : vector<1x128x128xf32> to vector<128x128xf32>
    %c4_135 = arith.constant 4 : index
    %c0_136 = arith.constant 0 : index
    %c0_137 = arith.constant 0 : index
    %330 = vector.load %arg11[%c4_135, %c0_136, %c0_137] : memref<8x1x128xf32, #tpu.memory_space<vmem>>, vector<1x1x128xf32>
    %331 = vector.shape_cast %330 : vector<1x1x128xf32> to vector<1x128xf32>
    %cst_138 = arith.constant dense<0.000000e+00> : vector<128x128xf32>
    %332 = tpu.matmul %327, %329, %cst_138 {dimension_numbers = #tpu.dot_dimension_numbers<[1], [0], [0], [1], [0, 0, 1, 1], [], []>} : vector<128x128xf32>, vector<128x128xf32>, vector<128x128xf32> -> vector<128x128xf32>
    %333 = vector.broadcast %331 : vector<1x128xf32> to vector<128x128xf32>
    %334 = arith.addf %332, %333 : vector<128x128xf32>
    %335 = vector.shape_cast %334 : vector<128x128xf32> to vector<2x64x128xf32>
    %cst_139 = arith.constant dense<0.000000e+00> : vector<2x128xf32>
    %336 = vector.multi_reduction <add>, %335, %cst_139 [1] : vector<2x64x128xf32> to vector<2x128xf32>
    %337 = vector.shape_cast %336 : vector<2x128xf32> to vector<2x1x128xf32>
    %cst_140 = arith.constant 6.400000e+01 : f32
    %338 = vector.broadcast %cst_140 : f32 to vector<2x1x128xf32>
    %339 = arith.divf %337, %338 : vector<2x1x128xf32>
    %340 = arith.mulf %335, %335 : vector<2x64x128xf32>
    %cst_141 = arith.constant dense<0.000000e+00> : vector<2x128xf32>
    %341 = vector.multi_reduction <add>, %340, %cst_141 [1] : vector<2x64x128xf32> to vector<2x128xf32>
    %342 = vector.shape_cast %341 : vector<2x128xf32> to vector<2x1x128xf32>
    %cst_142 = arith.constant 6.400000e+01 : f32
    %343 = vector.broadcast %cst_142 : f32 to vector<2x1x128xf32>
    %344 = arith.divf %342, %343 : vector<2x1x128xf32>
    %345 = arith.mulf %339, %339 : vector<2x1x128xf32>
    %346 = arith.subf %344, %345 : vector<2x1x128xf32>
    %cst_143 = arith.constant 0.000000e+00 : f32
    %347 = vector.broadcast %cst_143 : f32 to vector<2x1x128xf32>
    %348 = arith.maximumf %346, %347 : vector<2x1x128xf32>
    %349 = vector.broadcast %339 : vector<2x1x128xf32> to vector<2x64x128xf32>
    %350 = arith.subf %335, %349 : vector<2x64x128xf32>
    %cst_144 = arith.constant 9.99999974E-6 : f32
    %351 = vector.broadcast %cst_144 : f32 to vector<2x1x128xf32>
    %352 = arith.addf %348, %351 : vector<2x1x128xf32>
    %353 = math.rsqrt %352 : vector<2x1x128xf32>
    %354 = vector.broadcast %353 : vector<2x1x128xf32> to vector<2x64x128xf32>
    %355 = arith.mulf %350, %354 : vector<2x64x128xf32>
    %c4_145 = arith.constant 4 : index
    %c0_146 = arith.constant 0 : index
    %c0_147 = arith.constant 0 : index
    %356 = vector.load %arg12[%c4_145, %c0_146, %c0_147] : memref<8x1x128xf32, #tpu.memory_space<vmem>>, vector<1x1x128xf32>
    %357 = vector.shape_cast %356 : vector<1x1x128xf32> to vector<1x128xf32>
    %c4_148 = arith.constant 4 : index
    %c0_149 = arith.constant 0 : index
    %c0_150 = arith.constant 0 : index
    %358 = vector.load %arg13[%c4_148, %c0_149, %c0_150] : memref<8x1x128xf32, #tpu.memory_space<vmem>>, vector<1x1x128xf32>
    %359 = vector.shape_cast %358 : vector<1x1x128xf32> to vector<1x128xf32>
    %360 = vector.shape_cast %355 : vector<2x64x128xf32> to vector<128x128xf32>
    %cst_151 = arith.constant dense<0.000000e+00> : vector<128xf32>
    %361 = vector.multi_reduction <add>, %360, %cst_151 [0] : vector<128x128xf32> to vector<128xf32>
    %362 = vector.shape_cast %361 : vector<128xf32> to vector<1x128xf32>
    %cst_152 = arith.constant 1.280000e+02 : f32
    %363 = vector.broadcast %cst_152 : f32 to vector<1x128xf32>
    %364 = arith.divf %362, %363 : vector<1x128xf32>
    %365 = arith.mulf %360, %360 : vector<128x128xf32>
    %cst_153 = arith.constant dense<0.000000e+00> : vector<128xf32>
    %366 = vector.multi_reduction <add>, %365, %cst_153 [0] : vector<128x128xf32> to vector<128xf32>
    %367 = vector.shape_cast %366 : vector<128xf32> to vector<1x128xf32>
    %cst_154 = arith.constant 1.280000e+02 : f32
    %368 = vector.broadcast %cst_154 : f32 to vector<1x128xf32>
    %369 = arith.divf %367, %368 : vector<1x128xf32>
    %370 = arith.mulf %364, %364 : vector<1x128xf32>
    %371 = arith.subf %369, %370 : vector<1x128xf32>
    %cst_155 = arith.constant 0.000000e+00 : f32
    %372 = vector.broadcast %cst_155 : f32 to vector<1x128xf32>
    %373 = arith.maximumf %371, %372 : vector<1x128xf32>
    %374 = vector.shape_cast %364 : vector<1x128xf32> to vector<1x1x128xf32>
    %375 = vector.broadcast %374 : vector<1x1x128xf32> to vector<2x64x128xf32>
    %376 = arith.subf %355, %375 : vector<2x64x128xf32>
    %cst_156 = arith.constant 9.99999974E-6 : f32
    %377 = vector.broadcast %cst_156 : f32 to vector<1x128xf32>
    %378 = arith.addf %373, %377 : vector<1x128xf32>
    %379 = math.rsqrt %378 : vector<1x128xf32>
    %380 = vector.shape_cast %379 : vector<1x128xf32> to vector<1x1x128xf32>
    %381 = vector.broadcast %380 : vector<1x1x128xf32> to vector<2x64x128xf32>
    %382 = arith.mulf %376, %381 : vector<2x64x128xf32>
    %383 = vector.shape_cast %357 : vector<1x128xf32> to vector<1x1x128xf32>
    %384 = vector.broadcast %383 : vector<1x1x128xf32> to vector<2x64x128xf32>
    %385 = arith.mulf %382, %384 : vector<2x64x128xf32>
    %386 = vector.shape_cast %359 : vector<1x128xf32> to vector<1x1x128xf32>
    %387 = vector.broadcast %386 : vector<1x1x128xf32> to vector<2x64x128xf32>
    %388 = arith.addf %385, %387 : vector<2x64x128xf32>
    %cst_157 = arith.constant 0.000000e+00 : f32
    %389 = vector.broadcast %cst_157 : f32 to vector<2x64x128xf32>
    %390 = arith.maximumf %388, %389 : vector<2x64x128xf32>
    %391 = vector.shape_cast %390 : vector<2x64x128xf32> to vector<128x128xf32>
    %c5 = arith.constant 5 : index
    %c0_158 = arith.constant 0 : index
    %c0_159 = arith.constant 0 : index
    %392 = vector.load %arg10[%c5, %c0_158, %c0_159] : memref<8x128x128xf32, #tpu.memory_space<vmem>>, vector<1x128x128xf32>
    %393 = vector.shape_cast %392 : vector<1x128x128xf32> to vector<128x128xf32>
    %c5_160 = arith.constant 5 : index
    %c0_161 = arith.constant 0 : index
    %c0_162 = arith.constant 0 : index
    %394 = vector.load %arg11[%c5_160, %c0_161, %c0_162] : memref<8x1x128xf32, #tpu.memory_space<vmem>>, vector<1x1x128xf32>
    %395 = vector.shape_cast %394 : vector<1x1x128xf32> to vector<1x128xf32>
    %cst_163 = arith.constant dense<0.000000e+00> : vector<128x128xf32>
    %396 = tpu.matmul %391, %393, %cst_163 {dimension_numbers = #tpu.dot_dimension_numbers<[1], [0], [0], [1], [0, 0, 1, 1], [], []>} : vector<128x128xf32>, vector<128x128xf32>, vector<128x128xf32> -> vector<128x128xf32>
    %397 = vector.broadcast %395 : vector<1x128xf32> to vector<128x128xf32>
    %398 = arith.addf %396, %397 : vector<128x128xf32>
    %399 = vector.shape_cast %398 : vector<128x128xf32> to vector<2x64x128xf32>
    %cst_164 = arith.constant dense<0.000000e+00> : vector<2x128xf32>
    %400 = vector.multi_reduction <add>, %399, %cst_164 [1] : vector<2x64x128xf32> to vector<2x128xf32>
    %401 = vector.shape_cast %400 : vector<2x128xf32> to vector<2x1x128xf32>
    %cst_165 = arith.constant 6.400000e+01 : f32
    %402 = vector.broadcast %cst_165 : f32 to vector<2x1x128xf32>
    %403 = arith.divf %401, %402 : vector<2x1x128xf32>
    %404 = arith.mulf %399, %399 : vector<2x64x128xf32>
    %cst_166 = arith.constant dense<0.000000e+00> : vector<2x128xf32>
    %405 = vector.multi_reduction <add>, %404, %cst_166 [1] : vector<2x64x128xf32> to vector<2x128xf32>
    %406 = vector.shape_cast %405 : vector<2x128xf32> to vector<2x1x128xf32>
    %cst_167 = arith.constant 6.400000e+01 : f32
    %407 = vector.broadcast %cst_167 : f32 to vector<2x1x128xf32>
    %408 = arith.divf %406, %407 : vector<2x1x128xf32>
    %409 = arith.mulf %403, %403 : vector<2x1x128xf32>
    %410 = arith.subf %408, %409 : vector<2x1x128xf32>
    %cst_168 = arith.constant 0.000000e+00 : f32
    %411 = vector.broadcast %cst_168 : f32 to vector<2x1x128xf32>
    %412 = arith.maximumf %410, %411 : vector<2x1x128xf32>
    %413 = vector.broadcast %403 : vector<2x1x128xf32> to vector<2x64x128xf32>
    %414 = arith.subf %399, %413 : vector<2x64x128xf32>
    %cst_169 = arith.constant 9.99999974E-6 : f32
    %415 = vector.broadcast %cst_169 : f32 to vector<2x1x128xf32>
    %416 = arith.addf %412, %415 : vector<2x1x128xf32>
    %417 = math.rsqrt %416 : vector<2x1x128xf32>
    %418 = vector.broadcast %417 : vector<2x1x128xf32> to vector<2x64x128xf32>
    %419 = arith.mulf %414, %418 : vector<2x64x128xf32>
    %c5_170 = arith.constant 5 : index
    %c0_171 = arith.constant 0 : index
    %c0_172 = arith.constant 0 : index
    %420 = vector.load %arg12[%c5_170, %c0_171, %c0_172] : memref<8x1x128xf32, #tpu.memory_space<vmem>>, vector<1x1x128xf32>
    %421 = vector.shape_cast %420 : vector<1x1x128xf32> to vector<1x128xf32>
    %c5_173 = arith.constant 5 : index
    %c0_174 = arith.constant 0 : index
    %c0_175 = arith.constant 0 : index
    %422 = vector.load %arg13[%c5_173, %c0_174, %c0_175] : memref<8x1x128xf32, #tpu.memory_space<vmem>>, vector<1x1x128xf32>
    %423 = vector.shape_cast %422 : vector<1x1x128xf32> to vector<1x128xf32>
    %424 = vector.shape_cast %419 : vector<2x64x128xf32> to vector<128x128xf32>
    %cst_176 = arith.constant dense<0.000000e+00> : vector<128xf32>
    %425 = vector.multi_reduction <add>, %424, %cst_176 [0] : vector<128x128xf32> to vector<128xf32>
    %426 = vector.shape_cast %425 : vector<128xf32> to vector<1x128xf32>
    %cst_177 = arith.constant 1.280000e+02 : f32
    %427 = vector.broadcast %cst_177 : f32 to vector<1x128xf32>
    %428 = arith.divf %426, %427 : vector<1x128xf32>
    %429 = arith.mulf %424, %424 : vector<128x128xf32>
    %cst_178 = arith.constant dense<0.000000e+00> : vector<128xf32>
    %430 = vector.multi_reduction <add>, %429, %cst_178 [0] : vector<128x128xf32> to vector<128xf32>
    %431 = vector.shape_cast %430 : vector<128xf32> to vector<1x128xf32>
    %cst_179 = arith.constant 1.280000e+02 : f32
    %432 = vector.broadcast %cst_179 : f32 to vector<1x128xf32>
    %433 = arith.divf %431, %432 : vector<1x128xf32>
    %434 = arith.mulf %428, %428 : vector<1x128xf32>
    %435 = arith.subf %433, %434 : vector<1x128xf32>
    %cst_180 = arith.constant 0.000000e+00 : f32
    %436 = vector.broadcast %cst_180 : f32 to vector<1x128xf32>
    %437 = arith.maximumf %435, %436 : vector<1x128xf32>
    %438 = vector.shape_cast %428 : vector<1x128xf32> to vector<1x1x128xf32>
    %439 = vector.broadcast %438 : vector<1x1x128xf32> to vector<2x64x128xf32>
    %440 = arith.subf %419, %439 : vector<2x64x128xf32>
    %cst_181 = arith.constant 9.99999974E-6 : f32
    %441 = vector.broadcast %cst_181 : f32 to vector<1x128xf32>
    %442 = arith.addf %437, %441 : vector<1x128xf32>
    %443 = math.rsqrt %442 : vector<1x128xf32>
    %444 = vector.shape_cast %443 : vector<1x128xf32> to vector<1x1x128xf32>
    %445 = vector.broadcast %444 : vector<1x1x128xf32> to vector<2x64x128xf32>
    %446 = arith.mulf %440, %445 : vector<2x64x128xf32>
    %447 = vector.shape_cast %421 : vector<1x128xf32> to vector<1x1x128xf32>
    %448 = vector.broadcast %447 : vector<1x1x128xf32> to vector<2x64x128xf32>
    %449 = arith.mulf %446, %448 : vector<2x64x128xf32>
    %450 = vector.shape_cast %423 : vector<1x128xf32> to vector<1x1x128xf32>
    %451 = vector.broadcast %450 : vector<1x1x128xf32> to vector<2x64x128xf32>
    %452 = arith.addf %449, %451 : vector<2x64x128xf32>
    %453 = arith.addf %452, %326 : vector<2x64x128xf32>
    %cst_182 = arith.constant 0.000000e+00 : f32
    %454 = vector.broadcast %cst_182 : f32 to vector<2x64x128xf32>
    %455 = arith.maximumf %453, %454 : vector<2x64x128xf32>
    %456 = vector.shape_cast %455 : vector<2x64x128xf32> to vector<128x128xf32>
    %c6 = arith.constant 6 : index
    %c0_183 = arith.constant 0 : index
    %c0_184 = arith.constant 0 : index
    %457 = vector.load %arg10[%c6, %c0_183, %c0_184] : memref<8x128x128xf32, #tpu.memory_space<vmem>>, vector<1x128x128xf32>
    %458 = vector.shape_cast %457 : vector<1x128x128xf32> to vector<128x128xf32>
    %c6_185 = arith.constant 6 : index
    %c0_186 = arith.constant 0 : index
    %c0_187 = arith.constant 0 : index
    %459 = vector.load %arg11[%c6_185, %c0_186, %c0_187] : memref<8x1x128xf32, #tpu.memory_space<vmem>>, vector<1x1x128xf32>
    %460 = vector.shape_cast %459 : vector<1x1x128xf32> to vector<1x128xf32>
    %cst_188 = arith.constant dense<0.000000e+00> : vector<128x128xf32>
    %461 = tpu.matmul %456, %458, %cst_188 {dimension_numbers = #tpu.dot_dimension_numbers<[1], [0], [0], [1], [0, 0, 1, 1], [], []>} : vector<128x128xf32>, vector<128x128xf32>, vector<128x128xf32> -> vector<128x128xf32>
    %462 = vector.broadcast %460 : vector<1x128xf32> to vector<128x128xf32>
    %463 = arith.addf %461, %462 : vector<128x128xf32>
    %464 = vector.shape_cast %463 : vector<128x128xf32> to vector<2x64x128xf32>
    %cst_189 = arith.constant dense<0.000000e+00> : vector<2x128xf32>
    %465 = vector.multi_reduction <add>, %464, %cst_189 [1] : vector<2x64x128xf32> to vector<2x128xf32>
    %466 = vector.shape_cast %465 : vector<2x128xf32> to vector<2x1x128xf32>
    %cst_190 = arith.constant 6.400000e+01 : f32
    %467 = vector.broadcast %cst_190 : f32 to vector<2x1x128xf32>
    %468 = arith.divf %466, %467 : vector<2x1x128xf32>
    %469 = arith.mulf %464, %464 : vector<2x64x128xf32>
    %cst_191 = arith.constant dense<0.000000e+00> : vector<2x128xf32>
    %470 = vector.multi_reduction <add>, %469, %cst_191 [1] : vector<2x64x128xf32> to vector<2x128xf32>
    %471 = vector.shape_cast %470 : vector<2x128xf32> to vector<2x1x128xf32>
    %cst_192 = arith.constant 6.400000e+01 : f32
    %472 = vector.broadcast %cst_192 : f32 to vector<2x1x128xf32>
    %473 = arith.divf %471, %472 : vector<2x1x128xf32>
    %474 = arith.mulf %468, %468 : vector<2x1x128xf32>
    %475 = arith.subf %473, %474 : vector<2x1x128xf32>
    %cst_193 = arith.constant 0.000000e+00 : f32
    %476 = vector.broadcast %cst_193 : f32 to vector<2x1x128xf32>
    %477 = arith.maximumf %475, %476 : vector<2x1x128xf32>
    %478 = vector.broadcast %468 : vector<2x1x128xf32> to vector<2x64x128xf32>
    %479 = arith.subf %464, %478 : vector<2x64x128xf32>
    %cst_194 = arith.constant 9.99999974E-6 : f32
    %480 = vector.broadcast %cst_194 : f32 to vector<2x1x128xf32>
    %481 = arith.addf %477, %480 : vector<2x1x128xf32>
    %482 = math.rsqrt %481 : vector<2x1x128xf32>
    %483 = vector.broadcast %482 : vector<2x1x128xf32> to vector<2x64x128xf32>
    %484 = arith.mulf %479, %483 : vector<2x64x128xf32>
    %c6_195 = arith.constant 6 : index
    %c0_196 = arith.constant 0 : index
    %c0_197 = arith.constant 0 : index
    %485 = vector.load %arg12[%c6_195, %c0_196, %c0_197] : memref<8x1x128xf32, #tpu.memory_space<vmem>>, vector<1x1x128xf32>
    %486 = vector.shape_cast %485 : vector<1x1x128xf32> to vector<1x128xf32>
    %c6_198 = arith.constant 6 : index
    %c0_199 = arith.constant 0 : index
    %c0_200 = arith.constant 0 : index
    %487 = vector.load %arg13[%c6_198, %c0_199, %c0_200] : memref<8x1x128xf32, #tpu.memory_space<vmem>>, vector<1x1x128xf32>
    %488 = vector.shape_cast %487 : vector<1x1x128xf32> to vector<1x128xf32>
    %489 = vector.shape_cast %484 : vector<2x64x128xf32> to vector<128x128xf32>
    %cst_201 = arith.constant dense<0.000000e+00> : vector<128xf32>
    %490 = vector.multi_reduction <add>, %489, %cst_201 [0] : vector<128x128xf32> to vector<128xf32>
    %491 = vector.shape_cast %490 : vector<128xf32> to vector<1x128xf32>
    %cst_202 = arith.constant 1.280000e+02 : f32
    %492 = vector.broadcast %cst_202 : f32 to vector<1x128xf32>
    %493 = arith.divf %491, %492 : vector<1x128xf32>
    %494 = arith.mulf %489, %489 : vector<128x128xf32>
    %cst_203 = arith.constant dense<0.000000e+00> : vector<128xf32>
    %495 = vector.multi_reduction <add>, %494, %cst_203 [0] : vector<128x128xf32> to vector<128xf32>
    %496 = vector.shape_cast %495 : vector<128xf32> to vector<1x128xf32>
    %cst_204 = arith.constant 1.280000e+02 : f32
    %497 = vector.broadcast %cst_204 : f32 to vector<1x128xf32>
    %498 = arith.divf %496, %497 : vector<1x128xf32>
    %499 = arith.mulf %493, %493 : vector<1x128xf32>
    %500 = arith.subf %498, %499 : vector<1x128xf32>
    %cst_205 = arith.constant 0.000000e+00 : f32
    %501 = vector.broadcast %cst_205 : f32 to vector<1x128xf32>
    %502 = arith.maximumf %500, %501 : vector<1x128xf32>
    %503 = vector.shape_cast %493 : vector<1x128xf32> to vector<1x1x128xf32>
    %504 = vector.broadcast %503 : vector<1x1x128xf32> to vector<2x64x128xf32>
    %505 = arith.subf %484, %504 : vector<2x64x128xf32>
    %cst_206 = arith.constant 9.99999974E-6 : f32
    %506 = vector.broadcast %cst_206 : f32 to vector<1x128xf32>
    %507 = arith.addf %502, %506 : vector<1x128xf32>
    %508 = math.rsqrt %507 : vector<1x128xf32>
    %509 = vector.shape_cast %508 : vector<1x128xf32> to vector<1x1x128xf32>
    %510 = vector.broadcast %509 : vector<1x1x128xf32> to vector<2x64x128xf32>
    %511 = arith.mulf %505, %510 : vector<2x64x128xf32>
    %512 = vector.shape_cast %486 : vector<1x128xf32> to vector<1x1x128xf32>
    %513 = vector.broadcast %512 : vector<1x1x128xf32> to vector<2x64x128xf32>
    %514 = arith.mulf %511, %513 : vector<2x64x128xf32>
    %515 = vector.shape_cast %488 : vector<1x128xf32> to vector<1x1x128xf32>
    %516 = vector.broadcast %515 : vector<1x1x128xf32> to vector<2x64x128xf32>
    %517 = arith.addf %514, %516 : vector<2x64x128xf32>
    %cst_207 = arith.constant 0.000000e+00 : f32
    %518 = vector.broadcast %cst_207 : f32 to vector<2x64x128xf32>
    %519 = arith.maximumf %517, %518 : vector<2x64x128xf32>
    %520 = vector.shape_cast %519 : vector<2x64x128xf32> to vector<128x128xf32>
    %c7 = arith.constant 7 : index
    %c0_208 = arith.constant 0 : index
    %c0_209 = arith.constant 0 : index
    %521 = vector.load %arg10[%c7, %c0_208, %c0_209] : memref<8x128x128xf32, #tpu.memory_space<vmem>>, vector<1x128x128xf32>
    %522 = vector.shape_cast %521 : vector<1x128x128xf32> to vector<128x128xf32>
    %c7_210 = arith.constant 7 : index
    %c0_211 = arith.constant 0 : index
    %c0_212 = arith.constant 0 : index
    %523 = vector.load %arg11[%c7_210, %c0_211, %c0_212] : memref<8x1x128xf32, #tpu.memory_space<vmem>>, vector<1x1x128xf32>
    %524 = vector.shape_cast %523 : vector<1x1x128xf32> to vector<1x128xf32>
    %cst_213 = arith.constant dense<0.000000e+00> : vector<128x128xf32>
    %525 = tpu.matmul %520, %522, %cst_213 {dimension_numbers = #tpu.dot_dimension_numbers<[1], [0], [0], [1], [0, 0, 1, 1], [], []>} : vector<128x128xf32>, vector<128x128xf32>, vector<128x128xf32> -> vector<128x128xf32>
    %526 = vector.broadcast %524 : vector<1x128xf32> to vector<128x128xf32>
    %527 = arith.addf %525, %526 : vector<128x128xf32>
    %528 = vector.shape_cast %527 : vector<128x128xf32> to vector<2x64x128xf32>
    %cst_214 = arith.constant dense<0.000000e+00> : vector<2x128xf32>
    %529 = vector.multi_reduction <add>, %528, %cst_214 [1] : vector<2x64x128xf32> to vector<2x128xf32>
    %530 = vector.shape_cast %529 : vector<2x128xf32> to vector<2x1x128xf32>
    %cst_215 = arith.constant 6.400000e+01 : f32
    %531 = vector.broadcast %cst_215 : f32 to vector<2x1x128xf32>
    %532 = arith.divf %530, %531 : vector<2x1x128xf32>
    %533 = arith.mulf %528, %528 : vector<2x64x128xf32>
    %cst_216 = arith.constant dense<0.000000e+00> : vector<2x128xf32>
    %534 = vector.multi_reduction <add>, %533, %cst_216 [1] : vector<2x64x128xf32> to vector<2x128xf32>
    %535 = vector.shape_cast %534 : vector<2x128xf32> to vector<2x1x128xf32>
    %cst_217 = arith.constant 6.400000e+01 : f32
    %536 = vector.broadcast %cst_217 : f32 to vector<2x1x128xf32>
    %537 = arith.divf %535, %536 : vector<2x1x128xf32>
    %538 = arith.mulf %532, %532 : vector<2x1x128xf32>
    %539 = arith.subf %537, %538 : vector<2x1x128xf32>
    %cst_218 = arith.constant 0.000000e+00 : f32
    %540 = vector.broadcast %cst_218 : f32 to vector<2x1x128xf32>
    %541 = arith.maximumf %539, %540 : vector<2x1x128xf32>
    %542 = vector.broadcast %532 : vector<2x1x128xf32> to vector<2x64x128xf32>
    %543 = arith.subf %528, %542 : vector<2x64x128xf32>
    %cst_219 = arith.constant 9.99999974E-6 : f32
    %544 = vector.broadcast %cst_219 : f32 to vector<2x1x128xf32>
    %545 = arith.addf %541, %544 : vector<2x1x128xf32>
    %546 = math.rsqrt %545 : vector<2x1x128xf32>
    %547 = vector.broadcast %546 : vector<2x1x128xf32> to vector<2x64x128xf32>
    %548 = arith.mulf %543, %547 : vector<2x64x128xf32>
    %c7_220 = arith.constant 7 : index
    %c0_221 = arith.constant 0 : index
    %c0_222 = arith.constant 0 : index
    %549 = vector.load %arg12[%c7_220, %c0_221, %c0_222] : memref<8x1x128xf32, #tpu.memory_space<vmem>>, vector<1x1x128xf32>
    %550 = vector.shape_cast %549 : vector<1x1x128xf32> to vector<1x128xf32>
    %c7_223 = arith.constant 7 : index
    %c0_224 = arith.constant 0 : index
    %c0_225 = arith.constant 0 : index
    %551 = vector.load %arg13[%c7_223, %c0_224, %c0_225] : memref<8x1x128xf32, #tpu.memory_space<vmem>>, vector<1x1x128xf32>
    %552 = vector.shape_cast %551 : vector<1x1x128xf32> to vector<1x128xf32>
    %553 = vector.shape_cast %548 : vector<2x64x128xf32> to vector<128x128xf32>
    %cst_226 = arith.constant dense<0.000000e+00> : vector<128xf32>
    %554 = vector.multi_reduction <add>, %553, %cst_226 [0] : vector<128x128xf32> to vector<128xf32>
    %555 = vector.shape_cast %554 : vector<128xf32> to vector<1x128xf32>
    %cst_227 = arith.constant 1.280000e+02 : f32
    %556 = vector.broadcast %cst_227 : f32 to vector<1x128xf32>
    %557 = arith.divf %555, %556 : vector<1x128xf32>
    %558 = arith.mulf %553, %553 : vector<128x128xf32>
    %cst_228 = arith.constant dense<0.000000e+00> : vector<128xf32>
    %559 = vector.multi_reduction <add>, %558, %cst_228 [0] : vector<128x128xf32> to vector<128xf32>
    %560 = vector.shape_cast %559 : vector<128xf32> to vector<1x128xf32>
    %cst_229 = arith.constant 1.280000e+02 : f32
    %561 = vector.broadcast %cst_229 : f32 to vector<1x128xf32>
    %562 = arith.divf %560, %561 : vector<1x128xf32>
    %563 = arith.mulf %557, %557 : vector<1x128xf32>
    %564 = arith.subf %562, %563 : vector<1x128xf32>
    %cst_230 = arith.constant 0.000000e+00 : f32
    %565 = vector.broadcast %cst_230 : f32 to vector<1x128xf32>
    %566 = arith.maximumf %564, %565 : vector<1x128xf32>
    %567 = vector.shape_cast %557 : vector<1x128xf32> to vector<1x1x128xf32>
    %568 = vector.broadcast %567 : vector<1x1x128xf32> to vector<2x64x128xf32>
    %569 = arith.subf %548, %568 : vector<2x64x128xf32>
    %cst_231 = arith.constant 9.99999974E-6 : f32
    %570 = vector.broadcast %cst_231 : f32 to vector<1x128xf32>
    %571 = arith.addf %566, %570 : vector<1x128xf32>
    %572 = math.rsqrt %571 : vector<1x128xf32>
    %573 = vector.shape_cast %572 : vector<1x128xf32> to vector<1x1x128xf32>
    %574 = vector.broadcast %573 : vector<1x1x128xf32> to vector<2x64x128xf32>
    %575 = arith.mulf %569, %574 : vector<2x64x128xf32>
    %576 = vector.shape_cast %550 : vector<1x128xf32> to vector<1x1x128xf32>
    %577 = vector.broadcast %576 : vector<1x1x128xf32> to vector<2x64x128xf32>
    %578 = arith.mulf %575, %577 : vector<2x64x128xf32>
    %579 = vector.shape_cast %552 : vector<1x128xf32> to vector<1x1x128xf32>
    %580 = vector.broadcast %579 : vector<1x1x128xf32> to vector<2x64x128xf32>
    %581 = arith.addf %578, %580 : vector<2x64x128xf32>
    %582 = arith.addf %581, %455 : vector<2x64x128xf32>
    %cst_232 = arith.constant 0.000000e+00 : f32
    %583 = vector.broadcast %cst_232 : f32 to vector<2x64x128xf32>
    %584 = arith.maximumf %582, %583 : vector<2x64x128xf32>
    %c0_233 = arith.constant 0 : index
    %c0_234 = arith.constant 0 : index
    %585 = vector.load %arg14[%c0_233, %c0_234] : memref<1x128xf32, #tpu.memory_space<vmem>>, vector<1x128xf32>
    %586 = vector.shape_cast %585 : vector<1x128xf32> to vector<1x1x128xf32>
    %587 = vector.broadcast %586 : vector<1x1x128xf32> to vector<2x64x128xf32>
    %588 = arith.mulf %584, %587 : vector<2x64x128xf32>
    %cst_235 = arith.constant dense<0.000000e+00> : vector<2x64xf32>
    %589 = vector.multi_reduction <add>, %588, %cst_235 [2] : vector<2x64x128xf32> to vector<2x64xf32>
    %c0_236 = arith.constant 0 : index
    %c0_237 = arith.constant 0 : index
    %590 = vector.load %arg15[%c0_236, %c0_237] : memref<1x1xf32, #tpu.memory_space<vmem>>, vector<1x1xf32>
    %591 = vector.broadcast %590 : vector<1x1xf32> to vector<2x64xf32>
    %592 = arith.addf %589, %591 : vector<2x64xf32>
    %c0_238 = arith.constant 0 : index
    %c0_239 = arith.constant 0 : index
    %593 = vector.load %arg16[%c0_238, %c0_239] : memref<2x64xf32, #tpu.memory_space<vmem>>, vector<2x64xf32>
    tpu.vector_store %arg16[%c0_238, %c0_239], %592 {strides = array<i32>} : memref<2x64xf32, #tpu.memory_space<vmem>>, vector<2x64xf32>,
    return
  }
}

</mosaic_0001>

<llo_original>
// kernel: _lambda_.2
$region0: #{_lambda_.2}
  #allocation0 [shape = 'u32[]', space=smem, size = 0x4, offset = 0x4, fixed_abs, tag = 'smem constant byte address 0x4 - core index']
  #allocation1 [shape = 'u32[144,128]{1,0:T(1,128)}', space=vmem, size = 0x12000, scoped, tag = 'internal scratch']
  %s0 = inlined_call_operand.hbm [shape: f32[2,64,128], index: 0, kind: input, shape index: {}]
  %s1 = inlined_call_operand.vmem [shape: f32[2,64,1], index: 1, kind: output, shape index: {0}]
  %s2 = inlined_call_operand.vmem [shape: f32[2,64,64], index: 2, kind: output, shape index: {1}]
  %3 = xla_tuple %s1, %s2
  %s4 = sld [smem:[#allocation0]]
  $region49: #{_lambda_.2} parent=0
    _
  %s6 = ssub.s32 1, %s4
  %s7 = scalar_select 0, %s6, %s4
  $region1: #{_lambda_.2} parent=0
    #allocation2 [shape = 'u8[65536]{0}', space=vmem, size = 0x10000, scoped, tag = 'input window, operand 0']
    #allocation3 [shape = 's32[2]{0}', space=sflag, size = 0x8, scoped, tag = 'scoped memory for _lambda_.2']
    %8 = vsyncpa [#allocation3], 0
    %s9 = scalar_lea.sflag [#allocation3], 1
    %10 = vsyncpa %s9, 0
    loop: start=0, step=1, limit=4
    $region2: #{_lambda_.2} parent=1 // loop_pre_header
      _
    $region3: #{_lambda_.2} parent=1 // loop_header
      %s12 = sphi 0, %s16
      %p13 = scmp.ge.s32.totalorder %s12, 4
      %s22 = sphi 0, %s24
      %s25 = sphi 0, %s22
      %s26 = sphi 0, %s25
      %s42 = sphi 0, %s26
      %s48 = sphi 0, %s50
      %s51 = sphi 0, %s48
      %s52 = sphi 0, %s51
      %s68 = sphi 0, %s52
      %s74 = sphi 0, %s76
      %s77 = sphi 0, %s74
      %s78 = sphi 0, %s77
      %s94 = sphi 0, %s78
    $region4: #{_lambda_.2} parent=1 // loop_header_branch
      %15 = sbr.rel (%p13) target = $region8
    $region5: #{_lambda_.2} parent=1 // loop_body
      %s17 = ssub.s32 %s12, 1
      %s18 = ssub.s32 %s12, 2
      %s19 = sadd.s32 %s12, 1
      %s20 = ssub.s32 %s12, %s19
      %p21 = scmp.eq.s32.totalorder %s20, 0
      %s23 = sadd.s32 %s22, 1
      %s24 = scalar_select %p21, %s22, %s23
      %p27 = pneg %p21
      %p28 = scmp.eq.s32.totalorder %s12, 1
      %p29 = por %p27, %p28
      %p30 = scmp.ne.s32.totalorder %s22, %s25
      %p31 = scmp.eq.s32.totalorder %s12, 0
      %p32 = por %p30, %p31
      %p33 = scmp.ne.s32.totalorder %s22, %s25
      %p34 = scmp.eq.s32.totalorder %s17, 1
      %p35 = por %p33, %p34
      %p36 = scmp.ne.s32.totalorder %s25, %s26
      %p37 = scmp.eq.s32.totalorder %s17, 0
      %p38 = por %p36, %p37
      %p39 = scmp.ne.s32.totalorder %s25, %s26
      %p40 = scmp.eq.s32.totalorder %s18, 1
      %p41 = por %p39, %p40
      %p43 = scmp.ne.s32.totalorder %s26, %s42
      %p44 = scmp.eq.s32.totalorder %s18, 0
      %p45 = por %p43, %p44
      %s46 = ssub.s32 %s12, %s19
      %p47 = scmp.eq.s32.totalorder %s46, 0
      %s49 = sadd.s32 %s48, 1
      %s50 = scalar_select %p47, %s48, %s49
      %p53 = pneg %p47
      %p54 = scmp.eq.s32.totalorder %s12, 1
      %p55 = por %p53, %p54
      %p56 = scmp.ne.s32.totalorder %s48, %s51
      %p57 = scmp.eq.s32.totalorder %s12, 0
      %p58 = por %p56, %p57
      %p59 = scmp.ne.s32.totalorder %s48, %s51
      %p60 = scmp.eq.s32.totalorder %s17, 1
      %p61 = por %p59, %p60
      %p62 = scmp.ne.s32.totalorder %s51, %s52
      %p63 = scmp.eq.s32.totalorder %s17, 0
      %p64 = por %p62, %p63
      %p65 = scmp.ne.s32.totalorder %s51, %s52
      %p66 = scmp.eq.s32.totalorder %s18, 1
      %p67 = por %p65, %p66
      %p69 = scmp.ne.s32.totalorder %s52, %s68
      %p70 = scmp.eq.s32.totalorder %s18, 0
      %p71 = por %p69, %p70
      %s72 = ssub.s32 %s12, %s19
      %p73 = scmp.eq.s32.totalorder %s72, 0
      %s75 = sadd.s32 %s74, 1
      %s76 = scalar_select %p73, %s74, %s75
      %p79 = pneg %p73
      %p80 = scmp.eq.s32.totalorder %s12, 1
      %p81 = por %p79, %p80
      %p82 = scmp.ne.s32.totalorder %s74, %s77
      %p83 = scmp.eq.s32.totalorder %s12, 0
      %p84 = por %p82, %p83
      %p85 = scmp.ne.s32.totalorder %s74, %s77
      %p86 = scmp.eq.s32.totalorder %s17, 1
      %p87 = por %p85, %p86
      %p88 = scmp.ne.s32.totalorder %s77, %s78
      %p89 = scmp.eq.s32.totalorder %s17, 0
      %p90 = por %p88, %p89
      %p91 = scmp.ne.s32.totalorder %s77, %s78
      %p92 = scmp.eq.s32.totalorder %s18, 1
      %p93 = por %p91, %p92
      %p95 = scmp.ne.s32.totalorder %s78, %s94
      %p96 = scmp.eq.s32.totalorder %s18, 0
      %p97 = por %p95, %p96
      %p98 = scmp.le.s32.totalorder 1, %s12
      %p99 = scmp.lt.s32.totalorder %s12, 3
      %p100 = pnand %p98, %p99
      %p101 = pneg %p100
      // Predicated region
      $region9: #{_lambda_.2} parent=5 // pred_check
        _
      $region10: #{_lambda_.2} parent=5 // pred_check_branch
        %103 = sbr.rel (%p100) target = $region12
      $region11: #{_lambda_.2} parent=5 // pred_region
        %s104 = ssub.s32 %s12, 1
      $region12: #{_lambda_.2} parent=5 // pred_fallthru
        _
      %p105 = scmp.lt.s32.totalorder %s12, 2
      // Predicated region
      $region13: #{_lambda_.2} parent=5 // pred_check
        %p106 = pneg %p105
      $region14: #{_lambda_.2} parent=5 // pred_check_branch
        %108 = sbr.rel (%p106) target = $region16
      $region15: #{_lambda_.2} parent=5 // pred_region
        // Predicated region
        $region17: #{_lambda_.2} parent=15 // pred_check
          %p109 = pneg %p32
        $region18: #{_lambda_.2} parent=15 // pred_check_branch
          %111 = sbr.rel (%p109) target = $region20
        $region19: #{_lambda_.2} parent=15 // pred_region
          %s112 = sand.u32 %s22, 1
          %s113 = scalar_lea.sflag [#allocation3], %s112
          %s114 = sand.u32 %s22, 1
          %s115 = smul.addr %s114, 64
          %s116 = scalar_lea.vmem [#allocation2], %s115
          %s118 = ssub.s32 1024, 1024
          %119 = vsyncadd %s113, %s118
          %s120 = smul.addr %s12, 8
          %s121 = smul.addr %s120, 128
          %s122 = scalar_lea.hbm %s0, %s121
          %s123 = sshll.u32 %s116, 4
          %s124 = int_to_ptr.vmem [resolvable:$true] %s123
          %129 = dma.hbm_to_vmem [thread:$0]  %s122, 1024, %s124, %s113, 128, 128, 8
        $region20: #{_lambda_.2} parent=15 // pred_fallthru
          _
      $region16: #{_lambda_.2} parent=5 // pred_fallthru
        _
      %p130 = scmp.le.s32.totalorder 1, %s12
      %p131 = scmp.lt.s32.totalorder %s12, 3
      %p132 = pnand %p130, %p131
      %p133 = pneg %p132
      // Predicated region
      $region21: #{_lambda_.2} parent=5 // pred_check
        _
      $region22: #{_lambda_.2} parent=5 // pred_check_branch
        %135 = sbr.rel (%p132) target = $region24
      $region23: #{_lambda_.2} parent=5 // pred_region
        %s136 = ssub.s32 %s12, 1
        %s137 = sand.u32 %s25, 1
        %s138 = scalar_lea.sflag [#allocation3], %s137
        %s139 = sand.u32 %s25, 1
        %s140 = smul.addr %s139, 64
        %s141 = scalar_lea.vmem [#allocation2], %s140
        // Predicated region
        $region25: #{_lambda_.2} parent=23 // pred_check
          %p142 = pneg %p38
        $region26: #{_lambda_.2} parent=23 // pred_check_branch
          %144 = sbr.rel (%p142) target = $region28
        $region27: #{_lambda_.2} parent=23 // pred_region
          %145 = dma.done %s138, 1024
        $region28: #{_lambda_.2} parent=23 // pred_fallthru
          _
        %s146 = sand.u32 %s25, 1
        %s147 = scalar_lea.sflag [#allocation3], %s146
        %s148 = sand.u32 %s25, 1
        %s149 = smul.addr %s148, 64
        %s150 = scalar_lea.vmem [#allocation2], %s149
        %p151 = pneg %p38
        %p152 = pneg %p35
        %p153 = pneg %p64
        %p154 = pneg %p61
        %p155 = scmp.lt.s32.totalorder %s17, 1
        %s156 = scalar_select %p155, %s17, 1
        %s157 = smul.addr %s156, 8
        %s158 = smul.addr %s157, 8
        %s159 = scalar_lea.vmem %s1, %s158
        %p160 = pneg %p90
        %p161 = pneg %p87
        %p162 = scmp.lt.s32.totalorder %s17, 1
        %s163 = scalar_select %p162, %s17, 1
        %s164 = smul.addr %s163, 8
        %s165 = smul.addr %s164, 8
        %s166 = scalar_lea.vmem %s2, %s165
        %p167 = scmp.lt.s32.totalorder %s17, 1
        %s168 = scalar_select %p167, %s17, 1
        %s169 = smul.addr %s168, 8
        %s170 = smul.addr %s169, 8
        %s171 = scalar_lea.vmem %s1, %s170
        %p172 = scmp.lt.s32.totalorder %s17, 1
        %s173 = scalar_select %p172, %s17, 1
        %s174 = smul.addr %s173, 8
        %s175 = smul.addr %s174, 8
        %s176 = scalar_lea.vmem %s2, %s175
        %v177 = vld [vmem:[%s141] sm:$0xff]
        %v178 = vld [vmem:[%s141 + $0x8] sm:$0xff]
        %v179 = vld [vmem:[%s141 + $0x10] sm:$0xff]
        %v180 = vld [vmem:[%s141 + $0x18] sm:$0xff]
        %v181 = vld [vmem:[%s141 + $0x20] sm:$0xff]
        %v182 = vld [vmem:[%s141 + $0x28] sm:$0xff]
        %v183 = vld [vmem:[%s141 + $0x30] sm:$0xff]
        %v184 = vld [vmem:[%s141 + $0x38] sm:$0xff]
        %v185 = vmul.f32 %v177, %v177
        %v186 = vmul.f32 %v178, %v178
        %v187 = vmul.f32 %v179, %v179
        %v188 = vmul.f32 %v180, %v180
        %v189 = vmul.f32 %v181, %v181
        %v190 = vmul.f32 %v182, %v182
        %v191 = vmul.f32 %v183, %v183
        %v192 = vmul.f32 %v184, %v184
        %193 = vadd.xlane.f32.xlu0 %v185
        %v194 = vpop.xlane.xlu0 %193
        %195 = vadd.xlane.f32.xlu0 %v186
        %v196 = vpop.xlane.xlu0 %195
        %197 = vadd.xlane.f32.xlu0 %v187
        %v198 = vpop.xlane.xlu0 %197
        %199 = vadd.xlane.f32.xlu0 %v188
        %v200 = vpop.xlane.xlu0 %199
        %201 = vadd.xlane.f32.xlu0 %v189
        %v202 = vpop.xlane.xlu0 %201
        %203 = vadd.xlane.f32.xlu0 %v190
        %v204 = vpop.xlane.xlu0 %203
        %205 = vadd.xlane.f32.xlu0 %v191
        %v206 = vpop.xlane.xlu0 %205
        %207 = vadd.xlane.f32.xlu0 %v192
        %v208 = vpop.xlane.xlu0 %207
        %v209 = vrsqrt.pop %v194
        %v210 = vmul.f32 %v194, %v209
        %vm211 = vcmp.eq.f32.partialorder %v194, inf
        %v212 = vsel %vm211, %v194, %v210
        %vm213 = vcmp.eq.f32.partialorder %v194, 0.0
        %v214 = vand.u32 %v194, 2147483648
        %v215 = vsel %vm213, %v214, %v212
        %v216 = vrsqrt.pop %v196
        %v217 = vmul.f32 %v196, %v216
        %vm218 = vcmp.eq.f32.partialorder %v196, inf
        %v219 = vsel %vm218, %v196, %v217
        %vm220 = vcmp.eq.f32.partialorder %v196, 0.0
        %v221 = vand.u32 %v196, 2147483648
        %v222 = vsel %vm220, %v221, %v219
        %v223 = vrsqrt.pop %v198
        %v224 = vmul.f32 %v198, %v223
        %vm225 = vcmp.eq.f32.partialorder %v198, inf
        %v226 = vsel %vm225, %v198, %v224
        %vm227 = vcmp.eq.f32.partialorder %v198, 0.0
        %v228 = vand.u32 %v198, 2147483648
        %v229 = vsel %vm227, %v228, %v226
        %v230 = vrsqrt.pop %v200
        %v231 = vmul.f32 %v200, %v230
        %vm232 = vcmp.eq.f32.partialorder %v200, inf
        %v233 = vsel %vm232, %v200, %v231
        %vm234 = vcmp.eq.f32.partialorder %v200, 0.0
        %v235 = vand.u32 %v200, 2147483648
        %v236 = vsel %vm234, %v235, %v233
        %v237 = vrsqrt.pop %v202
        %v238 = vmul.f32 %v202, %v237
        %vm239 = vcmp.eq.f32.partialorder %v202, inf
        %v240 = vsel %vm239, %v202, %v238
        %vm241 = vcmp.eq.f32.partialorder %v202, 0.0
        %v242 = vand.u32 %v202, 2147483648
        %v243 = vsel %vm241, %v242, %v240
        %v244 = vrsqrt.pop %v204
        %v245 = vmul.f32 %v204, %v244
        %vm246 = vcmp.eq.f32.partialorder %v204, inf
        %v247 = vsel %vm246, %v204, %v245
        %vm248 = vcmp.eq.f32.partialorder %v204, 0.0
        %v249 = vand.u32 %v204, 2147483648
        %v250 = vsel %vm248, %v249, %v247
        %v251 = vrsqrt.pop %v206
        %v252 = vmul.f32 %v206, %v251
        %vm253 = vcmp.eq.f32.partialorder %v206, inf
        %v254 = vsel %vm253, %v206, %v252
        %vm255 = vcmp.eq.f32.partialorder %v206, 0.0
        %v256 = vand.u32 %v206, 2147483648
        %v257 = vsel %vm255, %v256, %v254
        %v258 = vrsqrt.pop %v208
        %v259 = vmul.f32 %v208, %v258
        %vm260 = vcmp.eq.f32.partialorder %v208, inf
        %v261 = vsel %vm260, %v208, %v259
        %vm262 = vcmp.eq.f32.partialorder %v208, 0.0
        %v263 = vand.u32 %v208, 2147483648
        %v264 = vsel %vm262, %v263, %v261
        %v265 = vadd.f32 %v215, 1e-05
        %v266 = vadd.f32 %v222, 1e-05
        %v267 = vadd.f32 %v229, 1e-05
        %v268 = vadd.f32 %v236, 1e-05
        %v269 = vadd.f32 %v243, 1e-05
        %v270 = vadd.f32 %v250, 1e-05
        %v271 = vadd.f32 %v257, 1e-05
        %v272 = vadd.f32 %v264, 1e-05
        %v273 = vrcp.pop %v265
        %v274 = vmul.f32 %v177, %v273
        %v275 = vrcp.pop %v266
        %v276 = vmul.f32 %v178, %v275
        %v277 = vrcp.pop %v267
        %v278 = vmul.f32 %v179, %v277
        %v279 = vrcp.pop %v268
        %v280 = vmul.f32 %v180, %v279
        %v281 = vrcp.pop %v269
        %v282 = vmul.f32 %v181, %v281
        %v283 = vrcp.pop %v270
        %v284 = vmul.f32 %v182, %v283
        %v285 = vrcp.pop %v271
        %v286 = vmul.f32 %v183, %v285
        %v287 = vrcp.pop %v272
        %v288 = vmul.f32 %v184, %v287
        %289 = vmatprep.subr.mxu0 0.0
        %290 = vmatpush1.xpose.msra.mxu0 0.0
        %291 = vmatprep.subr.mxu0 0.0
        %292 = vmatpush1.xpose.msra.mxu0 0.0
        %293 = vmatprep.subr.mxu0 0.0
        %294 = vmatpush1.xpose.msra.mxu0 0.0
        %295 = vmatprep.subr.mxu0 0.0
        %296 = vmatpush1.xpose.msra.mxu0 0.0
        %297 = vmatprep.subr.mxu0 0.0
        %298 = vmatpush1.xpose.msra.mxu0 0.0
        %299 = vmatprep.subr.mxu0 0.0
        %300 = vmatpush1.xpose.msra.mxu0 0.0
        %301 = vmatprep.subr.mxu0 0.0
        %302 = vmatpush1.xpose.msra.mxu0 0.0
        %303 = vmatprep.subr.mxu0 0.0
        %304 = vmatpush1.xpose.msra.mxu0 0.0
        %305 = vmatprep.subr.mxu0 0.0
        %306 = vmatpush1.xpose.msra.mxu0 %v288
        %307 = vmatprep.subr.mxu0 0.0
        %308 = vmatpush1.xpose.msra.mxu0 %v286
        %309 = vmatprep.subr.mxu0 0.0
        %310 = vmatpush1.xpose.msra.mxu0 %v284
        %311 = vmatprep.subr.mxu0 0.0
        %312 = vmatpush1.xpose.msra.mxu0 %v282
        %313 = vmatprep.subr.mxu0 0.0
        %314 = vmatpush1.xpose.msra.mxu0 %v280
        %315 = vmatprep.subr.mxu0 0.0
        %316 = vmatpush1.xpose.msra.mxu0 %v278
        %317 = vmatprep.subr.mxu0 0.0
        %318 = vmatpush1.xpose.msra.mxu0 %v276
        %319 = vmatprep.subr.mxu0 0.0
        %320 = vmatpush1.xpose.msra.mxu0 %v274
        %321 = vmatprep.subr.mxu0 0.0
        %322 = vmatpush2.xpose.msra.mxu0 0.0
        %323 = vmatprep.subr.mxu0 0.0
        %324 = vmatpush2.xpose.msra.mxu0 0.0
        %325 = vmatprep.subr.mxu0 0.0
        %326 = vmatpush2.xpose.msra.mxu0 0.0
        %327 = vmatprep.subr.mxu0 0.0
        %328 = vmatpush2.xpose.msra.mxu0 0.0
        %329 = vmatprep.subr.mxu0 0.0
        %330 = vmatpush2.xpose.msra.mxu0 0.0
        %331 = vmatprep.subr.mxu0 0.0
        %332 = vmatpush2.xpose.msra.mxu0 0.0
        %333 = vmatprep.subr.mxu0 0.0
        %334 = vmatpush2.xpose.msra.mxu0 0.0
        %335 = vmatprep.subr.mxu0 0.0
        %336 = vmatpush2.xpose.msra.mxu0 0.0
        %337 = vmatprep.subr.mxu0 0.0
        %338 = vmatpush2.xpose.msra.mxu0 0.0
        %339 = vmatprep.subr.mxu0 0.0
        %340 = vmatpush2.xpose.msra.mxu0 0.0
        %341 = vmatprep.subr.mxu0 0.0
        %342 = vmatpush2.xpose.msra.mxu0 0.0
        %343 = vmatprep.subr.mxu0 0.0
        %344 = vmatpush2.xpose.msra.mxu0 0.0
        %345 = vmatprep.subr.mxu0 0.0
        %346 = vmatpush2.xpose.msra.mxu0 0.0
        %347 = vmatprep.subr.mxu0 0.0
        %348 = vmatpush2.xpose.msra.mxu0 0.0
        %349 = vmatprep.subr.mxu0 0.0
        %350 = vmatpush2.xpose.msra.mxu0 0.0
        %351 = vmatprep.subr.mxu0 0.0
        %352 = vmatpush2.xpose.msra.mxu0 0.0
        %353 = vmatprep.mubr.f32.mxu0 0.0
        %354 = vmatmul.mubr.f32.gmra.mxu0 %v274
        %v355 = vpop.f32.mrf.mxu0
        %v356 = vadd.f32 0.0, %v355
        %v357 = vpop.f32.mrf.mxu0
        %358 = vmatprep.mubr.f32.mxu0 0.0
        %359 = vmatmul.mubr.f32.gmra.mxu0 %v276
        %v360 = vpop.f32.mrf.mxu0
        %v361 = vadd.f32 0.0, %v360
        %v362 = vpop.f32.mrf.mxu0
        %363 = vmatprep.mubr.f32.mxu0 0.0
        %364 = vmatmul.mubr.f32.gmra.mxu0 %v278
        %v365 = vpop.f32.mrf.mxu0
        %v366 = vadd.f32 0.0, %v365
        %v367 = vpop.f32.mrf.mxu0
        %368 = vmatprep.mubr.f32.mxu0 0.0
        %369 = vmatmul.mubr.f32.gmra.mxu0 %v280
        %v370 = vpop.f32.mrf.mxu0
        %v371 = vadd.f32 0.0, %v370
        %v372 = vpop.f32.mrf.mxu0
        %373 = vmatprep.mubr.f32.mxu0 0.0
        %374 = vmatmul.mubr.f32.gmra.mxu0 %v282
        %v375 = vpop.f32.mrf.mxu0
        %v376 = vadd.f32 0.0, %v375
        %v377 = vpop.f32.mrf.mxu0
        %378 = vmatprep.mubr.f32.mxu0 0.0
        %379 = vmatmul.mubr.f32.gmra.mxu0 %v284
        %v380 = vpop.f32.mrf.mxu0
        %v381 = vadd.f32 0.0, %v380
        %v382 = vpop.f32.mrf.mxu0
        %383 = vmatprep.mubr.f32.mxu0 0.0
        %384 = vmatmul.mubr.f32.gmra.mxu0 %v286
        %v385 = vpop.f32.mrf.mxu0
        %v386 = vadd.f32 0.0, %v385
        %v387 = vpop.f32.mrf.mxu0
        %388 = vmatprep.mubr.f32.mxu0 0.0
        %389 = vmatmul.mubr.f32.gmra.mxu0 %v288
        %v390 = vpop.f32.mrf.mxu0
        %v391 = vadd.f32 0.0, %v390
        %v392 = vpop.f32.mrf.mxu0
        %393 = vdwg.mxu0
        %vm394 = vcmask 523264
        %v395 = vsel %vm394, %v356, 0.0
        %396 = vadd.xlane.f32.xlu0 %v395
        %v397 = vpop.xlane.xlu0 %396
        %v398 = vsel %vm394, %v361, 0.0
        %399 = vadd.xlane.f32.xlu0 %v398
        %v400 = vpop.xlane.xlu0 %399
        %v401 = vsel %vm394, %v366, 0.0
        %402 = vadd.xlane.f32.xlu0 %v401
        %v403 = vpop.xlane.xlu0 %402
        %v404 = vsel %vm394, %v371, 0.0
        %405 = vadd.xlane.f32.xlu0 %v404
        %v406 = vpop.xlane.xlu0 %405
        %v407 = vsel %vm394, %v376, 0.0
        %408 = vadd.xlane.f32.xlu0 %v407
        %v409 = vpop.xlane.xlu0 %408
        %v410 = vsel %vm394, %v381, 0.0
        %411 = vadd.xlane.f32.xlu0 %v410
        %v412 = vpop.xlane.xlu0 %411
        %v413 = vsel %vm394, %v386, 0.0
        %414 = vadd.xlane.f32.xlu0 %v413
        %v415 = vpop.xlane.xlu0 %414
        %v416 = vsel %vm394, %v391, 0.0
        %417 = vadd.xlane.f32.xlu0 %v416
        %v418 = vpop.xlane.xlu0 %417
        %v419 = vsub.f32 %v397, 1.0
        %v420 = vsub.f32 %v400, 1.0
        %v421 = vsub.f32 %v403, 1.0
        %v422 = vsub.f32 %v406, 1.0
        %v423 = vsub.f32 %v409, 1.0
        %v424 = vsub.f32 %v412, 1.0
        %v425 = vsub.f32 %v415, 1.0
        %v426 = vsub.f32 %v418, 1.0
        %v427 = vrcp.pop 64.0
        %v428 = vmul.f32 %v419, %v427
        %v429 = vmul.f32 %v420, %v427
        %v430 = vmul.f32 %v421, %v427
        %v431 = vmul.f32 %v422, %v427
        %v432 = vmul.f32 %v423, %v427
        %v433 = vmul.f32 %v424, %v427
        %v434 = vmul.f32 %v425, %v427
        %v435 = vmul.f32 %v426, %v427
        %v436 = vtanh.pop %v428
        %v437 = vtanh.pop %v429
        %v438 = vtanh.pop %v430
        %v439 = vtanh.pop %v431
        %v440 = vtanh.pop %v432
        %v441 = vtanh.pop %v433
        %v442 = vtanh.pop %v434
        %v443 = vtanh.pop %v435
        %v444 = vmax.f32 %v436, 0.0
        %v445 = vmax.f32 %v437, 0.0
        %v446 = vmax.f32 %v438, 0.0
        %v447 = vmax.f32 %v439, 0.0
        %v448 = vmax.f32 %v440, 0.0
        %v449 = vmax.f32 %v441, 0.0
        %v450 = vmax.f32 %v442, 0.0
        %v451 = vmax.f32 %v443, 0.0
        %v452 = vadd.f32 %v395, %v398
        %v453 = vadd.f32 %v452, %v401
        %v454 = vadd.f32 %v453, %v404
        %v455 = vadd.f32 %v454, %v407
        %v456 = vadd.f32 %v455, %v410
        %v457 = vadd.f32 %v456, %v413
        %v458 = vadd.f32 %v457, %v416
        %v459 = vrot.slane %v458, 4
        %v460 = vadd.f32 %v458, %v459
        %v461 = vrot.slane %v460, 2
        %v462 = vadd.f32 %v460, %v461
        %v463 = vrot.slane %v462, 1
        %v464 = vadd.f32 %v462, %v463
        %v465 = vsub.f32 %v464, 1.0
        %v466 = vmul.f32 %v465, %v427
        %v467 = vtanh.pop %v466
        %v468 = vmax.f32 %v467, 0.0
        %vm469 = vcmask 7168
        %470 = vst.msk [vmem:[%s171] sm:$0xff] %vm469, %v444
        %471 = vst.msk [vmem:[%s171 + $0x8] sm:$0xff] %vm469, %v445
        %472 = vst.msk [vmem:[%s171 + $0x10] sm:$0xff] %vm469, %v446
        %473 = vst.msk [vmem:[%s171 + $0x18] sm:$0xff] %vm469, %v447
        %474 = vst.msk [vmem:[%s171 + $0x20] sm:$0xff] %vm469, %v448
        %475 = vst.msk [vmem:[%s171 + $0x28] sm:$0xff] %vm469, %v449
        %476 = vst.msk [vmem:[%s171 + $0x30] sm:$0xff] %vm469, %v450
        %477 = vst.msk [vmem:[%s171 + $0x38] sm:$0xff] %vm469, %v451
        %v478 = vmul.f32 %v444, %v468
        %v479 = vmul.f32 %v445, %v468
        %v480 = vmul.f32 %v446, %v468
        %v481 = vmul.f32 %v447, %v468
        %v482 = vmul.f32 %v448, %v468
        %v483 = vmul.f32 %v449, %v468
        %v484 = vmul.f32 %v450, %v468
        %v485 = vmul.f32 %v451, %v468
        %486 = vmatprep.subr.mxu0 0.0
        %487 = vmatpush1.xpose.msra.mxu0 0.0
        %488 = vmatprep.subr.mxu0 0.0
        %489 = vmatpush1.xpose.msra.mxu0 0.0
        %490 = vmatprep.subr.mxu0 0.0
        %491 = vmatpush1.xpose.msra.mxu0 0.0
        %492 = vmatprep.subr.mxu0 0.0
        %493 = vmatpush1.xpose.msra.mxu0 0.0
        %494 = vmatprep.subr.mxu0 0.0
        %495 = vmatpush1.xpose.msra.mxu0 0.0
        %496 = vmatprep.subr.mxu0 0.0
        %497 = vmatpush1.xpose.msra.mxu0 0.0
        %498 = vmatprep.subr.mxu0 0.0
        %499 = vmatpush1.xpose.msra.mxu0 0.0
        %500 = vmatprep.subr.mxu0 0.0
        %501 = vmatpush1.xpose.msra.mxu0 0.0
        %502 = vmatprep.subr.mxu0 0.0
        %503 = vmatpush1.xpose.msra.mxu0 %v184
        %504 = vmatprep.subr.mxu0 0.0
        %505 = vmatpush1.xpose.msra.mxu0 %v183
        %506 = vmatprep.subr.mxu0 0.0
        %507 = vmatpush1.xpose.msra.mxu0 %v182
        %508 = vmatprep.subr.mxu0 0.0
        %509 = vmatpush1.xpose.msra.mxu0 %v181
        %510 = vmatprep.subr.mxu0 0.0
        %511 = vmatpush1.xpose.msra.mxu0 %v180
        %512 = vmatprep.subr.mxu0 0.0
        %513 = vmatpush1.xpose.msra.mxu0 %v179
        %514 = vmatprep.subr.mxu0 0.0
        %515 = vmatpush1.xpose.msra.mxu0 %v178
        %516 = vmatprep.subr.mxu0 0.0
        %517 = vmatpush1.xpose.msra.mxu0 %v177
        %518 = vmatprep.subr.mxu0 0.0
        %519 = vmatpush2.xpose.msra.mxu0 0.0
        %520 = vmatprep.subr.mxu0 0.0
        %521 = vmatpush2.xpose.msra.mxu0 0.0
        %522 = vmatprep.subr.mxu0 0.0
        %523 = vmatpush2.xpose.msra.mxu0 0.0
        %524 = vmatprep.subr.mxu0 0.0
        %525 = vmatpush2.xpose.msra.mxu0 0.0
        %526 = vmatprep.subr.mxu0 0.0
        %527 = vmatpush2.xpose.msra.mxu0 0.0
        %528 = vmatprep.subr.mxu0 0.0
        %529 = vmatpush2.xpose.msra.mxu0 0.0
        %530 = vmatprep.subr.mxu0 0.0
        %531 = vmatpush2.xpose.msra.mxu0 0.0
        %532 = vmatprep.subr.mxu0 0.0
        %533 = vmatpush2.xpose.msra.mxu0 0.0
        %534 = vmatprep.subr.mxu0 0.0
        %535 = vmatpush2.xpose.msra.mxu0 0.0
        %536 = vmatprep.subr.mxu0 0.0
        %537 = vmatpush2.xpose.msra.mxu0 0.0
        %538 = vmatprep.subr.mxu0 0.0
        %539 = vmatpush2.xpose.msra.mxu0 0.0
        %540 = vmatprep.subr.mxu0 0.0
        %541 = vmatpush2.xpose.msra.mxu0 0.0
        %542 = vmatprep.subr.mxu0 0.0
        %543 = vmatpush2.xpose.msra.mxu0 0.0
        %544 = vmatprep.subr.mxu0 0.0
        %545 = vmatpush2.xpose.msra.mxu0 0.0
        %546 = vmatprep.subr.mxu0 0.0
        %547 = vmatpush2.xpose.msra.mxu0 0.0
        %548 = vmatprep.subr.mxu0 0.0
        %549 = vmatpush2.xpose.msra.mxu0 0.0
        %550 = vmatprep.mubr.f32.mxu0 0.0
        %551 = vmatmul.mubr.f32.gmra.mxu0 %v177
        %v552 = vpop.f32.mrf.mxu0
        %v553 = vadd.f32 %v478, %v552
        %v554 = vpop.f32.mrf.mxu0
        %555 = vmatprep.mubr.f32.mxu0 0.0
        %556 = vmatmul.mubr.f32.gmra.mxu0 %v178
        %v557 = vpop.f32.mrf.mxu0
        %v558 = vadd.f32 %v479, %v557
        %v559 = vpop.f32.mrf.mxu0
        %560 = vmatprep.mubr.f32.mxu0 0.0
        %561 = vmatmul.mubr.f32.gmra.mxu0 %v179
        %v562 = vpop.f32.mrf.mxu0
        %v563 = vadd.f32 %v480, %v562
        %v564 = vpop.f32.mrf.mxu0
        %565 = vmatprep.mubr.f32.mxu0 0.0
        %566 = vmatmul.mubr.f32.gmra.mxu0 %v180
        %v567 = vpop.f32.mrf.mxu0
        %v568 = vadd.f32 %v481, %v567
        %v569 = vpop.f32.mrf.mxu0
        %570 = vmatprep.mubr.f32.mxu0 0.0
        %571 = vmatmul.mubr.f32.gmra.mxu0 %v181
        %v572 = vpop.f32.mrf.mxu0
        %v573 = vadd.f32 %v482, %v572
        %v574 = vpop.f32.mrf.mxu0
        %575 = vmatprep.mubr.f32.mxu0 0.0
        %576 = vmatmul.mubr.f32.gmra.mxu0 %v182
        %v577 = vpop.f32.mrf.mxu0
        %v578 = vadd.f32 %v483, %v577
        %v579 = vpop.f32.mrf.mxu0
        %580 = vmatprep.mubr.f32.mxu0 0.0
        %581 = vmatmul.mubr.f32.gmra.mxu0 %v183
        %v582 = vpop.f32.mrf.mxu0
        %v583 = vadd.f32 %v484, %v582
        %v584 = vpop.f32.mrf.mxu0
        %585 = vmatprep.mubr.f32.mxu0 0.0
        %586 = vmatmul.mubr.f32.gmra.mxu0 %v184
        %v587 = vpop.f32.mrf.mxu0
        %v588 = vadd.f32 %v485, %v587
        %v589 = vpop.f32.mrf.mxu0
        %590 = vdwg.mxu0
        %v591 = vmul.f32 %v444, %v444
        %v592 = vmul.f32 %v445, %v445
        %v593 = vmul.f32 %v446, %v446
        %v594 = vmul.f32 %v447, %v447
        %v595 = vmul.f32 %v448, %v448
        %v596 = vmul.f32 %v449, %v449
        %v597 = vmul.f32 %v450, %v450
        %v598 = vmul.f32 %v451, %v451
        %v599 = vadd.f32 %v194, %v591
        %v600 = vadd.f32 %v196, %v592
        %v601 = vadd.f32 %v198, %v593
        %v602 = vadd.f32 %v200, %v594
        %v603 = vadd.f32 %v202, %v595
        %v604 = vadd.f32 %v204, %v596
        %v605 = vadd.f32 %v206, %v597
        %v606 = vadd.f32 %v208, %v598
        %v607 = vlaneseq
        %v608 = vshrl.u32 %v607, 7
        %v609 = vadd.s32 %v608, 8
        %v610 = vadd.s32 %v608, 16
        %v611 = vadd.s32 %v608, 24
        %v612 = vadd.s32 %v608, 32
        %v613 = vadd.s32 %v608, 40
        %v614 = vadd.s32 %v608, 48
        %v615 = vadd.s32 %v608, 56
        %v616 = vlaneseq
        %v617 = vand.u32 %v616, 127
        %vm618 = vcmp.eq.s32.totalorder %v608, %v617
        %vm619 = vcmp.eq.s32.totalorder %v609, %v617
        %vm620 = vcmp.eq.s32.totalorder %v610, %v617
        %vm621 = vcmp.eq.s32.totalorder %v611, %v617
        %vm622 = vcmp.eq.s32.totalorder %v612, %v617
        %vm623 = vcmp.eq.s32.totalorder %v613, %v617
        %vm624 = vcmp.eq.s32.totalorder %v614, %v617
        %vm625 = vcmp.eq.s32.totalorder %v615, %v617
        %v626 = vsel %vm618, %v553, 0.0
        %v627 = vsel %vm619, %v558, 0.0
        %v628 = vsel %vm620, %v563, 0.0
        %v629 = vsel %vm621, %v568, 0.0
        %v630 = vsel %vm622, %v573, 0.0
        %v631 = vsel %vm623, %v578, 0.0
        %v632 = vsel %vm624, %v583, 0.0
        %v633 = vsel %vm625, %v588, 0.0
        %v634 = vsel %vm394, %v626, 0.0
        %v635 = vsel %vm394, %v627, 0.0
        %v636 = vadd.f32 %v634, %v635
        %v637 = vsel %vm394, %v628, 0.0
        %v638 = vadd.f32 %v636, %v637
        %v639 = vsel %vm394, %v629, 0.0
        %v640 = vadd.f32 %v638, %v639
        %v641 = vsel %vm394, %v630, 0.0
        %v642 = vadd.f32 %v640, %v641
        %v643 = vsel %vm394, %v631, 0.0
        %v644 = vadd.f32 %v642, %v643
        %v645 = vsel %vm394, %v632, 0.0
        %v646 = vadd.f32 %v644, %v645
        %v647 = vsel %vm394, %v633, 0.0
        %v648 = vadd.f32 %v646, %v647
        %v649 = vrot.slane %v648, 4
        %v650 = vadd.f32 %v648, %v649
        %v651 = vrot.slane %v650, 2
        %v652 = vadd.f32 %v650, %v651
        %v653 = vrot.slane %v652, 1
        %v654 = vadd.f32 %v652, %v653
        %v655 = vmul.f32 %v553, 2.0
        %v656 = vmul.f32 %v558, 2.0
        %v657 = vmul.f32 %v563, 2.0
        %v658 = vmul.f32 %v568, 2.0
        %v659 = vmul.f32 %v573, 2.0
        %v660 = vmul.f32 %v578, 2.0
        %v661 = vmul.f32 %v583, 2.0
        %v662 = vmul.f32 %v588, 2.0
        %v663 = vsub.f32 %v655, %v599
        %v664 = vsub.f32 %v656, %v600
        %v665 = vsub.f32 %v657, %v601
        %v666 = vsub.f32 %v658, %v602
        %v667 = vsub.f32 %v659, %v603
        %v668 = vsub.f32 %v660, %v604
        %v669 = vsub.f32 %v661, %v605
        %v670 = vsub.f32 %v662, %v606
        %v671 = vsub.f32 %v663, %v654
        %v672 = vsub.f32 %v664, %v654
        %v673 = vsub.f32 %v665, %v654
        %v674 = vsub.f32 %v666, %v654
        %v675 = vsub.f32 %v667, %v654
        %v676 = vsub.f32 %v668, %v654
        %v677 = vsub.f32 %v669, %v654
        %v678 = vsub.f32 %v670, %v654
        %679 = vst.msk [vmem:[%s176] sm:$0xff] %vm394, %v671
        %680 = vst.msk [vmem:[%s176 + $0x8] sm:$0xff] %vm394, %v672
        %681 = vst.msk [vmem:[%s176 + $0x10] sm:$0xff] %vm394, %v673
        %682 = vst.msk [vmem:[%s176 + $0x18] sm:$0xff] %vm394, %v674
        %683 = vst.msk [vmem:[%s176 + $0x20] sm:$0xff] %vm394, %v675
        %684 = vst.msk [vmem:[%s176 + $0x28] sm:$0xff] %vm394, %v676
        %685 = vst.msk [vmem:[%s176 + $0x30] sm:$0xff] %vm394, %v677
        %686 = vst.msk [vmem:[%s176 + $0x38] sm:$0xff] %vm394, %v678
        %p687 = scmp.lt.s32.totalorder %s17, 1
        %s688 = scalar_select %p687, %s17, 1
        %s689 = smul.addr %s688, 8
        %s690 = smul.addr %s689, 8
        %s691 = scalar_lea.vmem %s1, %s690
        %p692 = scmp.lt.s32.totalorder %s17, 1
        %s693 = scalar_select %p692, %s17, 1
        %s694 = smul.addr %s693, 8
        %s695 = smul.addr %s694, 8
        %s696 = scalar_lea.vmem %s2, %s695
        // Predicated region
        $region29: #{_lambda_.2} parent=23 // pred_check
          %p697 = pneg %p61
        $region30: #{_lambda_.2} parent=23 // pred_check_branch
          %699 = sbr.rel (%p697) target = $region32
        $region31: #{_lambda_.2} parent=23 // pred_region
          _
        $region32: #{_lambda_.2} parent=23 // pred_fallthru
          _
        // Predicated region
        $region33: #{_lambda_.2} parent=23 // pred_check
          %p700 = pneg %p87
        $region34: #{_lambda_.2} parent=23 // pred_check_branch
          %702 = sbr.rel (%p700) target = $region36
        $region35: #{_lambda_.2} parent=23 // pred_region
          _
        $region36: #{_lambda_.2} parent=23 // pred_fallthru
          _
      $region24: #{_lambda_.2} parent=5 // pred_fallthru
        _
      %p703 = scmp.le.s32.totalorder 2, %s12
      // Predicated region
      $region37: #{_lambda_.2} parent=5 // pred_check
        %p704 = pneg %p703
      $region38: #{_lambda_.2} parent=5 // pred_check_branch
        %706 = sbr.rel (%p704) target = $region40
      $region39: #{_lambda_.2} parent=5 // pred_region
        %s707 = ssub.s32 %s12, 2
        // Predicated region
        $region41: #{_lambda_.2} parent=39 // pred_check
          %p708 = pneg %p67
        $region42: #{_lambda_.2} parent=39 // pred_check_branch
          %710 = sbr.rel (%p708) target = $region44
        $region43: #{_lambda_.2} parent=39 // pred_region
          %p711 = scmp.lt.s32.totalorder %s18, 1
          %s712 = scalar_select %p711, %s18, 1
          %s713 = smul.addr %s712, 8
          %s714 = smul.addr %s713, 8
          %s715 = scalar_lea.vmem %s1, %s714
        $region44: #{_lambda_.2} parent=39 // pred_fallthru
          _
        // Predicated region
        $region45: #{_lambda_.2} parent=39 // pred_check
          %p716 = pneg %p93
        $region46: #{_lambda_.2} parent=39 // pred_check_branch
          %718 = sbr.rel (%p716) target = $region48
        $region47: #{_lambda_.2} parent=39 // pred_region
          %p719 = scmp.lt.s32.totalorder %s18, 1
          %s720 = scalar_select %p719, %s18, 1
          %s721 = smul.addr %s720, 8
          %s722 = smul.addr %s721, 8
          %s723 = scalar_lea.vmem %s2, %s722
        $region48: #{_lambda_.2} parent=39 // pred_fallthru
          _
      $region40: #{_lambda_.2} parent=5 // pred_fallthru
        _
    $region6: #{_lambda_.2} parent=1 // loop_footer
      %s16 = sadd.s32 1, %s12
    $region7: #{_lambda_.2} parent=1 // loop_footer_branch
      %11 = sbr.rel target = $region3
    $region8: #{_lambda_.2} parent=1 // loop_exit
      _
    %724 = vsyncpa [#allocation3], 1
    %s725 = scalar_lea.sflag [#allocation3], 1
    %726 = vsyncpa %s725, 1

// kernel: _lambda_.3
$region0: #{_lambda_.3}
  #allocation0 [shape = 'u32[]', space=smem, size = 0x4, offset = 0x4, fixed_abs, tag = 'smem constant byte address 0x4 - core index']
  #allocation1 [shape = 'u32[144,128]{1,0:T(1,128)}', space=vmem, size = 0x12000, scoped, tag = 'internal scratch']
  #allocation2 [shape = 'f32[1,1]{1,0:T(1,128)S(1)}', space=vmem, size = 0x200, scoped, tag = 'scoped memory for _lambda_.3']
  %s0 = inlined_call_operand.vmem [shape: f32[2,64,128], index: 0, kind: input, shape index: {}]
  %s1 = inlined_call_operand.vmem [shape: f32[2,64,1], index: 1, kind: input, shape index: {}]
  %s2 = inlined_call_operand.vmem [shape: s32[2,512,1], index: 2, kind: input, shape index: {}]
  %s3 = inlined_call_operand.vmem [shape: f32[128,128], index: 3, kind: input, shape index: {}]
  %s4 = inlined_call_operand.vmem [shape: f32[1,128], index: 4, kind: input, shape index: {}]
  %s5 = inlined_call_operand.vmem [shape: f32[128,128], index: 5, kind: input, shape index: {}]
  %s6 = inlined_call_operand.vmem [shape: f32[1,128], index: 6, kind: input, shape index: {}]
  %s7 = inlined_call_operand.vmem [shape: f32[1,128], index: 7, kind: input, shape index: {}]
  %s8 = inlined_call_operand.vmem [shape: f32[1,128], index: 8, kind: input, shape index: {}]
  %s9 = inlined_call_operand.vmem [shape: f32[1,128], index: 9, kind: input, shape index: {}]
  %s10 = inlined_call_operand.vmem [shape: f32[8,128,128], index: 10, kind: input, shape index: {}]
  %s11 = inlined_call_operand.vmem [shape: f32[8,1,128], index: 11, kind: input, shape index: {}]
  %s12 = inlined_call_operand.vmem [shape: f32[8,1,128], index: 12, kind: input, shape index: {}]
  %s13 = inlined_call_operand.vmem [shape: f32[8,1,128], index: 13, kind: input, shape index: {}]
  %s14 = inlined_call_operand.vmem [shape: f32[1,128], index: 14, kind: input, shape index: {}]
  %s15 = inlined_call_operand.<no memory space> [shape: f32[1,1], index: 15, kind: input, shape index: {}]
  %s16 = inlined_call_operand.hbm [shape: f32[2,64], index: 16, kind: output, shape index: {}]
  %s17 = sld [smem:[#allocation0]]
  $region74: #{_lambda_.3} parent=0
    _
  %s19 = ssub.s32 1, %s17
  %s20 = scalar_select 0, %s19, %s17
  %v21 = vstv %s15
  %22 = vst [vmem:[#allocation2] sm:$0x1] %v21
  $region1: #{_lambda_.3} parent=0
    #allocation3 [shape = 'u8[1024]{0}', space=vmem, size = 0x400, scoped, tag = 'output window, operand 0, single buffered']
    #allocation4 [shape = 's32[1]{0}', space=sflag, size = 0x4, scoped, tag = 'scoped memory for _lambda_.3']
    %23 = vsyncpa [#allocation4], 0
    // Predicated region
    $region2: #{_lambda_.3} parent=1 // pred_check
      _
    $region3: #{_lambda_.3} parent=1 // pred_check_branch
      %25 = sbr.rel (0) target = $region5
    $region4: #{_lambda_.3} parent=1 // pred_region
      _
    $region5: #{_lambda_.3} parent=1 // pred_fallthru
      _
    // Predicated region
    $region6: #{_lambda_.3} parent=1 // pred_check
      _
    $region7: #{_lambda_.3} parent=1 // pred_check_branch
      %27 = sbr.rel (0) target = $region9
    $region8: #{_lambda_.3} parent=1 // pred_region
      _
    $region9: #{_lambda_.3} parent=1 // pred_fallthru
      _
    // Predicated region
    $region10: #{_lambda_.3} parent=1 // pred_check
      _
    $region11: #{_lambda_.3} parent=1 // pred_check_branch
      %29 = sbr.rel (0) target = $region13
    $region12: #{_lambda_.3} parent=1 // pred_region
      _
    $region13: #{_lambda_.3} parent=1 // pred_fallthru
      _
    // Predicated region
    $region14: #{_lambda_.3} parent=1 // pred_check
      _
    $region15: #{_lambda_.3} parent=1 // pred_check_branch
      %31 = sbr.rel (0) target = $region17
    $region16: #{_lambda_.3} parent=1 // pred_region
      _
    $region17: #{_lambda_.3} parent=1 // pred_fallthru
      _
    // Predicated region
    $region18: #{_lambda_.3} parent=1 // pred_check
      _
    $region19: #{_lambda_.3} parent=1 // pred_check_branch
      %33 = sbr.rel (0) target = $region21
    $region20: #{_lambda_.3} parent=1 // pred_region
      _
    $region21: #{_lambda_.3} parent=1 // pred_fallthru
      _
    // Predicated region
    $region22: #{_lambda_.3} parent=1 // pred_check
      _
    $region23: #{_lambda_.3} parent=1 // pred_check_branch
      %35 = sbr.rel (0) target = $region25
    $region24: #{_lambda_.3} parent=1 // pred_region
      _
    $region25: #{_lambda_.3} parent=1 // pred_fallthru
      _
    // Predicated region
    $region26: #{_lambda_.3} parent=1 // pred_check
      _
    $region27: #{_lambda_.3} parent=1 // pred_check_branch
      %37 = sbr.rel (0) target = $region29
    $region28: #{_lambda_.3} parent=1 // pred_region
      _
    $region29: #{_lambda_.3} parent=1 // pred_fallthru
      _
    // Predicated region
    $region30: #{_lambda_.3} parent=1 // pred_check
      _
    $region31: #{_lambda_.3} parent=1 // pred_check_branch
      %39 = sbr.rel (0) target = $region33
    $region32: #{_lambda_.3} parent=1 // pred_region
      _
    $region33: #{_lambda_.3} parent=1 // pred_fallthru
      _
    // Predicated region
    $region34: #{_lambda_.3} parent=1 // pred_check
      _
    $region35: #{_lambda_.3} parent=1 // pred_check_branch
      %41 = sbr.rel (0) target = $region37
    $region36: #{_lambda_.3} parent=1 // pred_region
      _
    $region37: #{_lambda_.3} parent=1 // pred_fallthru
      _
    // Predicated region
    $region38: #{_lambda_.3} parent=1 // pred_check
      _
    $region39: #{_lambda_.3} parent=1 // pred_check_branch
      %43 = sbr.rel (0) target = $region41
    $region40: #{_lambda_.3} parent=1 // pred_region
      _
    $region41: #{_lambda_.3} parent=1 // pred_fallthru
      _
    // Predicated region
    $region42: #{_lambda_.3} parent=1 // pred_check
      _
    $region43: #{_lambda_.3} parent=1 // pred_check_branch
      %45 = sbr.rel (0) target = $region45
    $region44: #{_lambda_.3} parent=1 // pred_region
      _
    $region45: #{_lambda_.3} parent=1 // pred_fallthru
      _
    // Predicated region
    $region46: #{_lambda_.3} parent=1 // pred_check
      _
    $region47: #{_lambda_.3} parent=1 // pred_check_branch
      %47 = sbr.rel (0) target = $region49
    $region48: #{_lambda_.3} parent=1 // pred_region
      _
    $region49: #{_lambda_.3} parent=1 // pred_fallthru
      _
    // Predicated region
    $region50: #{_lambda_.3} parent=1 // pred_check
      _
    $region51: #{_lambda_.3} parent=1 // pred_check_branch
      %49 = sbr.rel (0) target = $region53
    $region52: #{_lambda_.3} parent=1 // pred_region
      _
    $region53: #{_lambda_.3} parent=1 // pred_fallthru
      _
    // Predicated region
    $region54: #{_lambda_.3} parent=1 // pred_check
      _
    $region55: #{_lambda_.3} parent=1 // pred_check_branch
      %51 = sbr.rel (0) target = $region57
    $region56: #{_lambda_.3} parent=1 // pred_region
      _
    $region57: #{_lambda_.3} parent=1 // pred_fallthru
      _
    // Predicated region
    $region58: #{_lambda_.3} parent=1 // pred_check
      _
    $region59: #{_lambda_.3} parent=1 // pred_check_branch
      %53 = sbr.rel (0) target = $region61
    $region60: #{_lambda_.3} parent=1 // pred_region
      _
    $region61: #{_lambda_.3} parent=1 // pred_fallthru
      _
    // Predicated region
    $region62: #{_lambda_.3} parent=1 // pred_check
      _
    $region63: #{_lambda_.3} parent=1 // pred_check_branch
      %55 = sbr.rel (0) target = $region65
    $region64: #{_lambda_.3} parent=1 // pred_region
      _
    $region65: #{_lambda_.3} parent=1 // pred_fallthru
      _
    %v56 = vld [vmem:[%s0] sm:$0xff]
    %v57 = vld [vmem:[%s0 + $0x8] sm:$0xff]
    %v58 = vld [vmem:[%s0 + $0x10] sm:$0xff]
    %v59 = vld [vmem:[%s0 + $0x18] sm:$0xff]
    %v60 = vld [vmem:[%s0 + $0x20] sm:$0xff]
    %v61 = vld [vmem:[%s0 + $0x28] sm:$0xff]
    %v62 = vld [vmem:[%s0 + $0x30] sm:$0xff]
    %v63 = vld [vmem:[%s0 + $0x38] sm:$0xff]
    %v64 = vld [vmem:[%s0 + $0x40] sm:$0xff]
    %v65 = vld [vmem:[%s0 + $0x48] sm:$0xff]
    %v66 = vld [vmem:[%s0 + $0x50] sm:$0xff]
    %v67 = vld [vmem:[%s0 + $0x58] sm:$0xff]
    %v68 = vld [vmem:[%s0 + $0x60] sm:$0xff]
    %v69 = vld [vmem:[%s0 + $0x68] sm:$0xff]
    %v70 = vld [vmem:[%s0 + $0x70] sm:$0xff]
    %v71 = vld [vmem:[%s0 + $0x78] sm:$0xff]
    %v72 = vld [vmem:[%s1] sm:$0xff]
    %v73 = vld [vmem:[%s1 + $0x8] sm:$0xff]
    %v74 = vld [vmem:[%s1 + $0x10] sm:$0xff]
    %v75 = vld [vmem:[%s1 + $0x18] sm:$0xff]
    %v76 = vld [vmem:[%s1 + $0x20] sm:$0xff]
    %v77 = vld [vmem:[%s1 + $0x28] sm:$0xff]
    %v78 = vld [vmem:[%s1 + $0x30] sm:$0xff]
    %v79 = vld [vmem:[%s1 + $0x38] sm:$0xff]
    %v80 = vld [vmem:[%s1 + $0x40] sm:$0xff]
    %v81 = vld [vmem:[%s1 + $0x48] sm:$0xff]
    %v82 = vld [vmem:[%s1 + $0x50] sm:$0xff]
    %v83 = vld [vmem:[%s1 + $0x58] sm:$0xff]
    %v84 = vld [vmem:[%s1 + $0x60] sm:$0xff]
    %v85 = vld [vmem:[%s1 + $0x68] sm:$0xff]
    %v86 = vld [vmem:[%s1 + $0x70] sm:$0xff]
    %v87 = vld [vmem:[%s1 + $0x78] sm:$0xff]
    %v88 = vld [vmem:[%s3] sm:$0xff]
    %v89 = vld [vmem:[%s3 + $0x8] sm:$0xff]
    %v90 = vld [vmem:[%s3 + $0x10] sm:$0xff]
    %v91 = vld [vmem:[%s3 + $0x18] sm:$0xff]
    %v92 = vld [vmem:[%s3 + $0x20] sm:$0xff]
    %v93 = vld [vmem:[%s3 + $0x28] sm:$0xff]
    %v94 = vld [vmem:[%s3 + $0x30] sm:$0xff]
    %v95 = vld [vmem:[%s3 + $0x38] sm:$0xff]
    %v96 = vld [vmem:[%s3 + $0x40] sm:$0xff]
    %v97 = vld [vmem:[%s3 + $0x48] sm:$0xff]
    %v98 = vld [vmem:[%s3 + $0x50] sm:$0xff]
    %v99 = vld [vmem:[%s3 + $0x58] sm:$0xff]
    %v100 = vld [vmem:[%s3 + $0x60] sm:$0xff]
    %v101 = vld [vmem:[%s3 + $0x68] sm:$0xff]
    %v102 = vld [vmem:[%s3 + $0x70] sm:$0xff]
    %v103 = vld [vmem:[%s3 + $0x78] sm:$0xff]
    %v104 = vld [vmem:[%s7] sm:$0x1]
    %v106 = vlaneseq
    %v107 = vshrl.u32 %v106, 7
    %v108 = vsub.s32 0, %v107
    %v109 = vrot.slane %v104, %v108
    %111 = vmatprep.subr.mxu0 0.0
    %112 = vmatpush1.msra.mxu0 %v103
    %113 = vmatprep.subr.mxu0 0.0
    %114 = vmatpush1.msra.mxu0 %v102
    %115 = vmatprep.subr.mxu0 0.0
    %116 = vmatpush1.msra.mxu0 %v101
    %117 = vmatprep.subr.mxu0 0.0
    %118 = vmatpush1.msra.mxu0 %v100
    %119 = vmatprep.subr.mxu0 0.0
    %120 = vmatpush1.msra.mxu0 %v99
    %121 = vmatprep.subr.mxu0 0.0
    %122 = vmatpush1.msra.mxu0 %v98
    %123 = vmatprep.subr.mxu0 0.0
    %124 = vmatpush1.msra.mxu0 %v97
    %125 = vmatprep.subr.mxu0 0.0
    %126 = vmatpush1.msra.mxu0 %v96
    %127 = vmatprep.subr.mxu0 0.0
    %128 = vmatpush1.msra.mxu0 %v95
    %129 = vmatprep.subr.mxu0 0.0
    %130 = vmatpush1.msra.mxu0 %v94
    %131 = vmatprep.subr.mxu0 0.0
    %132 = vmatpush1.msra.mxu0 %v93
    %133 = vmatprep.subr.mxu0 0.0
    %134 = vmatpush1.msra.mxu0 %v92
    %135 = vmatprep.subr.mxu0 0.0
    %136 = vmatpush1.msra.mxu0 %v91
    %137 = vmatprep.subr.mxu0 0.0
    %138 = vmatpush1.msra.mxu0 %v90
    %139 = vmatprep.subr.mxu0 0.0
    %140 = vmatpush1.msra.mxu0 %v89
    %141 = vmatprep.subr.mxu0 0.0
    %142 = vmatpush1.msra.mxu0 %v88
    %143 = vmatprep.subr.mxu0 0.0
    %144 = vmatpush2.msra.mxu0 0.0
    %145 = vmatprep.subr.mxu0 0.0
    %146 = vmatpush2.msra.mxu0 0.0
    %147 = vmatprep.subr.mxu0 0.0
    %148 = vmatpush2.msra.mxu0 0.0
    %149 = vmatprep.subr.mxu0 0.0
    %150 = vmatpush2.msra.mxu0 0.0
    %151 = vmatprep.subr.mxu0 0.0
    %152 = vmatpush2.msra.mxu0 0.0
    %153 = vmatprep.subr.mxu0 0.0
    %154 = vmatpush2.msra.mxu0 0.0
    %155 = vmatprep.subr.mxu0 0.0
    %156 = vmatpush2.msra.mxu0 0.0
    %157 = vmatprep.subr.mxu0 0.0
    %158 = vmatpush2.msra.mxu0 0.0
    %159 = vmatprep.subr.mxu0 0.0
    %160 = vmatpush2.msra.mxu0 0.0
    %161 = vmatprep.subr.mxu0 0.0
    %162 = vmatpush2.msra.mxu0 0.0
    %163 = vmatprep.subr.mxu0 0.0
    %164 = vmatpush2.msra.mxu0 0.0
    %165 = vmatprep.subr.mxu0 0.0
    %166 = vmatpush2.msra.mxu0 0.0
    %167 = vmatprep.subr.mxu0 0.0
    %168 = vmatpush2.msra.mxu0 0.0
    %169 = vmatprep.subr.mxu0 0.0
    %170 = vmatpush2.msra.mxu0 0.0
    %171 = vmatprep.subr.mxu0 0.0
    %172 = vmatpush2.msra.mxu0 0.0
    %173 = vmatprep.subr.mxu0 0.0
    %174 = vmatpush2.msra.mxu0 0.0
    %175 = vmatprep.mubr.f32.mxu0 0.0
    %176 = vmatmul.mubr.f32.gmra.mxu0 %v56
    %v177 = vpop.f32.mrf.mxu0
    %v178 = vadd.f32 %v109, %v177
    %v179 = vpop.f32.mrf.mxu0
    %180 = vmatprep.mubr.f32.mxu0 0.0
    %181 = vmatmul.mubr.f32.gmra.mxu0 %v57
    %v182 = vpop.f32.mrf.mxu0
    %v183 = vadd.f32 %v109, %v182
    %v184 = vpop.f32.mrf.mxu0
    %185 = vmatprep.mubr.f32.mxu0 0.0
    %186 = vmatmul.mubr.f32.gmra.mxu0 %v58
    %v187 = vpop.f32.mrf.mxu0
    %v188 = vadd.f32 %v109, %v187
    %v189 = vpop.f32.mrf.mxu0
    %190 = vmatprep.mubr.f32.mxu0 0.0
    %191 = vmatmul.mubr.f32.gmra.mxu0 %v59
    %v192 = vpop.f32.mrf.mxu0
    %v193 = vadd.f32 %v109, %v192
    %v194 = vpop.f32.mrf.mxu0
    %195 = vmatprep.mubr.f32.mxu0 0.0
    %196 = vmatmul.mubr.f32.gmra.mxu0 %v60
    %v197 = vpop.f32.mrf.mxu0
    %v198 = vadd.f32 %v109, %v197
    %v199 = vpop.f32.mrf.mxu0
    %200 = vmatprep.mubr.f32.mxu0 0.0
    %201 = vmatmul.mubr.f32.gmra.mxu0 %v61
    %v202 = vpop.f32.mrf.mxu0
    %v203 = vadd.f32 %v109, %v202
    %v204 = vpop.f32.mrf.mxu0
    %205 = vmatprep.mubr.f32.mxu0 0.0
    %206 = vmatmul.mubr.f32.gmra.mxu0 %v62
    %v207 = vpop.f32.mrf.mxu0
    %v208 = vadd.f32 %v109, %v207
    %v209 = vpop.f32.mrf.mxu0
    %210 = vmatprep.mubr.f32.mxu0 0.0
    %211 = vmatmul.mubr.f32.gmra.mxu0 %v63
    %v212 = vpop.f32.mrf.mxu0
    %v213 = vadd.f32 %v109, %v212
    %v214 = vpop.f32.mrf.mxu0
    %215 = vmatprep.mubr.f32.mxu0 0.0
    %216 = vmatmul.mubr.f32.gmra.mxu0 %v64
    %v217 = vpop.f32.mrf.mxu0
    %v218 = vadd.f32 %v109, %v217
    %v219 = vpop.f32.mrf.mxu0
    %220 = vmatprep.mubr.f32.mxu0 0.0
    %221 = vmatmul.mubr.f32.gmra.mxu0 %v65
    %v222 = vpop.f32.mrf.mxu0
    %v223 = vadd.f32 %v109, %v222
    %v224 = vpop.f32.mrf.mxu0
    %225 = vmatprep.mubr.f32.mxu0 0.0
    %226 = vmatmul.mubr.f32.gmra.mxu0 %v66
    %v227 = vpop.f32.mrf.mxu0
    %v228 = vadd.f32 %v109, %v227
    %v229 = vpop.f32.mrf.mxu0
    %230 = vmatprep.mubr.f32.mxu0 0.0
    %231 = vmatmul.mubr.f32.gmra.mxu0 %v67
    %v232 = vpop.f32.mrf.mxu0
    %v233 = vadd.f32 %v109, %v232
    %v234 = vpop.f32.mrf.mxu0
    %235 = vmatprep.mubr.f32.mxu0 0.0
    %236 = vmatmul.mubr.f32.gmra.mxu0 %v68
    %v237 = vpop.f32.mrf.mxu0
    %v238 = vadd.f32 %v109, %v237
    %v239 = vpop.f32.mrf.mxu0
    %240 = vmatprep.mubr.f32.mxu0 0.0
    %241 = vmatmul.mubr.f32.gmra.mxu0 %v69
    %v242 = vpop.f32.mrf.mxu0
    %v243 = vadd.f32 %v109, %v242
    %v244 = vpop.f32.mrf.mxu0
    %245 = vmatprep.mubr.f32.mxu0 0.0
    %246 = vmatmul.mubr.f32.gmra.mxu0 %v70
    %v247 = vpop.f32.mrf.mxu0
    %v248 = vadd.f32 %v109, %v247
    %v249 = vpop.f32.mrf.mxu0
    %250 = vmatprep.mubr.f32.mxu0 0.0
    %251 = vmatmul.mubr.f32.gmra.mxu0 %v71
    %v252 = vpop.f32.mrf.mxu0
    %v253 = vadd.f32 %v109, %v252
    %v254 = vpop.f32.mrf.mxu0
    %255 = vdwg.mxu0
    %v256 = vld [vmem:[%s4] sm:$0x1]
    %258 = vset.pattern.permute.xlu0 0
    %259 = vperm.xlu0 %258, %v72
    %v260 = vpop.permute.xlu0 %259
    %263 = vset.pattern.permute.xlu0 0
    %264 = vperm.xlu0 %263, %v73
    %v265 = vpop.permute.xlu0 %264
    %268 = vset.pattern.permute.xlu0 0
    %269 = vperm.xlu0 %268, %v74
    %v270 = vpop.permute.xlu0 %269
    %273 = vset.pattern.permute.xlu0 0
    %274 = vperm.xlu0 %273, %v75
    %v275 = vpop.permute.xlu0 %274
    %278 = vset.pattern.permute.xlu0 0
    %279 = vperm.xlu0 %278, %v76
    %v280 = vpop.permute.xlu0 %279
    %283 = vset.pattern.permute.xlu0 0
    %284 = vperm.xlu0 %283, %v77
    %v285 = vpop.permute.xlu0 %284
    %288 = vset.pattern.permute.xlu0 0
    %289 = vperm.xlu0 %288, %v78
    %v290 = vpop.permute.xlu0 %289
    %293 = vset.pattern.permute.xlu0 0
    %294 = vperm.xlu0 %293, %v79
    %v295 = vpop.permute.xlu0 %294
    %298 = vset.pattern.permute.xlu0 0
    %299 = vperm.xlu0 %298, %v80
    %v300 = vpop.permute.xlu0 %299
    %303 = vset.pattern.permute.xlu0 0
    %304 = vperm.xlu0 %303, %v81
    %v305 = vpop.permute.xlu0 %304
    %308 = vset.pattern.permute.xlu0 0
    %309 = vperm.xlu0 %308, %v82
    %v310 = vpop.permute.xlu0 %309
    %313 = vset.pattern.permute.xlu0 0
    %314 = vperm.xlu0 %313, %v83
    %v315 = vpop.permute.xlu0 %314
    %318 = vset.pattern.permute.xlu0 0
    %319 = vperm.xlu0 %318, %v84
    %v320 = vpop.permute.xlu0 %319
    %323 = vset.pattern.permute.xlu0 0
    %324 = vperm.xlu0 %323, %v85
    %v325 = vpop.permute.xlu0 %324
    %328 = vset.pattern.permute.xlu0 0
    %329 = vperm.xlu0 %328, %v86
    %v330 = vpop.permute.xlu0 %329
    %333 = vset.pattern.permute.xlu0 0
    %334 = vperm.xlu0 %333, %v87
    %v335 = vpop.permute.xlu0 %334
    %v338 = vlaneseq
    %v339 = vshrl.u32 %v338, 7
    %v340 = vsub.s32 0, %v339
    %v341 = vrot.slane %v256, %v340
    %v343 = vmul.f32 %v260, %v341
    %v344 = vmul.f32 %v265, %v341
    %v345 = vmul.f32 %v270, %v341
    %v346 = vmul.f32 %v275, %v341
    %v347 = vmul.f32 %v280, %v341
    %v348 = vmul.f32 %v285, %v341
    %v349 = vmul.f32 %v290, %v341
    %v350 = vmul.f32 %v295, %v341
    %v351 = vmul.f32 %v300, %v341
    %v352 = vmul.f32 %v305, %v341
    %v353 = vmul.f32 %v310, %v341
    %v354 = vmul.f32 %v315, %v341
    %v355 = vmul.f32 %v320, %v341
    %v356 = vmul.f32 %v325, %v341
    %v357 = vmul.f32 %v330, %v341
    %v358 = vmul.f32 %v335, %v341
    %v359 = vadd.f32 %v178, %v343
    %v360 = vadd.f32 %v183, %v344
    %v361 = vadd.f32 %v188, %v345
    %v362 = vadd.f32 %v193, %v346
    %v363 = vadd.f32 %v198, %v347
    %v364 = vadd.f32 %v203, %v348
    %v365 = vadd.f32 %v208, %v349
    %v366 = vadd.f32 %v213, %v350
    %v367 = vadd.f32 %v218, %v351
    %v368 = vadd.f32 %v223, %v352
    %v369 = vadd.f32 %v228, %v353
    %v370 = vadd.f32 %v233, %v354
    %v371 = vadd.f32 %v238, %v355
    %v372 = vadd.f32 %v243, %v356
    %v373 = vadd.f32 %v248, %v357
    %v374 = vadd.f32 %v253, %v358
    %v375 = vld [vmem:[%s5] sm:$0xff]
    %v376 = vld [vmem:[%s5 + $0x8] sm:$0xff]
    %v377 = vld [vmem:[%s5 + $0x10] sm:$0xff]
    %v378 = vld [vmem:[%s5 + $0x18] sm:$0xff]
    %v379 = vld [vmem:[%s5 + $0x20] sm:$0xff]
    %v380 = vld [vmem:[%s5 + $0x28] sm:$0xff]
    %v381 = vld [vmem:[%s5 + $0x30] sm:$0xff]
    %v382 = vld [vmem:[%s5 + $0x38] sm:$0xff]
    %v383 = vld [vmem:[%s5 + $0x40] sm:$0xff]
    %v384 = vld [vmem:[%s5 + $0x48] sm:$0xff]
    %v385 = vld [vmem:[%s5 + $0x50] sm:$0xff]
    %v386 = vld [vmem:[%s5 + $0x58] sm:$0xff]
    %v387 = vld [vmem:[%s5 + $0x60] sm:$0xff]
    %v388 = vld [vmem:[%s5 + $0x68] sm:$0xff]
    %v389 = vld [vmem:[%s5 + $0x70] sm:$0xff]
    %v390 = vld [vmem:[%s5 + $0x78] sm:$0xff]
    %391 = vmatprep.subr.mxu0 0.0
    %392 = vmatpush1.msra.mxu0 %v390
    %393 = vmatprep.subr.mxu0 0.0
    %394 = vmatpush1.msra.mxu0 %v389
    %395 = vmatprep.subr.mxu0 0.0
    %396 = vmatpush1.msra.mxu0 %v388
    %397 = vmatprep.subr.mxu0 0.0
    %398 = vmatpush1.msra.mxu0 %v387
    %399 = vmatprep.subr.mxu0 0.0
    %400 = vmatpush1.msra.mxu0 %v386
    %401 = vmatprep.subr.mxu0 0.0
    %402 = vmatpush1.msra.mxu0 %v385
    %403 = vmatprep.subr.mxu0 0.0
    %404 = vmatpush1.msra.mxu0 %v384
    %405 = vmatprep.subr.mxu0 0.0
    %406 = vmatpush1.msra.mxu0 %v383
    %407 = vmatprep.subr.mxu0 0.0
    %408 = vmatpush1.msra.mxu0 %v382
    %409 = vmatprep.subr.mxu0 0.0
    %410 = vmatpush1.msra.mxu0 %v381
    %411 = vmatprep.subr.mxu0 0.0
    %412 = vmatpush1.msra.mxu0 %v380
    %413 = vmatprep.subr.mxu0 0.0
    %414 = vmatpush1.msra.mxu0 %v379
    %415 = vmatprep.subr.mxu0 0.0
    %416 = vmatpush1.msra.mxu0 %v378
    %417 = vmatprep.subr.mxu0 0.0
    %418 = vmatpush1.msra.mxu0 %v377
    %419 = vmatprep.subr.mxu0 0.0
    %420 = vmatpush1.msra.mxu0 %v376
    %421 = vmatprep.subr.mxu0 0.0
    %422 = vmatpush1.msra.mxu0 %v375
    %423 = vmatprep.subr.mxu0 0.0
    %424 = vmatpush2.msra.mxu0 0.0
    %425 = vmatprep.subr.mxu0 0.0
    %426 = vmatpush2.msra.mxu0 0.0
    %427 = vmatprep.subr.mxu0 0.0
    %428 = vmatpush2.msra.mxu0 0.0
    %429 = vmatprep.subr.mxu0 0.0
    %430 = vmatpush2.msra.mxu0 0.0
    %431 = vmatprep.subr.mxu0 0.0
    %432 = vmatpush2.msra.mxu0 0.0
    %433 = vmatprep.subr.mxu0 0.0
    %434 = vmatpush2.msra.mxu0 0.0
    %435 = vmatprep.subr.mxu0 0.0
    %436 = vmatpush2.msra.mxu0 0.0
    %437 = vmatprep.subr.mxu0 0.0
    %438 = vmatpush2.msra.mxu0 0.0
    %439 = vmatprep.subr.mxu0 0.0
    %440 = vmatpush2.msra.mxu0 0.0
    %441 = vmatprep.subr.mxu0 0.0
    %442 = vmatpush2.msra.mxu0 0.0
    %443 = vmatprep.subr.mxu0 0.0
    %444 = vmatpush2.msra.mxu0 0.0
    %445 = vmatprep.subr.mxu0 0.0
    %446 = vmatpush2.msra.mxu0 0.0
    %447 = vmatprep.subr.mxu0 0.0
    %448 = vmatpush2.msra.mxu0 0.0
    %449 = vmatprep.subr.mxu0 0.0
    %450 = vmatpush2.msra.mxu0 0.0
    %451 = vmatprep.subr.mxu0 0.0
    %452 = vmatpush2.msra.mxu0 0.0
    %453 = vmatprep.subr.mxu0 0.0
    %454 = vmatpush2.msra.mxu0 0.0
    %455 = vmatprep.mubr.f32.mxu0 0.0
    %456 = vmatmul.mubr.f32.gmra.mxu0 %v56
    %v457 = vpop.f32.mrf.mxu0
    %v458 = vadd.f32 0.0, %v457
    %v459 = vpop.f32.mrf.mxu0
    %460 = vmatprep.mubr.f32.mxu0 0.0
    %461 = vmatmul.mubr.f32.gmra.mxu0 %v57
    %v462 = vpop.f32.mrf.mxu0
    %v463 = vadd.f32 0.0, %v462
    %v464 = vpop.f32.mrf.mxu0
    %465 = vmatprep.mubr.f32.mxu0 0.0
    %466 = vmatmul.mubr.f32.gmra.mxu0 %v58
    %v467 = vpop.f32.mrf.mxu0
    %v468 = vadd.f32 0.0, %v467
    %v469 = vpop.f32.mrf.mxu0
    %470 = vmatprep.mubr.f32.mxu0 0.0
    %471 = vmatmul.mubr.f32.gmra.mxu0 %v59
    %v472 = vpop.f32.mrf.mxu0
    %v473 = vadd.f32 0.0, %v472
    %v474 = vpop.f32.mrf.mxu0
    %475 = vmatprep.mubr.f32.mxu0 0.0
    %476 = vmatmul.mubr.f32.gmra.mxu0 %v60
    %v477 = vpop.f32.mrf.mxu0
    %v478 = vadd.f32 0.0, %v477
    %v479 = vpop.f32.mrf.mxu0
    %480 = vmatprep.mubr.f32.mxu0 0.0
    %481 = vmatmul.mubr.f32.gmra.mxu0 %v61
    %v482 = vpop.f32.mrf.mxu0
    %v483 = vadd.f32 0.0, %v482
    %v484 = vpop.f32.mrf.mxu0
    %485 = vmatprep.mubr.f32.mxu0 0.0
    %486 = vmatmul.mubr.f32.gmra.mxu0 %v62
    %v487 = vpop.f32.mrf.mxu0
    %v488 = vadd.f32 0.0, %v487
    %v489 = vpop.f32.mrf.mxu0
    %490 = vmatprep.mubr.f32.mxu0 0.0
    %491 = vmatmul.mubr.f32.gmra.mxu0 %v63
    %v492 = vpop.f32.mrf.mxu0
    %v493 = vadd.f32 0.0, %v492
    %v494 = vpop.f32.mrf.mxu0
    %495 = vmatprep.mubr.f32.mxu0 0.0
    %496 = vmatmul.mubr.f32.gmra.mxu0 %v64
    %v497 = vpop.f32.mrf.mxu0
    %v498 = vadd.f32 0.0, %v497
    %v499 = vpop.f32.mrf.mxu0
    %500 = vmatprep.mubr.f32.mxu0 0.0
    %501 = vmatmul.mubr.f32.gmra.mxu0 %v65
    %v502 = vpop.f32.mrf.mxu0
    %v503 = vadd.f32 0.0, %v502
    %v504 = vpop.f32.mrf.mxu0
    %505 = vmatprep.mubr.f32.mxu0 0.0
    %506 = vmatmul.mubr.f32.gmra.mxu0 %v66
    %v507 = vpop.f32.mrf.mxu0
    %v508 = vadd.f32 0.0, %v507
    %v509 = vpop.f32.mrf.mxu0
    %510 = vmatprep.mubr.f32.mxu0 0.0
    %511 = vmatmul.mubr.f32.gmra.mxu0 %v67
    %v512 = vpop.f32.mrf.mxu0
    %v513 = vadd.f32 0.0, %v512
    %v514 = vpop.f32.mrf.mxu0
    %515 = vmatprep.mubr.f32.mxu0 0.0
    %516 = vmatmul.mubr.f32.gmra.mxu0 %v68
    %v517 = vpop.f32.mrf.mxu0
    %v518 = vadd.f32 0.0, %v517
    %v519 = vpop.f32.mrf.mxu0
    %520 = vmatprep.mubr.f32.mxu0 0.0
    %521 = vmatmul.mubr.f32.gmra.mxu0 %v69
    %v522 = vpop.f32.mrf.mxu0
    %v523 = vadd.f32 0.0, %v522
    %v524 = vpop.f32.mrf.mxu0
    %525 = vmatprep.mubr.f32.mxu0 0.0
    %526 = vmatmul.mubr.f32.gmra.mxu0 %v70
    %v527 = vpop.f32.mrf.mxu0
    %v528 = vadd.f32 0.0, %v527
    %v529 = vpop.f32.mrf.mxu0
    %530 = vmatprep.mubr.f32.mxu0 0.0
    %531 = vmatmul.mubr.f32.gmra.mxu0 %v71
    %v532 = vpop.f32.mrf.mxu0
    %v533 = vadd.f32 0.0, %v532
    %v534 = vpop.f32.mrf.mxu0
    %535 = vdwg.mxu0
    %v536 = vld [vmem:[%s6] sm:$0x1]
    %v538 = vlaneseq
    %v539 = vshrl.u32 %v538, 7
    %v540 = vsub.s32 0, %v539
    %v541 = vrot.slane %v536, %v540
    %v543 = vmul.f32 %v260, %v541
    %v544 = vmul.f32 %v265, %v541
    %v545 = vmul.f32 %v270, %v541
    %v546 = vmul.f32 %v275, %v541
    %v547 = vmul.f32 %v280, %v541
    %v548 = vmul.f32 %v285, %v541
    %v549 = vmul.f32 %v290, %v541
    %v550 = vmul.f32 %v295, %v541
    %v551 = vmul.f32 %v300, %v541
    %v552 = vmul.f32 %v305, %v541
    %v553 = vmul.f32 %v310, %v541
    %v554 = vmul.f32 %v315, %v541
    %v555 = vmul.f32 %v320, %v541
    %v556 = vmul.f32 %v325, %v541
    %v557 = vmul.f32 %v330, %v541
    %v558 = vmul.f32 %v335, %v541
    %v559 = vadd.f32 %v458, %v543
    %v560 = vadd.f32 %v463, %v544
    %v561 = vadd.f32 %v468, %v545
    %v562 = vadd.f32 %v473, %v546
    %v563 = vadd.f32 %v478, %v547
    %v564 = vadd.f32 %v483, %v548
    %v565 = vadd.f32 %v488, %v549
    %v566 = vadd.f32 %v493, %v550
    %v567 = vadd.f32 %v498, %v551
    %v568 = vadd.f32 %v503, %v552
    %v569 = vadd.f32 %v508, %v553
    %v570 = vadd.f32 %v513, %v554
    %v571 = vadd.f32 %v518, %v555
    %v572 = vadd.f32 %v523, %v556
    %v573 = vadd.f32 %v528, %v557
    %v574 = vadd.f32 %v533, %v558
    %v575 = vld [vmem:[%s2] sm:$0xff]
    %v576 = vld [vmem:[%s2 + $0x8] sm:$0xff]
    %v577 = vld [vmem:[%s2 + $0x10] sm:$0xff]
    %v578 = vld [vmem:[%s2 + $0x18] sm:$0xff]
    %v579 = vld [vmem:[%s2 + $0x20] sm:$0xff]
    %v580 = vld [vmem:[%s2 + $0x28] sm:$0xff]
    %v581 = vld [vmem:[%s2 + $0x30] sm:$0xff]
    %v582 = vld [vmem:[%s2 + $0x38] sm:$0xff]
    %v583 = vld [vmem:[%s2 + $0x40] sm:$0xff]
    %v584 = vld [vmem:[%s2 + $0x48] sm:$0xff]
    %v585 = vld [vmem:[%s2 + $0x50] sm:$0xff]
    %v586 = vld [vmem:[%s2 + $0x58] sm:$0xff]
    %v587 = vld [vmem:[%s2 + $0x60] sm:$0xff]
    %v588 = vld [vmem:[%s2 + $0x68] sm:$0xff]
    %v589 = vld [vmem:[%s2 + $0x70] sm:$0xff]
    %v590 = vld [vmem:[%s2 + $0x78] sm:$0xff]
    %v591 = vld [vmem:[%s2 + $0x80] sm:$0xff]
    %v592 = vld [vmem:[%s2 + $0x88] sm:$0xff]
    %v593 = vld [vmem:[%s2 + $0x90] sm:$0xff]
    %v594 = vld [vmem:[%s2 + $0x98] sm:$0xff]
    %v595 = vld [vmem:[%s2 + $0xa0] sm:$0xff]
    %v596 = vld [vmem:[%s2 + $0xa8] sm:$0xff]
    %v597 = vld [vmem:[%s2 + $0xb0] sm:$0xff]
    %v598 = vld [vmem:[%s2 + $0xb8] sm:$0xff]
    %v599 = vld [vmem:[%s2 + $0xc0] sm:$0xff]
    %v600 = vld [vmem:[%s2 + $0xc8] sm:$0xff]
    %v601 = vld [vmem:[%s2 + $0xd0] sm:$0xff]
    %v602 = vld [vmem:[%s2 + $0xd8] sm:$0xff]
    %v603 = vld [vmem:[%s2 + $0xe0] sm:$0xff]
    %v604 = vld [vmem:[%s2 + $0xe8] sm:$0xff]
    %v605 = vld [vmem:[%s2 + $0xf0] sm:$0xff]
    %v606 = vld [vmem:[%s2 + $0xf8] sm:$0xff]
    %v607 = vld [vmem:[%s2 + $0x100] sm:$0xff]
    %v608 = vld [vmem:[%s2 + $0x108] sm:$0xff]
    %v609 = vld [vmem:[%s2 + $0x110] sm:$0xff]
    %v610 = vld [vmem:[%s2 + $0x118] sm:$0xff]
    %v611 = vld [vmem:[%s2 + $0x120] sm:$0xff]
    %v612 = vld [vmem:[%s2 + $0x128] sm:$0xff]
    %v613 = vld [vmem:[%s2 + $0x130] sm:$0xff]
    %v614 = vld [vmem:[%s2 + $0x138] sm:$0xff]
    %v615 = vld [vmem:[%s2 + $0x140] sm:$0xff]
    %v616 = vld [vmem:[%s2 + $0x148] sm:$0xff]
    %v617 = vld [vmem:[%s2 + $0x150] sm:$0xff]
    %v618 = vld [vmem:[%s2 + $0x158] sm:$0xff]
    %v619 = vld [vmem:[%s2 + $0x160] sm:$0xff]
    %v620 = vld [vmem:[%s2 + $0x168] sm:$0xff]
    %v621 = vld [vmem:[%s2 + $0x170] sm:$0xff]
    %v622 = vld [vmem:[%s2 + $0x178] sm:$0xff]
    %v623 = vld [vmem:[%s2 + $0x180] sm:$0xff]
    %v624 = vld [vmem:[%s2 + $0x188] sm:$0xff]
    %v625 = vld [vmem:[%s2 + $0x190] sm:$0xff]
    %v626 = vld [vmem:[%s2 + $0x198] sm:$0xff]
    %v627 = vld [vmem:[%s2 + $0x1a0] sm:$0xff]
    %v628 = vld [vmem:[%s2 + $0x1a8] sm:$0xff]
    %v629 = vld [vmem:[%s2 + $0x1b0] sm:$0xff]
    %v630 = vld [vmem:[%s2 + $0x1b8] sm:$0xff]
    %v631 = vld [vmem:[%s2 + $0x1c0] sm:$0xff]
    %v632 = vld [vmem:[%s2 + $0x1c8] sm:$0xff]
    %v633 = vld [vmem:[%s2 + $0x1d0] sm:$0xff]
    %v634 = vld [vmem:[%s2 + $0x1d8] sm:$0xff]
    %v635 = vld [vmem:[%s2 + $0x1e0] sm:$0xff]
    %v636 = vld [vmem:[%s2 + $0x1e8] sm:$0xff]
    %v637 = vld [vmem:[%s2 + $0x1f0] sm:$0xff]
    %v638 = vld [vmem:[%s2 + $0x1f8] sm:$0xff]
    %v639 = vld [vmem:[%s2 + $0x200] sm:$0xff]
    %v640 = vld [vmem:[%s2 + $0x208] sm:$0xff]
    %v641 = vld [vmem:[%s2 + $0x210] sm:$0xff]
    %v642 = vld [vmem:[%s2 + $0x218] sm:$0xff]
    %v643 = vld [vmem:[%s2 + $0x220] sm:$0xff]
    %v644 = vld [vmem:[%s2 + $0x228] sm:$0xff]
    %v645 = vld [vmem:[%s2 + $0x230] sm:$0xff]
    %v646 = vld [vmem:[%s2 + $0x238] sm:$0xff]
    %v647 = vld [vmem:[%s2 + $0x240] sm:$0xff]
    %v648 = vld [vmem:[%s2 + $0x248] sm:$0xff]
    %v649 = vld [vmem:[%s2 + $0x250] sm:$0xff]
    %v650 = vld [vmem:[%s2 + $0x258] sm:$0xff]
    %v651 = vld [vmem:[%s2 + $0x260] sm:$0xff]
    %v652 = vld [vmem:[%s2 + $0x268] sm:$0xff]
    %v653 = vld [vmem:[%s2 + $0x270] sm:$0xff]
    %v654 = vld [vmem:[%s2 + $0x278] sm:$0xff]
    %v655 = vld [vmem:[%s2 + $0x280] sm:$0xff]
    %v656 = vld [vmem:[%s2 + $0x288] sm:$0xff]
    %v657 = vld [vmem:[%s2 + $0x290] sm:$0xff]
    %v658 = vld [vmem:[%s2 + $0x298] sm:$0xff]
    %v659 = vld [vmem:[%s2 + $0x2a0] sm:$0xff]
    %v660 = vld [vmem:[%s2 + $0x2a8] sm:$0xff]
    %v661 = vld [vmem:[%s2 + $0x2b0] sm:$0xff]
    %v662 = vld [vmem:[%s2 + $0x2b8] sm:$0xff]
    %v663 = vld [vmem:[%s2 + $0x2c0] sm:$0xff]
    %v664 = vld [vmem:[%s2 + $0x2c8] sm:$0xff]
    %v665 = vld [vmem:[%s2 + $0x2d0] sm:$0xff]
    %v666 = vld [vmem:[%s2 + $0x2d8] sm:$0xff]
    %v667 = vld [vmem:[%s2 + $0x2e0] sm:$0xff]
    %v668 = vld [vmem:[%s2 + $0x2e8] sm:$0xff]
    %v669 = vld [vmem:[%s2 + $0x2f0] sm:$0xff]
    %v670 = vld [vmem:[%s2 + $0x2f8] sm:$0xff]
    %v671 = vld [vmem:[%s2 + $0x300] sm:$0xff]
    %v672 = vld [vmem:[%s2 + $0x308] sm:$0xff]
    %v673 = vld [vmem:[%s2 + $0x310] sm:$0xff]
    %v674 = vld [vmem:[%s2 + $0x318] sm:$0xff]
    %v675 = vld [vmem:[%s2 + $0x320] sm:$0xff]
    %v676 = vld [vmem:[%s2 + $0x328] sm:$0xff]
    %v677 = vld [vmem:[%s2 + $0x330] sm:$0xff]
    %v678 = vld [vmem:[%s2 + $0x338] sm:$0xff]
    %v679 = vld [vmem:[%s2 + $0x340] sm:$0xff]
    %v680 = vld [vmem:[%s2 + $0x348] sm:$0xff]
    %v681 = vld [vmem:[%s2 + $0x350] sm:$0xff]
    %v682 = vld [vmem:[%s2 + $0x358] sm:$0xff]
    %v683 = vld [vmem:[%s2 + $0x360] sm:$0xff]
    %v684 = vld [vmem:[%s2 + $0x368] sm:$0xff]
    %v685 = vld [vmem:[%s2 + $0x370] sm:$0xff]
    %v686 = vld [vmem:[%s2 + $0x378] sm:$0xff]
    %v687 = vld [vmem:[%s2 + $0x380] sm:$0xff]
    %v688 = vld [vmem:[%s2 + $0x388] sm:$0xff]
    %v689 = vld [vmem:[%s2 + $0x390] sm:$0xff]
    %v690 = vld [vmem:[%s2 + $0x398] sm:$0xff]
    %v691 = vld [vmem:[%s2 + $0x3a0] sm:$0xff]
    %v692 = vld [vmem:[%s2 + $0x3a8] sm:$0xff]
    %v693 = vld [vmem:[%s2 + $0x3b0] sm:$0xff]
    %v694 = vld [vmem:[%s2 + $0x3b8] sm:$0xff]
    %v695 = vld [vmem:[%s2 + $0x3c0] sm:$0xff]
    %v696 = vld [vmem:[%s2 + $0x3c8] sm:$0xff]
    %v697 = vld [vmem:[%s2 + $0x3d0] sm:$0xff]
    %v698 = vld [vmem:[%s2 + $0x3d8] sm:$0xff]
    %v699 = vld [vmem:[%s2 + $0x3e0] sm:$0xff]
    %v700 = vld [vmem:[%s2 + $0x3e8] sm:$0xff]
    %v701 = vld [vmem:[%s2 + $0x3f0] sm:$0xff]
    %v702 = vld [vmem:[%s2 + $0x3f8] sm:$0xff]
    %v703 = vlaneseq
    %v704 = vand.u32 %v703, 127
    %705 = vset.pattern.permute.xlu0 0
    %706 = vperm.xlu0 %705, %v575
    %v707 = vpop.permute.xlu0 %706
    %708 = vset.pattern.permute.xlu0 0
    %709 = vperm.xlu0 %708, %v576
    %v710 = vpop.permute.xlu0 %709
    %711 = vset.pattern.permute.xlu0 0
    %712 = vperm.xlu0 %711, %v577
    %v713 = vpop.permute.xlu0 %712
    %714 = vset.pattern.permute.xlu0 0
    %715 = vperm.xlu0 %714, %v578
    %v716 = vpop.permute.xlu0 %715
    %717 = vset.pattern.permute.xlu0 0
    %718 = vperm.xlu0 %717, %v579
    %v719 = vpop.permute.xlu0 %718
    %720 = vset.pattern.permute.xlu0 0
    %721 = vperm.xlu0 %720, %v580
    %v722 = vpop.permute.xlu0 %721
    %723 = vset.pattern.permute.xlu0 0
    %724 = vperm.xlu0 %723, %v581
    %v725 = vpop.permute.xlu0 %724
    %726 = vset.pattern.permute.xlu0 0
    %727 = vperm.xlu0 %726, %v582
    %v728 = vpop.permute.xlu0 %727
    %729 = vset.pattern.permute.xlu0 0
    %730 = vperm.xlu0 %729, %v583
    %v731 = vpop.permute.xlu0 %730
    %732 = vset.pattern.permute.xlu0 0
    %733 = vperm.xlu0 %732, %v584
    %v734 = vpop.permute.xlu0 %733
    %735 = vset.pattern.permute.xlu0 0
    %736 = vperm.xlu0 %735, %v585
    %v737 = vpop.permute.xlu0 %736
    %738 = vset.pattern.permute.xlu0 0
    %739 = vperm.xlu0 %738, %v586
    %v740 = vpop.permute.xlu0 %739
    %741 = vset.pattern.permute.xlu0 0
    %742 = vperm.xlu0 %741, %v587
    %v743 = vpop.permute.xlu0 %742
    %744 = vset.pattern.permute.xlu0 0
    %745 = vperm.xlu0 %744, %v588
    %v746 = vpop.permute.xlu0 %745
    %747 = vset.pattern.permute.xlu0 0
    %748 = vperm.xlu0 %747, %v589
    %v749 = vpop.permute.xlu0 %748
    %750 = vset.pattern.permute.xlu0 0
    %751 = vperm.xlu0 %750, %v590
    %v752 = vpop.permute.xlu0 %751
    %753 = vset.pattern.permute.xlu0 0
    %754 = vperm.xlu0 %753, %v591
    %v755 = vpop.permute.xlu0 %754
    %756 = vset.pattern.permute.xlu0 0
    %757 = vperm.xlu0 %756, %v592
    %v758 = vpop.permute.xlu0 %757
    %759 = vset.pattern.permute.xlu0 0
    %760 = vperm.xlu0 %759, %v593
    %v761 = vpop.permute.xlu0 %760
    %762 = vset.pattern.permute.xlu0 0
    %763 = vperm.xlu0 %762, %v594
    %v764 = vpop.permute.xlu0 %763
    %765 = vset.pattern.permute.xlu0 0
    %766 = vperm.xlu0 %765, %v595
    %v767 = vpop.permute.xlu0 %766
    %768 = vset.pattern.permute.xlu0 0
    %769 = vperm.xlu0 %768, %v596
    %v770 = vpop.permute.xlu0 %769
    %771 = vset.pattern.permute.xlu0 0
    %772 = vperm.xlu0 %771, %v597
    %v773 = vpop.permute.xlu0 %772
    %774 = vset.pattern.permute.xlu0 0
    %775 = vperm.xlu0 %774, %v598
    %v776 = vpop.permute.xlu0 %775
    %777 = vset.pattern.permute.xlu0 0
    %778 = vperm.xlu0 %777, %v599
    %v779 = vpop.permute.xlu0 %778
    %780 = vset.pattern.permute.xlu0 0
    %781 = vperm.xlu0 %780, %v600
    %v782 = vpop.permute.xlu0 %781
    %783 = vset.pattern.permute.xlu0 0
    %784 = vperm.xlu0 %783, %v601
    %v785 = vpop.permute.xlu0 %784
    %786 = vset.pattern.permute.xlu0 0
    %787 = vperm.xlu0 %786, %v602
    %v788 = vpop.permute.xlu0 %787
    %789 = vset.pattern.permute.xlu0 0
    %790 = vperm.xlu0 %789, %v603
    %v791 = vpop.permute.xlu0 %790
    %792 = vset.pattern.permute.xlu0 0
    %793 = vperm.xlu0 %792, %v604
    %v794 = vpop.permute.xlu0 %793
    %795 = vset.pattern.permute.xlu0 0
    %796 = vperm.xlu0 %795, %v605
    %v797 = vpop.permute.xlu0 %796
    %798 = vset.pattern.permute.xlu0 0
    %799 = vperm.xlu0 %798, %v606
    %v800 = vpop.permute.xlu0 %799
    %801 = vset.pattern.permute.xlu0 0
    %802 = vperm.xlu0 %801, %v607
    %v803 = vpop.permute.xlu0 %802
    %804 = vset.pattern.permute.xlu0 0
    %805 = vperm.xlu0 %804, %v608
    %v806 = vpop.permute.xlu0 %805
    %807 = vset.pattern.permute.xlu0 0
    %808 = vperm.xlu0 %807, %v609
    %v809 = vpop.permute.xlu0 %808
    %810 = vset.pattern.permute.xlu0 0
    %811 = vperm.xlu0 %810, %v610
    %v812 = vpop.permute.xlu0 %811
    %813 = vset.pattern.permute.xlu0 0
    %814 = vperm.xlu0 %813, %v611
    %v815 = vpop.permute.xlu0 %814
    %816 = vset.pattern.permute.xlu0 0
    %817 = vperm.xlu0 %816, %v612
    %v818 = vpop.permute.xlu0 %817
    %819 = vset.pattern.permute.xlu0 0
    %820 = vperm.xlu0 %819, %v613
    %v821 = vpop.permute.xlu0 %820
    %822 = vset.pattern.permute.xlu0 0
    %823 = vperm.xlu0 %822, %v614
    %v824 = vpop.permute.xlu0 %823
    %825 = vset.pattern.permute.xlu0 0
    %826 = vperm.xlu0 %825, %v615
    %v827 = vpop.permute.xlu0 %826
    %828 = vset.pattern.permute.xlu0 0
    %829 = vperm.xlu0 %828, %v616
    %v830 = vpop.permute.xlu0 %829
    %831 = vset.pattern.permute.xlu0 0
    %832 = vperm.xlu0 %831, %v617
    %v833 = vpop.permute.xlu0 %832
    %834 = vset.pattern.permute.xlu0 0
    %835 = vperm.xlu0 %834, %v618
    %v836 = vpop.permute.xlu0 %835
    %837 = vset.pattern.permute.xlu0 0
    %838 = vperm.xlu0 %837, %v619
    %v839 = vpop.permute.xlu0 %838
    %840 = vset.pattern.permute.xlu0 0
    %841 = vperm.xlu0 %840, %v620
    %v842 = vpop.permute.xlu0 %841
    %843 = vset.pattern.permute.xlu0 0
    %844 = vperm.xlu0 %843, %v621
    %v845 = vpop.permute.xlu0 %844
    %846 = vset.pattern.permute.xlu0 0
    %847 = vperm.xlu0 %846, %v622
    %v848 = vpop.permute.xlu0 %847
    %849 = vset.pattern.permute.xlu0 0
    %850 = vperm.xlu0 %849, %v623
    %v851 = vpop.permute.xlu0 %850
    %852 = vset.pattern.permute.xlu0 0
    %853 = vperm.xlu0 %852, %v624
    %v854 = vpop.permute.xlu0 %853
    %855 = vset.pattern.permute.xlu0 0
    %856 = vperm.xlu0 %855, %v625
    %v857 = vpop.permute.xlu0 %856
    %858 = vset.pattern.permute.xlu0 0
    %859 = vperm.xlu0 %858, %v626
    %v860 = vpop.permute.xlu0 %859
    %861 = vset.pattern.permute.xlu0 0
    %862 = vperm.xlu0 %861, %v627
    %v863 = vpop.permute.xlu0 %862
    %864 = vset.pattern.permute.xlu0 0
    %865 = vperm.xlu0 %864, %v628
    %v866 = vpop.permute.xlu0 %865
    %867 = vset.pattern.permute.xlu0 0
    %868 = vperm.xlu0 %867, %v629
    %v869 = vpop.permute.xlu0 %868
    %870 = vset.pattern.permute.xlu0 0
    %871 = vperm.xlu0 %870, %v630
    %v872 = vpop.permute.xlu0 %871
    %873 = vset.pattern.permute.xlu0 0
    %874 = vperm.xlu0 %873, %v631
    %v875 = vpop.permute.xlu0 %874
    %876 = vset.pattern.permute.xlu0 0
    %877 = vperm.xlu0 %876, %v632
    %v878 = vpop.permute.xlu0 %877
    %879 = vset.pattern.permute.xlu0 0
    %880 = vperm.xlu0 %879, %v633
    %v881 = vpop.permute.xlu0 %880
    %882 = vset.pattern.permute.xlu0 0
    %883 = vperm.xlu0 %882, %v634
    %v884 = vpop.permute.xlu0 %883
    %885 = vset.pattern.permute.xlu0 0
    %886 = vperm.xlu0 %885, %v635
    %v887 = vpop.permute.xlu0 %886
    %888 = vset.pattern.permute.xlu0 0
    %889 = vperm.xlu0 %888, %v636
    %v890 = vpop.permute.xlu0 %889
    %891 = vset.pattern.permute.xlu0 0
    %892 = vperm.xlu0 %891, %v637
    %v893 = vpop.permute.xlu0 %892
    %894 = vset.pattern.permute.xlu0 0
    %895 = vperm.xlu0 %894, %v638
    %v896 = vpop.permute.xlu0 %895
    %897 = vset.pattern.permute.xlu0 0
    %898 = vperm.xlu0 %897, %v639
    %v899 = vpop.permute.xlu0 %898
    %900 = vset.pattern.permute.xlu0 0
    %901 = vperm.xlu0 %900, %v640
    %v902 = vpop.permute.xlu0 %901
    %903 = vset.pattern.permute.xlu0 0
    %904 = vperm.xlu0 %903, %v641
    %v905 = vpop.permute.xlu0 %904
    %906 = vset.pattern.permute.xlu0 0
    %907 = vperm.xlu0 %906, %v642
    %v908 = vpop.permute.xlu0 %907
    %909 = vset.pattern.permute.xlu0 0
    %910 = vperm.xlu0 %909, %v643
    %v911 = vpop.permute.xlu0 %910
    %912 = vset.pattern.permute.xlu0 0
    %913 = vperm.xlu0 %912, %v644
    %v914 = vpop.permute.xlu0 %913
    %915 = vset.pattern.permute.xlu0 0
    %916 = vperm.xlu0 %915, %v645
    %v917 = vpop.permute.xlu0 %916
    %918 = vset.pattern.permute.xlu0 0
    %919 = vperm.xlu0 %918, %v646
    %v920 = vpop.permute.xlu0 %919
    %921 = vset.pattern.permute.xlu0 0
    %922 = vperm.xlu0 %921, %v647
    %v923 = vpop.permute.xlu0 %922
    %924 = vset.pattern.permute.xlu0 0
    %925 = vperm.xlu0 %924, %v648
    %v926 = vpop.permute.xlu0 %925
    %927 = vset.pattern.permute.xlu0 0
    %928 = vperm.xlu0 %927, %v649
    %v929 = vpop.permute.xlu0 %928
    %930 = vset.pattern.permute.xlu0 0
    %931 = vperm.xlu0 %930, %v650
    %v932 = vpop.permute.xlu0 %931
    %933 = vset.pattern.permute.xlu0 0
    %934 = vperm.xlu0 %933, %v651
    %v935 = vpop.permute.xlu0 %934
    %936 = vset.pattern.permute.xlu0 0
    %937 = vperm.xlu0 %936, %v652
    %v938 = vpop.permute.xlu0 %937
    %939 = vset.pattern.permute.xlu0 0
    %940 = vperm.xlu0 %939, %v653
    %v941 = vpop.permute.xlu0 %940
    %942 = vset.pattern.permute.xlu0 0
    %943 = vperm.xlu0 %942, %v654
    %v944 = vpop.permute.xlu0 %943
    %945 = vset.pattern.permute.xlu0 0
    %946 = vperm.xlu0 %945, %v655
    %v947 = vpop.permute.xlu0 %946
    %948 = vset.pattern.permute.xlu0 0
    %949 = vperm.xlu0 %948, %v656
    %v950 = vpop.permute.xlu0 %949
    %951 = vset.pattern.permute.xlu0 0
    %952 = vperm.xlu0 %951, %v657
    %v953 = vpop.permute.xlu0 %952
    %954 = vset.pattern.permute.xlu0 0
    %955 = vperm.xlu0 %954, %v658
    %v956 = vpop.permute.xlu0 %955
    %957 = vset.pattern.permute.xlu0 0
    %958 = vperm.xlu0 %957, %v659
    %v959 = vpop.permute.xlu0 %958
    %960 = vset.pattern.permute.xlu0 0
    %961 = vperm.xlu0 %960, %v660
    %v962 = vpop.permute.xlu0 %961
    %963 = vset.pattern.permute.xlu0 0
    %964 = vperm.xlu0 %963, %v661
    %v965 = vpop.permute.xlu0 %964
    %966 = vset.pattern.permute.xlu0 0
    %967 = vperm.xlu0 %966, %v662
    %v968 = vpop.permute.xlu0 %967
    %969 = vset.pattern.permute.xlu0 0
    %970 = vperm.xlu0 %969, %v663
    %v971 = vpop.permute.xlu0 %970
    %972 = vset.pattern.permute.xlu0 0
    %973 = vperm.xlu0 %972, %v664
    %v974 = vpop.permute.xlu0 %973
    %975 = vset.pattern.permute.xlu0 0
    %976 = vperm.xlu0 %975, %v665
    %v977 = vpop.permute.xlu0 %976
    %978 = vset.pattern.permute.xlu0 0
    %979 = vperm.xlu0 %978, %v666
    %v980 = vpop.permute.xlu0 %979
    %981 = vset.pattern.permute.xlu0 0
    %982 = vperm.xlu0 %981, %v667
    %v983 = vpop.permute.xlu0 %982
    %984 = vset.pattern.permute.xlu0 0
    %985 = vperm.xlu0 %984, %v668
    %v986 = vpop.permute.xlu0 %985
    %987 = vset.pattern.permute.xlu0 0
    %988 = vperm.xlu0 %987, %v669
    %v989 = vpop.permute.xlu0 %988
    %990 = vset.pattern.permute.xlu0 0
    %991 = vperm.xlu0 %990, %v670
    %v992 = vpop.permute.xlu0 %991
    %993 = vset.pattern.permute.xlu0 0
    %994 = vperm.xlu0 %993, %v671
    %v995 = vpop.permute.xlu0 %994
    %996 = vset.pattern.permute.xlu0 0
    %997 = vperm.xlu0 %996, %v672
    %v998 = vpop.permute.xlu0 %997
    %999 = vset.pattern.permute.xlu0 0
    %1000 = vperm.xlu0 %999, %v673
    %v1001 = vpop.permute.xlu0 %1000
    %1002 = vset.pattern.permute.xlu0 0
    %1003 = vperm.xlu0 %1002, %v674
    %v1004 = vpop.permute.xlu0 %1003
    %1005 = vset.pattern.permute.xlu0 0
    %1006 = vperm.xlu0 %1005, %v675
    %v1007 = vpop.permute.xlu0 %1006
    %1008 = vset.pattern.permute.xlu0 0
    %1009 = vperm.xlu0 %1008, %v676
    %v1010 = vpop.permute.xlu0 %1009
    %1011 = vset.pattern.permute.xlu0 0
    %1012 = vperm.xlu0 %1011, %v677
    %v1013 = vpop.permute.xlu0 %1012
    %1014 = vset.pattern.permute.xlu0 0
    %1015 = vperm.xlu0 %1014, %v678
    %v1016 = vpop.permute.xlu0 %1015
    %1017 = vset.pattern.permute.xlu0 0
    %1018 = vperm.xlu0 %1017, %v679
    %v1019 = vpop.permute.xlu0 %1018
    %1020 = vset.pattern.permute.xlu0 0
    %1021 = vperm.xlu0 %1020, %v680
    %v1022 = vpop.permute.xlu0 %1021
    %1023 = vset.pattern.permute.xlu0 0
    %1024 = vperm.xlu0 %1023, %v681
    %v1025 = vpop.permute.xlu0 %1024
    %1026 = vset.pattern.permute.xlu0 0
    %1027 = vperm.xlu0 %1026, %v682
    %v1028 = vpop.permute.xlu0 %1027
    %1029 = vset.pattern.permute.xlu0 0
    %1030 = vperm.xlu0 %1029, %v683
    %v1031 = vpop.permute.xlu0 %1030
    %1032 = vset.pattern.permute.xlu0 0
    %1033 = vperm.xlu0 %1032, %v684
    %v1034 = vpop.permute.xlu0 %1033
    %1035 = vset.pattern.permute.xlu0 0
    %1036 = vperm.xlu0 %1035, %v685
    %v1037 = vpop.permute.xlu0 %1036
    %1038 = vset.pattern.permute.xlu0 0
    %1039 = vperm.xlu0 %1038, %v686
    %v1040 = vpop.permute.xlu0 %1039
    %1041 = vset.pattern.permute.xlu0 0
    %1042 = vperm.xlu0 %1041, %v687
    %v1043 = vpop.permute.xlu0 %1042
    %1044 = vset.pattern.permute.xlu0 0
    %1045 = vperm.xlu0 %1044, %v688
    %v1046 = vpop.permute.xlu0 %1045
    %1047 = vset.pattern.permute.xlu0 0
    %1048 = vperm.xlu0 %1047, %v689
    %v1049 = vpop.permute.xlu0 %1048
    %1050 = vset.pattern.permute.xlu0 0
    %1051 = vperm.xlu0 %1050, %v690
    %v1052 = vpop.permute.xlu0 %1051
    %1053 = vset.pattern.permute.xlu0 0
    %1054 = vperm.xlu0 %1053, %v691
    %v1055 = vpop.permute.xlu0 %1054
    %1056 = vset.pattern.permute.xlu0 0
    %1057 = vperm.xlu0 %1056, %v692
    %v1058 = vpop.permute.xlu0 %1057
    %1059 = vset.pattern.permute.xlu0 0
    %1060 = vperm.xlu0 %1059, %v693
    %v1061 = vpop.permute.xlu0 %1060
    %1062 = vset.pattern.permute.xlu0 0
    %1063 = vperm.xlu0 %1062, %v694
    %v1064 = vpop.permute.xlu0 %1063
    %1065 = vset.pattern.permute.xlu0 0
    %1066 = vperm.xlu0 %1065, %v695
    %v1067 = vpop.permute.xlu0 %1066
    %1068 = vset.pattern.permute.xlu0 0
    %1069 = vperm.xlu0 %1068, %v696
    %v1070 = vpop.permute.xlu0 %1069
    %1071 = vset.pattern.permute.xlu0 0
    %1072 = vperm.xlu0 %1071, %v697
    %v1073 = vpop.permute.xlu0 %1072
    %1074 = vset.pattern.permute.xlu0 0
    %1075 = vperm.xlu0 %1074, %v698
    %v1076 = vpop.permute.xlu0 %1075
    %1077 = vset.pattern.permute.xlu0 0
    %1078 = vperm.xlu0 %1077, %v699
    %v1079 = vpop.permute.xlu0 %1078
    %1080 = vset.pattern.permute.xlu0 0
    %1081 = vperm.xlu0 %1080, %v700
    %v1082 = vpop.permute.xlu0 %1081
    %1083 = vset.pattern.permute.xlu0 0
    %1084 = vperm.xlu0 %1083, %v701
    %v1085 = vpop.permute.xlu0 %1084
    %1086 = vset.pattern.permute.xlu0 0
    %1087 = vperm.xlu0 %1086, %v702
    %v1088 = vpop.permute.xlu0 %1087
    %vm1089 = vcmp.eq.s32.totalorder %v707, %v704
    %vm1090 = vcmp.eq.s32.totalorder %v710, %v704
    %vm1091 = vcmp.eq.s32.totalorder %v713, %v704
    %vm1092 = vcmp.eq.s32.totalorder %v716, %v704
    %vm1093 = vcmp.eq.s32.totalorder %v719, %v704
    %vm1094 = vcmp.eq.s32.totalorder %v722, %v704
    %vm1095 = vcmp.eq.s32.totalorder %v725, %v704
    %vm1096 = vcmp.eq.s32.totalorder %v728, %v704
    %vm1097 = vcmp.eq.s32.totalorder %v731, %v704
    %vm1098 = vcmp.eq.s32.totalorder %v734, %v704
    %vm1099 = vcmp.eq.s32.totalorder %v737, %v704
    %vm1100 = vcmp.eq.s32.totalorder %v740, %v704
    %vm1101 = vcmp.eq.s32.totalorder %v743, %v704
    %vm1102 = vcmp.eq.s32.totalorder %v746, %v704
    %vm1103 = vcmp.eq.s32.totalorder %v749, %v704
    %vm1104 = vcmp.eq.s32.totalorder %v752, %v704
    %vm1105 = vcmp.eq.s32.totalorder %v755, %v704
    %vm1106 = vcmp.eq.s32.totalorder %v758, %v704
    %vm1107 = vcmp.eq.s32.totalorder %v761, %v704
    %vm1108 = vcmp.eq.s32.totalorder %v764, %v704
    %vm1109 = vcmp.eq.s32.totalorder %v767, %v704
    %vm1110 = vcmp.eq.s32.totalorder %v770, %v704
    %vm1111 = vcmp.eq.s32.totalorder %v773, %v704
    %vm1112 = vcmp.eq.s32.totalorder %v776, %v704
    %vm1113 = vcmp.eq.s32.totalorder %v779, %v704
    %vm1114 = vcmp.eq.s32.totalorder %v782, %v704
    %vm1115 = vcmp.eq.s32.totalorder %v785, %v704
    %vm1116 = vcmp.eq.s32.totalorder %v788, %v704
    %vm1117 = vcmp.eq.s32.totalorder %v791, %v704
    %vm1118 = vcmp.eq.s32.totalorder %v794, %v704
    %vm1119 = vcmp.eq.s32.totalorder %v797, %v704
    %vm1120 = vcmp.eq.s32.totalorder %v800, %v704
    %vm1121 = vcmp.eq.s32.totalorder %v803, %v704
    %vm1122 = vcmp.eq.s32.totalorder %v806, %v704
    %vm1123 = vcmp.eq.s32.totalorder %v809, %v704
    %vm1124 = vcmp.eq.s32.totalorder %v812, %v704
    %vm1125 = vcmp.eq.s32.totalorder %v815, %v704
    %vm1126 = vcmp.eq.s32.totalorder %v818, %v704
    %vm1127 = vcmp.eq.s32.totalorder %v821, %v704
    %vm1128 = vcmp.eq.s32.totalorder %v824, %v704
    %vm1129 = vcmp.eq.s32.totalorder %v827, %v704
    %vm1130 = vcmp.eq.s32.totalorder %v830, %v704
    %vm1131 = vcmp.eq.s32.totalorder %v833, %v704
    %vm1132 = vcmp.eq.s32.totalorder %v836, %v704
    %vm1133 = vcmp.eq.s32.totalorder %v839, %v704
    %vm1134 = vcmp.eq.s32.totalorder %v842, %v704
    %vm1135 = vcmp.eq.s32.totalorder %v845, %v704
    %vm1136 = vcmp.eq.s32.totalorder %v848, %v704
    %vm1137 = vcmp.eq.s32.totalorder %v851, %v704
    %vm1138 = vcmp.eq.s32.totalorder %v854, %v704
    %vm1139 = vcmp.eq.s32.totalorder %v857, %v704
    %vm1140 = vcmp.eq.s32.totalorder %v860, %v704
    %vm1141 = vcmp.eq.s32.totalorder %v863, %v704
    %vm1142 = vcmp.eq.s32.totalorder %v866, %v704
    %vm1143 = vcmp.eq.s32.totalorder %v869, %v704
    %vm1144 = vcmp.eq.s32.totalorder %v872, %v704
    %vm1145 = vcmp.eq.s32.totalorder %v875, %v704
    %vm1146 = vcmp.eq.s32.totalorder %v878, %v704
    %vm1147 = vcmp.eq.s32.totalorder %v881, %v704
    %vm1148 = vcmp.eq.s32.totalorder %v884, %v704
    %vm1149 = vcmp.eq.s32.totalorder %v887, %v704
    %vm1150 = vcmp.eq.s32.totalorder %v890, %v704
    %vm1151 = vcmp.eq.s32.totalorder %v893, %v704
    %vm1152 = vcmp.eq.s32.totalorder %v896, %v704
    %vm1153 = vcmp.eq.s32.totalorder %v899, %v704
    %vm1154 = vcmp.eq.s32.totalorder %v902, %v704
    %vm1155 = vcmp.eq.s32.totalorder %v905, %v704
    %vm1156 = vcmp.eq.s32.totalorder %v908, %v704
    %vm1157 = vcmp.eq.s32.totalorder %v911, %v704
    %vm1158 = vcmp.eq.s32.totalorder %v914, %v704
    %vm1159 = vcmp.eq.s32.totalorder %v917, %v704
    %vm1160 = vcmp.eq.s32.totalorder %v920, %v704
    %vm1161 = vcmp.eq.s32.totalorder %v923, %v704
    %vm1162 = vcmp.eq.s32.totalorder %v926, %v704
    %vm1163 = vcmp.eq.s32.totalorder %v929, %v704
    %vm1164 = vcmp.eq.s32.totalorder %v932, %v704
    %vm1165 = vcmp.eq.s32.totalorder %v935, %v704
    %vm1166 = vcmp.eq.s32.totalorder %v938, %v704
    %vm1167 = vcmp.eq.s32.totalorder %v941, %v704
    %vm1168 = vcmp.eq.s32.totalorder %v944, %v704
    %vm1169 = vcmp.eq.s32.totalorder %v947, %v704
    %vm1170 = vcmp.eq.s32.totalorder %v950, %v704
    %vm1171 = vcmp.eq.s32.totalorder %v953, %v704
    %vm1172 = vcmp.eq.s32.totalorder %v956, %v704
    %vm1173 = vcmp.eq.s32.totalorder %v959, %v704
    %vm1174 = vcmp.eq.s32.totalorder %v962, %v704
    %vm1175 = vcmp.eq.s32.totalorder %v965, %v704
    %vm1176 = vcmp.eq.s32.totalorder %v968, %v704
    %vm1177 = vcmp.eq.s32.totalorder %v971, %v704
    %vm1178 = vcmp.eq.s32.totalorder %v974, %v704
    %vm1179 = vcmp.eq.s32.totalorder %v977, %v704
    %vm1180 = vcmp.eq.s32.totalorder %v980, %v704
    %vm1181 = vcmp.eq.s32.totalorder %v983, %v704
    %vm1182 = vcmp.eq.s32.totalorder %v986, %v704
    %vm1183 = vcmp.eq.s32.totalorder %v989, %v704
    %vm1184 = vcmp.eq.s32.totalorder %v992, %v704
    %vm1185 = vcmp.eq.s32.totalorder %v995, %v704
    %vm1186 = vcmp.eq.s32.totalorder %v998, %v704
    %vm1187 = vcmp.eq.s32.totalorder %v1001, %v704
    %vm1188 = vcmp.eq.s32.totalorder %v1004, %v704
    %vm1189 = vcmp.eq.s32.totalorder %v1007, %v704
    %vm1190 = vcmp.eq.s32.totalorder %v1010, %v704
    %vm1191 = vcmp.eq.s32.totalorder %v1013, %v704
    %vm1192 = vcmp.eq.s32.totalorder %v1016, %v704
    %vm1193 = vcmp.eq.s32.totalorder %v1019, %v704
    %vm1194 = vcmp.eq.s32.totalorder %v1022, %v704
    %vm1195 = vcmp.eq.s32.totalorder %v1025, %v704
    %vm1196 = vcmp.eq.s32.totalorder %v1028, %v704
    %vm1197 = vcmp.eq.s32.totalorder %v1031, %v704
    %vm1198 = vcmp.eq.s32.totalorder %v1034, %v704
    %vm1199 = vcmp.eq.s32.totalorder %v1037, %v704
    %vm1200 = vcmp.eq.s32.totalorder %v1040, %v704
    %vm1201 = vcmp.eq.s32.totalorder %v1043, %v704
    %vm1202 = vcmp.eq.s32.totalorder %v1046, %v704
    %vm1203 = vcmp.eq.s32.totalorder %v1049, %v704
    %vm1204 = vcmp.eq.s32.totalorder %v1052, %v704
    %vm1205 = vcmp.eq.s32.totalorder %v1055, %v704
    %vm1206 = vcmp.eq.s32.totalorder %v1058, %v704
    %vm1207 = vcmp.eq.s32.totalorder %v1061, %v704
    %vm1208 = vcmp.eq.s32.totalorder %v1064, %v704
    %vm1209 = vcmp.eq.s32.totalorder %v1067, %v704
    %vm1210 = vcmp.eq.s32.totalorder %v1070, %v704
    %vm1211 = vcmp.eq.s32.totalorder %v1073, %v704
    %vm1212 = vcmp.eq.s32.totalorder %v1076, %v704
    %vm1213 = vcmp.eq.s32.totalorder %v1079, %v704
    %vm1214 = vcmp.eq.s32.totalorder %v1082, %v704
    %vm1215 = vcmp.eq.s32.totalorder %v1085, %v704
    %vm1216 = vcmp.eq.s32.totalorder %v1088, %v704
    %v1217 = vsel %vm1089, 1, 0
    %v1218 = vsel %vm1090, 1, 0
    %v1219 = vsel %vm1091, 1, 0
    %v1220 = vsel %vm1092, 1, 0
    %v1221 = vsel %vm1093, 1, 0
    %v1222 = vsel %vm1094, 1, 0
    %v1223 = vsel %vm1095, 1, 0
    %v1224 = vsel %vm1096, 1, 0
    %v1225 = vsel %vm1097, 1, 0
    %v1226 = vsel %vm1098, 1, 0
    %v1227 = vsel %vm1099, 1, 0
    %v1228 = vsel %vm1100, 1, 0
    %v1229 = vsel %vm1101, 1, 0
    %v1230 = vsel %vm1102, 1, 0
    %v1231 = vsel %vm1103, 1, 0
    %v1232 = vsel %vm1104, 1, 0
    %v1233 = vsel %vm1105, 1, 0
    %v1234 = vsel %vm1106, 1, 0
    %v1235 = vsel %vm1107, 1, 0
    %v1236 = vsel %vm1108, 1, 0
    %v1237 = vsel %vm1109, 1, 0
    %v1238 = vsel %vm1110, 1, 0
    %v1239 = vsel %vm1111, 1, 0
    %v1240 = vsel %vm1112, 1, 0
    %v1241 = vsel %vm1113, 1, 0
    %v1242 = vsel %vm1114, 1, 0
    %v1243 = vsel %vm1115, 1, 0
    %v1244 = vsel %vm1116, 1, 0
    %v1245 = vsel %vm1117, 1, 0
    %v1246 = vsel %vm1118, 1, 0
    %v1247 = vsel %vm1119, 1, 0
    %v1248 = vsel %vm1120, 1, 0
    %v1249 = vsel %vm1121, 1, 0
    %v1250 = vsel %vm1122, 1, 0
    %v1251 = vsel %vm1123, 1, 0
    %v1252 = vsel %vm1124, 1, 0
    %v1253 = vsel %vm1125, 1, 0
    %v1254 = vsel %vm1126, 1, 0
    %v1255 = vsel %vm1127, 1, 0
    %v1256 = vsel %vm1128, 1, 0
    %v1257 = vsel %vm1129, 1, 0
    %v1258 = vsel %vm1130, 1, 0
    %v1259 = vsel %vm1131, 1, 0
    %v1260 = vsel %vm1132, 1, 0
    %v1261 = vsel %vm1133, 1, 0
    %v1262 = vsel %vm1134, 1, 0
    %v1263 = vsel %vm1135, 1, 0
    %v1264 = vsel %vm1136, 1, 0
    %v1265 = vsel %vm1137, 1, 0
    %v1266 = vsel %vm1138, 1, 0
    %v1267 = vsel %vm1139, 1, 0
    %v1268 = vsel %vm1140, 1, 0
    %v1269 = vsel %vm1141, 1, 0
    %v1270 = vsel %vm1142, 1, 0
    %v1271 = vsel %vm1143, 1, 0
    %v1272 = vsel %vm1144, 1, 0
    %v1273 = vsel %vm1145, 1, 0
    %v1274 = vsel %vm1146, 1, 0
    %v1275 = vsel %vm1147, 1, 0
    %v1276 = vsel %vm1148, 1, 0
    %v1277 = vsel %vm1149, 1, 0
    %v1278 = vsel %vm1150, 1, 0
    %v1279 = vsel %vm1151, 1, 0
    %v1280 = vsel %vm1152, 1, 0
    %v1281 = vsel %vm1153, 1, 0
    %v1282 = vsel %vm1154, 1, 0
    %v1283 = vsel %vm1155, 1, 0
    %v1284 = vsel %vm1156, 1, 0
    %v1285 = vsel %vm1157, 1, 0
    %v1286 = vsel %vm1158, 1, 0
    %v1287 = vsel %vm1159, 1, 0
    %v1288 = vsel %vm1160, 1, 0
    %v1289 = vsel %vm1161, 1, 0
    %v1290 = vsel %vm1162, 1, 0
    %v1291 = vsel %vm1163, 1, 0
    %v1292 = vsel %vm1164, 1, 0
    %v1293 = vsel %vm1165, 1, 0
    %v1294 = vsel %vm1166, 1, 0
    %v1295 = vsel %vm1167, 1, 0
    %v1296 = vsel %vm1168, 1, 0
    %v1297 = vsel %vm1169, 1, 0
    %v1298 = vsel %vm1170, 1, 0
    %v1299 = vsel %vm1171, 1, 0
    %v1300 = vsel %vm1172, 1, 0
    %v1301 = vsel %vm1173, 1, 0
    %v1302 = vsel %vm1174, 1, 0
    %v1303 = vsel %vm1175, 1, 0
    %v1304 = vsel %vm1176, 1, 0
    %v1305 = vsel %vm1177, 1, 0
    %v1306 = vsel %vm1178, 1, 0
    %v1307 = vsel %vm1179, 1, 0
    %v1308 = vsel %vm1180, 1, 0
    %v1309 = vsel %vm1181, 1, 0
    %v1310 = vsel %vm1182, 1, 0
    %v1311 = vsel %vm1183, 1, 0
    %v1312 = vsel %vm1184, 1, 0
    %v1313 = vsel %vm1185, 1, 0
    %v1314 = vsel %vm1186, 1, 0
    %v1315 = vsel %vm1187, 1, 0
    %v1316 = vsel %vm1188, 1, 0
    %v1317 = vsel %vm1189, 1, 0
    %v1318 = vsel %vm1190, 1, 0
    %v1319 = vsel %vm1191, 1, 0
    %v1320 = vsel %vm1192, 1, 0
    %v1321 = vsel %vm1193, 1, 0
    %v1322 = vsel %vm1194, 1, 0
    %v1323 = vsel %vm1195, 1, 0
    %v1324 = vsel %vm1196, 1, 0
    %v1325 = vsel %vm1197, 1, 0
    %v1326 = vsel %vm1198, 1, 0
    %v1327 = vsel %vm1199, 1, 0
    %v1328 = vsel %vm1200, 1, 0
    %v1329 = vsel %vm1201, 1, 0
    %v1330 = vsel %vm1202, 1, 0
    %v1331 = vsel %vm1203, 1, 0
    %v1332 = vsel %vm1204, 1, 0
    %v1333 = vsel %vm1205, 1, 0
    %v1334 = vsel %vm1206, 1, 0
    %v1335 = vsel %vm1207, 1, 0
    %v1336 = vsel %vm1208, 1, 0
    %v1337 = vsel %vm1209, 1, 0
    %v1338 = vsel %vm1210, 1, 0
    %v1339 = vsel %vm1211, 1, 0
    %v1340 = vsel %vm1212, 1, 0
    %v1341 = vsel %vm1213, 1, 0
    %v1342 = vsel %vm1214, 1, 0
    %v1343 = vsel %vm1215, 1, 0
    %v1344 = vsel %vm1216, 1, 0
    %v1345 = vcvt.s32.f32 %v1217
    %v1346 = vcvt.s32.f32 %v1218
    %v1347 = vcvt.s32.f32 %v1219
    %v1348 = vcvt.s32.f32 %v1220
    %v1349 = vcvt.s32.f32 %v1221
    %v1350 = vcvt.s32.f32 %v1222
    %v1351 = vcvt.s32.f32 %v1223
    %v1352 = vcvt.s32.f32 %v1224
    %v1353 = vcvt.s32.f32 %v1225
    %v1354 = vcvt.s32.f32 %v1226
    %v1355 = vcvt.s32.f32 %v1227
    %v1356 = vcvt.s32.f32 %v1228
    %v1357 = vcvt.s32.f32 %v1229
    %v1358 = vcvt.s32.f32 %v1230
    %v1359 = vcvt.s32.f32 %v1231
    %v1360 = vcvt.s32.f32 %v1232
    %v1361 = vcvt.s32.f32 %v1233
    %v1362 = vcvt.s32.f32 %v1234
    %v1363 = vcvt.s32.f32 %v1235
    %v1364 = vcvt.s32.f32 %v1236
    %v1365 = vcvt.s32.f32 %v1237
    %v1366 = vcvt.s32.f32 %v1238
    %v1367 = vcvt.s32.f32 %v1239
    %v1368 = vcvt.s32.f32 %v1240
    %v1369 = vcvt.s32.f32 %v1241
    %v1370 = vcvt.s32.f32 %v1242
    %v1371 = vcvt.s32.f32 %v1243
    %v1372 = vcvt.s32.f32 %v1244
    %v1373 = vcvt.s32.f32 %v1245
    %v1374 = vcvt.s32.f32 %v1246
    %v1375 = vcvt.s32.f32 %v1247
    %v1376 = vcvt.s32.f32 %v1248
    %v1377 = vcvt.s32.f32 %v1249
    %v1378 = vcvt.s32.f32 %v1250
    %v1379 = vcvt.s32.f32 %v1251
    %v1380 = vcvt.s32.f32 %v1252
    %v1381 = vcvt.s32.f32 %v1253
    %v1382 = vcvt.s32.f32 %v1254
    %v1383 = vcvt.s32.f32 %v1255
    %v1384 = vcvt.s32.f32 %v1256
    %v1385 = vcvt.s32.f32 %v1257
    %v1386 = vcvt.s32.f32 %v1258
    %v1387 = vcvt.s32.f32 %v1259
    %v1388 = vcvt.s32.f32 %v1260
    %v1389 = vcvt.s32.f32 %v1261
    %v1390 = vcvt.s32.f32 %v1262
    %v1391 = vcvt.s32.f32 %v1263
    %v1392 = vcvt.s32.f32 %v1264
    %v1393 = vcvt.s32.f32 %v1265
    %v1394 = vcvt.s32.f32 %v1266
    %v1395 = vcvt.s32.f32 %v1267
    %v1396 = vcvt.s32.f32 %v1268
    %v1397 = vcvt.s32.f32 %v1269
    %v1398 = vcvt.s32.f32 %v1270
    %v1399 = vcvt.s32.f32 %v1271
    %v1400 = vcvt.s32.f32 %v1272
    %v1401 = vcvt.s32.f32 %v1273
    %v1402 = vcvt.s32.f32 %v1274
    %v1403 = vcvt.s32.f32 %v1275
    %v1404 = vcvt.s32.f32 %v1276
    %v1405 = vcvt.s32.f32 %v1277
    %v1406 = vcvt.s32.f32 %v1278
    %v1407 = vcvt.s32.f32 %v1279
    %v1408 = vcvt.s32.f32 %v1280
    %v1409 = vcvt.s32.f32 %v1281
    %v1410 = vcvt.s32.f32 %v1282
    %v1411 = vcvt.s32.f32 %v1283
    %v1412 = vcvt.s32.f32 %v1284
    %v1413 = vcvt.s32.f32 %v1285
    %v1414 = vcvt.s32.f32 %v1286
    %v1415 = vcvt.s32.f32 %v1287
    %v1416 = vcvt.s32.f32 %v1288
    %v1417 = vcvt.s32.f32 %v1289
    %v1418 = vcvt.s32.f32 %v1290
    %v1419 = vcvt.s32.f32 %v1291
    %v1420 = vcvt.s32.f32 %v1292
    %v1421 = vcvt.s32.f32 %v1293
    %v1422 = vcvt.s32.f32 %v1294
    %v1423 = vcvt.s32.f32 %v1295
    %v1424 = vcvt.s32.f32 %v1296
    %v1425 = vcvt.s32.f32 %v1297
    %v1426 = vcvt.s32.f32 %v1298
    %v1427 = vcvt.s32.f32 %v1299
    %v1428 = vcvt.s32.f32 %v1300
    %v1429 = vcvt.s32.f32 %v1301
    %v1430 = vcvt.s32.f32 %v1302
    %v1431 = vcvt.s32.f32 %v1303
    %v1432 = vcvt.s32.f32 %v1304
    %v1433 = vcvt.s32.f32 %v1305
    %v1434 = vcvt.s32.f32 %v1306
    %v1435 = vcvt.s32.f32 %v1307
    %v1436 = vcvt.s32.f32 %v1308
    %v1437 = vcvt.s32.f32 %v1309
    %v1438 = vcvt.s32.f32 %v1310
    %v1439 = vcvt.s32.f32 %v1311
    %v1440 = vcvt.s32.f32 %v1312
    %v1441 = vcvt.s32.f32 %v1313
    %v1442 = vcvt.s32.f32 %v1314
    %v1443 = vcvt.s32.f32 %v1315
    %v1444 = vcvt.s32.f32 %v1316
    %v1445 = vcvt.s32.f32 %v1317
    %v1446 = vcvt.s32.f32 %v1318
    %v1447 = vcvt.s32.f32 %v1319
    %v1448 = vcvt.s32.f32 %v1320
    %v1449 = vcvt.s32.f32 %v1321
    %v1450 = vcvt.s32.f32 %v1322
    %v1451 = vcvt.s32.f32 %v1323
    %v1452 = vcvt.s32.f32 %v1324
    %v1453 = vcvt.s32.f32 %v1325
    %v1454 = vcvt.s32.f32 %v1326
    %v1455 = vcvt.s32.f32 %v1327
    %v1456 = vcvt.s32.f32 %v1328
    %v1457 = vcvt.s32.f32 %v1329
    %v1458 = vcvt.s32.f32 %v1330
    %v1459 = vcvt.s32.f32 %v1331
    %v1460 = vcvt.s32.f32 %v1332
    %v1461 = vcvt.s32.f32 %v1333
    %v1462 = vcvt.s32.f32 %v1334
    %v1463 = vcvt.s32.f32 %v1335
    %v1464 = vcvt.s32.f32 %v1336
    %v1465 = vcvt.s32.f32 %v1337
    %v1466 = vcvt.s32.f32 %v1338
    %v1467 = vcvt.s32.f32 %v1339
    %v1468 = vcvt.s32.f32 %v1340
    %v1469 = vcvt.s32.f32 %v1341
    %v1470 = vcvt.s32.f32 %v1342
    %v1471 = vcvt.s32.f32 %v1343
    %v1472 = vcvt.s32.f32 %v1344
    %vm1473 = vcmask 523264
    %v1475 = vsel %vm1473, %v1345, 0
    %v1478 = vsel %vm1473, %v1346, 0
    %v1481 = vsel %vm1473, %v1347, 0
    %v1484 = vsel %vm1473, %v1348, 0
    %v1487 = vsel %vm1473, %v1349, 0
    %v1490 = vsel %vm1473, %v1350, 0
    %v1493 = vsel %vm1473, %v1351, 0
    %v1496 = vsel %vm1473, %v1352, 0
    %v1499 = vsel %vm1473, %v1353, 0
    %v1502 = vsel %vm1473, %v1354, 0
    %v1505 = vsel %vm1473, %v1355, 0
    %v1508 = vsel %vm1473, %v1356, 0
    %v1511 = vsel %vm1473, %v1357, 0
    %v1514 = vsel %vm1473, %v1358, 0
    %v1517 = vsel %vm1473, %v1359, 0
    %v1520 = vsel %vm1473, %v1360, 0
    %v1523 = vsel %vm1473, %v1361, 0
    %v1526 = vsel %vm1473, %v1362, 0
    %v1529 = vsel %vm1473, %v1363, 0
    %v1532 = vsel %vm1473, %v1364, 0
    %v1535 = vsel %vm1473, %v1365, 0
    %v1538 = vsel %vm1473, %v1366, 0
    %v1541 = vsel %vm1473, %v1367, 0
    %v1544 = vsel %vm1473, %v1368, 0
    %v1547 = vsel %vm1473, %v1369, 0
    %v1550 = vsel %vm1473, %v1370, 0
    %v1553 = vsel %vm1473, %v1371, 0
    %v1556 = vsel %vm1473, %v1372, 0
    %v1559 = vsel %vm1473, %v1373, 0
    %v1562 = vsel %vm1473, %v1374, 0
    %v1565 = vsel %vm1473, %v1375, 0
    %v1568 = vsel %vm1473, %v1376, 0
    %v1571 = vsel %vm1473, %v1377, 0
    %v1574 = vsel %vm1473, %v1378, 0
    %v1577 = vsel %vm1473, %v1379, 0
    %v1580 = vsel %vm1473, %v1380, 0
    %v1583 = vsel %vm1473, %v1381, 0
    %v1586 = vsel %vm1473, %v1382, 0
    %v1589 = vsel %vm1473, %v1383, 0
    %v1592 = vsel %vm1473, %v1384, 0
    %v1595 = vsel %vm1473, %v1385, 0
    %v1598 = vsel %vm1473, %v1386, 0
    %v1601 = vsel %vm1473, %v1387, 0
    %v1604 = vsel %vm1473, %v1388, 0
    %v1607 = vsel %vm1473, %v1389, 0
    %v1610 = vsel %vm1473, %v1390, 0
    %v1613 = vsel %vm1473, %v1391, 0
    %v1616 = vsel %vm1473, %v1392, 0
    %v1619 = vsel %vm1473, %v1393, 0
    %v1622 = vsel %vm1473, %v1394, 0
    %v1625 = vsel %vm1473, %v1395, 0
    %v1628 = vsel %vm1473, %v1396, 0
    %v1631 = vsel %vm1473, %v1397, 0
    %v1634 = vsel %vm1473, %v1398, 0
    %v1637 = vsel %vm1473, %v1399, 0
    %v1640 = vsel %vm1473, %v1400, 0
    %v1643 = vsel %vm1473, %v1401, 0
    %v1646 = vsel %vm1473, %v1402, 0
    %v1649 = vsel %vm1473, %v1403, 0
    %v1652 = vsel %vm1473, %v1404, 0
    %v1655 = vsel %vm1473, %v1405, 0
    %v1658 = vsel %vm1473, %v1406, 0
    %v1661 = vsel %vm1473, %v1407, 0
    %v1664 = vsel %vm1473, %v1408, 0
    %1666 = vmatprep.subr.mxu0 0.0
    %1667 = vmatpush1.msra.mxu0 0.0
    %1668 = vmatprep.subr.mxu0 0.0
    %1669 = vmatpush1.msra.mxu0 0.0
    %1670 = vmatprep.subr.mxu0 0.0
    %1671 = vmatpush1.msra.mxu0 0.0
    %1672 = vmatprep.subr.mxu0 0.0
    %1673 = vmatpush1.msra.mxu0 0.0
    %1674 = vmatprep.subr.mxu0 0.0
    %1675 = vmatpush1.msra.mxu0 0.0
    %1676 = vmatprep.subr.mxu0 0.0
    %1677 = vmatpush1.msra.mxu0 0.0
    %1678 = vmatprep.subr.mxu0 0.0
    %1679 = vmatpush1.msra.mxu0 0.0
    %1680 = vmatprep.subr.mxu0 0.0
    %1681 = vmatpush1.msra.mxu0 0.0
    %1682 = vmatprep.subr.mxu0 0.0
    %1683 = vmatpush1.msra.mxu0 %v566
    %1684 = vmatprep.subr.mxu0 0.0
    %1685 = vmatpush1.msra.mxu0 %v565
    %1686 = vmatprep.subr.mxu0 0.0
    %1687 = vmatpush1.msra.mxu0 %v564
    %1688 = vmatprep.subr.mxu0 0.0
    %1689 = vmatpush1.msra.mxu0 %v563
    %1690 = vmatprep.subr.mxu0 0.0
    %1691 = vmatpush1.msra.mxu0 %v562
    %1692 = vmatprep.subr.mxu0 0.0
    %1693 = vmatpush1.msra.mxu0 %v561
    %1694 = vmatprep.subr.mxu0 0.0
    %1695 = vmatpush1.msra.mxu0 %v560
    %1696 = vmatprep.subr.mxu0 0.0
    %1697 = vmatpush1.msra.mxu0 %v559
    %1698 = vmatprep.subr.mxu0 0.0
    %1699 = vmatpush2.msra.mxu0 0.0
    %1700 = vmatprep.subr.mxu0 0.0
    %1701 = vmatpush2.msra.mxu0 0.0
    %1702 = vmatprep.subr.mxu0 0.0
    %1703 = vmatpush2.msra.mxu0 0.0
    %1704 = vmatprep.subr.mxu0 0.0
    %1705 = vmatpush2.msra.mxu0 0.0
    %1706 = vmatprep.subr.mxu0 0.0
    %1707 = vmatpush2.msra.mxu0 0.0
    %1708 = vmatprep.subr.mxu0 0.0
    %1709 = vmatpush2.msra.mxu0 0.0
    %1710 = vmatprep.subr.mxu0 0.0
    %1711 = vmatpush2.msra.mxu0 0.0
    %1712 = vmatprep.subr.mxu0 0.0
    %1713 = vmatpush2.msra.mxu0 0.0
    %1714 = vmatprep.subr.mxu0 0.0
    %1715 = vmatpush2.msra.mxu0 0.0
    %1716 = vmatprep.subr.mxu0 0.0
    %1717 = vmatpush2.msra.mxu0 0.0
    %1718 = vmatprep.subr.mxu0 0.0
    %1719 = vmatpush2.msra.mxu0 0.0
    %1720 = vmatprep.subr.mxu0 0.0
    %1721 = vmatpush2.msra.mxu0 0.0
    %1722 = vmatprep.subr.mxu0 0.0
    %1723 = vmatpush2.msra.mxu0 0.0
    %1724 = vmatprep.subr.mxu0 0.0
    %1725 = vmatpush2.msra.mxu0 0.0
    %1726 = vmatprep.subr.mxu0 0.0
    %1727 = vmatpush2.msra.mxu0 0.0
    %1728 = vmatprep.subr.mxu0 0.0
    %1729 = vmatpush2.msra.mxu0 0.0
    %1730 = vmatprep.mubr.f32.mxu0 0.0
    %1731 = vmatmul.mubr.f32.gmra.mxu0 %v1475
    %v1732 = vpop.f32.mrf.mxu0
    %v1733 = vadd.f32 0.0, %v1732
    %v1734 = vpop.f32.mrf.mxu0
    %1735 = vmatprep.mubr.f32.mxu0 0.0
    %1736 = vmatmul.mubr.f32.gmra.mxu0 %v1478
    %v1737 = vpop.f32.mrf.mxu0
    %v1738 = vadd.f32 0.0, %v1737
    %v1739 = vpop.f32.mrf.mxu0
    %1740 = vmatprep.mubr.f32.mxu0 0.0
    %1741 = vmatmul.mubr.f32.gmra.mxu0 %v1481
    %v1742 = vpop.f32.mrf.mxu0
    %v1743 = vadd.f32 0.0, %v1742
    %v1744 = vpop.f32.mrf.mxu0
    %1745 = vmatprep.mubr.f32.mxu0 0.0
    %1746 = vmatmul.mubr.f32.gmra.mxu0 %v1484
    %v1747 = vpop.f32.mrf.mxu0
    %v1748 = vadd.f32 0.0, %v1747
    %v1749 = vpop.f32.mrf.mxu0
    %1750 = vmatprep.mubr.f32.mxu0 0.0
    %1751 = vmatmul.mubr.f32.gmra.mxu0 %v1487
    %v1752 = vpop.f32.mrf.mxu0
    %v1753 = vadd.f32 0.0, %v1752
    %v1754 = vpop.f32.mrf.mxu0
    %1755 = vmatprep.mubr.f32.mxu0 0.0
    %1756 = vmatmul.mubr.f32.gmra.mxu0 %v1490
    %v1757 = vpop.f32.mrf.mxu0
    %v1758 = vadd.f32 0.0, %v1757
    %v1759 = vpop.f32.mrf.mxu0
    %1760 = vmatprep.mubr.f32.mxu0 0.0
    %1761 = vmatmul.mubr.f32.gmra.mxu0 %v1493
    %v1762 = vpop.f32.mrf.mxu0
    %v1763 = vadd.f32 0.0, %v1762
    %v1764 = vpop.f32.mrf.mxu0
    %1765 = vmatprep.mubr.f32.mxu0 0.0
    %1766 = vmatmul.mubr.f32.gmra.mxu0 %v1496
    %v1767 = vpop.f32.mrf.mxu0
    %v1768 = vadd.f32 0.0, %v1767
    %v1769 = vpop.f32.mrf.mxu0
    %1770 = vmatprep.mubr.f32.mxu0 0.0
    %1771 = vmatmul.mubr.f32.gmra.mxu0 %v1499
    %v1772 = vpop.f32.mrf.mxu0
    %v1773 = vadd.f32 0.0, %v1772
    %v1774 = vpop.f32.mrf.mxu0
    %1775 = vmatprep.mubr.f32.mxu0 0.0
    %1776 = vmatmul.mubr.f32.gmra.mxu0 %v1502
    %v1777 = vpop.f32.mrf.mxu0
    %v1778 = vadd.f32 0.0, %v1777
    %v1779 = vpop.f32.mrf.mxu0
    %1780 = vmatprep.mubr.f32.mxu0 0.0
    %1781 = vmatmul.mubr.f32.gmra.mxu0 %v1505
    %v1782 = vpop.f32.mrf.mxu0
    %v1783 = vadd.f32 0.0, %v1782
    %v1784 = vpop.f32.mrf.mxu0
    %1785 = vmatprep.mubr.f32.mxu0 0.0
    %1786 = vmatmul.mubr.f32.gmra.mxu0 %v1508
    %v1787 = vpop.f32.mrf.mxu0
    %v1788 = vadd.f32 0.0, %v1787
    %v1789 = vpop.f32.mrf.mxu0
    %1790 = vmatprep.mubr.f32.mxu0 0.0
    %1791 = vmatmul.mubr.f32.gmra.mxu0 %v1511
    %v1792 = vpop.f32.mrf.mxu0
    %v1793 = vadd.f32 0.0, %v1792
    %v1794 = vpop.f32.mrf.mxu0
    %1795 = vmatprep.mubr.f32.mxu0 0.0
    %1796 = vmatmul.mubr.f32.gmra.mxu0 %v1514
    %v1797 = vpop.f32.mrf.mxu0
    %v1798 = vadd.f32 0.0, %v1797
    %v1799 = vpop.f32.mrf.mxu0
    %1800 = vmatprep.mubr.f32.mxu0 0.0
    %1801 = vmatmul.mubr.f32.gmra.mxu0 %v1517
    %v1802 = vpop.f32.mrf.mxu0
    %v1803 = vadd.f32 0.0, %v1802
    %v1804 = vpop.f32.mrf.mxu0
    %1805 = vmatprep.mubr.f32.mxu0 0.0
    %1806 = vmatmul.mubr.f32.gmra.mxu0 %v1520
    %v1807 = vpop.f32.mrf.mxu0
    %v1808 = vadd.f32 0.0, %v1807
    %v1809 = vpop.f32.mrf.mxu0
    %1810 = vmatprep.mubr.f32.mxu0 0.0
    %1811 = vmatmul.mubr.f32.gmra.mxu0 %v1523
    %v1812 = vpop.f32.mrf.mxu0
    %v1813 = vadd.f32 0.0, %v1812
    %v1814 = vpop.f32.mrf.mxu0
    %1815 = vmatprep.mubr.f32.mxu0 0.0
    %1816 = vmatmul.mubr.f32.gmra.mxu0 %v1526
    %v1817 = vpop.f32.mrf.mxu0
    %v1818 = vadd.f32 0.0, %v1817
    %v1819 = vpop.f32.mrf.mxu0
    %1820 = vmatprep.mubr.f32.mxu0 0.0
    %1821 = vmatmul.mubr.f32.gmra.mxu0 %v1529
    %v1822 = vpop.f32.mrf.mxu0
    %v1823 = vadd.f32 0.0, %v1822
    %v1824 = vpop.f32.mrf.mxu0
    %1825 = vmatprep.mubr.f32.mxu0 0.0
    %1826 = vmatmul.mubr.f32.gmra.mxu0 %v1532
    %v1827 = vpop.f32.mrf.mxu0
    %v1828 = vadd.f32 0.0, %v1827
    %v1829 = vpop.f32.mrf.mxu0
    %1830 = vmatprep.mubr.f32.mxu0 0.0
    %1831 = vmatmul.mubr.f32.gmra.mxu0 %v1535
    %v1832 = vpop.f32.mrf.mxu0
    %v1833 = vadd.f32 0.0, %v1832
    %v1834 = vpop.f32.mrf.mxu0
    %1835 = vmatprep.mubr.f32.mxu0 0.0
    %1836 = vmatmul.mubr.f32.gmra.mxu0 %v1538
    %v1837 = vpop.f32.mrf.mxu0
    %v1838 = vadd.f32 0.0, %v1837
    %v1839 = vpop.f32.mrf.mxu0
    %1840 = vmatprep.mubr.f32.mxu0 0.0
    %1841 = vmatmul.mubr.f32.gmra.mxu0 %v1541
    %v1842 = vpop.f32.mrf.mxu0
    %v1843 = vadd.f32 0.0, %v1842
    %v1844 = vpop.f32.mrf.mxu0
    %1845 = vmatprep.mubr.f32.mxu0 0.0
    %1846 = vmatmul.mubr.f32.gmra.mxu0 %v1544
    %v1847 = vpop.f32.mrf.mxu0
    %v1848 = vadd.f32 0.0, %v1847
    %v1849 = vpop.f32.mrf.mxu0
    %1850 = vmatprep.mubr.f32.mxu0 0.0
    %1851 = vmatmul.mubr.f32.gmra.mxu0 %v1547
    %v1852 = vpop.f32.mrf.mxu0
    %v1853 = vadd.f32 0.0, %v1852
    %v1854 = vpop.f32.mrf.mxu0
    %1855 = vmatprep.mubr.f32.mxu0 0.0
    %1856 = vmatmul.mubr.f32.gmra.mxu0 %v1550
    %v1857 = vpop.f32.mrf.mxu0
    %v1858 = vadd.f32 0.0, %v1857
    %v1859 = vpop.f32.mrf.mxu0
    %1860 = vmatprep.mubr.f32.mxu0 0.0
    %1861 = vmatmul.mubr.f32.gmra.mxu0 %v1553
    %v1862 = vpop.f32.mrf.mxu0
    %v1863 = vadd.f32 0.0, %v1862
    %v1864 = vpop.f32.mrf.mxu0
    %1865 = vmatprep.mubr.f32.mxu0 0.0
    %1866 = vmatmul.mubr.f32.gmra.mxu0 %v1556
    %v1867 = vpop.f32.mrf.mxu0
    %v1868 = vadd.f32 0.0, %v1867
    %v1869 = vpop.f32.mrf.mxu0
    %1870 = vmatprep.mubr.f32.mxu0 0.0
    %1871 = vmatmul.mubr.f32.gmra.mxu0 %v1559
    %v1872 = vpop.f32.mrf.mxu0
    %v1873 = vadd.f32 0.0, %v1872
    %v1874 = vpop.f32.mrf.mxu0
    %1875 = vmatprep.mubr.f32.mxu0 0.0
    %1876 = vmatmul.mubr.f32.gmra.mxu0 %v1562
    %v1877 = vpop.f32.mrf.mxu0
    %v1878 = vadd.f32 0.0, %v1877
    %v1879 = vpop.f32.mrf.mxu0
    %1880 = vmatprep.mubr.f32.mxu0 0.0
    %1881 = vmatmul.mubr.f32.gmra.mxu0 %v1565
    %v1882 = vpop.f32.mrf.mxu0
    %v1883 = vadd.f32 0.0, %v1882
    %v1884 = vpop.f32.mrf.mxu0
    %1885 = vmatprep.mubr.f32.mxu0 0.0
    %1886 = vmatmul.mubr.f32.gmra.mxu0 %v1568
    %v1887 = vpop.f32.mrf.mxu0
    %v1888 = vadd.f32 0.0, %v1887
    %v1889 = vpop.f32.mrf.mxu0
    %1890 = vmatprep.mubr.f32.mxu0 0.0
    %1891 = vmatmul.mubr.f32.gmra.mxu0 %v1571
    %v1892 = vpop.f32.mrf.mxu0
    %v1893 = vadd.f32 0.0, %v1892
    %v1894 = vpop.f32.mrf.mxu0
    %1895 = vmatprep.mubr.f32.mxu0 0.0
    %1896 = vmatmul.mubr.f32.gmra.mxu0 %v1574
    %v1897 = vpop.f32.mrf.mxu0
    %v1898 = vadd.f32 0.0, %v1897
    %v1899 = vpop.f32.mrf.mxu0
    %1900 = vmatprep.mubr.f32.mxu0 0.0
    %1901 = vmatmul.mubr.f32.gmra.mxu0 %v1577
    %v1902 = vpop.f32.mrf.mxu0
    %v1903 = vadd.f32 0.0, %v1902
    %v1904 = vpop.f32.mrf.mxu0
    %1905 = vmatprep.mubr.f32.mxu0 0.0
    %1906 = vmatmul.mubr.f32.gmra.mxu0 %v1580
    %v1907 = vpop.f32.mrf.mxu0
    %v1908 = vadd.f32 0.0, %v1907
    %v1909 = vpop.f32.mrf.mxu0
    %1910 = vmatprep.mubr.f32.mxu0 0.0
    %1911 = vmatmul.mubr.f32.gmra.mxu0 %v1583
    %v1912 = vpop.f32.mrf.mxu0
    %v1913 = vadd.f32 0.0, %v1912
    %v1914 = vpop.f32.mrf.mxu0
    %1915 = vmatprep.mubr.f32.mxu0 0.0
    %1916 = vmatmul.mubr.f32.gmra.mxu0 %v1586
    %v1917 = vpop.f32.mrf.mxu0
    %v1918 = vadd.f32 0.0, %v1917
    %v1919 = vpop.f32.mrf.mxu0
    %1920 = vmatprep.mubr.f32.mxu0 0.0
    %1921 = vmatmul.mubr.f32.gmra.mxu0 %v1589
    %v1922 = vpop.f32.mrf.mxu0
    %v1923 = vadd.f32 0.0, %v1922
    %v1924 = vpop.f32.mrf.mxu0
    %1925 = vmatprep.mubr.f32.mxu0 0.0
    %1926 = vmatmul.mubr.f32.gmra.mxu0 %v1592
    %v1927 = vpop.f32.mrf.mxu0
    %v1928 = vadd.f32 0.0, %v1927
    %v1929 = vpop.f32.mrf.mxu0
    %1930 = vmatprep.mubr.f32.mxu0 0.0
    %1931 = vmatmul.mubr.f32.gmra.mxu0 %v1595
    %v1932 = vpop.f32.mrf.mxu0
    %v1933 = vadd.f32 0.0, %v1932
    %v1934 = vpop.f32.mrf.mxu0
    %1935 = vmatprep.mubr.f32.mxu0 0.0
    %1936 = vmatmul.mubr.f32.gmra.mxu0 %v1598
    %v1937 = vpop.f32.mrf.mxu0
    %v1938 = vadd.f32 0.0, %v1937
    %v1939 = vpop.f32.mrf.mxu0
    %1940 = vmatprep.mubr.f32.mxu0 0.0
    %1941 = vmatmul.mubr.f32.gmra.mxu0 %v1601
    %v1942 = vpop.f32.mrf.mxu0
    %v1943 = vadd.f32 0.0, %v1942
    %v1944 = vpop.f32.mrf.mxu0
    %1945 = vmatprep.mubr.f32.mxu0 0.0
    %1946 = vmatmul.mubr.f32.gmra.mxu0 %v1604
    %v1947 = vpop.f32.mrf.mxu0
    %v1948 = vadd.f32 0.0, %v1947
    %v1949 = vpop.f32.mrf.mxu0
    %1950 = vmatprep.mubr.f32.mxu0 0.0
    %1951 = vmatmul.mubr.f32.gmra.mxu0 %v1607
    %v1952 = vpop.f32.mrf.mxu0
    %v1953 = vadd.f32 0.0, %v1952
    %v1954 = vpop.f32.mrf.mxu0
    %1955 = vmatprep.mubr.f32.mxu0 0.0
    %1956 = vmatmul.mubr.f32.gmra.mxu0 %v1610
    %v1957 = vpop.f32.mrf.mxu0
    %v1958 = vadd.f32 0.0, %v1957
    %v1959 = vpop.f32.mrf.mxu0
    %1960 = vmatprep.mubr.f32.mxu0 0.0
    %1961 = vmatmul.mubr.f32.gmra.mxu0 %v1613
    %v1962 = vpop.f32.mrf.mxu0
    %v1963 = vadd.f32 0.0, %v1962
    %v1964 = vpop.f32.mrf.mxu0
    %1965 = vmatprep.mubr.f32.mxu0 0.0
    %1966 = vmatmul.mubr.f32.gmra.mxu0 %v1616
    %v1967 = vpop.f32.mrf.mxu0
    %v1968 = vadd.f32 0.0, %v1967
    %v1969 = vpop.f32.mrf.mxu0
    %1970 = vmatprep.mubr.f32.mxu0 0.0
    %1971 = vmatmul.mubr.f32.gmra.mxu0 %v1619
    %v1972 = vpop.f32.mrf.mxu0
    %v1973 = vadd.f32 0.0, %v1972
    %v1974 = vpop.f32.mrf.mxu0
    %1975 = vmatprep.mubr.f32.mxu0 0.0
    %1976 = vmatmul.mubr.f32.gmra.mxu0 %v1622
    %v1977 = vpop.f32.mrf.mxu0
    %v1978 = vadd.f32 0.0, %v1977
    %v1979 = vpop.f32.mrf.mxu0
    %1980 = vmatprep.mubr.f32.mxu0 0.0
    %1981 = vmatmul.mubr.f32.gmra.mxu0 %v1625
    %v1982 = vpop.f32.mrf.mxu0
    %v1983 = vadd.f32 0.0, %v1982
    %v1984 = vpop.f32.mrf.mxu0
    %1985 = vmatprep.mubr.f32.mxu0 0.0
    %1986 = vmatmul.mubr.f32.gmra.mxu0 %v1628
    %v1987 = vpop.f32.mrf.mxu0
    %v1988 = vadd.f32 0.0, %v1987
    %v1989 = vpop.f32.mrf.mxu0
    %1990 = vmatprep.mubr.f32.mxu0 0.0
    %1991 = vmatmul.mubr.f32.gmra.mxu0 %v1631
    %v1992 = vpop.f32.mrf.mxu0
    %v1993 = vadd.f32 0.0, %v1992
    %v1994 = vpop.f32.mrf.mxu0
    %1995 = vmatprep.mubr.f32.mxu0 0.0
    %1996 = vmatmul.mubr.f32.gmra.mxu0 %v1634
    %v1997 = vpop.f32.mrf.mxu0
    %v1998 = vadd.f32 0.0, %v1997
    %v1999 = vpop.f32.mrf.mxu0
    %2000 = vmatprep.mubr.f32.mxu0 0.0
    %2001 = vmatmul.mubr.f32.gmra.mxu0 %v1637
    %v2002 = vpop.f32.mrf.mxu0
    %v2003 = vadd.f32 0.0, %v2002
    %v2004 = vpop.f32.mrf.mxu0
    %2005 = vmatprep.mubr.f32.mxu0 0.0
    %2006 = vmatmul.mubr.f32.gmra.mxu0 %v1640
    %v2007 = vpop.f32.mrf.mxu0
    %v2008 = vadd.f32 0.0, %v2007
    %v2009 = vpop.f32.mrf.mxu0
    %2010 = vmatprep.mubr.f32.mxu0 0.0
    %2011 = vmatmul.mubr.f32.gmra.mxu0 %v1643
    %v2012 = vpop.f32.mrf.mxu0
    %v2013 = vadd.f32 0.0, %v2012
    %v2014 = vpop.f32.mrf.mxu0
    %2015 = vmatprep.mubr.f32.mxu0 0.0
    %2016 = vmatmul.mubr.f32.gmra.mxu0 %v1646
    %v2017 = vpop.f32.mrf.mxu0
    %v2018 = vadd.f32 0.0, %v2017
    %v2019 = vpop.f32.mrf.mxu0
    %2020 = vmatprep.mubr.f32.mxu0 0.0
    %2021 = vmatmul.mubr.f32.gmra.mxu0 %v1649
    %v2022 = vpop.f32.mrf.mxu0
    %v2023 = vadd.f32 0.0, %v2022
    %v2024 = vpop.f32.mrf.mxu0
    %2025 = vmatprep.mubr.f32.mxu0 0.0
    %2026 = vmatmul.mubr.f32.gmra.mxu0 %v1652
    %v2027 = vpop.f32.mrf.mxu0
    %v2028 = vadd.f32 0.0, %v2027
    %v2029 = vpop.f32.mrf.mxu0
    %2030 = vmatprep.mubr.f32.mxu0 0.0
    %2031 = vmatmul.mubr.f32.gmra.mxu0 %v1655
    %v2032 = vpop.f32.mrf.mxu0
    %v2033 = vadd.f32 0.0, %v2032
    %v2034 = vpop.f32.mrf.mxu0
    %2035 = vmatprep.mubr.f32.mxu0 0.0
    %2036 = vmatmul.mubr.f32.gmra.mxu0 %v1658
    %v2037 = vpop.f32.mrf.mxu0
    %v2038 = vadd.f32 0.0, %v2037
    %v2039 = vpop.f32.mrf.mxu0
    %2040 = vmatprep.mubr.f32.mxu0 0.0
    %2041 = vmatmul.mubr.f32.gmra.mxu0 %v1661
    %v2042 = vpop.f32.mrf.mxu0
    %v2043 = vadd.f32 0.0, %v2042
    %v2044 = vpop.f32.mrf.mxu0
    %2045 = vmatprep.mubr.f32.mxu0 0.0
    %2046 = vmatmul.mubr.f32.gmra.mxu0 %v1664
    %v2047 = vpop.f32.mrf.mxu0
    %v2048 = vadd.f32 0.0, %v2047
    %v2049 = vpop.f32.mrf.mxu0
    %2050 = vdwg.mxu0
    %v2052 = vsel %vm1473, %v1409, 0
    %v2055 = vsel %vm1473, %v1410, 0
    %v2058 = vsel %vm1473, %v1411, 0
    %v2061 = vsel %vm1473, %v1412, 0
    %v2064 = vsel %vm1473, %v1413, 0
    %v2067 = vsel %vm1473, %v1414, 0
    %v2070 = vsel %vm1473, %v1415, 0
    %v2073 = vsel %vm1473, %v1416, 0
    %v2076 = vsel %vm1473, %v1417, 0
    %v2079 = vsel %vm1473, %v1418, 0
    %v2082 = vsel %vm1473, %v1419, 0
    %v2085 = vsel %vm1473, %v1420, 0
    %v2088 = vsel %vm1473, %v1421, 0
    %v2091 = vsel %vm1473, %v1422, 0
    %v2094 = vsel %vm1473, %v1423, 0
    %v2097 = vsel %vm1473, %v1424, 0
    %v2100 = vsel %vm1473, %v1425, 0
    %v2103 = vsel %vm1473, %v1426, 0
    %v2106 = vsel %vm1473, %v1427, 0
    %v2109 = vsel %vm1473, %v1428, 0
    %v2112 = vsel %vm1473, %v1429, 0
    %v2115 = vsel %vm1473, %v1430, 0
    %v2118 = vsel %vm1473, %v1431, 0
    %v2121 = vsel %vm1473, %v1432, 0
    %v2124 = vsel %vm1473, %v1433, 0
    %v2127 = vsel %vm1473, %v1434, 0
    %v2130 = vsel %vm1473, %v1435, 0
    %v2133 = vsel %vm1473, %v1436, 0
    %v2136 = vsel %vm1473, %v1437, 0
    %v2139 = vsel %vm1473, %v1438, 0
    %v2142 = vsel %vm1473, %v1439, 0
    %v2145 = vsel %vm1473, %v1440, 0
    %v2148 = vsel %vm1473, %v1441, 0
    %v2151 = vsel %vm1473, %v1442, 0
    %v2154 = vsel %vm1473, %v1443, 0
    %v2157 = vsel %vm1473, %v1444, 0
    %v2160 = vsel %vm1473, %v1445, 0
    %v2163 = vsel %vm1473, %v1446, 0
    %v2166 = vsel %vm1473, %v1447, 0
    %v2169 = vsel %vm1473, %v1448, 0
    %v2172 = vsel %vm1473, %v1449, 0
    %v2175 = vsel %vm1473, %v1450, 0
    %v2178 = vsel %vm1473, %v1451, 0
    %v2181 = vsel %vm1473, %v1452, 0
    %v2184 = vsel %vm1473, %v1453, 0
    %v2187 = vsel %vm1473, %v1454, 0
    %v2190 = vsel %vm1473, %v1455, 0
    %v2193 = vsel %vm1473, %v1456, 0
    %v2196 = vsel %vm1473, %v1457, 0
    %v2199 = vsel %vm1473, %v1458, 0
    %v2202 = vsel %vm1473, %v1459, 0
    %v2205 = vsel %vm1473, %v1460, 0
    %v2208 = vsel %vm1473, %v1461, 0
    %v2211 = vsel %vm1473, %v1462, 0
    %v2214 = vsel %vm1473, %v1463, 0
    %v2217 = vsel %vm1473, %v1464, 0
    %v2220 = vsel %vm1473, %v1465, 0
    %v2223 = vsel %vm1473, %v1466, 0
    %v2226 = vsel %vm1473, %v1467, 0
    %v2229 = vsel %vm1473, %v1468, 0
    %v2232 = vsel %vm1473, %v1469, 0
    %v2235 = vsel %vm1473, %v1470, 0
    %v2238 = vsel %vm1473, %v1471, 0
    %v2241 = vsel %vm1473, %v1472, 0
    %2243 = vmatprep.subr.mxu0 0.0
    %2244 = vmatpush1.msra.mxu0 0.0
    %2245 = vmatprep.subr.mxu0 0.0
    %2246 = vmatpush1.msra.mxu0 0.0
    %2247 = vmatprep.subr.mxu0 0.0
    %2248 = vmatpush1.msra.mxu0 0.0
    %2249 = vmatprep.subr.mxu0 0.0
    %2250 = vmatpush1.msra.mxu0 0.0
    %2251 = vmatprep.subr.mxu0 0.0
    %2252 = vmatpush1.msra.mxu0 0.0
    %2253 = vmatprep.subr.mxu0 0.0
    %2254 = vmatpush1.msra.mxu0 0.0
    %2255 = vmatprep.subr.mxu0 0.0
    %2256 = vmatpush1.msra.mxu0 0.0
    %2257 = vmatprep.subr.mxu0 0.0
    %2258 = vmatpush1.msra.mxu0 0.0
    %2259 = vmatprep.subr.mxu0 0.0
    %2260 = vmatpush1.msra.mxu0 %v574
    %2261 = vmatprep.subr.mxu0 0.0
    %2262 = vmatpush1.msra.mxu0 %v573
    %2263 = vmatprep.subr.mxu0 0.0
    %2264 = vmatpush1.msra.mxu0 %v572
    %2265 = vmatprep.subr.mxu0 0.0
    %2266 = vmatpush1.msra.mxu0 %v571
    %2267 = vmatprep.subr.mxu0 0.0
    %2268 = vmatpush1.msra.mxu0 %v570
    %2269 = vmatprep.subr.mxu0 0.0
    %2270 = vmatpush1.msra.mxu0 %v569
    %2271 = vmatprep.subr.mxu0 0.0
    %2272 = vmatpush1.msra.mxu0 %v568
    %2273 = vmatprep.subr.mxu0 0.0
    %2274 = vmatpush1.msra.mxu0 %v567
    %2275 = vmatprep.subr.mxu0 0.0
    %2276 = vmatpush2.msra.mxu0 0.0
    %2277 = vmatprep.subr.mxu0 0.0
    %2278 = vmatpush2.msra.mxu0 0.0
    %2279 = vmatprep.subr.mxu0 0.0
    %2280 = vmatpush2.msra.mxu0 0.0
    %2281 = vmatprep.subr.mxu0 0.0
    %2282 = vmatpush2.msra.mxu0 0.0
    %2283 = vmatprep.subr.mxu0 0.0
    %2284 = vmatpush2.msra.mxu0 0.0
    %2285 = vmatprep.subr.mxu0 0.0
    %2286 = vmatpush2.msra.mxu0 0.0
    %2287 = vmatprep.subr.mxu0 0.0
    %2288 = vmatpush2.msra.mxu0 0.0
    %2289 = vmatprep.subr.mxu0 0.0
    %2290 = vmatpush2.msra.mxu0 0.0
    %2291 = vmatprep.subr.mxu0 0.0
    %2292 = vmatpush2.msra.mxu0 0.0
    %2293 = vmatprep.subr.mxu0 0.0
    %2294 = vmatpush2.msra.mxu0 0.0
    %2295 = vmatprep.subr.mxu0 0.0
    %2296 = vmatpush2.msra.mxu0 0.0
    %2297 = vmatprep.subr.mxu0 0.0
    %2298 = vmatpush2.msra.mxu0 0.0
    %2299 = vmatprep.subr.mxu0 0.0
    %2300 = vmatpush2.msra.mxu0 0.0
    %2301 = vmatprep.subr.mxu0 0.0
    %2302 = vmatpush2.msra.mxu0 0.0
    %2303 = vmatprep.subr.mxu0 0.0
    %2304 = vmatpush2.msra.mxu0 0.0
    %2305 = vmatprep.subr.mxu0 0.0
    %2306 = vmatpush2.msra.mxu0 0.0
    %2307 = vmatprep.mubr.f32.mxu0 0.0
    %2308 = vmatmul.mubr.f32.gmra.mxu0 %v2052
    %v2309 = vpop.f32.mrf.mxu0
    %v2310 = vadd.f32 0.0, %v2309
    %v2311 = vpop.f32.mrf.mxu0
    %2312 = vmatprep.mubr.f32.mxu0 0.0
    %2313 = vmatmul.mubr.f32.gmra.mxu0 %v2055
    %v2314 = vpop.f32.mrf.mxu0
    %v2315 = vadd.f32 0.0, %v2314
    %v2316 = vpop.f32.mrf.mxu0
    %2317 = vmatprep.mubr.f32.mxu0 0.0
    %2318 = vmatmul.mubr.f32.gmra.mxu0 %v2058
    %v2319 = vpop.f32.mrf.mxu0
    %v2320 = vadd.f32 0.0, %v2319
    %v2321 = vpop.f32.mrf.mxu0
    %2322 = vmatprep.mubr.f32.mxu0 0.0
    %2323 = vmatmul.mubr.f32.gmra.mxu0 %v2061
    %v2324 = vpop.f32.mrf.mxu0
    %v2325 = vadd.f32 0.0, %v2324
    %v2326 = vpop.f32.mrf.mxu0
    %2327 = vmatprep.mubr.f32.mxu0 0.0
    %2328 = vmatmul.mubr.f32.gmra.mxu0 %v2064
    %v2329 = vpop.f32.mrf.mxu0
    %v2330 = vadd.f32 0.0, %v2329
    %v2331 = vpop.f32.mrf.mxu0
    %2332 = vmatprep.mubr.f32.mxu0 0.0
    %2333 = vmatmul.mubr.f32.gmra.mxu0 %v2067
    %v2334 = vpop.f32.mrf.mxu0
    %v2335 = vadd.f32 0.0, %v2334
    %v2336 = vpop.f32.mrf.mxu0
    %2337 = vmatprep.mubr.f32.mxu0 0.0
    %2338 = vmatmul.mubr.f32.gmra.mxu0 %v2070
    %v2339 = vpop.f32.mrf.mxu0
    %v2340 = vadd.f32 0.0, %v2339
    %v2341 = vpop.f32.mrf.mxu0
    %2342 = vmatprep.mubr.f32.mxu0 0.0
    %2343 = vmatmul.mubr.f32.gmra.mxu0 %v2073
    %v2344 = vpop.f32.mrf.mxu0
    %v2345 = vadd.f32 0.0, %v2344
    %v2346 = vpop.f32.mrf.mxu0
    %2347 = vmatprep.mubr.f32.mxu0 0.0
    %2348 = vmatmul.mubr.f32.gmra.mxu0 %v2076
    %v2349 = vpop.f32.mrf.mxu0
    %v2350 = vadd.f32 0.0, %v2349
    %v2351 = vpop.f32.mrf.mxu0
    %2352 = vmatprep.mubr.f32.mxu0 0.0
    %2353 = vmatmul.mubr.f32.gmra.mxu0 %v2079
    %v2354 = vpop.f32.mrf.mxu0
    %v2355 = vadd.f32 0.0, %v2354
    %v2356 = vpop.f32.mrf.mxu0
    %2357 = vmatprep.mubr.f32.mxu0 0.0
    %2358 = vmatmul.mubr.f32.gmra.mxu0 %v2082
    %v2359 = vpop.f32.mrf.mxu0
    %v2360 = vadd.f32 0.0, %v2359
    %v2361 = vpop.f32.mrf.mxu0
    %2362 = vmatprep.mubr.f32.mxu0 0.0
    %2363 = vmatmul.mubr.f32.gmra.mxu0 %v2085
    %v2364 = vpop.f32.mrf.mxu0
    %v2365 = vadd.f32 0.0, %v2364
    %v2366 = vpop.f32.mrf.mxu0
    %2367 = vmatprep.mubr.f32.mxu0 0.0
    %2368 = vmatmul.mubr.f32.gmra.mxu0 %v2088
    %v2369 = vpop.f32.mrf.mxu0
    %v2370 = vadd.f32 0.0, %v2369
    %v2371 = vpop.f32.mrf.mxu0
    %2372 = vmatprep.mubr.f32.mxu0 0.0
    %2373 = vmatmul.mubr.f32.gmra.mxu0 %v2091
    %v2374 = vpop.f32.mrf.mxu0
    %v2375 = vadd.f32 0.0, %v2374
    %v2376 = vpop.f32.mrf.mxu0
    %2377 = vmatprep.mubr.f32.mxu0 0.0
    %2378 = vmatmul.mubr.f32.gmra.mxu0 %v2094
    %v2379 = vpop.f32.mrf.mxu0
    %v2380 = vadd.f32 0.0, %v2379
    %v2381 = vpop.f32.mrf.mxu0
    %2382 = vmatprep.mubr.f32.mxu0 0.0
    %2383 = vmatmul.mubr.f32.gmra.mxu0 %v2097
    %v2384 = vpop.f32.mrf.mxu0
    %v2385 = vadd.f32 0.0, %v2384
    %v2386 = vpop.f32.mrf.mxu0
    %2387 = vmatprep.mubr.f32.mxu0 0.0
    %2388 = vmatmul.mubr.f32.gmra.mxu0 %v2100
    %v2389 = vpop.f32.mrf.mxu0
    %v2390 = vadd.f32 0.0, %v2389
    %v2391 = vpop.f32.mrf.mxu0
    %2392 = vmatprep.mubr.f32.mxu0 0.0
    %2393 = vmatmul.mubr.f32.gmra.mxu0 %v2103
    %v2394 = vpop.f32.mrf.mxu0
    %v2395 = vadd.f32 0.0, %v2394
    %v2396 = vpop.f32.mrf.mxu0
    %2397 = vmatprep.mubr.f32.mxu0 0.0
    %2398 = vmatmul.mubr.f32.gmra.mxu0 %v2106
    %v2399 = vpop.f32.mrf.mxu0
    %v2400 = vadd.f32 0.0, %v2399
    %v2401 = vpop.f32.mrf.mxu0
    %2402 = vmatprep.mubr.f32.mxu0 0.0
    %2403 = vmatmul.mubr.f32.gmra.mxu0 %v2109
    %v2404 = vpop.f32.mrf.mxu0
    %v2405 = vadd.f32 0.0, %v2404
    %v2406 = vpop.f32.mrf.mxu0
    %2407 = vmatprep.mubr.f32.mxu0 0.0
    %2408 = vmatmul.mubr.f32.gmra.mxu0 %v2112
    %v2409 = vpop.f32.mrf.mxu0
    %v2410 = vadd.f32 0.0, %v2409
    %v2411 = vpop.f32.mrf.mxu0
    %2412 = vmatprep.mubr.f32.mxu0 0.0
    %2413 = vmatmul.mubr.f32.gmra.mxu0 %v2115
    %v2414 = vpop.f32.mrf.mxu0
    %v2415 = vadd.f32 0.0, %v2414
    %v2416 = vpop.f32.mrf.mxu0
    %2417 = vmatprep.mubr.f32.mxu0 0.0
    %2418 = vmatmul.mubr.f32.gmra.mxu0 %v2118
    %v2419 = vpop.f32.mrf.mxu0
    %v2420 = vadd.f32 0.0, %v2419
    %v2421 = vpop.f32.mrf.mxu0
    %2422 = vmatprep.mubr.f32.mxu0 0.0
    %2423 = vmatmul.mubr.f32.gmra.mxu0 %v2121
    %v2424 = vpop.f32.mrf.mxu0
    %v2425 = vadd.f32 0.0, %v2424
    %v2426 = vpop.f32.mrf.mxu0
    %2427 = vmatprep.mubr.f32.mxu0 0.0
    %2428 = vmatmul.mubr.f32.gmra.mxu0 %v2124
    %v2429 = vpop.f32.mrf.mxu0
    %v2430 = vadd.f32 0.0, %v2429
    %v2431 = vpop.f32.mrf.mxu0
    %2432 = vmatprep.mubr.f32.mxu0 0.0
    %2433 = vmatmul.mubr.f32.gmra.mxu0 %v2127
    %v2434 = vpop.f32.mrf.mxu0
    %v2435 = vadd.f32 0.0, %v2434
    %v2436 = vpop.f32.mrf.mxu0
    %2437 = vmatprep.mubr.f32.mxu0 0.0
    %2438 = vmatmul.mubr.f32.gmra.mxu0 %v2130
    %v2439 = vpop.f32.mrf.mxu0
    %v2440 = vadd.f32 0.0, %v2439
    %v2441 = vpop.f32.mrf.mxu0
    %2442 = vmatprep.mubr.f32.mxu0 0.0
    %2443 = vmatmul.mubr.f32.gmra.mxu0 %v2133
    %v2444 = vpop.f32.mrf.mxu0
    %v2445 = vadd.f32 0.0, %v2444
    %v2446 = vpop.f32.mrf.mxu0
    %2447 = vmatprep.mubr.f32.mxu0 0.0
    %2448 = vmatmul.mubr.f32.gmra.mxu0 %v2136
    %v2449 = vpop.f32.mrf.mxu0
    %v2450 = vadd.f32 0.0, %v2449
    %v2451 = vpop.f32.mrf.mxu0
    %2452 = vmatprep.mubr.f32.mxu0 0.0
    %2453 = vmatmul.mubr.f32.gmra.mxu0 %v2139
    %v2454 = vpop.f32.mrf.mxu0
    %v2455 = vadd.f32 0.0, %v2454
    %v2456 = vpop.f32.mrf.mxu0
    %2457 = vmatprep.mubr.f32.mxu0 0.0
    %2458 = vmatmul.mubr.f32.gmra.mxu0 %v2142
    %v2459 = vpop.f32.mrf.mxu0
    %v2460 = vadd.f32 0.0, %v2459
    %v2461 = vpop.f32.mrf.mxu0
    %2462 = vmatprep.mubr.f32.mxu0 0.0
    %2463 = vmatmul.mubr.f32.gmra.mxu0 %v2145
    %v2464 = vpop.f32.mrf.mxu0
    %v2465 = vadd.f32 0.0, %v2464
    %v2466 = vpop.f32.mrf.mxu0
    %2467 = vmatprep.mubr.f32.mxu0 0.0
    %2468 = vmatmul.mubr.f32.gmra.mxu0 %v2148
    %v2469 = vpop.f32.mrf.mxu0
    %v2470 = vadd.f32 0.0, %v2469
    %v2471 = vpop.f32.mrf.mxu0
    %2472 = vmatprep.mubr.f32.mxu0 0.0
    %2473 = vmatmul.mubr.f32.gmra.mxu0 %v2151
    %v2474 = vpop.f32.mrf.mxu0
    %v2475 = vadd.f32 0.0, %v2474
    %v2476 = vpop.f32.mrf.mxu0
    %2477 = vmatprep.mubr.f32.mxu0 0.0
    %2478 = vmatmul.mubr.f32.gmra.mxu0 %v2154
    %v2479 = vpop.f32.mrf.mxu0
    %v2480 = vadd.f32 0.0, %v2479
    %v2481 = vpop.f32.mrf.mxu0
    %2482 = vmatprep.mubr.f32.mxu0 0.0
    %2483 = vmatmul.mubr.f32.gmra.mxu0 %v2157
    %v2484 = vpop.f32.mrf.mxu0
    %v2485 = vadd.f32 0.0, %v2484
    %v2486 = vpop.f32.mrf.mxu0
    %2487 = vmatprep.mubr.f32.mxu0 0.0
    %2488 = vmatmul.mubr.f32.gmra.mxu0 %v2160
    %v2489 = vpop.f32.mrf.mxu0
    %v2490 = vadd.f32 0.0, %v2489
    %v2491 = vpop.f32.mrf.mxu0
    %2492 = vmatprep.mubr.f32.mxu0 0.0
    %2493 = vmatmul.mubr.f32.gmra.mxu0 %v2163
    %v2494 = vpop.f32.mrf.mxu0
    %v2495 = vadd.f32 0.0, %v2494
    %v2496 = vpop.f32.mrf.mxu0
    %2497 = vmatprep.mubr.f32.mxu0 0.0
    %2498 = vmatmul.mubr.f32.gmra.mxu0 %v2166
    %v2499 = vpop.f32.mrf.mxu0
    %v2500 = vadd.f32 0.0, %v2499
    %v2501 = vpop.f32.mrf.mxu0
    %2502 = vmatprep.mubr.f32.mxu0 0.0
    %2503 = vmatmul.mubr.f32.gmra.mxu0 %v2169
    %v2504 = vpop.f32.mrf.mxu0
    %v2505 = vadd.f32 0.0, %v2504
    %v2506 = vpop.f32.mrf.mxu0
    %2507 = vmatprep.mubr.f32.mxu0 0.0
    %2508 = vmatmul.mubr.f32.gmra.mxu0 %v2172
    %v2509 = vpop.f32.mrf.mxu0
    %v2510 = vadd.f32 0.0, %v2509
    %v2511 = vpop.f32.mrf.mxu0
    %2512 = vmatprep.mubr.f32.mxu0 0.0
    %2513 = vmatmul.mubr.f32.gmra.mxu0 %v2175
    %v2514 = vpop.f32.mrf.mxu0
    %v2515 = vadd.f32 0.0, %v2514
    %v2516 = vpop.f32.mrf.mxu0
    %2517 = vmatprep.mubr.f32.mxu0 0.0
    %2518 = vmatmul.mubr.f32.gmra.mxu0 %v2178
    %v2519 = vpop.f32.mrf.mxu0
    %v2520 = vadd.f32 0.0, %v2519
    %v2521 = vpop.f32.mrf.mxu0
    %2522 = vmatprep.mubr.f32.mxu0 0.0
    %2523 = vmatmul.mubr.f32.gmra.mxu0 %v2181
    %v2524 = vpop.f32.mrf.mxu0
    %v2525 = vadd.f32 0.0, %v2524
    %v2526 = vpop.f32.mrf.mxu0
    %2527 = vmatprep.mubr.f32.mxu0 0.0
    %2528 = vmatmul.mubr.f32.gmra.mxu0 %v2184
    %v2529 = vpop.f32.mrf.mxu0
    %v2530 = vadd.f32 0.0, %v2529
    %v2531 = vpop.f32.mrf.mxu0
    %2532 = vmatprep.mubr.f32.mxu0 0.0
    %2533 = vmatmul.mubr.f32.gmra.mxu0 %v2187
    %v2534 = vpop.f32.mrf.mxu0
    %v2535 = vadd.f32 0.0, %v2534
    %v2536 = vpop.f32.mrf.mxu0
    %2537 = vmatprep.mubr.f32.mxu0 0.0
    %2538 = vmatmul.mubr.f32.gmra.mxu0 %v2190
    %v2539 = vpop.f32.mrf.mxu0
    %v2540 = vadd.f32 0.0, %v2539
    %v2541 = vpop.f32.mrf.mxu0
    %2542 = vmatprep.mubr.f32.mxu0 0.0
    %2543 = vmatmul.mubr.f32.gmra.mxu0 %v2193
    %v2544 = vpop.f32.mrf.mxu0
    %v2545 = vadd.f32 0.0, %v2544
    %v2546 = vpop.f32.mrf.mxu0
    %2547 = vmatprep.mubr.f32.mxu0 0.0
    %2548 = vmatmul.mubr.f32.gmra.mxu0 %v2196
    %v2549 = vpop.f32.mrf.mxu0
    %v2550 = vadd.f32 0.0, %v2549
    %v2551 = vpop.f32.mrf.mxu0
    %2552 = vmatprep.mubr.f32.mxu0 0.0
    %2553 = vmatmul.mubr.f32.gmra.mxu0 %v2199
    %v2554 = vpop.f32.mrf.mxu0
    %v2555 = vadd.f32 0.0, %v2554
    %v2556 = vpop.f32.mrf.mxu0
    %2557 = vmatprep.mubr.f32.mxu0 0.0
    %2558 = vmatmul.mubr.f32.gmra.mxu0 %v2202
    %v2559 = vpop.f32.mrf.mxu0
    %v2560 = vadd.f32 0.0, %v2559
    %v2561 = vpop.f32.mrf.mxu0
    %2562 = vmatprep.mubr.f32.mxu0 0.0
    %2563 = vmatmul.mubr.f32.gmra.mxu0 %v2205
    %v2564 = vpop.f32.mrf.mxu0
    %v2565 = vadd.f32 0.0, %v2564
    %v2566 = vpop.f32.mrf.mxu0
    %2567 = vmatprep.mubr.f32.mxu0 0.0
    %2568 = vmatmul.mubr.f32.gmra.mxu0 %v2208
    %v2569 = vpop.f32.mrf.mxu0
    %v2570 = vadd.f32 0.0, %v2569
    %v2571 = vpop.f32.mrf.mxu0
    %2572 = vmatprep.mubr.f32.mxu0 0.0
    %2573 = vmatmul.mubr.f32.gmra.mxu0 %v2211
    %v2574 = vpop.f32.mrf.mxu0
    %v2575 = vadd.f32 0.0, %v2574
    %v2576 = vpop.f32.mrf.mxu0
    %2577 = vmatprep.mubr.f32.mxu0 0.0
    %2578 = vmatmul.mubr.f32.gmra.mxu0 %v2214
    %v2579 = vpop.f32.mrf.mxu0
    %v2580 = vadd.f32 0.0, %v2579
    %v2581 = vpop.f32.mrf.mxu0
    %2582 = vmatprep.mubr.f32.mxu0 0.0
    %2583 = vmatmul.mubr.f32.gmra.mxu0 %v2217
    %v2584 = vpop.f32.mrf.mxu0
    %v2585 = vadd.f32 0.0, %v2584
    %v2586 = vpop.f32.mrf.mxu0
    %2587 = vmatprep.mubr.f32.mxu0 0.0
    %2588 = vmatmul.mubr.f32.gmra.mxu0 %v2220
    %v2589 = vpop.f32.mrf.mxu0
    %v2590 = vadd.f32 0.0, %v2589
    %v2591 = vpop.f32.mrf.mxu0
    %2592 = vmatprep.mubr.f32.mxu0 0.0
    %2593 = vmatmul.mubr.f32.gmra.mxu0 %v2223
    %v2594 = vpop.f32.mrf.mxu0
    %v2595 = vadd.f32 0.0, %v2594
    %v2596 = vpop.f32.mrf.mxu0
    %2597 = vmatprep.mubr.f32.mxu0 0.0
    %2598 = vmatmul.mubr.f32.gmra.mxu0 %v2226
    %v2599 = vpop.f32.mrf.mxu0
    %v2600 = vadd.f32 0.0, %v2599
    %v2601 = vpop.f32.mrf.mxu0
    %2602 = vmatprep.mubr.f32.mxu0 0.0
    %2603 = vmatmul.mubr.f32.gmra.mxu0 %v2229
    %v2604 = vpop.f32.mrf.mxu0
    %v2605 = vadd.f32 0.0, %v2604
    %v2606 = vpop.f32.mrf.mxu0
    %2607 = vmatprep.mubr.f32.mxu0 0.0
    %2608 = vmatmul.mubr.f32.gmra.mxu0 %v2232
    %v2609 = vpop.f32.mrf.mxu0
    %v2610 = vadd.f32 0.0, %v2609
    %v2611 = vpop.f32.mrf.mxu0
    %2612 = vmatprep.mubr.f32.mxu0 0.0
    %2613 = vmatmul.mubr.f32.gmra.mxu0 %v2235
    %v2614 = vpop.f32.mrf.mxu0
    %v2615 = vadd.f32 0.0, %v2614
    %v2616 = vpop.f32.mrf.mxu0
    %2617 = vmatprep.mubr.f32.mxu0 0.0
    %2618 = vmatmul.mubr.f32.gmra.mxu0 %v2238
    %v2619 = vpop.f32.mrf.mxu0
    %v2620 = vadd.f32 0.0, %v2619
    %v2621 = vpop.f32.mrf.mxu0
    %2622 = vmatprep.mubr.f32.mxu0 0.0
    %2623 = vmatmul.mubr.f32.gmra.mxu0 %v2241
    %v2624 = vpop.f32.mrf.mxu0
    %v2625 = vadd.f32 0.0, %v2624
    %v2626 = vpop.f32.mrf.mxu0
    %2627 = vdwg.mxu0
    %v2644 = vcombine.high %v359, %v359
    %v2646 = vunpack.c.l.s4 1966171168
    %v2647 = vunpack.c.0.s8 %v2646
    %v2648 = vlaneseq
    %v2649 = vshrl.u32 %v2648, 7
    %v2650 = vsub.s32 %v2647, %v2649
    %v2651 = vrot.slane %v359, %v2650
    %v2653 = vunpack.c.l.s4 1966171168
    %v2654 = vunpack.c.0.s8 %v2653
    %v2655 = vlaneseq
    %v2656 = vshrl.u32 %v2655, 7
    %v2657 = vsub.s32 %v2654, %v2656
    %v2658 = vrot.slane %v2644, %v2657
    %v2659 = vcombine.high %v2651, %v2651
    %v2660 = vcombine.high %v2658, %v2658
    %v2662 = vunpack.c.l.s4 1966171168
    %v2663 = vunpack.c.0.s8 %v2662
    %v2664 = vlaneseq
    %v2665 = vshrl.u32 %v2664, 7
    %v2666 = vsub.s32 %v2663, %v2665
    %v2667 = vrot.slane %v2651, %v2666
    %v2669 = vunpack.c.l.s4 1966171168
    %v2670 = vunpack.c.0.s8 %v2669
    %v2671 = vlaneseq
    %v2672 = vshrl.u32 %v2671, 7
    %v2673 = vsub.s32 %v2670, %v2672
    %v2674 = vrot.slane %v2658, %v2673
    %v2676 = vunpack.c.l.s4 1966171168
    %v2677 = vunpack.c.0.s8 %v2676
    %v2678 = vlaneseq
    %v2679 = vshrl.u32 %v2678, 7
    %v2680 = vsub.s32 %v2677, %v2679
    %v2681 = vrot.slane %v2659, %v2680
    %v2683 = vunpack.c.l.s4 1966171168
    %v2684 = vunpack.c.0.s8 %v2683
    %v2685 = vlaneseq
    %v2686 = vshrl.u32 %v2685, 7
    %v2687 = vsub.s32 %v2684, %v2686
    %v2688 = vrot.slane %v2660, %v2687
    %v2689 = vcombine.high %v2667, %v2667
    %v2690 = vcombine.high %v2674, %v2674
    %v2691 = vcombine.high %v2681, %v2681
    %v2692 = vcombine.high %v2688, %v2688
    %v2693 = vcombine.high %v360, %v360
    %v2695 = vunpack.c.l.s4 1966171168
    %v2696 = vunpack.c.0.s8 %v2695
    %v2697 = vlaneseq
    %v2698 = vshrl.u32 %v2697, 7
    %v2699 = vsub.s32 %v2696, %v2698
    %v2700 = vrot.slane %v360, %v2699
    %v2702 = vunpack.c.l.s4 1966171168
    %v2703 = vunpack.c.0.s8 %v2702
    %v2704 = vlaneseq
    %v2705 = vshrl.u32 %v2704, 7
    %v2706 = vsub.s32 %v2703, %v2705
    %v2707 = vrot.slane %v2693, %v2706
    %v2708 = vcombine.high %v2700, %v2700
    %v2709 = vcombine.high %v2707, %v2707
    %v2711 = vunpack.c.l.s4 1966171168
    %v2712 = vunpack.c.0.s8 %v2711
    %v2713 = vlaneseq
    %v2714 = vshrl.u32 %v2713, 7
    %v2715 = vsub.s32 %v2712, %v2714
    %v2716 = vrot.slane %v2700, %v2715
    %v2718 = vunpack.c.l.s4 1966171168
    %v2719 = vunpack.c.0.s8 %v2718
    %v2720 = vlaneseq
    %v2721 = vshrl.u32 %v2720, 7
    %v2722 = vsub.s32 %v2719, %v2721
    %v2723 = vrot.slane %v2707, %v2722
    %v2725 = vunpack.c.l.s4 1966171168
    %v2726 = vunpack.c.0.s8 %v2725
    %v2727 = vlaneseq
    %v2728 = vshrl.u32 %v2727, 7
    %v2729 = vsub.s32 %v2726, %v2728
    %v2730 = vrot.slane %v2708, %v2729
    %v2732 = vunpack.c.l.s4 1966171168
    %v2733 = vunpack.c.0.s8 %v2732
    %v2734 = vlaneseq
    %v2735 = vshrl.u32 %v2734, 7
    %v2736 = vsub.s32 %v2733, %v2735
    %v2737 = vrot.slane %v2709, %v2736
    %v2738 = vcombine.high %v2716, %v2716
    %v2739 = vcombine.high %v2723, %v2723
    %v2740 = vcombine.high %v2730, %v2730
    %v2741 = vcombine.high %v2737, %v2737
    %v2742 = vcombine.high %v361, %v361
    %v2744 = vunpack.c.l.s4 1966171168
    %v2745 = vunpack.c.0.s8 %v2744
    %v2746 = vlaneseq
    %v2747 = vshrl.u32 %v2746, 7
    %v2748 = vsub.s32 %v2745, %v2747
    %v2749 = vrot.slane %v361, %v2748
    %v2751 = vunpack.c.l.s4 1966171168
    %v2752 = vunpack.c.0.s8 %v2751
    %v2753 = vlaneseq
    %v2754 = vshrl.u32 %v2753, 7
    %v2755 = vsub.s32 %v2752, %v2754
    %v2756 = vrot.slane %v2742, %v2755
    %v2757 = vcombine.high %v2749, %v2749
    %v2758 = vcombine.high %v2756, %v2756
    %v2760 = vunpack.c.l.s4 1966171168
    %v2761 = vunpack.c.0.s8 %v2760
    %v2762 = vlaneseq
    %v2763 = vshrl.u32 %v2762, 7
    %v2764 = vsub.s32 %v2761, %v2763
    %v2765 = vrot.slane %v2749, %v2764
    %v2767 = vunpack.c.l.s4 1966171168
    %v2768 = vunpack.c.0.s8 %v2767
    %v2769 = vlaneseq
    %v2770 = vshrl.u32 %v2769, 7
    %v2771 = vsub.s32 %v2768, %v2770
    %v2772 = vrot.slane %v2756, %v2771
    %v2774 = vunpack.c.l.s4 1966171168
    %v2775 = vunpack.c.0.s8 %v2774
    %v2776 = vlaneseq
    %v2777 = vshrl.u32 %v2776, 7
    %v2778 = vsub.s32 %v2775, %v2777
    %v2779 = vrot.slane %v2757, %v2778
    %v2781 = vunpack.c.l.s4 1966171168
    %v2782 = vunpack.c.0.s8 %v2781
    %v2783 = vlaneseq
    %v2784 = vshrl.u32 %v2783, 7
    %v2785 = vsub.s32 %v2782, %v2784
    %v2786 = vrot.slane %v2758, %v2785
    %v2787 = vcombine.high %v2765, %v2765
    %v2788 = vcombine.high %v2772, %v2772
    %v2789 = vcombine.high %v2779, %v2779
    %v2790 = vcombine.high %v2786, %v2786
    %v2791 = vcombine.high %v362, %v362
    %v2793 = vunpack.c.l.s4 1966171168
    %v2794 = vunpack.c.0.s8 %v2793
    %v2795 = vlaneseq
    %v2796 = vshrl.u32 %v2795, 7
    %v2797 = vsub.s32 %v2794, %v2796
    %v2798 = vrot.slane %v362, %v2797
    %v2800 = vunpack.c.l.s4 1966171168
    %v2801 = vunpack.c.0.s8 %v2800
    %v2802 = vlaneseq
    %v2803 = vshrl.u32 %v2802, 7
    %v2804 = vsub.s32 %v2801, %v2803
    %v2805 = vrot.slane %v2791, %v2804
    %v2806 = vcombine.high %v2798, %v2798
    %v2807 = vcombine.high %v2805, %v2805
    %v2809 = vunpack.c.l.s4 1966171168
    %v2810 = vunpack.c.0.s8 %v2809
    %v2811 = vlaneseq
    %v2812 = vshrl.u32 %v2811, 7
    %v2813 = vsub.s32 %v2810, %v2812
    %v2814 = vrot.slane %v2798, %v2813
    %v2816 = vunpack.c.l.s4 1966171168
    %v2817 = vunpack.c.0.s8 %v2816
    %v2818 = vlaneseq
    %v2819 = vshrl.u32 %v2818, 7
    %v2820 = vsub.s32 %v2817, %v2819
    %v2821 = vrot.slane %v2805, %v2820
    %v2823 = vunpack.c.l.s4 1966171168
    %v2824 = vunpack.c.0.s8 %v2823
    %v2825 = vlaneseq
    %v2826 = vshrl.u32 %v2825, 7
    %v2827 = vsub.s32 %v2824, %v2826
    %v2828 = vrot.slane %v2806, %v2827
    %v2830 = vunpack.c.l.s4 1966171168
    %v2831 = vunpack.c.0.s8 %v2830
    %v2832 = vlaneseq
    %v2833 = vshrl.u32 %v2832, 7
    %v2834 = vsub.s32 %v2831, %v2833
    %v2835 = vrot.slane %v2807, %v2834
    %v2836 = vcombine.high %v2814, %v2814
    %v2837 = vcombine.high %v2821, %v2821
    %v2838 = vcombine.high %v2828, %v2828
    %v2839 = vcombine.high %v2835, %v2835
    %v2840 = vcombine.high %v363, %v363
    %v2842 = vunpack.c.l.s4 1966171168
    %v2843 = vunpack.c.0.s8 %v2842
    %v2844 = vlaneseq
    %v2845 = vshrl.u32 %v2844, 7
    %v2846 = vsub.s32 %v2843, %v2845
    %v2847 = vrot.slane %v363, %v2846
    %v2849 = vunpack.c.l.s4 1966171168
    %v2850 = vunpack.c.0.s8 %v2849
    %v2851 = vlaneseq
    %v2852 = vshrl.u32 %v2851, 7
    %v2853 = vsub.s32 %v2850, %v2852
    %v2854 = vrot.slane %v2840, %v2853
    %v2855 = vcombine.high %v2847, %v2847
    %v2856 = vcombine.high %v2854, %v2854
    %v2858 = vunpack.c.l.s4 1966171168
    %v2859 = vunpack.c.0.s8 %v2858
    %v2860 = vlaneseq
    %v2861 = vshrl.u32 %v2860, 7
    %v2862 = vsub.s32 %v2859, %v2861
    %v2863 = vrot.slane %v2847, %v2862
    %v2865 = vunpack.c.l.s4 1966171168
    %v2866 = vunpack.c.0.s8 %v2865
    %v2867 = vlaneseq
    %v2868 = vshrl.u32 %v2867, 7
    %v2869 = vsub.s32 %v2866, %v2868
    %v2870 = vrot.slane %v2854, %v2869
    %v2872 = vunpack.c.l.s4 1966171168
    %v2873 = vunpack.c.0.s8 %v2872
    %v2874 = vlaneseq
    %v2875 = vshrl.u32 %v2874, 7
    %v2876 = vsub.s32 %v2873, %v2875
    %v2877 = vrot.slane %v2855, %v2876
    %v2879 = vunpack.c.l.s4 1966171168
    %v2880 = vunpack.c.0.s8 %v2879
    %v2881 = vlaneseq
    %v2882 = vshrl.u32 %v2881, 7
    %v2883 = vsub.s32 %v2880, %v2882
    %v2884 = vrot.slane %v2856, %v2883
    %v2885 = vcombine.high %v2863, %v2863
    %v2886 = vcombine.high %v2870, %v2870
    %v2887 = vcombine.high %v2877, %v2877
    %v2888 = vcombine.high %v2884, %v2884
    %v2889 = vcombine.high %v364, %v364
    %v2891 = vunpack.c.l.s4 1966171168
    %v2892 = vunpack.c.0.s8 %v2891
    %v2893 = vlaneseq
    %v2894 = vshrl.u32 %v2893, 7
    %v2895 = vsub.s32 %v2892, %v2894
    %v2896 = vrot.slane %v364, %v2895
    %v2898 = vunpack.c.l.s4 1966171168
    %v2899 = vunpack.c.0.s8 %v2898
    %v2900 = vlaneseq
    %v2901 = vshrl.u32 %v2900, 7
    %v2902 = vsub.s32 %v2899, %v2901
    %v2903 = vrot.slane %v2889, %v2902
    %v2904 = vcombine.high %v2896, %v2896
    %v2905 = vcombine.high %v2903, %v2903
    %v2907 = vunpack.c.l.s4 1966171168
    %v2908 = vunpack.c.0.s8 %v2907
    %v2909 = vlaneseq
    %v2910 = vshrl.u32 %v2909, 7
    %v2911 = vsub.s32 %v2908, %v2910
    %v2912 = vrot.slane %v2896, %v2911
    %v2914 = vunpack.c.l.s4 1966171168
    %v2915 = vunpack.c.0.s8 %v2914
    %v2916 = vlaneseq
    %v2917 = vshrl.u32 %v2916, 7
    %v2918 = vsub.s32 %v2915, %v2917
    %v2919 = vrot.slane %v2903, %v2918
    %v2921 = vunpack.c.l.s4 1966171168
    %v2922 = vunpack.c.0.s8 %v2921
    %v2923 = vlaneseq
    %v2924 = vshrl.u32 %v2923, 7
    %v2925 = vsub.s32 %v2922, %v2924
    %v2926 = vrot.slane %v2904, %v2925
    %v2928 = vunpack.c.l.s4 1966171168
    %v2929 = vunpack.c.0.s8 %v2928
    %v2930 = vlaneseq
    %v2931 = vshrl.u32 %v2930, 7
    %v2932 = vsub.s32 %v2929, %v2931
    %v2933 = vrot.slane %v2905, %v2932
    %v2934 = vcombine.high %v2912, %v2912
    %v2935 = vcombine.high %v2919, %v2919
    %v2936 = vcombine.high %v2926, %v2926
    %v2937 = vcombine.high %v2933, %v2933
    %v2938 = vcombine.high %v365, %v365
    %v2940 = vunpack.c.l.s4 1966171168
    %v2941 = vunpack.c.0.s8 %v2940
    %v2942 = vlaneseq
    %v2943 = vshrl.u32 %v2942, 7
    %v2944 = vsub.s32 %v2941, %v2943
    %v2945 = vrot.slane %v365, %v2944
    %v2947 = vunpack.c.l.s4 1966171168
    %v2948 = vunpack.c.0.s8 %v2947
    %v2949 = vlaneseq
    %v2950 = vshrl.u32 %v2949, 7
    %v2951 = vsub.s32 %v2948, %v2950
    %v2952 = vrot.slane %v2938, %v2951
    %v2953 = vcombine.high %v2945, %v2945
    %v2954 = vcombine.high %v2952, %v2952
    %v2956 = vunpack.c.l.s4 1966171168
    %v2957 = vunpack.c.0.s8 %v2956
    %v2958 = vlaneseq
    %v2959 = vshrl.u32 %v2958, 7
    %v2960 = vsub.s32 %v2957, %v2959
    %v2961 = vrot.slane %v2945, %v2960
    %v2963 = vunpack.c.l.s4 1966171168
    %v2964 = vunpack.c.0.s8 %v2963
    %v2965 = vlaneseq
    %v2966 = vshrl.u32 %v2965, 7
    %v2967 = vsub.s32 %v2964, %v2966
    %v2968 = vrot.slane %v2952, %v2967
    %v2970 = vunpack.c.l.s4 1966171168
    %v2971 = vunpack.c.0.s8 %v2970
    %v2972 = vlaneseq
    %v2973 = vshrl.u32 %v2972, 7
    %v2974 = vsub.s32 %v2971, %v2973
    %v2975 = vrot.slane %v2953, %v2974
    %v2977 = vunpack.c.l.s4 1966171168
    %v2978 = vunpack.c.0.s8 %v2977
    %v2979 = vlaneseq
    %v2980 = vshrl.u32 %v2979, 7
    %v2981 = vsub.s32 %v2978, %v2980
    %v2982 = vrot.slane %v2954, %v2981
    %v2983 = vcombine.high %v2961, %v2961
    %v2984 = vcombine.high %v2968, %v2968
    %v2985 = vcombine.high %v2975, %v2975
    %v2986 = vcombine.high %v2982, %v2982
    %v2987 = vcombine.high %v366, %v366
    %v2989 = vunpack.c.l.s4 1966171168
    %v2990 = vunpack.c.0.s8 %v2989
    %v2991 = vlaneseq
    %v2992 = vshrl.u32 %v2991, 7
    %v2993 = vsub.s32 %v2990, %v2992
    %v2994 = vrot.slane %v366, %v2993
    %v2996 = vunpack.c.l.s4 1966171168
    %v2997 = vunpack.c.0.s8 %v2996
    %v2998 = vlaneseq
    %v2999 = vshrl.u32 %v2998, 7
    %v3000 = vsub.s32 %v2997, %v2999
    %v3001 = vrot.slane %v2987, %v3000
    %v3002 = vcombine.high %v2994, %v2994
    %v3003 = vcombine.high %v3001, %v3001
    %v3005 = vunpack.c.l.s4 1966171168
    %v3006 = vunpack.c.0.s8 %v3005
    %v3007 = vlaneseq
    %v3008 = vshrl.u32 %v3007, 7
    %v3009 = vsub.s32 %v3006, %v3008
    %v3010 = vrot.slane %v2994, %v3009
    %v3012 = vunpack.c.l.s4 1966171168
    %v3013 = vunpack.c.0.s8 %v3012
    %v3014 = vlaneseq
    %v3015 = vshrl.u32 %v3014, 7
    %v3016 = vsub.s32 %v3013, %v3015
    %v3017 = vrot.slane %v3001, %v3016
    %v3019 = vunpack.c.l.s4 1966171168
    %v3020 = vunpack.c.0.s8 %v3019
    %v3021 = vlaneseq
    %v3022 = vshrl.u32 %v3021, 7
    %v3023 = vsub.s32 %v3020, %v3022
    %v3024 = vrot.slane %v3002, %v3023
    %v3026 = vunpack.c.l.s4 1966171168
    %v3027 = vunpack.c.0.s8 %v3026
    %v3028 = vlaneseq
    %v3029 = vshrl.u32 %v3028, 7
    %v3030 = vsub.s32 %v3027, %v3029
    %v3031 = vrot.slane %v3003, %v3030
    %v3032 = vcombine.high %v3010, %v3010
    %v3033 = vcombine.high %v3017, %v3017
    %v3034 = vcombine.high %v3024, %v3024
    %v3035 = vcombine.high %v3031, %v3031
    %v3036 = vcombine.high %v367, %v367
    %v3038 = vunpack.c.l.s4 1966171168
    %v3039 = vunpack.c.0.s8 %v3038
    %v3040 = vlaneseq
    %v3041 = vshrl.u32 %v3040, 7
    %v3042 = vsub.s32 %v3039, %v3041
    %v3043 = vrot.slane %v367, %v3042
    %v3045 = vunpack.c.l.s4 1966171168
    %v3046 = vunpack.c.0.s8 %v3045
    %v3047 = vlaneseq
    %v3048 = vshrl.u32 %v3047, 7
    %v3049 = vsub.s32 %v3046, %v3048
    %v3050 = vrot.slane %v3036, %v3049
    %v3051 = vcombine.high %v3043, %v3043
    %v3052 = vcombine.high %v3050, %v3050
    %v3054 = vunpack.c.l.s4 1966171168
    %v3055 = vunpack.c.0.s8 %v3054
    %v3056 = vlaneseq
    %v3057 = vshrl.u32 %v3056, 7
    %v3058 = vsub.s32 %v3055, %v3057
    %v3059 = vrot.slane %v3043, %v3058
    %v3061 = vunpack.c.l.s4 1966171168
    %v3062 = vunpack.c.0.s8 %v3061
    %v3063 = vlaneseq
    %v3064 = vshrl.u32 %v3063, 7
    %v3065 = vsub.s32 %v3062, %v3064
    %v3066 = vrot.slane %v3050, %v3065
    %v3068 = vunpack.c.l.s4 1966171168
    %v3069 = vunpack.c.0.s8 %v3068
    %v3070 = vlaneseq
    %v3071 = vshrl.u32 %v3070, 7
    %v3072 = vsub.s32 %v3069, %v3071
    %v3073 = vrot.slane %v3051, %v3072
    %v3075 = vunpack.c.l.s4 1966171168
    %v3076 = vunpack.c.0.s8 %v3075
    %v3077 = vlaneseq
    %v3078 = vshrl.u32 %v3077, 7
    %v3079 = vsub.s32 %v3076, %v3078
    %v3080 = vrot.slane %v3052, %v3079
    %v3081 = vcombine.high %v3059, %v3059
    %v3082 = vcombine.high %v3066, %v3066
    %v3083 = vcombine.high %v3073, %v3073
    %v3084 = vcombine.high %v3080, %v3080
    %v3085 = vcombine.high %v368, %v368
    %v3087 = vunpack.c.l.s4 1966171168
    %v3088 = vunpack.c.0.s8 %v3087
    %v3089 = vlaneseq
    %v3090 = vshrl.u32 %v3089, 7
    %v3091 = vsub.s32 %v3088, %v3090
    %v3092 = vrot.slane %v368, %v3091
    %v3094 = vunpack.c.l.s4 1966171168
    %v3095 = vunpack.c.0.s8 %v3094
    %v3096 = vlaneseq
    %v3097 = vshrl.u32 %v3096, 7
    %v3098 = vsub.s32 %v3095, %v3097
    %v3099 = vrot.slane %v3085, %v3098
    %v3100 = vcombine.high %v3092, %v3092
    %v3101 = vcombine.high %v3099, %v3099
    %v3103 = vunpack.c.l.s4 1966171168
    %v3104 = vunpack.c.0.s8 %v3103
    %v3105 = vlaneseq
    %v3106 = vshrl.u32 %v3105, 7
    %v3107 = vsub.s32 %v3104, %v3106
    %v3108 = vrot.slane %v3092, %v3107
    %v3110 = vunpack.c.l.s4 1966171168
    %v3111 = vunpack.c.0.s8 %v3110
    %v3112 = vlaneseq
    %v3113 = vshrl.u32 %v3112, 7
    %v3114 = vsub.s32 %v3111, %v3113
    %v3115 = vrot.slane %v3099, %v3114
    %v3117 = vunpack.c.l.s4 1966171168
    %v3118 = vunpack.c.0.s8 %v3117
    %v3119 = vlaneseq
    %v3120 = vshrl.u32 %v3119, 7
    %v3121 = vsub.s32 %v3118, %v3120
    %v3122 = vrot.slane %v3100, %v3121
    %v3124 = vunpack.c.l.s4 1966171168
    %v3125 = vunpack.c.0.s8 %v3124
    %v3126 = vlaneseq
    %v3127 = vshrl.u32 %v3126, 7
    %v3128 = vsub.s32 %v3125, %v3127
    %v3129 = vrot.slane %v3101, %v3128
    %v3130 = vcombine.high %v3108, %v3108
    %v3131 = vcombine.high %v3115, %v3115
    %v3132 = vcombine.high %v3122, %v3122
    %v3133 = vcombine.high %v3129, %v3129
    %v3134 = vcombine.high %v369, %v369
    %v3136 = vunpack.c.l.s4 1966171168
    %v3137 = vunpack.c.0.s8 %v3136
    %v3138 = vlaneseq
    %v3139 = vshrl.u32 %v3138, 7
    %v3140 = vsub.s32 %v3137, %v3139
    %v3141 = vrot.slane %v369, %v3140
    %v3143 = vunpack.c.l.s4 1966171168
    %v3144 = vunpack.c.0.s8 %v3143
    %v3145 = vlaneseq
    %v3146 = vshrl.u32 %v3145, 7
    %v3147 = vsub.s32 %v3144, %v3146
    %v3148 = vrot.slane %v3134, %v3147
    %v3149 = vcombine.high %v3141, %v3141
    %v3150 = vcombine.high %v3148, %v3148
    %v3152 = vunpack.c.l.s4 1966171168
    %v3153 = vunpack.c.0.s8 %v3152
    %v3154 = vlaneseq
    %v3155 = vshrl.u32 %v3154, 7
    %v3156 = vsub.s32 %v3153, %v3155
    %v3157 = vrot.slane %v3141, %v3156
    %v3159 = vunpack.c.l.s4 1966171168
    %v3160 = vunpack.c.0.s8 %v3159
    %v3161 = vlaneseq
    %v3162 = vshrl.u32 %v3161, 7
    %v3163 = vsub.s32 %v3160, %v3162
    %v3164 = vrot.slane %v3148, %v3163
    %v3166 = vunpack.c.l.s4 1966171168
    %v3167 = vunpack.c.0.s8 %v3166
    %v3168 = vlaneseq
    %v3169 = vshrl.u32 %v3168, 7
    %v3170 = vsub.s32 %v3167, %v3169
    %v3171 = vrot.slane %v3149, %v3170
    %v3173 = vunpack.c.l.s4 1966171168
    %v3174 = vunpack.c.0.s8 %v3173
    %v3175 = vlaneseq
    %v3176 = vshrl.u32 %v3175, 7
    %v3177 = vsub.s32 %v3174, %v3176
    %v3178 = vrot.slane %v3150, %v3177
    %v3179 = vcombine.high %v3157, %v3157
    %v3180 = vcombine.high %v3164, %v3164
    %v3181 = vcombine.high %v3171, %v3171
    %v3182 = vcombine.high %v3178, %v3178
    %v3183 = vcombine.high %v370, %v370
    %v3185 = vunpack.c.l.s4 1966171168
    %v3186 = vunpack.c.0.s8 %v3185
    %v3187 = vlaneseq
    %v3188 = vshrl.u32 %v3187, 7
    %v3189 = vsub.s32 %v3186, %v3188
    %v3190 = vrot.slane %v370, %v3189
    %v3192 = vunpack.c.l.s4 1966171168
    %v3193 = vunpack.c.0.s8 %v3192
    %v3194 = vlaneseq
    %v3195 = vshrl.u32 %v3194, 7
    %v3196 = vsub.s32 %v3193, %v3195
    %v3197 = vrot.slane %v3183, %v3196
    %v3198 = vcombine.high %v3190, %v3190
    %v3199 = vcombine.high %v3197, %v3197
    %v3201 = vunpack.c.l.s4 1966171168
    %v3202 = vunpack.c.0.s8 %v3201
    %v3203 = vlaneseq
    %v3204 = vshrl.u32 %v3203, 7
    %v3205 = vsub.s32 %v3202, %v3204
    %v3206 = vrot.slane %v3190, %v3205
    %v3208 = vunpack.c.l.s4 1966171168
    %v3209 = vunpack.c.0.s8 %v3208
    %v3210 = vlaneseq
    %v3211 = vshrl.u32 %v3210, 7
    %v3212 = vsub.s32 %v3209, %v3211
    %v3213 = vrot.slane %v3197, %v3212
    %v3215 = vunpack.c.l.s4 1966171168
    %v3216 = vunpack.c.0.s8 %v3215
    %v3217 = vlaneseq
    %v3218 = vshrl.u32 %v3217, 7
    %v3219 = vsub.s32 %v3216, %v3218
    %v3220 = vrot.slane %v3198, %v3219
    %v3222 = vunpack.c.l.s4 1966171168
    %v3223 = vunpack.c.0.s8 %v3222
    %v3224 = vlaneseq
    %v3225 = vshrl.u32 %v3224, 7
    %v3226 = vsub.s32 %v3223, %v3225
    %v3227 = vrot.slane %v3199, %v3226
    %v3228 = vcombine.high %v3206, %v3206
    %v3229 = vcombine.high %v3213, %v3213
    %v3230 = vcombine.high %v3220, %v3220
    %v3231 = vcombine.high %v3227, %v3227
    %v3232 = vcombine.high %v371, %v371
    %v3234 = vunpack.c.l.s4 1966171168
    %v3235 = vunpack.c.0.s8 %v3234
    %v3236 = vlaneseq
    %v3237 = vshrl.u32 %v3236, 7
    %v3238 = vsub.s32 %v3235, %v3237
    %v3239 = vrot.slane %v371, %v3238
    %v3241 = vunpack.c.l.s4 1966171168
    %v3242 = vunpack.c.0.s8 %v3241
    %v3243 = vlaneseq
    %v3244 = vshrl.u32 %v3243, 7
    %v3245 = vsub.s32 %v3242, %v3244
    %v3246 = vrot.slane %v3232, %v3245
    %v3247 = vcombine.high %v3239, %v3239
    %v3248 = vcombine.high %v3246, %v3246
    %v3250 = vunpack.c.l.s4 1966171168
    %v3251 = vunpack.c.0.s8 %v3250
    %v3252 = vlaneseq
    %v3253 = vshrl.u32 %v3252, 7
    %v3254 = vsub.s32 %v3251, %v3253
    %v3255 = vrot.slane %v3239, %v3254
    %v3257 = vunpack.c.l.s4 1966171168
    %v3258 = vunpack.c.0.s8 %v3257
    %v3259 = vlaneseq
    %v3260 = vshrl.u32 %v3259, 7
    %v3261 = vsub.s32 %v3258, %v3260
    %v3262 = vrot.slane %v3246, %v3261
    %v3264 = vunpack.c.l.s4 1966171168
    %v3265 = vunpack.c.0.s8 %v3264
    %v3266 = vlaneseq
    %v3267 = vshrl.u32 %v3266, 7
    %v3268 = vsub.s32 %v3265, %v3267
    %v3269 = vrot.slane %v3247, %v3268
    %v3271 = vunpack.c.l.s4 1966171168
    %v3272 = vunpack.c.0.s8 %v3271
    %v3273 = vlaneseq
    %v3274 = vshrl.u32 %v3273, 7
    %v3275 = vsub.s32 %v3272, %v3274
    %v3276 = vrot.slane %v3248, %v3275
    %v3277 = vcombine.high %v3255, %v3255
    %v3278 = vcombine.high %v3262, %v3262
    %v3279 = vcombine.high %v3269, %v3269
    %v3280 = vcombine.high %v3276, %v3276
    %v3281 = vcombine.high %v372, %v372
    %v3283 = vunpack.c.l.s4 1966171168
    %v3284 = vunpack.c.0.s8 %v3283
    %v3285 = vlaneseq
    %v3286 = vshrl.u32 %v3285, 7
    %v3287 = vsub.s32 %v3284, %v3286
    %v3288 = vrot.slane %v372, %v3287
    %v3290 = vunpack.c.l.s4 1966171168
    %v3291 = vunpack.c.0.s8 %v3290
    %v3292 = vlaneseq
    %v3293 = vshrl.u32 %v3292, 7
    %v3294 = vsub.s32 %v3291, %v3293
    %v3295 = vrot.slane %v3281, %v3294
    %v3296 = vcombine.high %v3288, %v3288
    %v3297 = vcombine.high %v3295, %v3295
    %v3299 = vunpack.c.l.s4 1966171168
    %v3300 = vunpack.c.0.s8 %v3299
    %v3301 = vlaneseq
    %v3302 = vshrl.u32 %v3301, 7
    %v3303 = vsub.s32 %v3300, %v3302
    %v3304 = vrot.slane %v3288, %v3303
    %v3306 = vunpack.c.l.s4 1966171168
    %v3307 = vunpack.c.0.s8 %v3306
    %v3308 = vlaneseq
    %v3309 = vshrl.u32 %v3308, 7
    %v3310 = vsub.s32 %v3307, %v3309
    %v3311 = vrot.slane %v3295, %v3310
    %v3313 = vunpack.c.l.s4 1966171168
    %v3314 = vunpack.c.0.s8 %v3313
    %v3315 = vlaneseq
    %v3316 = vshrl.u32 %v3315, 7
    %v3317 = vsub.s32 %v3314, %v3316
    %v3318 = vrot.slane %v3296, %v3317
    %v3320 = vunpack.c.l.s4 1966171168
    %v3321 = vunpack.c.0.s8 %v3320
    %v3322 = vlaneseq
    %v3323 = vshrl.u32 %v3322, 7
    %v3324 = vsub.s32 %v3321, %v3323
    %v3325 = vrot.slane %v3297, %v3324
    %v3326 = vcombine.high %v3304, %v3304
    %v3327 = vcombine.high %v3311, %v3311
    %v3328 = vcombine.high %v3318, %v3318
    %v3329 = vcombine.high %v3325, %v3325
    %v3330 = vcombine.high %v373, %v373
    %v3332 = vunpack.c.l.s4 1966171168
    %v3333 = vunpack.c.0.s8 %v3332
    %v3334 = vlaneseq
    %v3335 = vshrl.u32 %v3334, 7
    %v3336 = vsub.s32 %v3333, %v3335
    %v3337 = vrot.slane %v373, %v3336
    %v3339 = vunpack.c.l.s4 1966171168
    %v3340 = vunpack.c.0.s8 %v3339
    %v3341 = vlaneseq
    %v3342 = vshrl.u32 %v3341, 7
    %v3343 = vsub.s32 %v3340, %v3342
    %v3344 = vrot.slane %v3330, %v3343
    %v3345 = vcombine.high %v3337, %v3337
    %v3346 = vcombine.high %v3344, %v3344
    %v3348 = vunpack.c.l.s4 1966171168
    %v3349 = vunpack.c.0.s8 %v3348
    %v3350 = vlaneseq
    %v3351 = vshrl.u32 %v3350, 7
    %v3352 = vsub.s32 %v3349, %v3351
    %v3353 = vrot.slane %v3337, %v3352
    %v3355 = vunpack.c.l.s4 1966171168
    %v3356 = vunpack.c.0.s8 %v3355
    %v3357 = vlaneseq
    %v3358 = vshrl.u32 %v3357, 7
    %v3359 = vsub.s32 %v3356, %v3358
    %v3360 = vrot.slane %v3344, %v3359
    %v3362 = vunpack.c.l.s4 1966171168
    %v3363 = vunpack.c.0.s8 %v3362
    %v3364 = vlaneseq
    %v3365 = vshrl.u32 %v3364, 7
    %v3366 = vsub.s32 %v3363, %v3365
    %v3367 = vrot.slane %v3345, %v3366
    %v3369 = vunpack.c.l.s4 1966171168
    %v3370 = vunpack.c.0.s8 %v3369
    %v3371 = vlaneseq
    %v3372 = vshrl.u32 %v3371, 7
    %v3373 = vsub.s32 %v3370, %v3372
    %v3374 = vrot.slane %v3346, %v3373
    %v3375 = vcombine.high %v3353, %v3353
    %v3376 = vcombine.high %v3360, %v3360
    %v3377 = vcombine.high %v3367, %v3367
    %v3378 = vcombine.high %v3374, %v3374
    %v3379 = vcombine.high %v374, %v374
    %v3381 = vunpack.c.l.s4 1966171168
    %v3382 = vunpack.c.0.s8 %v3381
    %v3383 = vlaneseq
    %v3384 = vshrl.u32 %v3383, 7
    %v3385 = vsub.s32 %v3382, %v3384
    %v3386 = vrot.slane %v374, %v3385
    %v3388 = vunpack.c.l.s4 1966171168
    %v3389 = vunpack.c.0.s8 %v3388
    %v3390 = vlaneseq
    %v3391 = vshrl.u32 %v3390, 7
    %v3392 = vsub.s32 %v3389, %v3391
    %v3393 = vrot.slane %v3379, %v3392
    %v3394 = vcombine.high %v3386, %v3386
    %v3395 = vcombine.high %v3393, %v3393
    %v3397 = vunpack.c.l.s4 1966171168
    %v3398 = vunpack.c.0.s8 %v3397
    %v3399 = vlaneseq
    %v3400 = vshrl.u32 %v3399, 7
    %v3401 = vsub.s32 %v3398, %v3400
    %v3402 = vrot.slane %v3386, %v3401
    %v3404 = vunpack.c.l.s4 1966171168
    %v3405 = vunpack.c.0.s8 %v3404
    %v3406 = vlaneseq
    %v3407 = vshrl.u32 %v3406, 7
    %v3408 = vsub.s32 %v3405, %v3407
    %v3409 = vrot.slane %v3393, %v3408
    %v3411 = vunpack.c.l.s4 1966171168
    %v3412 = vunpack.c.0.s8 %v3411
    %v3413 = vlaneseq
    %v3414 = vshrl.u32 %v3413, 7
    %v3415 = vsub.s32 %v3412, %v3414
    %v3416 = vrot.slane %v3394, %v3415
    %v3418 = vunpack.c.l.s4 1966171168
    %v3419 = vunpack.c.0.s8 %v3418
    %v3420 = vlaneseq
    %v3421 = vshrl.u32 %v3420, 7
    %v3422 = vsub.s32 %v3419, %v3421
    %v3423 = vrot.slane %v3395, %v3422
    %v3424 = vcombine.high %v3402, %v3402
    %v3425 = vcombine.high %v3409, %v3409
    %v3426 = vcombine.high %v3416, %v3416
    %v3427 = vcombine.high %v3423, %v3423
    %v3428 = vlaneseq
    %v3429 = vshrl.u32 %v3428, 7
    %v3430 = vsub.s32 0, %v3429
    %v3431 = vrot.slane %v2667, %v3430
    %v3432 = vlaneseq
    %v3433 = vshrl.u32 %v3432, 7
    %v3434 = vsub.s32 0, %v3433
    %v3435 = vrot.slane %v2681, %v3434
    %v3436 = vlaneseq
    %v3437 = vshrl.u32 %v3436, 7
    %v3438 = vsub.s32 0, %v3437
    %v3439 = vrot.slane %v2689, %v3438
    %v3440 = vlaneseq
    %v3441 = vshrl.u32 %v3440, 7
    %v3442 = vsub.s32 0, %v3441
    %v3443 = vrot.slane %v2691, %v3442
    %v3444 = vlaneseq
    %v3445 = vshrl.u32 %v3444, 7
    %v3446 = vsub.s32 0, %v3445
    %v3447 = vrot.slane %v2674, %v3446
    %v3448 = vlaneseq
    %v3449 = vshrl.u32 %v3448, 7
    %v3450 = vsub.s32 0, %v3449
    %v3451 = vrot.slane %v2688, %v3450
    %v3452 = vlaneseq
    %v3453 = vshrl.u32 %v3452, 7
    %v3454 = vsub.s32 0, %v3453
    %v3455 = vrot.slane %v2690, %v3454
    %v3456 = vlaneseq
    %v3457 = vshrl.u32 %v3456, 7
    %v3458 = vsub.s32 0, %v3457
    %v3459 = vrot.slane %v2692, %v3458
    %v3460 = vlaneseq
    %v3461 = vshrl.u32 %v3460, 7
    %v3462 = vsub.s32 0, %v3461
    %v3463 = vrot.slane %v2716, %v3462
    %v3464 = vlaneseq
    %v3465 = vshrl.u32 %v3464, 7
    %v3466 = vsub.s32 0, %v3465
    %v3467 = vrot.slane %v2730, %v3466
    %v3468 = vlaneseq
    %v3469 = vshrl.u32 %v3468, 7
    %v3470 = vsub.s32 0, %v3469
    %v3471 = vrot.slane %v2738, %v3470
    %v3472 = vlaneseq
    %v3473 = vshrl.u32 %v3472, 7
    %v3474 = vsub.s32 0, %v3473
    %v3475 = vrot.slane %v2740, %v3474
    %v3476 = vlaneseq
    %v3477 = vshrl.u32 %v3476, 7
    %v3478 = vsub.s32 0, %v3477
    %v3479 = vrot.slane %v2723, %v3478
    %v3480 = vlaneseq
    %v3481 = vshrl.u32 %v3480, 7
    %v3482 = vsub.s32 0, %v3481
    %v3483 = vrot.slane %v2737, %v3482
    %v3484 = vlaneseq
    %v3485 = vshrl.u32 %v3484, 7
    %v3486 = vsub.s32 0, %v3485
    %v3487 = vrot.slane %v2739, %v3486
    %v3488 = vlaneseq
    %v3489 = vshrl.u32 %v3488, 7
    %v3490 = vsub.s32 0, %v3489
    %v3491 = vrot.slane %v2741, %v3490
    %v3492 = vlaneseq
    %v3493 = vshrl.u32 %v3492, 7
    %v3494 = vsub.s32 0, %v3493
    %v3495 = vrot.slane %v2765, %v3494
    %v3496 = vlaneseq
    %v3497 = vshrl.u32 %v3496, 7
    %v3498 = vsub.s32 0, %v3497
    %v3499 = vrot.slane %v2779, %v3498
    %v3500 = vlaneseq
    %v3501 = vshrl.u32 %v3500, 7
    %v3502 = vsub.s32 0, %v3501
    %v3503 = vrot.slane %v2787, %v3502
    %v3504 = vlaneseq
    %v3505 = vshrl.u32 %v3504, 7
    %v3506 = vsub.s32 0, %v3505
    %v3507 = vrot.slane %v2789, %v3506
    %v3508 = vlaneseq
    %v3509 = vshrl.u32 %v3508, 7
    %v3510 = vsub.s32 0, %v3509
    %v3511 = vrot.slane %v2772, %v3510
    %v3512 = vlaneseq
    %v3513 = vshrl.u32 %v3512, 7
    %v3514 = vsub.s32 0, %v3513
    %v3515 = vrot.slane %v2786, %v3514
    %v3516 = vlaneseq
    %v3517 = vshrl.u32 %v3516, 7
    %v3518 = vsub.s32 0, %v3517
    %v3519 = vrot.slane %v2788, %v3518
    %v3520 = vlaneseq
    %v3521 = vshrl.u32 %v3520, 7
    %v3522 = vsub.s32 0, %v3521
    %v3523 = vrot.slane %v2790, %v3522
    %v3524 = vlaneseq
    %v3525 = vshrl.u32 %v3524, 7
    %v3526 = vsub.s32 0, %v3525
    %v3527 = vrot.slane %v2814, %v3526
    %v3528 = vlaneseq
    %v3529 = vshrl.u32 %v3528, 7
    %v3530 = vsub.s32 0, %v3529
    %v3531 = vrot.slane %v2828, %v3530
    %v3532 = vlaneseq
    %v3533 = vshrl.u32 %v3532, 7
    %v3534 = vsub.s32 0, %v3533
    %v3535 = vrot.slane %v2836, %v3534
    %v3536 = vlaneseq
    %v3537 = vshrl.u32 %v3536, 7
    %v3538 = vsub.s32 0, %v3537
    %v3539 = vrot.slane %v2838, %v3538
    %v3540 = vlaneseq
    %v3541 = vshrl.u32 %v3540, 7
    %v3542 = vsub.s32 0, %v3541
    %v3543 = vrot.slane %v2821, %v3542
    %v3544 = vlaneseq
    %v3545 = vshrl.u32 %v3544, 7
    %v3546 = vsub.s32 0, %v3545
    %v3547 = vrot.slane %v2835, %v3546
    %v3548 = vlaneseq
    %v3549 = vshrl.u32 %v3548, 7
    %v3550 = vsub.s32 0, %v3549
    %v3551 = vrot.slane %v2837, %v3550
    %v3552 = vlaneseq
    %v3553 = vshrl.u32 %v3552, 7
    %v3554 = vsub.s32 0, %v3553
    %v3555 = vrot.slane %v2839, %v3554
    %v3556 = vlaneseq
    %v3557 = vshrl.u32 %v3556, 7
    %v3558 = vsub.s32 0, %v3557
    %v3559 = vrot.slane %v2863, %v3558
    %v3560 = vlaneseq
    %v3561 = vshrl.u32 %v3560, 7
    %v3562 = vsub.s32 0, %v3561
    %v3563 = vrot.slane %v2877, %v3562
    %v3564 = vlaneseq
    %v3565 = vshrl.u32 %v3564, 7
    %v3566 = vsub.s32 0, %v3565
    %v3567 = vrot.slane %v2885, %v3566
    %v3568 = vlaneseq
    %v3569 = vshrl.u32 %v3568, 7
    %v3570 = vsub.s32 0, %v3569
    %v3571 = vrot.slane %v2887, %v3570
    %v3572 = vlaneseq
    %v3573 = vshrl.u32 %v3572, 7
    %v3574 = vsub.s32 0, %v3573
    %v3575 = vrot.slane %v2870, %v3574
    %v3576 = vlaneseq
    %v3577 = vshrl.u32 %v3576, 7
    %v3578 = vsub.s32 0, %v3577
    %v3579 = vrot.slane %v2884, %v3578
    %v3580 = vlaneseq
    %v3581 = vshrl.u32 %v3580, 7
    %v3582 = vsub.s32 0, %v3581
    %v3583 = vrot.slane %v2886, %v3582
    %v3584 = vlaneseq
    %v3585 = vshrl.u32 %v3584, 7
    %v3586 = vsub.s32 0, %v3585
    %v3587 = vrot.slane %v2888, %v3586
    %v3588 = vlaneseq
    %v3589 = vshrl.u32 %v3588, 7
    %v3590 = vsub.s32 0, %v3589
    %v3591 = vrot.slane %v2912, %v3590
    %v3592 = vlaneseq
    %v3593 = vshrl.u32 %v3592, 7
    %v3594 = vsub.s32 0, %v3593
    %v3595 = vrot.slane %v2926, %v3594
    %v3596 = vlaneseq
    %v3597 = vshrl.u32 %v3596, 7
    %v3598 = vsub.s32 0, %v3597
    %v3599 = vrot.slane %v2934, %v3598
    %v3600 = vlaneseq
    %v3601 = vshrl.u32 %v3600, 7
    %v3602 = vsub.s32 0, %v3601
    %v3603 = vrot.slane %v2936, %v3602
    %v3604 = vlaneseq
    %v3605 = vshrl.u32 %v3604, 7
    %v3606 = vsub.s32 0, %v3605
    %v3607 = vrot.slane %v2919, %v3606
    %v3608 = vlaneseq
    %v3609 = vshrl.u32 %v3608, 7
    %v3610 = vsub.s32 0, %v3609
    %v3611 = vrot.slane %v2933, %v3610
    %v3612 = vlaneseq
    %v3613 = vshrl.u32 %v3612, 7
    %v3614 = vsub.s32 0, %v3613
    %v3615 = vrot.slane %v2935, %v3614
    %v3616 = vlaneseq
    %v3617 = vshrl.u32 %v3616, 7
    %v3618 = vsub.s32 0, %v3617
    %v3619 = vrot.slane %v2937, %v3618
    %v3620 = vlaneseq
    %v3621 = vshrl.u32 %v3620, 7
    %v3622 = vsub.s32 0, %v3621
    %v3623 = vrot.slane %v2961, %v3622
    %v3624 = vlaneseq
    %v3625 = vshrl.u32 %v3624, 7
    %v3626 = vsub.s32 0, %v3625
    %v3627 = vrot.slane %v2975, %v3626
    %v3628 = vlaneseq
    %v3629 = vshrl.u32 %v3628, 7
    %v3630 = vsub.s32 0, %v3629
    %v3631 = vrot.slane %v2983, %v3630
    %v3632 = vlaneseq
    %v3633 = vshrl.u32 %v3632, 7
    %v3634 = vsub.s32 0, %v3633
    %v3635 = vrot.slane %v2985, %v3634
    %v3636 = vlaneseq
    %v3637 = vshrl.u32 %v3636, 7
    %v3638 = vsub.s32 0, %v3637
    %v3639 = vrot.slane %v2968, %v3638
    %v3640 = vlaneseq
    %v3641 = vshrl.u32 %v3640, 7
    %v3642 = vsub.s32 0, %v3641
    %v3643 = vrot.slane %v2982, %v3642
    %v3644 = vlaneseq
    %v3645 = vshrl.u32 %v3644, 7
    %v3646 = vsub.s32 0, %v3645
    %v3647 = vrot.slane %v2984, %v3646
    %v3648 = vlaneseq
    %v3649 = vshrl.u32 %v3648, 7
    %v3650 = vsub.s32 0, %v3649
    %v3651 = vrot.slane %v2986, %v3650
    %v3652 = vlaneseq
    %v3653 = vshrl.u32 %v3652, 7
    %v3654 = vsub.s32 0, %v3653
    %v3655 = vrot.slane %v3010, %v3654
    %v3656 = vlaneseq
    %v3657 = vshrl.u32 %v3656, 7
    %v3658 = vsub.s32 0, %v3657
    %v3659 = vrot.slane %v3024, %v3658
    %v3660 = vlaneseq
    %v3661 = vshrl.u32 %v3660, 7
    %v3662 = vsub.s32 0, %v3661
    %v3663 = vrot.slane %v3032, %v3662
    %v3664 = vlaneseq
    %v3665 = vshrl.u32 %v3664, 7
    %v3666 = vsub.s32 0, %v3665
    %v3667 = vrot.slane %v3034, %v3666
    %v3668 = vlaneseq
    %v3669 = vshrl.u32 %v3668, 7
    %v3670 = vsub.s32 0, %v3669
    %v3671 = vrot.slane %v3017, %v3670
    %v3672 = vlaneseq
    %v3673 = vshrl.u32 %v3672, 7
    %v3674 = vsub.s32 0, %v3673
    %v3675 = vrot.slane %v3031, %v3674
    %v3676 = vlaneseq
    %v3677 = vshrl.u32 %v3676, 7
    %v3678 = vsub.s32 0, %v3677
    %v3679 = vrot.slane %v3033, %v3678
    %v3680 = vlaneseq
    %v3681 = vshrl.u32 %v3680, 7
    %v3682 = vsub.s32 0, %v3681
    %v3683 = vrot.slane %v3035, %v3682
    %v3684 = vlaneseq
    %v3685 = vshrl.u32 %v3684, 7
    %v3686 = vsub.s32 0, %v3685
    %v3687 = vrot.slane %v3059, %v3686
    %v3688 = vlaneseq
    %v3689 = vshrl.u32 %v3688, 7
    %v3690 = vsub.s32 0, %v3689
    %v3691 = vrot.slane %v3073, %v3690
    %v3692 = vlaneseq
    %v3693 = vshrl.u32 %v3692, 7
    %v3694 = vsub.s32 0, %v3693
    %v3695 = vrot.slane %v3081, %v3694
    %v3696 = vlaneseq
    %v3697 = vshrl.u32 %v3696, 7
    %v3698 = vsub.s32 0, %v3697
    %v3699 = vrot.slane %v3083, %v3698
    %v3700 = vlaneseq
    %v3701 = vshrl.u32 %v3700, 7
    %v3702 = vsub.s32 0, %v3701
    %v3703 = vrot.slane %v3066, %v3702
    %v3704 = vlaneseq
    %v3705 = vshrl.u32 %v3704, 7
    %v3706 = vsub.s32 0, %v3705
    %v3707 = vrot.slane %v3080, %v3706
    %v3708 = vlaneseq
    %v3709 = vshrl.u32 %v3708, 7
    %v3710 = vsub.s32 0, %v3709
    %v3711 = vrot.slane %v3082, %v3710
    %v3712 = vlaneseq
    %v3713 = vshrl.u32 %v3712, 7
    %v3714 = vsub.s32 0, %v3713
    %v3715 = vrot.slane %v3084, %v3714
    %v3716 = vlaneseq
    %v3717 = vshrl.u32 %v3716, 7
    %v3718 = vsub.s32 0, %v3717
    %v3719 = vrot.slane %v3108, %v3718
    %v3720 = vlaneseq
    %v3721 = vshrl.u32 %v3720, 7
    %v3722 = vsub.s32 0, %v3721
    %v3723 = vrot.slane %v3122, %v3722
    %v3724 = vlaneseq
    %v3725 = vshrl.u32 %v3724, 7
    %v3726 = vsub.s32 0, %v3725
    %v3727 = vrot.slane %v3130, %v3726
    %v3728 = vlaneseq
    %v3729 = vshrl.u32 %v3728, 7
    %v3730 = vsub.s32 0, %v3729
    %v3731 = vrot.slane %v3132, %v3730
    %v3732 = vlaneseq
    %v3733 = vshrl.u32 %v3732, 7
    %v3734 = vsub.s32 0, %v3733
    %v3735 = vrot.slane %v3115, %v3734
    %v3736 = vlaneseq
    %v3737 = vshrl.u32 %v3736, 7
    %v3738 = vsub.s32 0, %v3737
    %v3739 = vrot.slane %v3129, %v3738
    %v3740 = vlaneseq
    %v3741 = vshrl.u32 %v3740, 7
    %v3742 = vsub.s32 0, %v3741
    %v3743 = vrot.slane %v3131, %v3742
    %v3744 = vlaneseq
    %v3745 = vshrl.u32 %v3744, 7
    %v3746 = vsub.s32 0, %v3745
    %v3747 = vrot.slane %v3133, %v3746
    %v3748 = vlaneseq
    %v3749 = vshrl.u32 %v3748, 7
    %v3750 = vsub.s32 0, %v3749
    %v3751 = vrot.slane %v3157, %v3750
    %v3752 = vlaneseq
    %v3753 = vshrl.u32 %v3752, 7
    %v3754 = vsub.s32 0, %v3753
    %v3755 = vrot.slane %v3171, %v3754
    %v3756 = vlaneseq
    %v3757 = vshrl.u32 %v3756, 7
    %v3758 = vsub.s32 0, %v3757
    %v3759 = vrot.slane %v3179, %v3758
    %v3760 = vlaneseq
    %v3761 = vshrl.u32 %v3760, 7
    %v3762 = vsub.s32 0, %v3761
    %v3763 = vrot.slane %v3181, %v3762
    %v3764 = vlaneseq
    %v3765 = vshrl.u32 %v3764, 7
    %v3766 = vsub.s32 0, %v3765
    %v3767 = vrot.slane %v3164, %v3766
    %v3768 = vlaneseq
    %v3769 = vshrl.u32 %v3768, 7
    %v3770 = vsub.s32 0, %v3769
    %v3771 = vrot.slane %v3178, %v3770
    %v3772 = vlaneseq
    %v3773 = vshrl.u32 %v3772, 7
    %v3774 = vsub.s32 0, %v3773
    %v3775 = vrot.slane %v3180, %v3774
    %v3776 = vlaneseq
    %v3777 = vshrl.u32 %v3776, 7
    %v3778 = vsub.s32 0, %v3777
    %v3779 = vrot.slane %v3182, %v3778
    %v3780 = vlaneseq
    %v3781 = vshrl.u32 %v3780, 7
    %v3782 = vsub.s32 0, %v3781
    %v3783 = vrot.slane %v3206, %v3782
    %v3784 = vlaneseq
    %v3785 = vshrl.u32 %v3784, 7
    %v3786 = vsub.s32 0, %v3785
    %v3787 = vrot.slane %v3220, %v3786
    %v3788 = vlaneseq
    %v3789 = vshrl.u32 %v3788, 7
    %v3790 = vsub.s32 0, %v3789
    %v3791 = vrot.slane %v3228, %v3790
    %v3792 = vlaneseq
    %v3793 = vshrl.u32 %v3792, 7
    %v3794 = vsub.s32 0, %v3793
    %v3795 = vrot.slane %v3230, %v3794
    %v3796 = vlaneseq
    %v3797 = vshrl.u32 %v3796, 7
    %v3798 = vsub.s32 0, %v3797
    %v3799 = vrot.slane %v3213, %v3798
    %v3800 = vlaneseq
    %v3801 = vshrl.u32 %v3800, 7
    %v3802 = vsub.s32 0, %v3801
    %v3803 = vrot.slane %v3227, %v3802
    %v3804 = vlaneseq
    %v3805 = vshrl.u32 %v3804, 7
    %v3806 = vsub.s32 0, %v3805
    %v3807 = vrot.slane %v3229, %v3806
    %v3808 = vlaneseq
    %v3809 = vshrl.u32 %v3808, 7
    %v3810 = vsub.s32 0, %v3809
    %v3811 = vrot.slane %v3231, %v3810
    %v3812 = vlaneseq
    %v3813 = vshrl.u32 %v3812, 7
    %v3814 = vsub.s32 0, %v3813
    %v3815 = vrot.slane %v3255, %v3814
    %v3816 = vlaneseq
    %v3817 = vshrl.u32 %v3816, 7
    %v3818 = vsub.s32 0, %v3817
    %v3819 = vrot.slane %v3269, %v3818
    %v3820 = vlaneseq
    %v3821 = vshrl.u32 %v3820, 7
    %v3822 = vsub.s32 0, %v3821
    %v3823 = vrot.slane %v3277, %v3822
    %v3824 = vlaneseq
    %v3825 = vshrl.u32 %v3824, 7
    %v3826 = vsub.s32 0, %v3825
    %v3827 = vrot.slane %v3279, %v3826
    %v3828 = vlaneseq
    %v3829 = vshrl.u32 %v3828, 7
    %v3830 = vsub.s32 0, %v3829
    %v3831 = vrot.slane %v3262, %v3830
    %v3832 = vlaneseq
    %v3833 = vshrl.u32 %v3832, 7
    %v3834 = vsub.s32 0, %v3833
    %v3835 = vrot.slane %v3276, %v3834
    %v3836 = vlaneseq
    %v3837 = vshrl.u32 %v3836, 7
    %v3838 = vsub.s32 0, %v3837
    %v3839 = vrot.slane %v3278, %v3838
    %v3840 = vlaneseq
    %v3841 = vshrl.u32 %v3840, 7
    %v3842 = vsub.s32 0, %v3841
    %v3843 = vrot.slane %v3280, %v3842
    %v3844 = vlaneseq
    %v3845 = vshrl.u32 %v3844, 7
    %v3846 = vsub.s32 0, %v3845
    %v3847 = vrot.slane %v3304, %v3846
    %v3848 = vlaneseq
    %v3849 = vshrl.u32 %v3848, 7
    %v3850 = vsub.s32 0, %v3849
    %v3851 = vrot.slane %v3318, %v3850
    %v3852 = vlaneseq
    %v3853 = vshrl.u32 %v3852, 7
    %v3854 = vsub.s32 0, %v3853
    %v3855 = vrot.slane %v3326, %v3854
    %v3856 = vlaneseq
    %v3857 = vshrl.u32 %v3856, 7
    %v3858 = vsub.s32 0, %v3857
    %v3859 = vrot.slane %v3328, %v3858
    %v3860 = vlaneseq
    %v3861 = vshrl.u32 %v3860, 7
    %v3862 = vsub.s32 0, %v3861
    %v3863 = vrot.slane %v3311, %v3862
    %v3864 = vlaneseq
    %v3865 = vshrl.u32 %v3864, 7
    %v3866 = vsub.s32 0, %v3865
    %v3867 = vrot.slane %v3325, %v3866
    %v3868 = vlaneseq
    %v3869 = vshrl.u32 %v3868, 7
    %v3870 = vsub.s32 0, %v3869
    %v3871 = vrot.slane %v3327, %v3870
    %v3872 = vlaneseq
    %v3873 = vshrl.u32 %v3872, 7
    %v3874 = vsub.s32 0, %v3873
    %v3875 = vrot.slane %v3329, %v3874
    %v3876 = vlaneseq
    %v3877 = vshrl.u32 %v3876, 7
    %v3878 = vsub.s32 0, %v3877
    %v3879 = vrot.slane %v3353, %v3878
    %v3880 = vlaneseq
    %v3881 = vshrl.u32 %v3880, 7
    %v3882 = vsub.s32 0, %v3881
    %v3883 = vrot.slane %v3367, %v3882
    %v3884 = vlaneseq
    %v3885 = vshrl.u32 %v3884, 7
    %v3886 = vsub.s32 0, %v3885
    %v3887 = vrot.slane %v3375, %v3886
    %v3888 = vlaneseq
    %v3889 = vshrl.u32 %v3888, 7
    %v3890 = vsub.s32 0, %v3889
    %v3891 = vrot.slane %v3377, %v3890
    %v3892 = vlaneseq
    %v3893 = vshrl.u32 %v3892, 7
    %v3894 = vsub.s32 0, %v3893
    %v3895 = vrot.slane %v3360, %v3894
    %v3896 = vlaneseq
    %v3897 = vshrl.u32 %v3896, 7
    %v3898 = vsub.s32 0, %v3897
    %v3899 = vrot.slane %v3374, %v3898
    %v3900 = vlaneseq
    %v3901 = vshrl.u32 %v3900, 7
    %v3902 = vsub.s32 0, %v3901
    %v3903 = vrot.slane %v3376, %v3902
    %v3904 = vlaneseq
    %v3905 = vshrl.u32 %v3904, 7
    %v3906 = vsub.s32 0, %v3905
    %v3907 = vrot.slane %v3378, %v3906
    %v3908 = vlaneseq
    %v3909 = vshrl.u32 %v3908, 7
    %v3910 = vsub.s32 0, %v3909
    %v3911 = vrot.slane %v3402, %v3910
    %v3912 = vlaneseq
    %v3913 = vshrl.u32 %v3912, 7
    %v3914 = vsub.s32 0, %v3913
    %v3915 = vrot.slane %v3416, %v3914
    %v3916 = vlaneseq
    %v3917 = vshrl.u32 %v3916, 7
    %v3918 = vsub.s32 0, %v3917
    %v3919 = vrot.slane %v3424, %v3918
    %v3920 = vlaneseq
    %v3921 = vshrl.u32 %v3920, 7
    %v3922 = vsub.s32 0, %v3921
    %v3923 = vrot.slane %v3426, %v3922
    %v3924 = vlaneseq
    %v3925 = vshrl.u32 %v3924, 7
    %v3926 = vsub.s32 0, %v3925
    %v3927 = vrot.slane %v3409, %v3926
    %v3928 = vlaneseq
    %v3929 = vshrl.u32 %v3928, 7
    %v3930 = vsub.s32 0, %v3929
    %v3931 = vrot.slane %v3423, %v3930
    %v3932 = vlaneseq
    %v3933 = vshrl.u32 %v3932, 7
    %v3934 = vsub.s32 0, %v3933
    %v3935 = vrot.slane %v3425, %v3934
    %v3936 = vlaneseq
    %v3937 = vshrl.u32 %v3936, 7
    %v3938 = vsub.s32 0, %v3937
    %v3939 = vrot.slane %v3427, %v3938
    %v4068 = vsub.f32 %v3431, %v1733
    %v4069 = vsub.f32 %v3435, %v1738
    %v4070 = vsub.f32 %v3439, %v1743
    %v4071 = vsub.f32 %v3443, %v1748
    %v4072 = vsub.f32 %v3447, %v1753
    %v4073 = vsub.f32 %v3451, %v1758
    %v4074 = vsub.f32 %v3455, %v1763
    %v4075 = vsub.f32 %v3459, %v1768
    %v4076 = vsub.f32 %v3463, %v1773
    %v4077 = vsub.f32 %v3467, %v1778
    %v4078 = vsub.f32 %v3471, %v1783
    %v4079 = vsub.f32 %v3475, %v1788
    %v4080 = vsub.f32 %v3479, %v1793
    %v4081 = vsub.f32 %v3483, %v1798
    %v4082 = vsub.f32 %v3487, %v1803
    %v4083 = vsub.f32 %v3491, %v1808
    %v4084 = vsub.f32 %v3495, %v1813
    %v4085 = vsub.f32 %v3499, %v1818
    %v4086 = vsub.f32 %v3503, %v1823
    %v4087 = vsub.f32 %v3507, %v1828
    %v4088 = vsub.f32 %v3511, %v1833
    %v4089 = vsub.f32 %v3515, %v1838
    %v4090 = vsub.f32 %v3519, %v1843
    %v4091 = vsub.f32 %v3523, %v1848
    %v4092 = vsub.f32 %v3527, %v1853
    %v4093 = vsub.f32 %v3531, %v1858
    %v4094 = vsub.f32 %v3535, %v1863
    %v4095 = vsub.f32 %v3539, %v1868
    %v4096 = vsub.f32 %v3543, %v1873
    %v4097 = vsub.f32 %v3547, %v1878
    %v4098 = vsub.f32 %v3551, %v1883
    %v4099 = vsub.f32 %v3555, %v1888
    %v4100 = vsub.f32 %v3559, %v1893
    %v4101 = vsub.f32 %v3563, %v1898
    %v4102 = vsub.f32 %v3567, %v1903
    %v4103 = vsub.f32 %v3571, %v1908
    %v4104 = vsub.f32 %v3575, %v1913
    %v4105 = vsub.f32 %v3579, %v1918
    %v4106 = vsub.f32 %v3583, %v1923
    %v4107 = vsub.f32 %v3587, %v1928
    %v4108 = vsub.f32 %v3591, %v1933
    %v4109 = vsub.f32 %v3595, %v1938
    %v4110 = vsub.f32 %v3599, %v1943
    %v4111 = vsub.f32 %v3603, %v1948
    %v4112 = vsub.f32 %v3607, %v1953
    %v4113 = vsub.f32 %v3611, %v1958
    %v4114 = vsub.f32 %v3615, %v1963
    %v4115 = vsub.f32 %v3619, %v1968
    %v4116 = vsub.f32 %v3623, %v1973
    %v4117 = vsub.f32 %v3627, %v1978
    %v4118 = vsub.f32 %v3631, %v1983
    %v4119 = vsub.f32 %v3635, %v1988
    %v4120 = vsub.f32 %v3639, %v1993
    %v4121 = vsub.f32 %v3643, %v1998
    %v4122 = vsub.f32 %v3647, %v2003
    %v4123 = vsub.f32 %v3651, %v2008
    %v4124 = vsub.f32 %v3655, %v2013
    %v4125 = vsub.f32 %v3659, %v2018
    %v4126 = vsub.f32 %v3663, %v2023
    %v4127 = vsub.f32 %v3667, %v2028
    %v4128 = vsub.f32 %v3671, %v2033
    %v4129 = vsub.f32 %v3675, %v2038
    %v4130 = vsub.f32 %v3679, %v2043
    %v4131 = vsub.f32 %v3683, %v2048
    %v4132 = vsub.f32 %v3687, %v2310
    %v4133 = vsub.f32 %v3691, %v2315
    %v4134 = vsub.f32 %v3695, %v2320
    %v4135 = vsub.f32 %v3699, %v2325
    %v4136 = vsub.f32 %v3703, %v2330
    %v4137 = vsub.f32 %v3707, %v2335
    %v4138 = vsub.f32 %v3711, %v2340
    %v4139 = vsub.f32 %v3715, %v2345
    %v4140 = vsub.f32 %v3719, %v2350
    %v4141 = vsub.f32 %v3723, %v2355
    %v4142 = vsub.f32 %v3727, %v2360
    %v4143 = vsub.f32 %v3731, %v2365
    %v4144 = vsub.f32 %v3735, %v2370
    %v4145 = vsub.f32 %v3739, %v2375
    %v4146 = vsub.f32 %v3743, %v2380
    %v4147 = vsub.f32 %v3747, %v2385
    %v4148 = vsub.f32 %v3751, %v2390
    %v4149 = vsub.f32 %v3755, %v2395
    %v4150 = vsub.f32 %v3759, %v2400
    %v4151 = vsub.f32 %v3763, %v2405
    %v4152 = vsub.f32 %v3767, %v2410
    %v4153 = vsub.f32 %v3771, %v2415
    %v4154 = vsub.f32 %v3775, %v2420
    %v4155 = vsub.f32 %v3779, %v2425
    %v4156 = vsub.f32 %v3783, %v2430
    %v4157 = vsub.f32 %v3787, %v2435
    %v4158 = vsub.f32 %v3791, %v2440
    %v4159 = vsub.f32 %v3795, %v2445
    %v4160 = vsub.f32 %v3799, %v2450
    %v4161 = vsub.f32 %v3803, %v2455
    %v4162 = vsub.f32 %v3807, %v2460
    %v4163 = vsub.f32 %v3811, %v2465
    %v4164 = vsub.f32 %v3815, %v2470
    %v4165 = vsub.f32 %v3819, %v2475
    %v4166 = vsub.f32 %v3823, %v2480
    %v4167 = vsub.f32 %v3827, %v2485
    %v4168 = vsub.f32 %v3831, %v2490
    %v4169 = vsub.f32 %v3835, %v2495
    %v4170 = vsub.f32 %v3839, %v2500
    %v4171 = vsub.f32 %v3843, %v2505
    %v4172 = vsub.f32 %v3847, %v2510
    %v4173 = vsub.f32 %v3851, %v2515
    %v4174 = vsub.f32 %v3855, %v2520
    %v4175 = vsub.f32 %v3859, %v2525
    %v4176 = vsub.f32 %v3863, %v2530
    %v4177 = vsub.f32 %v3867, %v2535
    %v4178 = vsub.f32 %v3871, %v2540
    %v4179 = vsub.f32 %v3875, %v2545
    %v4180 = vsub.f32 %v3879, %v2550
    %v4181 = vsub.f32 %v3883, %v2555
    %v4182 = vsub.f32 %v3887, %v2560
    %v4183 = vsub.f32 %v3891, %v2565
    %v4184 = vsub.f32 %v3895, %v2570
    %v4185 = vsub.f32 %v3899, %v2575
    %v4186 = vsub.f32 %v3903, %v2580
    %v4187 = vsub.f32 %v3907, %v2585
    %v4188 = vsub.f32 %v3911, %v2590
    %v4189 = vsub.f32 %v3915, %v2595
    %v4190 = vsub.f32 %v3919, %v2600
    %v4191 = vsub.f32 %v3923, %v2605
    %v4192 = vsub.f32 %v3927, %v2610
    %v4193 = vsub.f32 %v3931, %v2615
    %v4194 = vsub.f32 %v3935, %v2620
    %v4195 = vsub.f32 %v3939, %v2625
    %v4196 = vadd.f32 %v4068, %v4069
    %v4197 = vadd.f32 %v4196, %v4070
    %v4198 = vadd.f32 %v4197, %v4071
    %v4199 = vadd.f32 %v4198, %v4072
    %v4200 = vadd.f32 %v4199, %v4073
    %v4201 = vadd.f32 %v4200, %v4074
    %v4202 = vadd.f32 %v4201, %v4075
    %v4203 = vadd.f32 %v4202, %v4076
    %v4204 = vadd.f32 %v4203, %v4077
    %v4205 = vadd.f32 %v4204, %v4078
    %v4206 = vadd.f32 %v4205, %v4079
    %v4207 = vadd.f32 %v4206, %v4080
    %v4208 = vadd.f32 %v4207, %v4081
    %v4209 = vadd.f32 %v4208, %v4082
    %v4210 = vadd.f32 %v4209, %v4083
    %v4211 = vadd.f32 %v4210, %v4084
    %v4212 = vadd.f32 %v4211, %v4085
    %v4213 = vadd.f32 %v4212, %v4086
    %v4214 = vadd.f32 %v4213, %v4087
    %v4215 = vadd.f32 %v4214, %v4088
    %v4216 = vadd.f32 %v4215, %v4089
    %v4217 = vadd.f32 %v4216, %v4090
    %v4218 = vadd.f32 %v4217, %v4091
    %v4219 = vadd.f32 %v4218, %v4092
    %v4220 = vadd.f32 %v4219, %v4093
    %v4221 = vadd.f32 %v4220, %v4094
    %v4222 = vadd.f32 %v4221, %v4095
    %v4223 = vadd.f32 %v4222, %v4096
    %v4224 = vadd.f32 %v4223, %v4097
    %v4225 = vadd.f32 %v4224, %v4098
    %v4226 = vadd.f32 %v4225, %v4099
    %v4227 = vadd.f32 %v4226, %v4100
    %v4228 = vadd.f32 %v4227, %v4101
    %v4229 = vadd.f32 %v4228, %v4102
    %v4230 = vadd.f32 %v4229, %v4103
    %v4231 = vadd.f32 %v4230, %v4104
    %v4232 = vadd.f32 %v4231, %v4105
    %v4233 = vadd.f32 %v4232, %v4106
    %v4234 = vadd.f32 %v4233, %v4107
    %v4235 = vadd.f32 %v4234, %v4108
    %v4236 = vadd.f32 %v4235, %v4109
    %v4237 = vadd.f32 %v4236, %v4110
    %v4238 = vadd.f32 %v4237, %v4111
    %v4239 = vadd.f32 %v4238, %v4112
    %v4240 = vadd.f32 %v4239, %v4113
    %v4241 = vadd.f32 %v4240, %v4114
    %v4242 = vadd.f32 %v4241, %v4115
    %v4243 = vadd.f32 %v4242, %v4116
    %v4244 = vadd.f32 %v4243, %v4117
    %v4245 = vadd.f32 %v4244, %v4118
    %v4246 = vadd.f32 %v4245, %v4119
    %v4247 = vadd.f32 %v4246, %v4120
    %v4248 = vadd.f32 %v4247, %v4121
    %v4249 = vadd.f32 %v4248, %v4122
    %v4250 = vadd.f32 %v4249, %v4123
    %v4251 = vadd.f32 %v4250, %v4124
    %v4252 = vadd.f32 %v4251, %v4125
    %v4253 = vadd.f32 %v4252, %v4126
    %v4254 = vadd.f32 %v4253, %v4127
    %v4255 = vadd.f32 %v4254, %v4128
    %v4256 = vadd.f32 %v4255, %v4129
    %v4257 = vadd.f32 %v4256, %v4130
    %v4258 = vadd.f32 %v4257, %v4131
    %v4259 = vadd.f32 %v4258, %v4132
    %v4260 = vadd.f32 %v4259, %v4133
    %v4261 = vadd.f32 %v4260, %v4134
    %v4262 = vadd.f32 %v4261, %v4135
    %v4263 = vadd.f32 %v4262, %v4136
    %v4264 = vadd.f32 %v4263, %v4137
    %v4265 = vadd.f32 %v4264, %v4138
    %v4266 = vadd.f32 %v4265, %v4139
    %v4267 = vadd.f32 %v4266, %v4140
    %v4268 = vadd.f32 %v4267, %v4141
    %v4269 = vadd.f32 %v4268, %v4142
    %v4270 = vadd.f32 %v4269, %v4143
    %v4271 = vadd.f32 %v4270, %v4144
    %v4272 = vadd.f32 %v4271, %v4145
    %v4273 = vadd.f32 %v4272, %v4146
    %v4274 = vadd.f32 %v4273, %v4147
    %v4275 = vadd.f32 %v4274, %v4148
    %v4276 = vadd.f32 %v4275, %v4149
    %v4277 = vadd.f32 %v4276, %v4150
    %v4278 = vadd.f32 %v4277, %v4151
    %v4279 = vadd.f32 %v4278, %v4152
    %v4280 = vadd.f32 %v4279, %v4153
    %v4281 = vadd.f32 %v4280, %v4154
    %v4282 = vadd.f32 %v4281, %v4155
    %v4283 = vadd.f32 %v4282, %v4156
    %v4284 = vadd.f32 %v4283, %v4157
    %v4285 = vadd.f32 %v4284, %v4158
    %v4286 = vadd.f32 %v4285, %v4159
    %v4287 = vadd.f32 %v4286, %v4160
    %v4288 = vadd.f32 %v4287, %v4161
    %v4289 = vadd.f32 %v4288, %v4162
    %v4290 = vadd.f32 %v4289, %v4163
    %v4291 = vadd.f32 %v4290, %v4164
    %v4292 = vadd.f32 %v4291, %v4165
    %v4293 = vadd.f32 %v4292, %v4166
    %v4294 = vadd.f32 %v4293, %v4167
    %v4295 = vadd.f32 %v4294, %v4168
    %v4296 = vadd.f32 %v4295, %v4169
    %v4297 = vadd.f32 %v4296, %v4170
    %v4298 = vadd.f32 %v4297, %v4171
    %v4299 = vadd.f32 %v4298, %v4172
    %v4300 = vadd.f32 %v4299, %v4173
    %v4301 = vadd.f32 %v4300, %v4174
    %v4302 = vadd.f32 %v4301, %v4175
    %v4303 = vadd.f32 %v4302, %v4176
    %v4304 = vadd.f32 %v4303, %v4177
    %v4305 = vadd.f32 %v4304, %v4178
    %v4306 = vadd.f32 %v4305, %v4179
    %v4307 = vadd.f32 %v4306, %v4180
    %v4308 = vadd.f32 %v4307, %v4181
    %v4309 = vadd.f32 %v4308, %v4182
    %v4310 = vadd.f32 %v4309, %v4183
    %v4311 = vadd.f32 %v4310, %v4184
    %v4312 = vadd.f32 %v4311, %v4185
    %v4313 = vadd.f32 %v4312, %v4186
    %v4314 = vadd.f32 %v4313, %v4187
    %v4315 = vadd.f32 %v4314, %v4188
    %v4316 = vadd.f32 %v4315, %v4189
    %v4317 = vadd.f32 %v4316, %v4190
    %v4318 = vadd.f32 %v4317, %v4191
    %v4319 = vadd.f32 %v4318, %v4192
    %v4320 = vadd.f32 %v4319, %v4193
    %v4321 = vadd.f32 %v4320, %v4194
    %v4322 = vadd.f32 %v4321, %v4195
    %v4323 = vrot.slane %v4322, 4
    %v4324 = vadd.f32 %v4322, %v4323
    %v4325 = vrot.slane %v4324, 2
    %v4326 = vadd.f32 %v4324, %v4325
    %v4327 = vrot.slane %v4326, 1
    %v4328 = vadd.f32 %v4326, %v4327
    %v4329 = vrcp.pop 1024.0
    %v4330 = vmul.f32 %v4328, %v4329
    %v4331 = vmul.f32 %v4068, %v4068
    %v4332 = vmul.f32 %v4069, %v4069
    %v4333 = vmul.f32 %v4070, %v4070
    %v4334 = vmul.f32 %v4071, %v4071
    %v4335 = vmul.f32 %v4072, %v4072
    %v4336 = vmul.f32 %v4073, %v4073
    %v4337 = vmul.f32 %v4074, %v4074
    %v4338 = vmul.f32 %v4075, %v4075
    %v4339 = vmul.f32 %v4076, %v4076
    %v4340 = vmul.f32 %v4077, %v4077
    %v4341 = vmul.f32 %v4078, %v4078
    %v4342 = vmul.f32 %v4079, %v4079
    %v4343 = vmul.f32 %v4080, %v4080
    %v4344 = vmul.f32 %v4081, %v4081
    %v4345 = vmul.f32 %v4082, %v4082
    %v4346 = vmul.f32 %v4083, %v4083
    %v4347 = vmul.f32 %v4084, %v4084
    %v4348 = vmul.f32 %v4085, %v4085
    %v4349 = vmul.f32 %v4086, %v4086
    %v4350 = vmul.f32 %v4087, %v4087
    %v4351 = vmul.f32 %v4088, %v4088
    %v4352 = vmul.f32 %v4089, %v4089
    %v4353 = vmul.f32 %v4090, %v4090
    %v4354 = vmul.f32 %v4091, %v4091
    %v4355 = vmul.f32 %v4092, %v4092
    %v4356 = vmul.f32 %v4093, %v4093
    %v4357 = vmul.f32 %v4094, %v4094
    %v4358 = vmul.f32 %v4095, %v4095
    %v4359 = vmul.f32 %v4096, %v4096
    %v4360 = vmul.f32 %v4097, %v4097
    %v4361 = vmul.f32 %v4098, %v4098
    %v4362 = vmul.f32 %v4099, %v4099
    %v4363 = vmul.f32 %v4100, %v4100
    %v4364 = vmul.f32 %v4101, %v4101
    %v4365 = vmul.f32 %v4102, %v4102
    %v4366 = vmul.f32 %v4103, %v4103
    %v4367 = vmul.f32 %v4104, %v4104
    %v4368 = vmul.f32 %v4105, %v4105
    %v4369 = vmul.f32 %v4106, %v4106
    %v4370 = vmul.f32 %v4107, %v4107
    %v4371 = vmul.f32 %v4108, %v4108
    %v4372 = vmul.f32 %v4109, %v4109
    %v4373 = vmul.f32 %v4110, %v4110
    %v4374 = vmul.f32 %v4111, %v4111
    %v4375 = vmul.f32 %v4112, %v4112
    %v4376 = vmul.f32 %v4113, %v4113
    %v4377 = vmul.f32 %v4114, %v4114
    %v4378 = vmul.f32 %v4115, %v4115
    %v4379 = vmul.f32 %v4116, %v4116
    %v4380 = vmul.f32 %v4117, %v4117
    %v4381 = vmul.f32 %v4118, %v4118
    %v4382 = vmul.f32 %v4119, %v4119
    %v4383 = vmul.f32 %v4120, %v4120
    %v4384 = vmul.f32 %v4121, %v4121
    %v4385 = vmul.f32 %v4122, %v4122
    %v4386 = vmul.f32 %v4123, %v4123
    %v4387 = vmul.f32 %v4124, %v4124
    %v4388 = vmul.f32 %v4125, %v4125
    %v4389 = vmul.f32 %v4126, %v4126
    %v4390 = vmul.f32 %v4127, %v4127
    %v4391 = vmul.f32 %v4128, %v4128
    %v4392 = vmul.f32 %v4129, %v4129
    %v4393 = vmul.f32 %v4130, %v4130
    %v4394 = vmul.f32 %v4131, %v4131
    %v4395 = vmul.f32 %v4132, %v4132
    %v4396 = vmul.f32 %v4133, %v4133
    %v4397 = vmul.f32 %v4134, %v4134
    %v4398 = vmul.f32 %v4135, %v4135
    %v4399 = vmul.f32 %v4136, %v4136
    %v4400 = vmul.f32 %v4137, %v4137
    %v4401 = vmul.f32 %v4138, %v4138
    %v4402 = vmul.f32 %v4139, %v4139
    %v4403 = vmul.f32 %v4140, %v4140
    %v4404 = vmul.f32 %v4141, %v4141
    %v4405 = vmul.f32 %v4142, %v4142
    %v4406 = vmul.f32 %v4143, %v4143
    %v4407 = vmul.f32 %v4144, %v4144
    %v4408 = vmul.f32 %v4145, %v4145
    %v4409 = vmul.f32 %v4146, %v4146
    %v4410 = vmul.f32 %v4147, %v4147
    %v4411 = vmul.f32 %v4148, %v4148
    %v4412 = vmul.f32 %v4149, %v4149
    %v4413 = vmul.f32 %v4150, %v4150
    %v4414 = vmul.f32 %v4151, %v4151
    %v4415 = vmul.f32 %v4152, %v4152
    %v4416 = vmul.f32 %v4153, %v4153
    %v4417 = vmul.f32 %v4154, %v4154
    %v4418 = vmul.f32 %v4155, %v4155
    %v4419 = vmul.f32 %v4156, %v4156
    %v4420 = vmul.f32 %v4157, %v4157
    %v4421 = vmul.f32 %v4158, %v4158
    %v4422 = vmul.f32 %v4159, %v4159
    %v4423 = vmul.f32 %v4160, %v4160
    %v4424 = vmul.f32 %v4161, %v4161
    %v4425 = vmul.f32 %v4162, %v4162
    %v4426 = vmul.f32 %v4163, %v4163
    %v4427 = vmul.f32 %v4164, %v4164
    %v4428 = vmul.f32 %v4165, %v4165
    %v4429 = vmul.f32 %v4166, %v4166
    %v4430 = vmul.f32 %v4167, %v4167
    %v4431 = vmul.f32 %v4168, %v4168
    %v4432 = vmul.f32 %v4169, %v4169
    %v4433 = vmul.f32 %v4170, %v4170
    %v4434 = vmul.f32 %v4171, %v4171
    %v4435 = vmul.f32 %v4172, %v4172
    %v4436 = vmul.f32 %v4173, %v4173
    %v4437 = vmul.f32 %v4174, %v4174
    %v4438 = vmul.f32 %v4175, %v4175
    %v4439 = vmul.f32 %v4176, %v4176
    %v4440 = vmul.f32 %v4177, %v4177
    %v4441 = vmul.f32 %v4178, %v4178
    %v4442 = vmul.f32 %v4179, %v4179
    %v4443 = vmul.f32 %v4180, %v4180
    %v4444 = vmul.f32 %v4181, %v4181
    %v4445 = vmul.f32 %v4182, %v4182
    %v4446 = vmul.f32 %v4183, %v4183
    %v4447 = vmul.f32 %v4184, %v4184
    %v4448 = vmul.f32 %v4185, %v4185
    %v4449 = vmul.f32 %v4186, %v4186
    %v4450 = vmul.f32 %v4187, %v4187
    %v4451 = vmul.f32 %v4188, %v4188
    %v4452 = vmul.f32 %v4189, %v4189
    %v4453 = vmul.f32 %v4190, %v4190
    %v4454 = vmul.f32 %v4191, %v4191
    %v4455 = vmul.f32 %v4192, %v4192
    %v4456 = vmul.f32 %v4193, %v4193
    %v4457 = vmul.f32 %v4194, %v4194
    %v4458 = vmul.f32 %v4195, %v4195
    %v4459 = vadd.f32 %v4331, %v4332
    %v4460 = vadd.f32 %v4459, %v4333
    %v4461 = vadd.f32 %v4460, %v4334
    %v4462 = vadd.f32 %v4461, %v4335
    %v4463 = vadd.f32 %v4462, %v4336
    %v4464 = vadd.f32 %v4463, %v4337
    %v4465 = vadd.f32 %v4464, %v4338
    %v4466 = vadd.f32 %v4465, %v4339
    %v4467 = vadd.f32 %v4466, %v4340
    %v4468 = vadd.f32 %v4467, %v4341
    %v4469 = vadd.f32 %v4468, %v4342
    %v4470 = vadd.f32 %v4469, %v4343
    %v4471 = vadd.f32 %v4470, %v4344
    %v4472 = vadd.f32 %v4471, %v4345
    %v4473 = vadd.f32 %v4472, %v4346
    %v4474 = vadd.f32 %v4473, %v4347
    %v4475 = vadd.f32 %v4474, %v4348
    %v4476 = vadd.f32 %v4475, %v4349
    %v4477 = vadd.f32 %v4476, %v4350
    %v4478 = vadd.f32 %v4477, %v4351
    %v4479 = vadd.f32 %v4478, %v4352
    %v4480 = vadd.f32 %v4479, %v4353
    %v4481 = vadd.f32 %v4480, %v4354
    %v4482 = vadd.f32 %v4481, %v4355
    %v4483 = vadd.f32 %v4482, %v4356
    %v4484 = vadd.f32 %v4483, %v4357
    %v4485 = vadd.f32 %v4484, %v4358
    %v4486 = vadd.f32 %v4485, %v4359
    %v4487 = vadd.f32 %v4486, %v4360
    %v4488 = vadd.f32 %v4487, %v4361
    %v4489 = vadd.f32 %v4488, %v4362
    %v4490 = vadd.f32 %v4489, %v4363
    %v4491 = vadd.f32 %v4490, %v4364
    %v4492 = vadd.f32 %v4491, %v4365
    %v4493 = vadd.f32 %v4492, %v4366
    %v4494 = vadd.f32 %v4493, %v4367
    %v4495 = vadd.f32 %v4494, %v4368
    %v4496 = vadd.f32 %v4495, %v4369
    %v4497 = vadd.f32 %v4496, %v4370
    %v4498 = vadd.f32 %v4497, %v4371
    %v4499 = vadd.f32 %v4498, %v4372
    %v4500 = vadd.f32 %v4499, %v4373
    %v4501 = vadd.f32 %v4500, %v4374
    %v4502 = vadd.f32 %v4501, %v4375
    %v4503 = vadd.f32 %v4502, %v4376
    %v4504 = vadd.f32 %v4503, %v4377
    %v4505 = vadd.f32 %v4504, %v4378
    %v4506 = vadd.f32 %v4505, %v4379
    %v4507 = vadd.f32 %v4506, %v4380
    %v4508 = vadd.f32 %v4507, %v4381
    %v4509 = vadd.f32 %v4508, %v4382
    %v4510 = vadd.f32 %v4509, %v4383
    %v4511 = vadd.f32 %v4510, %v4384
    %v4512 = vadd.f32 %v4511, %v4385
    %v4513 = vadd.f32 %v4512, %v4386
    %v4514 = vadd.f32 %v4513, %v4387
    %v4515 = vadd.f32 %v4514, %v4388
    %v4516 = vadd.f32 %v4515, %v4389
    %v4517 = vadd.f32 %v4516, %v4390
    %v4518 = vadd.f32 %v4517, %v4391
    %v4519 = vadd.f32 %v4518, %v4392
    %v4520 = vadd.f32 %v4519, %v4393
    %v4521 = vadd.f32 %v4520, %v4394
    %v4522 = vadd.f32 %v4521, %v4395
    %v4523 = vadd.f32 %v4522, %v4396
    %v4524 = vadd.f32 %v4523, %v4397
    %v4525 = vadd.f32 %v4524, %v4398
    %v4526 = vadd.f32 %v4525, %v4399
    %v4527 = vadd.f32 %v4526, %v4400
    %v4528 = vadd.f32 %v4527, %v4401
    %v4529 = vadd.f32 %v4528, %v4402
    %v4530 = vadd.f32 %v4529, %v4403
    %v4531 = vadd.f32 %v4530, %v4404
    %v4532 = vadd.f32 %v4531, %v4405
    %v4533 = vadd.f32 %v4532, %v4406
    %v4534 = vadd.f32 %v4533, %v4407
    %v4535 = vadd.f32 %v4534, %v4408
    %v4536 = vadd.f32 %v4535, %v4409
    %v4537 = vadd.f32 %v4536, %v4410
    %v4538 = vadd.f32 %v4537, %v4411
    %v4539 = vadd.f32 %v4538, %v4412
    %v4540 = vadd.f32 %v4539, %v4413
    %v4541 = vadd.f32 %v4540, %v4414
    %v4542 = vadd.f32 %v4541, %v4415
    %v4543 = vadd.f32 %v4542, %v4416
    %v4544 = vadd.f32 %v4543, %v4417
    %v4545 = vadd.f32 %v4544, %v4418
    %v4546 = vadd.f32 %v4545, %v4419
    %v4547 = vadd.f32 %v4546, %v4420
    %v4548 = vadd.f32 %v4547, %v4421
    %v4549 = vadd.f32 %v4548, %v4422
    %v4550 = vadd.f32 %v4549, %v4423
    %v4551 = vadd.f32 %v4550, %v4424
    %v4552 = vadd.f32 %v4551, %v4425
    %v4553 = vadd.f32 %v4552, %v4426
    %v4554 = vadd.f32 %v4553, %v4427
    %v4555 = vadd.f32 %v4554, %v4428
    %v4556 = vadd.f32 %v4555, %v4429
    %v4557 = vadd.f32 %v4556, %v4430
    %v4558 = vadd.f32 %v4557, %v4431
    %v4559 = vadd.f32 %v4558, %v4432
    %v4560 = vadd.f32 %v4559, %v4433
    %v4561 = vadd.f32 %v4560, %v4434
    %v4562 = vadd.f32 %v4561, %v4435
    %v4563 = vadd.f32 %v4562, %v4436
    %v4564 = vadd.f32 %v4563, %v4437
    %v4565 = vadd.f32 %v4564, %v4438
    %v4566 = vadd.f32 %v4565, %v4439
    %v4567 = vadd.f32 %v4566, %v4440
    %v4568 = vadd.f32 %v4567, %v4441
    %v4569 = vadd.f32 %v4568, %v4442
    %v4570 = vadd.f32 %v4569, %v4443
    %v4571 = vadd.f32 %v4570, %v4444
    %v4572 = vadd.f32 %v4571, %v4445
    %v4573 = vadd.f32 %v4572, %v4446
    %v4574 = vadd.f32 %v4573, %v4447
    %v4575 = vadd.f32 %v4574, %v4448
    %v4576 = vadd.f32 %v4575, %v4449
    %v4577 = vadd.f32 %v4576, %v4450
    %v4578 = vadd.f32 %v4577, %v4451
    %v4579 = vadd.f32 %v4578, %v4452
    %v4580 = vadd.f32 %v4579, %v4453
    %v4581 = vadd.f32 %v4580, %v4454
    %v4582 = vadd.f32 %v4581, %v4455
    %v4583 = vadd.f32 %v4582, %v4456
    %v4584 = vadd.f32 %v4583, %v4457
    %v4585 = vadd.f32 %v4584, %v4458
    %v4586 = vrot.slane %v4585, 4
    %v4587 = vadd.f32 %v4585, %v4586
    %v4588 = vrot.slane %v4587, 2
    %v4589 = vadd.f32 %v4587, %v4588
    %v4590 = vrot.slane %v4589, 1
    %v4591 = vadd.f32 %v4589, %v4590
    %v4592 = vmul.f32 %v4591, %v4329
    %v4593 = vmul.f32 %v4330, %v4330
    %v4594 = vsub.f32 %v4592, %v4593
    %v4595 = vmax.f32 %v4594, 0.0
    %v4596 = vsub.f32 %v4068, %v4330
    %v4597 = vsub.f32 %v4069, %v4330
    %v4598 = vsub.f32 %v4070, %v4330
    %v4599 = vsub.f32 %v4071, %v4330
    %v4600 = vsub.f32 %v4072, %v4330
    %v4601 = vsub.f32 %v4073, %v4330
    %v4602 = vsub.f32 %v4074, %v4330
    %v4603 = vsub.f32 %v4075, %v4330
    %v4604 = vsub.f32 %v4076, %v4330
    %v4605 = vsub.f32 %v4077, %v4330
    %v4606 = vsub.f32 %v4078, %v4330
    %v4607 = vsub.f32 %v4079, %v4330
    %v4608 = vsub.f32 %v4080, %v4330
    %v4609 = vsub.f32 %v4081, %v4330
    %v4610 = vsub.f32 %v4082, %v4330
    %v4611 = vsub.f32 %v4083, %v4330
    %v4612 = vsub.f32 %v4084, %v4330
    %v4613 = vsub.f32 %v4085, %v4330
    %v4614 = vsub.f32 %v4086, %v4330
    %v4615 = vsub.f32 %v4087, %v4330
    %v4616 = vsub.f32 %v4088, %v4330
    %v4617 = vsub.f32 %v4089, %v4330
    %v4618 = vsub.f32 %v4090, %v4330
    %v4619 = vsub.f32 %v4091, %v4330
    %v4620 = vsub.f32 %v4092, %v4330
    %v4621 = vsub.f32 %v4093, %v4330
    %v4622 = vsub.f32 %v4094, %v4330
    %v4623 = vsub.f32 %v4095, %v4330
    %v4624 = vsub.f32 %v4096, %v4330
    %v4625 = vsub.f32 %v4097, %v4330
    %v4626 = vsub.f32 %v4098, %v4330
    %v4627 = vsub.f32 %v4099, %v4330
    %v4628 = vsub.f32 %v4100, %v4330
    %v4629 = vsub.f32 %v4101, %v4330
    %v4630 = vsub.f32 %v4102, %v4330
    %v4631 = vsub.f32 %v4103, %v4330
    %v4632 = vsub.f32 %v4104, %v4330
    %v4633 = vsub.f32 %v4105, %v4330
    %v4634 = vsub.f32 %v4106, %v4330
    %v4635 = vsub.f32 %v4107, %v4330
    %v4636 = vsub.f32 %v4108, %v4330
    %v4637 = vsub.f32 %v4109, %v4330
    %v4638 = vsub.f32 %v4110, %v4330
    %v4639 = vsub.f32 %v4111, %v4330
    %v4640 = vsub.f32 %v4112, %v4330
    %v4641 = vsub.f32 %v4113, %v4330
    %v4642 = vsub.f32 %v4114, %v4330
    %v4643 = vsub.f32 %v4115, %v4330
    %v4644 = vsub.f32 %v4116, %v4330
    %v4645 = vsub.f32 %v4117, %v4330
    %v4646 = vsub.f32 %v4118, %v4330
    %v4647 = vsub.f32 %v4119, %v4330
    %v4648 = vsub.f32 %v4120, %v4330
    %v4649 = vsub.f32 %v4121, %v4330
    %v4650 = vsub.f32 %v4122, %v4330
    %v4651 = vsub.f32 %v4123, %v4330
    %v4652 = vsub.f32 %v4124, %v4330
    %v4653 = vsub.f32 %v4125, %v4330
    %v4654 = vsub.f32 %v4126, %v4330
    %v4655 = vsub.f32 %v4127, %v4330
    %v4656 = vsub.f32 %v4128, %v4330
    %v4657 = vsub.f32 %v4129, %v4330
    %v4658 = vsub.f32 %v4130, %v4330
    %v4659 = vsub.f32 %v4131, %v4330
    %v4660 = vsub.f32 %v4132, %v4330
    %v4661 = vsub.f32 %v4133, %v4330
    %v4662 = vsub.f32 %v4134, %v4330
    %v4663 = vsub.f32 %v4135, %v4330
    %v4664 = vsub.f32 %v4136, %v4330
    %v4665 = vsub.f32 %v4137, %v4330
    %v4666 = vsub.f32 %v4138, %v4330
    %v4667 = vsub.f32 %v4139, %v4330
    %v4668 = vsub.f32 %v4140, %v4330
    %v4669 = vsub.f32 %v4141, %v4330
    %v4670 = vsub.f32 %v4142, %v4330
    %v4671 = vsub.f32 %v4143, %v4330
    %v4672 = vsub.f32 %v4144, %v4330
    %v4673 = vsub.f32 %v4145, %v4330
    %v4674 = vsub.f32 %v4146, %v4330
    %v4675 = vsub.f32 %v4147, %v4330
    %v4676 = vsub.f32 %v4148, %v4330
    %v4677 = vsub.f32 %v4149, %v4330
    %v4678 = vsub.f32 %v4150, %v4330
    %v4679 = vsub.f32 %v4151, %v4330
    %v4680 = vsub.f32 %v4152, %v4330
    %v4681 = vsub.f32 %v4153, %v4330
    %v4682 = vsub.f32 %v4154, %v4330
    %v4683 = vsub.f32 %v4155, %v4330
    %v4684 = vsub.f32 %v4156, %v4330
    %v4685 = vsub.f32 %v4157, %v4330
    %v4686 = vsub.f32 %v4158, %v4330
    %v4687 = vsub.f32 %v4159, %v4330
    %v4688 = vsub.f32 %v4160, %v4330
    %v4689 = vsub.f32 %v4161, %v4330
    %v4690 = vsub.f32 %v4162, %v4330
    %v4691 = vsub.f32 %v4163, %v4330
    %v4692 = vsub.f32 %v4164, %v4330
    %v4693 = vsub.f32 %v4165, %v4330
    %v4694 = vsub.f32 %v4166, %v4330
    %v4695 = vsub.f32 %v4167, %v4330
    %v4696 = vsub.f32 %v4168, %v4330
    %v4697 = vsub.f32 %v4169, %v4330
    %v4698 = vsub.f32 %v4170, %v4330
    %v4699 = vsub.f32 %v4171, %v4330
    %v4700 = vsub.f32 %v4172, %v4330
    %v4701 = vsub.f32 %v4173, %v4330
    %v4702 = vsub.f32 %v4174, %v4330
    %v4703 = vsub.f32 %v4175, %v4330
    %v4704 = vsub.f32 %v4176, %v4330
    %v4705 = vsub.f32 %v4177, %v4330
    %v4706 = vsub.f32 %v4178, %v4330
    %v4707 = vsub.f32 %v4179, %v4330
    %v4708 = vsub.f32 %v4180, %v4330
    %v4709 = vsub.f32 %v4181, %v4330
    %v4710 = vsub.f32 %v4182, %v4330
    %v4711 = vsub.f32 %v4183, %v4330
    %v4712 = vsub.f32 %v4184, %v4330
    %v4713 = vsub.f32 %v4185, %v4330
    %v4714 = vsub.f32 %v4186, %v4330
    %v4715 = vsub.f32 %v4187, %v4330
    %v4716 = vsub.f32 %v4188, %v4330
    %v4717 = vsub.f32 %v4189, %v4330
    %v4718 = vsub.f32 %v4190, %v4330
    %v4719 = vsub.f32 %v4191, %v4330
    %v4720 = vsub.f32 %v4192, %v4330
    %v4721 = vsub.f32 %v4193, %v4330
    %v4722 = vsub.f32 %v4194, %v4330
    %v4723 = vsub.f32 %v4195, %v4330
    %v4724 = vadd.f32 %v4595, 1e-05
    %v4725 = vrsqrt.pop %v4724
    %v4726 = vmul.f32 %v4596, %v4725
    %v4727 = vmul.f32 %v4597, %v4725
    %v4728 = vmul.f32 %v4598, %v4725
    %v4729 = vmul.f32 %v4599, %v4725
    %v4730 = vmul.f32 %v4600, %v4725
    %v4731 = vmul.f32 %v4601, %v4725
    %v4732 = vmul.f32 %v4602, %v4725
    %v4733 = vmul.f32 %v4603, %v4725
    %v4734 = vmul.f32 %v4604, %v4725
    %v4735 = vmul.f32 %v4605, %v4725
    %v4736 = vmul.f32 %v4606, %v4725
    %v4737 = vmul.f32 %v4607, %v4725
    %v4738 = vmul.f32 %v4608, %v4725
    %v4739 = vmul.f32 %v4609, %v4725
    %v4740 = vmul.f32 %v4610, %v4725
    %v4741 = vmul.f32 %v4611, %v4725
    %v4742 = vmul.f32 %v4612, %v4725
    %v4743 = vmul.f32 %v4613, %v4725
    %v4744 = vmul.f32 %v4614, %v4725
    %v4745 = vmul.f32 %v4615, %v4725
    %v4746 = vmul.f32 %v4616, %v4725
    %v4747 = vmul.f32 %v4617, %v4725
    %v4748 = vmul.f32 %v4618, %v4725
    %v4749 = vmul.f32 %v4619, %v4725
    %v4750 = vmul.f32 %v4620, %v4725
    %v4751 = vmul.f32 %v4621, %v4725
    %v4752 = vmul.f32 %v4622, %v4725
    %v4753 = vmul.f32 %v4623, %v4725
    %v4754 = vmul.f32 %v4624, %v4725
    %v4755 = vmul.f32 %v4625, %v4725
    %v4756 = vmul.f32 %v4626, %v4725
    %v4757 = vmul.f32 %v4627, %v4725
    %v4758 = vmul.f32 %v4628, %v4725
    %v4759 = vmul.f32 %v4629, %v4725
    %v4760 = vmul.f32 %v4630, %v4725
    %v4761 = vmul.f32 %v4631, %v4725
    %v4762 = vmul.f32 %v4632, %v4725
    %v4763 = vmul.f32 %v4633, %v4725
    %v4764 = vmul.f32 %v4634, %v4725
    %v4765 = vmul.f32 %v4635, %v4725
    %v4766 = vmul.f32 %v4636, %v4725
    %v4767 = vmul.f32 %v4637, %v4725
    %v4768 = vmul.f32 %v4638, %v4725
    %v4769 = vmul.f32 %v4639, %v4725
    %v4770 = vmul.f32 %v4640, %v4725
    %v4771 = vmul.f32 %v4641, %v4725
    %v4772 = vmul.f32 %v4642, %v4725
    %v4773 = vmul.f32 %v4643, %v4725
    %v4774 = vmul.f32 %v4644, %v4725
    %v4775 = vmul.f32 %v4645, %v4725
    %v4776 = vmul.f32 %v4646, %v4725
    %v4777 = vmul.f32 %v4647, %v4725
    %v4778 = vmul.f32 %v4648, %v4725
    %v4779 = vmul.f32 %v4649, %v4725
    %v4780 = vmul.f32 %v4650, %v4725
    %v4781 = vmul.f32 %v4651, %v4725
    %v4782 = vmul.f32 %v4652, %v4725
    %v4783 = vmul.f32 %v4653, %v4725
    %v4784 = vmul.f32 %v4654, %v4725
    %v4785 = vmul.f32 %v4655, %v4725
    %v4786 = vmul.f32 %v4656, %v4725
    %v4787 = vmul.f32 %v4657, %v4725
    %v4788 = vmul.f32 %v4658, %v4725
    %v4789 = vmul.f32 %v4659, %v4725
    %v4790 = vmul.f32 %v4660, %v4725
    %v4791 = vmul.f32 %v4661, %v4725
    %v4792 = vmul.f32 %v4662, %v4725
    %v4793 = vmul.f32 %v4663, %v4725
    %v4794 = vmul.f32 %v4664, %v4725
    %v4795 = vmul.f32 %v4665, %v4725
    %v4796 = vmul.f32 %v4666, %v4725
    %v4797 = vmul.f32 %v4667, %v4725
    %v4798 = vmul.f32 %v4668, %v4725
    %v4799 = vmul.f32 %v4669, %v4725
    %v4800 = vmul.f32 %v4670, %v4725
    %v4801 = vmul.f32 %v4671, %v4725
    %v4802 = vmul.f32 %v4672, %v4725
    %v4803 = vmul.f32 %v4673, %v4725
    %v4804 = vmul.f32 %v4674, %v4725
    %v4805 = vmul.f32 %v4675, %v4725
    %v4806 = vmul.f32 %v4676, %v4725
    %v4807 = vmul.f32 %v4677, %v4725
    %v4808 = vmul.f32 %v4678, %v4725
    %v4809 = vmul.f32 %v4679, %v4725
    %v4810 = vmul.f32 %v4680, %v4725
    %v4811 = vmul.f32 %v4681, %v4725
    %v4812 = vmul.f32 %v4682, %v4725
    %v4813 = vmul.f32 %v4683, %v4725
    %v4814 = vmul.f32 %v4684, %v4725
    %v4815 = vmul.f32 %v4685, %v4725
    %v4816 = vmul.f32 %v4686, %v4725
    %v4817 = vmul.f32 %v4687, %v4725
    %v4818 = vmul.f32 %v4688, %v4725
    %v4819 = vmul.f32 %v4689, %v4725
    %v4820 = vmul.f32 %v4690, %v4725
    %v4821 = vmul.f32 %v4691, %v4725
    %v4822 = vmul.f32 %v4692, %v4725
    %v4823 = vmul.f32 %v4693, %v4725
    %v4824 = vmul.f32 %v4694, %v4725
    %v4825 = vmul.f32 %v4695, %v4725
    %v4826 = vmul.f32 %v4696, %v4725
    %v4827 = vmul.f32 %v4697, %v4725
    %v4828 = vmul.f32 %v4698, %v4725
    %v4829 = vmul.f32 %v4699, %v4725
    %v4830 = vmul.f32 %v4700, %v4725
    %v4831 = vmul.f32 %v4701, %v4725
    %v4832 = vmul.f32 %v4702, %v4725
    %v4833 = vmul.f32 %v4703, %v4725
    %v4834 = vmul.f32 %v4704, %v4725
    %v4835 = vmul.f32 %v4705, %v4725
    %v4836 = vmul.f32 %v4706, %v4725
    %v4837 = vmul.f32 %v4707, %v4725
    %v4838 = vmul.f32 %v4708, %v4725
    %v4839 = vmul.f32 %v4709, %v4725
    %v4840 = vmul.f32 %v4710, %v4725
    %v4841 = vmul.f32 %v4711, %v4725
    %v4842 = vmul.f32 %v4712, %v4725
    %v4843 = vmul.f32 %v4713, %v4725
    %v4844 = vmul.f32 %v4714, %v4725
    %v4845 = vmul.f32 %v4715, %v4725
    %v4846 = vmul.f32 %v4716, %v4725
    %v4847 = vmul.f32 %v4717, %v4725
    %v4848 = vmul.f32 %v4718, %v4725
    %v4849 = vmul.f32 %v4719, %v4725
    %v4850 = vmul.f32 %v4720, %v4725
    %v4851 = vmul.f32 %v4721, %v4725
    %v4852 = vmul.f32 %v4722, %v4725
    %v4853 = vmul.f32 %v4723, %v4725
    %v4854 = vld [vmem:[%s8] sm:$0x1]
    %v4856 = vlaneseq
    %v4857 = vshrl.u32 %v4856, 7
    %v4858 = vsub.s32 0, %v4857
    %v4859 = vrot.slane %v4854, %v4858
    %v4861 = vmul.f32 %v4726, %v4859
    %v4862 = vmul.f32 %v4727, %v4859
    %v4863 = vmul.f32 %v4728, %v4859
    %v4864 = vmul.f32 %v4729, %v4859
    %v4865 = vmul.f32 %v4730, %v4859
    %v4866 = vmul.f32 %v4731, %v4859
    %v4867 = vmul.f32 %v4732, %v4859
    %v4868 = vmul.f32 %v4733, %v4859
    %v4869 = vmul.f32 %v4734, %v4859
    %v4870 = vmul.f32 %v4735, %v4859
    %v4871 = vmul.f32 %v4736, %v4859
    %v4872 = vmul.f32 %v4737, %v4859
    %v4873 = vmul.f32 %v4738, %v4859
    %v4874 = vmul.f32 %v4739, %v4859
    %v4875 = vmul.f32 %v4740, %v4859
    %v4876 = vmul.f32 %v4741, %v4859
    %v4877 = vmul.f32 %v4742, %v4859
    %v4878 = vmul.f32 %v4743, %v4859
    %v4879 = vmul.f32 %v4744, %v4859
    %v4880 = vmul.f32 %v4745, %v4859
    %v4881 = vmul.f32 %v4746, %v4859
    %v4882 = vmul.f32 %v4747, %v4859
    %v4883 = vmul.f32 %v4748, %v4859
    %v4884 = vmul.f32 %v4749, %v4859
    %v4885 = vmul.f32 %v4750, %v4859
    %v4886 = vmul.f32 %v4751, %v4859
    %v4887 = vmul.f32 %v4752, %v4859
    %v4888 = vmul.f32 %v4753, %v4859
    %v4889 = vmul.f32 %v4754, %v4859
    %v4890 = vmul.f32 %v4755, %v4859
    %v4891 = vmul.f32 %v4756, %v4859
    %v4892 = vmul.f32 %v4757, %v4859
    %v4893 = vmul.f32 %v4758, %v4859
    %v4894 = vmul.f32 %v4759, %v4859
    %v4895 = vmul.f32 %v4760, %v4859
    %v4896 = vmul.f32 %v4761, %v4859
    %v4897 = vmul.f32 %v4762, %v4859
    %v4898 = vmul.f32 %v4763, %v4859
    %v4899 = vmul.f32 %v4764, %v4859
    %v4900 = vmul.f32 %v4765, %v4859
    %v4901 = vmul.f32 %v4766, %v4859
    %v4902 = vmul.f32 %v4767, %v4859
    %v4903 = vmul.f32 %v4768, %v4859
    %v4904 = vmul.f32 %v4769, %v4859
    %v4905 = vmul.f32 %v4770, %v4859
    %v4906 = vmul.f32 %v4771, %v4859
    %v4907 = vmul.f32 %v4772, %v4859
    %v4908 = vmul.f32 %v4773, %v4859
    %v4909 = vmul.f32 %v4774, %v4859
    %v4910 = vmul.f32 %v4775, %v4859
    %v4911 = vmul.f32 %v4776, %v4859
    %v4912 = vmul.f32 %v4777, %v4859
    %v4913 = vmul.f32 %v4778, %v4859
    %v4914 = vmul.f32 %v4779, %v4859
    %v4915 = vmul.f32 %v4780, %v4859
    %v4916 = vmul.f32 %v4781, %v4859
    %v4917 = vmul.f32 %v4782, %v4859
    %v4918 = vmul.f32 %v4783, %v4859
    %v4919 = vmul.f32 %v4784, %v4859
    %v4920 = vmul.f32 %v4785, %v4859
    %v4921 = vmul.f32 %v4786, %v4859
    %v4922 = vmul.f32 %v4787, %v4859
    %v4923 = vmul.f32 %v4788, %v4859
    %v4924 = vmul.f32 %v4789, %v4859
    %v4925 = vmul.f32 %v4790, %v4859
    %v4926 = vmul.f32 %v4791, %v4859
    %v4927 = vmul.f32 %v4792, %v4859
    %v4928 = vmul.f32 %v4793, %v4859
    %v4929 = vmul.f32 %v4794, %v4859
    %v4930 = vmul.f32 %v4795, %v4859
    %v4931 = vmul.f32 %v4796, %v4859
    %v4932 = vmul.f32 %v4797, %v4859
    %v4933 = vmul.f32 %v4798, %v4859
    %v4934 = vmul.f32 %v4799, %v4859
    %v4935 = vmul.f32 %v4800, %v4859
    %v4936 = vmul.f32 %v4801, %v4859
    %v4937 = vmul.f32 %v4802, %v4859
    %v4938 = vmul.f32 %v4803, %v4859
    %v4939 = vmul.f32 %v4804, %v4859
    %v4940 = vmul.f32 %v4805, %v4859
    %v4941 = vmul.f32 %v4806, %v4859
    %v4942 = vmul.f32 %v4807, %v4859
    %v4943 = vmul.f32 %v4808, %v4859
    %v4944 = vmul.f32 %v4809, %v4859
    %v4945 = vmul.f32 %v4810, %v4859
    %v4946 = vmul.f32 %v4811, %v4859
    %v4947 = vmul.f32 %v4812, %v4859
    %v4948 = vmul.f32 %v4813, %v4859
    %v4949 = vmul.f32 %v4814, %v4859
    %v4950 = vmul.f32 %v4815, %v4859
    %v4951 = vmul.f32 %v4816, %v4859
    %v4952 = vmul.f32 %v4817, %v4859
    %v4953 = vmul.f32 %v4818, %v4859
    %v4954 = vmul.f32 %v4819, %v4859
    %v4955 = vmul.f32 %v4820, %v4859
    %v4956 = vmul.f32 %v4821, %v4859
    %v4957 = vmul.f32 %v4822, %v4859
    %v4958 = vmul.f32 %v4823, %v4859
    %v4959 = vmul.f32 %v4824, %v4859
    %v4960 = vmul.f32 %v4825, %v4859
    %v4961 = vmul.f32 %v4826, %v4859
    %v4962 = vmul.f32 %v4827, %v4859
    %v4963 = vmul.f32 %v4828, %v4859
    %v4964 = vmul.f32 %v4829, %v4859
    %v4965 = vmul.f32 %v4830, %v4859
    %v4966 = vmul.f32 %v4831, %v4859
    %v4967 = vmul.f32 %v4832, %v4859
    %v4968 = vmul.f32 %v4833, %v4859
    %v4969 = vmul.f32 %v4834, %v4859
    %v4970 = vmul.f32 %v4835, %v4859
    %v4971 = vmul.f32 %v4836, %v4859
    %v4972 = vmul.f32 %v4837, %v4859
    %v4973 = vmul.f32 %v4838, %v4859
    %v4974 = vmul.f32 %v4839, %v4859
    %v4975 = vmul.f32 %v4840, %v4859
    %v4976 = vmul.f32 %v4841, %v4859
    %v4977 = vmul.f32 %v4842, %v4859
    %v4978 = vmul.f32 %v4843, %v4859
    %v4979 = vmul.f32 %v4844, %v4859
    %v4980 = vmul.f32 %v4845, %v4859
    %v4981 = vmul.f32 %v4846, %v4859
    %v4982 = vmul.f32 %v4847, %v4859
    %v4983 = vmul.f32 %v4848, %v4859
    %v4984 = vmul.f32 %v4849, %v4859
    %v4985 = vmul.f32 %v4850, %v4859
    %v4986 = vmul.f32 %v4851, %v4859
    %v4987 = vmul.f32 %v4852, %v4859
    %v4988 = vmul.f32 %v4853, %v4859
    %v4989 = vld [vmem:[%s9] sm:$0x1]
    %v4991 = vlaneseq
    %v4992 = vshrl.u32 %v4991, 7
    %v4993 = vsub.s32 0, %v4992
    %v4994 = vrot.slane %v4989, %v4993
    %v4996 = vadd.f32 %v4861, %v4994
    %v4997 = vadd.f32 %v4862, %v4994
    %v4998 = vadd.f32 %v4863, %v4994
    %v4999 = vadd.f32 %v4864, %v4994
    %v5000 = vadd.f32 %v4865, %v4994
    %v5001 = vadd.f32 %v4866, %v4994
    %v5002 = vadd.f32 %v4867, %v4994
    %v5003 = vadd.f32 %v4868, %v4994
    %v5004 = vadd.f32 %v4869, %v4994
    %v5005 = vadd.f32 %v4870, %v4994
    %v5006 = vadd.f32 %v4871, %v4994
    %v5007 = vadd.f32 %v4872, %v4994
    %v5008 = vadd.f32 %v4873, %v4994
    %v5009 = vadd.f32 %v4874, %v4994
    %v5010 = vadd.f32 %v4875, %v4994
    %v5011 = vadd.f32 %v4876, %v4994
    %v5012 = vadd.f32 %v4877, %v4994
    %v5013 = vadd.f32 %v4878, %v4994
    %v5014 = vadd.f32 %v4879, %v4994
    %v5015 = vadd.f32 %v4880, %v4994
    %v5016 = vadd.f32 %v4881, %v4994
    %v5017 = vadd.f32 %v4882, %v4994
    %v5018 = vadd.f32 %v4883, %v4994
    %v5019 = vadd.f32 %v4884, %v4994
    %v5020 = vadd.f32 %v4885, %v4994
    %v5021 = vadd.f32 %v4886, %v4994
    %v5022 = vadd.f32 %v4887, %v4994
    %v5023 = vadd.f32 %v4888, %v4994
    %v5024 = vadd.f32 %v4889, %v4994
    %v5025 = vadd.f32 %v4890, %v4994
    %v5026 = vadd.f32 %v4891, %v4994
    %v5027 = vadd.f32 %v4892, %v4994
    %v5028 = vadd.f32 %v4893, %v4994
    %v5029 = vadd.f32 %v4894, %v4994
    %v5030 = vadd.f32 %v4895, %v4994
    %v5031 = vadd.f32 %v4896, %v4994
    %v5032 = vadd.f32 %v4897, %v4994
    %v5033 = vadd.f32 %v4898, %v4994
    %v5034 = vadd.f32 %v4899, %v4994
    %v5035 = vadd.f32 %v4900, %v4994
    %v5036 = vadd.f32 %v4901, %v4994
    %v5037 = vadd.f32 %v4902, %v4994
    %v5038 = vadd.f32 %v4903, %v4994
    %v5039 = vadd.f32 %v4904, %v4994
    %v5040 = vadd.f32 %v4905, %v4994
    %v5041 = vadd.f32 %v4906, %v4994
    %v5042 = vadd.f32 %v4907, %v4994
    %v5043 = vadd.f32 %v4908, %v4994
    %v5044 = vadd.f32 %v4909, %v4994
    %v5045 = vadd.f32 %v4910, %v4994
    %v5046 = vadd.f32 %v4911, %v4994
    %v5047 = vadd.f32 %v4912, %v4994
    %v5048 = vadd.f32 %v4913, %v4994
    %v5049 = vadd.f32 %v4914, %v4994
    %v5050 = vadd.f32 %v4915, %v4994
    %v5051 = vadd.f32 %v4916, %v4994
    %v5052 = vadd.f32 %v4917, %v4994
    %v5053 = vadd.f32 %v4918, %v4994
    %v5054 = vadd.f32 %v4919, %v4994
    %v5055 = vadd.f32 %v4920, %v4994
    %v5056 = vadd.f32 %v4921, %v4994
    %v5057 = vadd.f32 %v4922, %v4994
    %v5058 = vadd.f32 %v4923, %v4994
    %v5059 = vadd.f32 %v4924, %v4994
    %v5060 = vadd.f32 %v4925, %v4994
    %v5061 = vadd.f32 %v4926, %v4994
    %v5062 = vadd.f32 %v4927, %v4994
    %v5063 = vadd.f32 %v4928, %v4994
    %v5064 = vadd.f32 %v4929, %v4994
    %v5065 = vadd.f32 %v4930, %v4994
    %v5066 = vadd.f32 %v4931, %v4994
    %v5067 = vadd.f32 %v4932, %v4994
    %v5068 = vadd.f32 %v4933, %v4994
    %v5069 = vadd.f32 %v4934, %v4994
    %v5070 = vadd.f32 %v4935, %v4994
    %v5071 = vadd.f32 %v4936, %v4994
    %v5072 = vadd.f32 %v4937, %v4994
    %v5073 = vadd.f32 %v4938, %v4994
    %v5074 = vadd.f32 %v4939, %v4994
    %v5075 = vadd.f32 %v4940, %v4994
    %v5076 = vadd.f32 %v4941, %v4994
    %v5077 = vadd.f32 %v4942, %v4994
    %v5078 = vadd.f32 %v4943, %v4994
    %v5079 = vadd.f32 %v4944, %v4994
    %v5080 = vadd.f32 %v4945, %v4994
    %v5081 = vadd.f32 %v4946, %v4994
    %v5082 = vadd.f32 %v4947, %v4994
    %v5083 = vadd.f32 %v4948, %v4994
    %v5084 = vadd.f32 %v4949, %v4994
    %v5085 = vadd.f32 %v4950, %v4994
    %v5086 = vadd.f32 %v4951, %v4994
    %v5087 = vadd.f32 %v4952, %v4994
    %v5088 = vadd.f32 %v4953, %v4994
    %v5089 = vadd.f32 %v4954, %v4994
    %v5090 = vadd.f32 %v4955, %v4994
    %v5091 = vadd.f32 %v4956, %v4994
    %v5092 = vadd.f32 %v4957, %v4994
    %v5093 = vadd.f32 %v4958, %v4994
    %v5094 = vadd.f32 %v4959, %v4994
    %v5095 = vadd.f32 %v4960, %v4994
    %v5096 = vadd.f32 %v4961, %v4994
    %v5097 = vadd.f32 %v4962, %v4994
    %v5098 = vadd.f32 %v4963, %v4994
    %v5099 = vadd.f32 %v4964, %v4994
    %v5100 = vadd.f32 %v4965, %v4994
    %v5101 = vadd.f32 %v4966, %v4994
    %v5102 = vadd.f32 %v4967, %v4994
    %v5103 = vadd.f32 %v4968, %v4994
    %v5104 = vadd.f32 %v4969, %v4994
    %v5105 = vadd.f32 %v4970, %v4994
    %v5106 = vadd.f32 %v4971, %v4994
    %v5107 = vadd.f32 %v4972, %v4994
    %v5108 = vadd.f32 %v4973, %v4994
    %v5109 = vadd.f32 %v4974, %v4994
    %v5110 = vadd.f32 %v4975, %v4994
    %v5111 = vadd.f32 %v4976, %v4994
    %v5112 = vadd.f32 %v4977, %v4994
    %v5113 = vadd.f32 %v4978, %v4994
    %v5114 = vadd.f32 %v4979, %v4994
    %v5115 = vadd.f32 %v4980, %v4994
    %v5116 = vadd.f32 %v4981, %v4994
    %v5117 = vadd.f32 %v4982, %v4994
    %v5118 = vadd.f32 %v4983, %v4994
    %v5119 = vadd.f32 %v4984, %v4994
    %v5120 = vadd.f32 %v4985, %v4994
    %v5121 = vadd.f32 %v4986, %v4994
    %v5122 = vadd.f32 %v4987, %v4994
    %v5123 = vadd.f32 %v4988, %v4994
    %v5124 = vmax.f32 %v4996, 0.0
    %v5125 = vmax.f32 %v4997, 0.0
    %v5126 = vmax.f32 %v4998, 0.0
    %v5127 = vmax.f32 %v4999, 0.0
    %v5128 = vmax.f32 %v5000, 0.0
    %v5129 = vmax.f32 %v5001, 0.0
    %v5130 = vmax.f32 %v5002, 0.0
    %v5131 = vmax.f32 %v5003, 0.0
    %v5132 = vmax.f32 %v5004, 0.0
    %v5133 = vmax.f32 %v5005, 0.0
    %v5134 = vmax.f32 %v5006, 0.0
    %v5135 = vmax.f32 %v5007, 0.0
    %v5136 = vmax.f32 %v5008, 0.0
    %v5137 = vmax.f32 %v5009, 0.0
    %v5138 = vmax.f32 %v5010, 0.0
    %v5139 = vmax.f32 %v5011, 0.0
    %v5140 = vmax.f32 %v5012, 0.0
    %v5141 = vmax.f32 %v5013, 0.0
    %v5142 = vmax.f32 %v5014, 0.0
    %v5143 = vmax.f32 %v5015, 0.0
    %v5144 = vmax.f32 %v5016, 0.0
    %v5145 = vmax.f32 %v5017, 0.0
    %v5146 = vmax.f32 %v5018, 0.0
    %v5147 = vmax.f32 %v5019, 0.0
    %v5148 = vmax.f32 %v5020, 0.0
    %v5149 = vmax.f32 %v5021, 0.0
    %v5150 = vmax.f32 %v5022, 0.0
    %v5151 = vmax.f32 %v5023, 0.0
    %v5152 = vmax.f32 %v5024, 0.0
    %v5153 = vmax.f32 %v5025, 0.0
    %v5154 = vmax.f32 %v5026, 0.0
    %v5155 = vmax.f32 %v5027, 0.0
    %v5156 = vmax.f32 %v5028, 0.0
    %v5157 = vmax.f32 %v5029, 0.0
    %v5158 = vmax.f32 %v5030, 0.0
    %v5159 = vmax.f32 %v5031, 0.0
    %v5160 = vmax.f32 %v5032, 0.0
    %v5161 = vmax.f32 %v5033, 0.0
    %v5162 = vmax.f32 %v5034, 0.0
    %v5163 = vmax.f32 %v5035, 0.0
    %v5164 = vmax.f32 %v5036, 0.0
    %v5165 = vmax.f32 %v5037, 0.0
    %v5166 = vmax.f32 %v5038, 0.0
    %v5167 = vmax.f32 %v5039, 0.0
    %v5168 = vmax.f32 %v5040, 0.0
    %v5169 = vmax.f32 %v5041, 0.0
    %v5170 = vmax.f32 %v5042, 0.0
    %v5171 = vmax.f32 %v5043, 0.0
    %v5172 = vmax.f32 %v5044, 0.0
    %v5173 = vmax.f32 %v5045, 0.0
    %v5174 = vmax.f32 %v5046, 0.0
    %v5175 = vmax.f32 %v5047, 0.0
    %v5176 = vmax.f32 %v5048, 0.0
    %v5177 = vmax.f32 %v5049, 0.0
    %v5178 = vmax.f32 %v5050, 0.0
    %v5179 = vmax.f32 %v5051, 0.0
    %v5180 = vmax.f32 %v5052, 0.0
    %v5181 = vmax.f32 %v5053, 0.0
    %v5182 = vmax.f32 %v5054, 0.0
    %v5183 = vmax.f32 %v5055, 0.0
    %v5184 = vmax.f32 %v5056, 0.0
    %v5185 = vmax.f32 %v5057, 0.0
    %v5186 = vmax.f32 %v5058, 0.0
    %v5187 = vmax.f32 %v5059, 0.0
    %v5188 = vmax.f32 %v5060, 0.0
    %v5189 = vmax.f32 %v5061, 0.0
    %v5190 = vmax.f32 %v5062, 0.0
    %v5191 = vmax.f32 %v5063, 0.0
    %v5192 = vmax.f32 %v5064, 0.0
    %v5193 = vmax.f32 %v5065, 0.0
    %v5194 = vmax.f32 %v5066, 0.0
    %v5195 = vmax.f32 %v5067, 0.0
    %v5196 = vmax.f32 %v5068, 0.0
    %v5197 = vmax.f32 %v5069, 0.0
    %v5198 = vmax.f32 %v5070, 0.0
    %v5199 = vmax.f32 %v5071, 0.0
    %v5200 = vmax.f32 %v5072, 0.0
    %v5201 = vmax.f32 %v5073, 0.0
    %v5202 = vmax.f32 %v5074, 0.0
    %v5203 = vmax.f32 %v5075, 0.0
    %v5204 = vmax.f32 %v5076, 0.0
    %v5205 = vmax.f32 %v5077, 0.0
    %v5206 = vmax.f32 %v5078, 0.0
    %v5207 = vmax.f32 %v5079, 0.0
    %v5208 = vmax.f32 %v5080, 0.0
    %v5209 = vmax.f32 %v5081, 0.0
    %v5210 = vmax.f32 %v5082, 0.0
    %v5211 = vmax.f32 %v5083, 0.0
    %v5212 = vmax.f32 %v5084, 0.0
    %v5213 = vmax.f32 %v5085, 0.0
    %v5214 = vmax.f32 %v5086, 0.0
    %v5215 = vmax.f32 %v5087, 0.0
    %v5216 = vmax.f32 %v5088, 0.0
    %v5217 = vmax.f32 %v5089, 0.0
    %v5218 = vmax.f32 %v5090, 0.0
    %v5219 = vmax.f32 %v5091, 0.0
    %v5220 = vmax.f32 %v5092, 0.0
    %v5221 = vmax.f32 %v5093, 0.0
    %v5222 = vmax.f32 %v5094, 0.0
    %v5223 = vmax.f32 %v5095, 0.0
    %v5224 = vmax.f32 %v5096, 0.0
    %v5225 = vmax.f32 %v5097, 0.0
    %v5226 = vmax.f32 %v5098, 0.0
    %v5227 = vmax.f32 %v5099, 0.0
    %v5228 = vmax.f32 %v5100, 0.0
    %v5229 = vmax.f32 %v5101, 0.0
    %v5230 = vmax.f32 %v5102, 0.0
    %v5231 = vmax.f32 %v5103, 0.0
    %v5232 = vmax.f32 %v5104, 0.0
    %v5233 = vmax.f32 %v5105, 0.0
    %v5234 = vmax.f32 %v5106, 0.0
    %v5235 = vmax.f32 %v5107, 0.0
    %v5236 = vmax.f32 %v5108, 0.0
    %v5237 = vmax.f32 %v5109, 0.0
    %v5238 = vmax.f32 %v5110, 0.0
    %v5239 = vmax.f32 %v5111, 0.0
    %v5240 = vmax.f32 %v5112, 0.0
    %v5241 = vmax.f32 %v5113, 0.0
    %v5242 = vmax.f32 %v5114, 0.0
    %v5243 = vmax.f32 %v5115, 0.0
    %v5244 = vmax.f32 %v5116, 0.0
    %v5245 = vmax.f32 %v5117, 0.0
    %v5246 = vmax.f32 %v5118, 0.0
    %v5247 = vmax.f32 %v5119, 0.0
    %v5248 = vmax.f32 %v5120, 0.0
    %v5249 = vmax.f32 %v5121, 0.0
    %v5250 = vmax.f32 %v5122, 0.0
    %v5251 = vmax.f32 %v5123, 0.0
    %v5252 = vrot.slane %v5124, 4
    %v5253 = vmax.f32 %v5124, %v5252
    %v5254 = vrot.slane %v5253, 2
    %v5255 = vmax.f32 %v5253, %v5254
    %v5256 = vrot.slane %v5255, 1
    %v5257 = vmax.f32 %v5255, %v5256
    %v5258 = vrot.slane %v5125, 4
    %v5259 = vmax.f32 %v5125, %v5258
    %v5260 = vrot.slane %v5259, 2
    %v5261 = vmax.f32 %v5259, %v5260
    %v5262 = vrot.slane %v5261, 1
    %v5263 = vmax.f32 %v5261, %v5262
    %v5264 = vrot.slane %v5126, 4
    %v5265 = vmax.f32 %v5126, %v5264
    %v5266 = vrot.slane %v5265, 2
    %v5267 = vmax.f32 %v5265, %v5266
    %v5268 = vrot.slane %v5267, 1
    %v5269 = vmax.f32 %v5267, %v5268
    %v5270 = vrot.slane %v5127, 4
    %v5271 = vmax.f32 %v5127, %v5270
    %v5272 = vrot.slane %v5271, 2
    %v5273 = vmax.f32 %v5271, %v5272
    %v5274 = vrot.slane %v5273, 1
    %v5275 = vmax.f32 %v5273, %v5274
    %v5276 = vrot.slane %v5128, 4
    %v5277 = vmax.f32 %v5128, %v5276
    %v5278 = vrot.slane %v5277, 2
    %v5279 = vmax.f32 %v5277, %v5278
    %v5280 = vrot.slane %v5279, 1
    %v5281 = vmax.f32 %v5279, %v5280
    %v5282 = vrot.slane %v5129, 4
    %v5283 = vmax.f32 %v5129, %v5282
    %v5284 = vrot.slane %v5283, 2
    %v5285 = vmax.f32 %v5283, %v5284
    %v5286 = vrot.slane %v5285, 1
    %v5287 = vmax.f32 %v5285, %v5286
    %v5288 = vrot.slane %v5130, 4
    %v5289 = vmax.f32 %v5130, %v5288
    %v5290 = vrot.slane %v5289, 2
    %v5291 = vmax.f32 %v5289, %v5290
    %v5292 = vrot.slane %v5291, 1
    %v5293 = vmax.f32 %v5291, %v5292
    %v5294 = vrot.slane %v5131, 4
    %v5295 = vmax.f32 %v5131, %v5294
    %v5296 = vrot.slane %v5295, 2
    %v5297 = vmax.f32 %v5295, %v5296
    %v5298 = vrot.slane %v5297, 1
    %v5299 = vmax.f32 %v5297, %v5298
    %v5300 = vrot.slane %v5132, 4
    %v5301 = vmax.f32 %v5132, %v5300
    %v5302 = vrot.slane %v5301, 2
    %v5303 = vmax.f32 %v5301, %v5302
    %v5304 = vrot.slane %v5303, 1
    %v5305 = vmax.f32 %v5303, %v5304
    %v5306 = vrot.slane %v5133, 4
    %v5307 = vmax.f32 %v5133, %v5306
    %v5308 = vrot.slane %v5307, 2
    %v5309 = vmax.f32 %v5307, %v5308
    %v5310 = vrot.slane %v5309, 1
    %v5311 = vmax.f32 %v5309, %v5310
    %v5312 = vrot.slane %v5134, 4
    %v5313 = vmax.f32 %v5134, %v5312
    %v5314 = vrot.slane %v5313, 2
    %v5315 = vmax.f32 %v5313, %v5314
    %v5316 = vrot.slane %v5315, 1
    %v5317 = vmax.f32 %v5315, %v5316
    %v5318 = vrot.slane %v5135, 4
    %v5319 = vmax.f32 %v5135, %v5318
    %v5320 = vrot.slane %v5319, 2
    %v5321 = vmax.f32 %v5319, %v5320
    %v5322 = vrot.slane %v5321, 1
    %v5323 = vmax.f32 %v5321, %v5322
    %v5324 = vrot.slane %v5136, 4
    %v5325 = vmax.f32 %v5136, %v5324
    %v5326 = vrot.slane %v5325, 2
    %v5327 = vmax.f32 %v5325, %v5326
    %v5328 = vrot.slane %v5327, 1
    %v5329 = vmax.f32 %v5327, %v5328
    %v5330 = vrot.slane %v5137, 4
    %v5331 = vmax.f32 %v5137, %v5330
    %v5332 = vrot.slane %v5331, 2
    %v5333 = vmax.f32 %v5331, %v5332
    %v5334 = vrot.slane %v5333, 1
    %v5335 = vmax.f32 %v5333, %v5334
    %v5336 = vrot.slane %v5138, 4
    %v5337 = vmax.f32 %v5138, %v5336
    %v5338 = vrot.slane %v5337, 2
    %v5339 = vmax.f32 %v5337, %v5338
    %v5340 = vrot.slane %v5339, 1
    %v5341 = vmax.f32 %v5339, %v5340
    %v5342 = vrot.slane %v5139, 4
    %v5343 = vmax.f32 %v5139, %v5342
    %v5344 = vrot.slane %v5343, 2
    %v5345 = vmax.f32 %v5343, %v5344
    %v5346 = vrot.slane %v5345, 1
    %v5347 = vmax.f32 %v5345, %v5346
    %v5348 = vrot.slane %v5140, 4
    %v5349 = vmax.f32 %v5140, %v5348
    %v5350 = vrot.slane %v5349, 2
    %v5351 = vmax.f32 %v5349, %v5350
    %v5352 = vrot.slane %v5351, 1
    %v5353 = vmax.f32 %v5351, %v5352
    %v5354 = vrot.slane %v5141, 4
    %v5355 = vmax.f32 %v5141, %v5354
    %v5356 = vrot.slane %v5355, 2
    %v5357 = vmax.f32 %v5355, %v5356
    %v5358 = vrot.slane %v5357, 1
    %v5359 = vmax.f32 %v5357, %v5358
    %v5360 = vrot.slane %v5142, 4
    %v5361 = vmax.f32 %v5142, %v5360
    %v5362 = vrot.slane %v5361, 2
    %v5363 = vmax.f32 %v5361, %v5362
    %v5364 = vrot.slane %v5363, 1
    %v5365 = vmax.f32 %v5363, %v5364
    %v5366 = vrot.slane %v5143, 4
    %v5367 = vmax.f32 %v5143, %v5366
    %v5368 = vrot.slane %v5367, 2
    %v5369 = vmax.f32 %v5367, %v5368
    %v5370 = vrot.slane %v5369, 1
    %v5371 = vmax.f32 %v5369, %v5370
    %v5372 = vrot.slane %v5144, 4
    %v5373 = vmax.f32 %v5144, %v5372
    %v5374 = vrot.slane %v5373, 2
    %v5375 = vmax.f32 %v5373, %v5374
    %v5376 = vrot.slane %v5375, 1
    %v5377 = vmax.f32 %v5375, %v5376
    %v5378 = vrot.slane %v5145, 4
    %v5379 = vmax.f32 %v5145, %v5378
    %v5380 = vrot.slane %v5379, 2
    %v5381 = vmax.f32 %v5379, %v5380
    %v5382 = vrot.slane %v5381, 1
    %v5383 = vmax.f32 %v5381, %v5382
    %v5384 = vrot.slane %v5146, 4
    %v5385 = vmax.f32 %v5146, %v5384
    %v5386 = vrot.slane %v5385, 2
    %v5387 = vmax.f32 %v5385, %v5386
    %v5388 = vrot.slane %v5387, 1
    %v5389 = vmax.f32 %v5387, %v5388
    %v5390 = vrot.slane %v5147, 4
    %v5391 = vmax.f32 %v5147, %v5390
    %v5392 = vrot.slane %v5391, 2
    %v5393 = vmax.f32 %v5391, %v5392
    %v5394 = vrot.slane %v5393, 1
    %v5395 = vmax.f32 %v5393, %v5394
    %v5396 = vrot.slane %v5148, 4
    %v5397 = vmax.f32 %v5148, %v5396
    %v5398 = vrot.slane %v5397, 2
    %v5399 = vmax.f32 %v5397, %v5398
    %v5400 = vrot.slane %v5399, 1
    %v5401 = vmax.f32 %v5399, %v5400
    %v5402 = vrot.slane %v5149, 4
    %v5403 = vmax.f32 %v5149, %v5402
    %v5404 = vrot.slane %v5403, 2
    %v5405 = vmax.f32 %v5403, %v5404
    %v5406 = vrot.slane %v5405, 1
    %v5407 = vmax.f32 %v5405, %v5406
    %v5408 = vrot.slane %v5150, 4
    %v5409 = vmax.f32 %v5150, %v5408
    %v5410 = vrot.slane %v5409, 2
    %v5411 = vmax.f32 %v5409, %v5410
    %v5412 = vrot.slane %v5411, 1
    %v5413 = vmax.f32 %v5411, %v5412
    %v5414 = vrot.slane %v5151, 4
    %v5415 = vmax.f32 %v5151, %v5414
    %v5416 = vrot.slane %v5415, 2
    %v5417 = vmax.f32 %v5415, %v5416
    %v5418 = vrot.slane %v5417, 1
    %v5419 = vmax.f32 %v5417, %v5418
    %v5420 = vrot.slane %v5152, 4
    %v5421 = vmax.f32 %v5152, %v5420
    %v5422 = vrot.slane %v5421, 2
    %v5423 = vmax.f32 %v5421, %v5422
    %v5424 = vrot.slane %v5423, 1
    %v5425 = vmax.f32 %v5423, %v5424
    %v5426 = vrot.slane %v5153, 4
    %v5427 = vmax.f32 %v5153, %v5426
    %v5428 = vrot.slane %v5427, 2
    %v5429 = vmax.f32 %v5427, %v5428
    %v5430 = vrot.slane %v5429, 1
    %v5431 = vmax.f32 %v5429, %v5430
    %v5432 = vrot.slane %v5154, 4
    %v5433 = vmax.f32 %v5154, %v5432
    %v5434 = vrot.slane %v5433, 2
    %v5435 = vmax.f32 %v5433, %v5434
    %v5436 = vrot.slane %v5435, 1
    %v5437 = vmax.f32 %v5435, %v5436
    %v5438 = vrot.slane %v5155, 4
    %v5439 = vmax.f32 %v5155, %v5438
    %v5440 = vrot.slane %v5439, 2
    %v5441 = vmax.f32 %v5439, %v5440
    %v5442 = vrot.slane %v5441, 1
    %v5443 = vmax.f32 %v5441, %v5442
    %v5444 = vrot.slane %v5156, 4
    %v5445 = vmax.f32 %v5156, %v5444
    %v5446 = vrot.slane %v5445, 2
    %v5447 = vmax.f32 %v5445, %v5446
    %v5448 = vrot.slane %v5447, 1
    %v5449 = vmax.f32 %v5447, %v5448
    %v5450 = vrot.slane %v5157, 4
    %v5451 = vmax.f32 %v5157, %v5450
    %v5452 = vrot.slane %v5451, 2
    %v5453 = vmax.f32 %v5451, %v5452
    %v5454 = vrot.slane %v5453, 1
    %v5455 = vmax.f32 %v5453, %v5454
    %v5456 = vrot.slane %v5158, 4
    %v5457 = vmax.f32 %v5158, %v5456
    %v5458 = vrot.slane %v5457, 2
    %v5459 = vmax.f32 %v5457, %v5458
    %v5460 = vrot.slane %v5459, 1
    %v5461 = vmax.f32 %v5459, %v5460
    %v5462 = vrot.slane %v5159, 4
    %v5463 = vmax.f32 %v5159, %v5462
    %v5464 = vrot.slane %v5463, 2
    %v5465 = vmax.f32 %v5463, %v5464
    %v5466 = vrot.slane %v5465, 1
    %v5467 = vmax.f32 %v5465, %v5466
    %v5468 = vrot.slane %v5160, 4
    %v5469 = vmax.f32 %v5160, %v5468
    %v5470 = vrot.slane %v5469, 2
    %v5471 = vmax.f32 %v5469, %v5470
    %v5472 = vrot.slane %v5471, 1
    %v5473 = vmax.f32 %v5471, %v5472
    %v5474 = vrot.slane %v5161, 4
    %v5475 = vmax.f32 %v5161, %v5474
    %v5476 = vrot.slane %v5475, 2
    %v5477 = vmax.f32 %v5475, %v5476
    %v5478 = vrot.slane %v5477, 1
    %v5479 = vmax.f32 %v5477, %v5478
    %v5480 = vrot.slane %v5162, 4
    %v5481 = vmax.f32 %v5162, %v5480
    %v5482 = vrot.slane %v5481, 2
    %v5483 = vmax.f32 %v5481, %v5482
    %v5484 = vrot.slane %v5483, 1
    %v5485 = vmax.f32 %v5483, %v5484
    %v5486 = vrot.slane %v5163, 4
    %v5487 = vmax.f32 %v5163, %v5486
    %v5488 = vrot.slane %v5487, 2
    %v5489 = vmax.f32 %v5487, %v5488
    %v5490 = vrot.slane %v5489, 1
    %v5491 = vmax.f32 %v5489, %v5490
    %v5492 = vrot.slane %v5164, 4
    %v5493 = vmax.f32 %v5164, %v5492
    %v5494 = vrot.slane %v5493, 2
    %v5495 = vmax.f32 %v5493, %v5494
    %v5496 = vrot.slane %v5495, 1
    %v5497 = vmax.f32 %v5495, %v5496
    %v5498 = vrot.slane %v5165, 4
    %v5499 = vmax.f32 %v5165, %v5498
    %v5500 = vrot.slane %v5499, 2
    %v5501 = vmax.f32 %v5499, %v5500
    %v5502 = vrot.slane %v5501, 1
    %v5503 = vmax.f32 %v5501, %v5502
    %v5504 = vrot.slane %v5166, 4
    %v5505 = vmax.f32 %v5166, %v5504
    %v5506 = vrot.slane %v5505, 2
    %v5507 = vmax.f32 %v5505, %v5506
    %v5508 = vrot.slane %v5507, 1
    %v5509 = vmax.f32 %v5507, %v5508
    %v5510 = vrot.slane %v5167, 4
    %v5511 = vmax.f32 %v5167, %v5510
    %v5512 = vrot.slane %v5511, 2
    %v5513 = vmax.f32 %v5511, %v5512
    %v5514 = vrot.slane %v5513, 1
    %v5515 = vmax.f32 %v5513, %v5514
    %v5516 = vrot.slane %v5168, 4
    %v5517 = vmax.f32 %v5168, %v5516
    %v5518 = vrot.slane %v5517, 2
    %v5519 = vmax.f32 %v5517, %v5518
    %v5520 = vrot.slane %v5519, 1
    %v5521 = vmax.f32 %v5519, %v5520
    %v5522 = vrot.slane %v5169, 4
    %v5523 = vmax.f32 %v5169, %v5522
    %v5524 = vrot.slane %v5523, 2
    %v5525 = vmax.f32 %v5523, %v5524
    %v5526 = vrot.slane %v5525, 1
    %v5527 = vmax.f32 %v5525, %v5526
    %v5528 = vrot.slane %v5170, 4
    %v5529 = vmax.f32 %v5170, %v5528
    %v5530 = vrot.slane %v5529, 2
    %v5531 = vmax.f32 %v5529, %v5530
    %v5532 = vrot.slane %v5531, 1
    %v5533 = vmax.f32 %v5531, %v5532
    %v5534 = vrot.slane %v5171, 4
    %v5535 = vmax.f32 %v5171, %v5534
    %v5536 = vrot.slane %v5535, 2
    %v5537 = vmax.f32 %v5535, %v5536
    %v5538 = vrot.slane %v5537, 1
    %v5539 = vmax.f32 %v5537, %v5538
    %v5540 = vrot.slane %v5172, 4
    %v5541 = vmax.f32 %v5172, %v5540
    %v5542 = vrot.slane %v5541, 2
    %v5543 = vmax.f32 %v5541, %v5542
    %v5544 = vrot.slane %v5543, 1
    %v5545 = vmax.f32 %v5543, %v5544
    %v5546 = vrot.slane %v5173, 4
    %v5547 = vmax.f32 %v5173, %v5546
    %v5548 = vrot.slane %v5547, 2
    %v5549 = vmax.f32 %v5547, %v5548
    %v5550 = vrot.slane %v5549, 1
    %v5551 = vmax.f32 %v5549, %v5550
    %v5552 = vrot.slane %v5174, 4
    %v5553 = vmax.f32 %v5174, %v5552
    %v5554 = vrot.slane %v5553, 2
    %v5555 = vmax.f32 %v5553, %v5554
    %v5556 = vrot.slane %v5555, 1
    %v5557 = vmax.f32 %v5555, %v5556
    %v5558 = vrot.slane %v5175, 4
    %v5559 = vmax.f32 %v5175, %v5558
    %v5560 = vrot.slane %v5559, 2
    %v5561 = vmax.f32 %v5559, %v5560
    %v5562 = vrot.slane %v5561, 1
    %v5563 = vmax.f32 %v5561, %v5562
    %v5564 = vrot.slane %v5176, 4
    %v5565 = vmax.f32 %v5176, %v5564
    %v5566 = vrot.slane %v5565, 2
    %v5567 = vmax.f32 %v5565, %v5566
    %v5568 = vrot.slane %v5567, 1
    %v5569 = vmax.f32 %v5567, %v5568
    %v5570 = vrot.slane %v5177, 4
    %v5571 = vmax.f32 %v5177, %v5570
    %v5572 = vrot.slane %v5571, 2
    %v5573 = vmax.f32 %v5571, %v5572
    %v5574 = vrot.slane %v5573, 1
    %v5575 = vmax.f32 %v5573, %v5574
    %v5576 = vrot.slane %v5178, 4
    %v5577 = vmax.f32 %v5178, %v5576
    %v5578 = vrot.slane %v5577, 2
    %v5579 = vmax.f32 %v5577, %v5578
    %v5580 = vrot.slane %v5579, 1
    %v5581 = vmax.f32 %v5579, %v5580
    %v5582 = vrot.slane %v5179, 4
    %v5583 = vmax.f32 %v5179, %v5582
    %v5584 = vrot.slane %v5583, 2
    %v5585 = vmax.f32 %v5583, %v5584
    %v5586 = vrot.slane %v5585, 1
    %v5587 = vmax.f32 %v5585, %v5586
    %v5588 = vrot.slane %v5180, 4
    %v5589 = vmax.f32 %v5180, %v5588
    %v5590 = vrot.slane %v5589, 2
    %v5591 = vmax.f32 %v5589, %v5590
    %v5592 = vrot.slane %v5591, 1
    %v5593 = vmax.f32 %v5591, %v5592
    %v5594 = vrot.slane %v5181, 4
    %v5595 = vmax.f32 %v5181, %v5594
    %v5596 = vrot.slane %v5595, 2
    %v5597 = vmax.f32 %v5595, %v5596
    %v5598 = vrot.slane %v5597, 1
    %v5599 = vmax.f32 %v5597, %v5598
    %v5600 = vrot.slane %v5182, 4
    %v5601 = vmax.f32 %v5182, %v5600
    %v5602 = vrot.slane %v5601, 2
    %v5603 = vmax.f32 %v5601, %v5602
    %v5604 = vrot.slane %v5603, 1
    %v5605 = vmax.f32 %v5603, %v5604
    %v5606 = vrot.slane %v5183, 4
    %v5607 = vmax.f32 %v5183, %v5606
    %v5608 = vrot.slane %v5607, 2
    %v5609 = vmax.f32 %v5607, %v5608
    %v5610 = vrot.slane %v5609, 1
    %v5611 = vmax.f32 %v5609, %v5610
    %v5612 = vrot.slane %v5184, 4
    %v5613 = vmax.f32 %v5184, %v5612
    %v5614 = vrot.slane %v5613, 2
    %v5615 = vmax.f32 %v5613, %v5614
    %v5616 = vrot.slane %v5615, 1
    %v5617 = vmax.f32 %v5615, %v5616
    %v5618 = vrot.slane %v5185, 4
    %v5619 = vmax.f32 %v5185, %v5618
    %v5620 = vrot.slane %v5619, 2
    %v5621 = vmax.f32 %v5619, %v5620
    %v5622 = vrot.slane %v5621, 1
    %v5623 = vmax.f32 %v5621, %v5622
    %v5624 = vrot.slane %v5186, 4
    %v5625 = vmax.f32 %v5186, %v5624
    %v5626 = vrot.slane %v5625, 2
    %v5627 = vmax.f32 %v5625, %v5626
    %v5628 = vrot.slane %v5627, 1
    %v5629 = vmax.f32 %v5627, %v5628
    %v5630 = vrot.slane %v5187, 4
    %v5631 = vmax.f32 %v5187, %v5630
    %v5632 = vrot.slane %v5631, 2
    %v5633 = vmax.f32 %v5631, %v5632
    %v5634 = vrot.slane %v5633, 1
    %v5635 = vmax.f32 %v5633, %v5634
    %v5636 = vrot.slane %v5188, 4
    %v5637 = vmax.f32 %v5188, %v5636
    %v5638 = vrot.slane %v5637, 2
    %v5639 = vmax.f32 %v5637, %v5638
    %v5640 = vrot.slane %v5639, 1
    %v5641 = vmax.f32 %v5639, %v5640
    %v5642 = vrot.slane %v5189, 4
    %v5643 = vmax.f32 %v5189, %v5642
    %v5644 = vrot.slane %v5643, 2
    %v5645 = vmax.f32 %v5643, %v5644
    %v5646 = vrot.slane %v5645, 1
    %v5647 = vmax.f32 %v5645, %v5646
    %v5648 = vrot.slane %v5190, 4
    %v5649 = vmax.f32 %v5190, %v5648
    %v5650 = vrot.slane %v5649, 2
    %v5651 = vmax.f32 %v5649, %v5650
    %v5652 = vrot.slane %v5651, 1
    %v5653 = vmax.f32 %v5651, %v5652
    %v5654 = vrot.slane %v5191, 4
    %v5655 = vmax.f32 %v5191, %v5654
    %v5656 = vrot.slane %v5655, 2
    %v5657 = vmax.f32 %v5655, %v5656
    %v5658 = vrot.slane %v5657, 1
    %v5659 = vmax.f32 %v5657, %v5658
    %v5660 = vrot.slane %v5192, 4
    %v5661 = vmax.f32 %v5192, %v5660
    %v5662 = vrot.slane %v5661, 2
    %v5663 = vmax.f32 %v5661, %v5662
    %v5664 = vrot.slane %v5663, 1
    %v5665 = vmax.f32 %v5663, %v5664
    %v5666 = vrot.slane %v5193, 4
    %v5667 = vmax.f32 %v5193, %v5666
    %v5668 = vrot.slane %v5667, 2
    %v5669 = vmax.f32 %v5667, %v5668
    %v5670 = vrot.slane %v5669, 1
    %v5671 = vmax.f32 %v5669, %v5670
    %v5672 = vrot.slane %v5194, 4
    %v5673 = vmax.f32 %v5194, %v5672
    %v5674 = vrot.slane %v5673, 2
    %v5675 = vmax.f32 %v5673, %v5674
    %v5676 = vrot.slane %v5675, 1
    %v5677 = vmax.f32 %v5675, %v5676
    %v5678 = vrot.slane %v5195, 4
    %v5679 = vmax.f32 %v5195, %v5678
    %v5680 = vrot.slane %v5679, 2
    %v5681 = vmax.f32 %v5679, %v5680
    %v5682 = vrot.slane %v5681, 1
    %v5683 = vmax.f32 %v5681, %v5682
    %v5684 = vrot.slane %v5196, 4
    %v5685 = vmax.f32 %v5196, %v5684
    %v5686 = vrot.slane %v5685, 2
    %v5687 = vmax.f32 %v5685, %v5686
    %v5688 = vrot.slane %v5687, 1
    %v5689 = vmax.f32 %v5687, %v5688
    %v5690 = vrot.slane %v5197, 4
    %v5691 = vmax.f32 %v5197, %v5690
    %v5692 = vrot.slane %v5691, 2
    %v5693 = vmax.f32 %v5691, %v5692
    %v5694 = vrot.slane %v5693, 1
    %v5695 = vmax.f32 %v5693, %v5694
    %v5696 = vrot.slane %v5198, 4
    %v5697 = vmax.f32 %v5198, %v5696
    %v5698 = vrot.slane %v5697, 2
    %v5699 = vmax.f32 %v5697, %v5698
    %v5700 = vrot.slane %v5699, 1
    %v5701 = vmax.f32 %v5699, %v5700
    %v5702 = vrot.slane %v5199, 4
    %v5703 = vmax.f32 %v5199, %v5702
    %v5704 = vrot.slane %v5703, 2
    %v5705 = vmax.f32 %v5703, %v5704
    %v5706 = vrot.slane %v5705, 1
    %v5707 = vmax.f32 %v5705, %v5706
    %v5708 = vrot.slane %v5200, 4
    %v5709 = vmax.f32 %v5200, %v5708
    %v5710 = vrot.slane %v5709, 2
    %v5711 = vmax.f32 %v5709, %v5710
    %v5712 = vrot.slane %v5711, 1
    %v5713 = vmax.f32 %v5711, %v5712
    %v5714 = vrot.slane %v5201, 4
    %v5715 = vmax.f32 %v5201, %v5714
    %v5716 = vrot.slane %v5715, 2
    %v5717 = vmax.f32 %v5715, %v5716
    %v5718 = vrot.slane %v5717, 1
    %v5719 = vmax.f32 %v5717, %v5718
    %v5720 = vrot.slane %v5202, 4
    %v5721 = vmax.f32 %v5202, %v5720
    %v5722 = vrot.slane %v5721, 2
    %v5723 = vmax.f32 %v5721, %v5722
    %v5724 = vrot.slane %v5723, 1
    %v5725 = vmax.f32 %v5723, %v5724
    %v5726 = vrot.slane %v5203, 4
    %v5727 = vmax.f32 %v5203, %v5726
    %v5728 = vrot.slane %v5727, 2
    %v5729 = vmax.f32 %v5727, %v5728
    %v5730 = vrot.slane %v5729, 1
    %v5731 = vmax.f32 %v5729, %v5730
    %v5732 = vrot.slane %v5204, 4
    %v5733 = vmax.f32 %v5204, %v5732
    %v5734 = vrot.slane %v5733, 2
    %v5735 = vmax.f32 %v5733, %v5734
    %v5736 = vrot.slane %v5735, 1
    %v5737 = vmax.f32 %v5735, %v5736
    %v5738 = vrot.slane %v5205, 4
    %v5739 = vmax.f32 %v5205, %v5738
    %v5740 = vrot.slane %v5739, 2
    %v5741 = vmax.f32 %v5739, %v5740
    %v5742 = vrot.slane %v5741, 1
    %v5743 = vmax.f32 %v5741, %v5742
    %v5744 = vrot.slane %v5206, 4
    %v5745 = vmax.f32 %v5206, %v5744
    %v5746 = vrot.slane %v5745, 2
    %v5747 = vmax.f32 %v5745, %v5746
    %v5748 = vrot.slane %v5747, 1
    %v5749 = vmax.f32 %v5747, %v5748
    %v5750 = vrot.slane %v5207, 4
    %v5751 = vmax.f32 %v5207, %v5750
    %v5752 = vrot.slane %v5751, 2
    %v5753 = vmax.f32 %v5751, %v5752
    %v5754 = vrot.slane %v5753, 1
    %v5755 = vmax.f32 %v5753, %v5754
    %v5756 = vrot.slane %v5208, 4
    %v5757 = vmax.f32 %v5208, %v5756
    %v5758 = vrot.slane %v5757, 2
    %v5759 = vmax.f32 %v5757, %v5758
    %v5760 = vrot.slane %v5759, 1
    %v5761 = vmax.f32 %v5759, %v5760
    %v5762 = vrot.slane %v5209, 4
    %v5763 = vmax.f32 %v5209, %v5762
    %v5764 = vrot.slane %v5763, 2
    %v5765 = vmax.f32 %v5763, %v5764
    %v5766 = vrot.slane %v5765, 1
    %v5767 = vmax.f32 %v5765, %v5766
    %v5768 = vrot.slane %v5210, 4
    %v5769 = vmax.f32 %v5210, %v5768
    %v5770 = vrot.slane %v5769, 2
    %v5771 = vmax.f32 %v5769, %v5770
    %v5772 = vrot.slane %v5771, 1
    %v5773 = vmax.f32 %v5771, %v5772
    %v5774 = vrot.slane %v5211, 4
    %v5775 = vmax.f32 %v5211, %v5774
    %v5776 = vrot.slane %v5775, 2
    %v5777 = vmax.f32 %v5775, %v5776
    %v5778 = vrot.slane %v5777, 1
    %v5779 = vmax.f32 %v5777, %v5778
    %v5780 = vrot.slane %v5212, 4
    %v5781 = vmax.f32 %v5212, %v5780
    %v5782 = vrot.slane %v5781, 2
    %v5783 = vmax.f32 %v5781, %v5782
    %v5784 = vrot.slane %v5783, 1
    %v5785 = vmax.f32 %v5783, %v5784
    %v5786 = vrot.slane %v5213, 4
    %v5787 = vmax.f32 %v5213, %v5786
    %v5788 = vrot.slane %v5787, 2
    %v5789 = vmax.f32 %v5787, %v5788
    %v5790 = vrot.slane %v5789, 1
    %v5791 = vmax.f32 %v5789, %v5790
    %v5792 = vrot.slane %v5214, 4
    %v5793 = vmax.f32 %v5214, %v5792
    %v5794 = vrot.slane %v5793, 2
    %v5795 = vmax.f32 %v5793, %v5794
    %v5796 = vrot.slane %v5795, 1
    %v5797 = vmax.f32 %v5795, %v5796
    %v5798 = vrot.slane %v5215, 4
    %v5799 = vmax.f32 %v5215, %v5798
    %v5800 = vrot.slane %v5799, 2
    %v5801 = vmax.f32 %v5799, %v5800
    %v5802 = vrot.slane %v5801, 1
    %v5803 = vmax.f32 %v5801, %v5802
    %v5804 = vrot.slane %v5216, 4
    %v5805 = vmax.f32 %v5216, %v5804
    %v5806 = vrot.slane %v5805, 2
    %v5807 = vmax.f32 %v5805, %v5806
    %v5808 = vrot.slane %v5807, 1
    %v5809 = vmax.f32 %v5807, %v5808
    %v5810 = vrot.slane %v5217, 4
    %v5811 = vmax.f32 %v5217, %v5810
    %v5812 = vrot.slane %v5811, 2
    %v5813 = vmax.f32 %v5811, %v5812
    %v5814 = vrot.slane %v5813, 1
    %v5815 = vmax.f32 %v5813, %v5814
    %v5816 = vrot.slane %v5218, 4
    %v5817 = vmax.f32 %v5218, %v5816
    %v5818 = vrot.slane %v5817, 2
    %v5819 = vmax.f32 %v5817, %v5818
    %v5820 = vrot.slane %v5819, 1
    %v5821 = vmax.f32 %v5819, %v5820
    %v5822 = vrot.slane %v5219, 4
    %v5823 = vmax.f32 %v5219, %v5822
    %v5824 = vrot.slane %v5823, 2
    %v5825 = vmax.f32 %v5823, %v5824
    %v5826 = vrot.slane %v5825, 1
    %v5827 = vmax.f32 %v5825, %v5826
    %v5828 = vrot.slane %v5220, 4
    %v5829 = vmax.f32 %v5220, %v5828
    %v5830 = vrot.slane %v5829, 2
    %v5831 = vmax.f32 %v5829, %v5830
    %v5832 = vrot.slane %v5831, 1
    %v5833 = vmax.f32 %v5831, %v5832
    %v5834 = vrot.slane %v5221, 4
    %v5835 = vmax.f32 %v5221, %v5834
    %v5836 = vrot.slane %v5835, 2
    %v5837 = vmax.f32 %v5835, %v5836
    %v5838 = vrot.slane %v5837, 1
    %v5839 = vmax.f32 %v5837, %v5838
    %v5840 = vrot.slane %v5222, 4
    %v5841 = vmax.f32 %v5222, %v5840
    %v5842 = vrot.slane %v5841, 2
    %v5843 = vmax.f32 %v5841, %v5842
    %v5844 = vrot.slane %v5843, 1
    %v5845 = vmax.f32 %v5843, %v5844
    %v5846 = vrot.slane %v5223, 4
    %v5847 = vmax.f32 %v5223, %v5846
    %v5848 = vrot.slane %v5847, 2
    %v5849 = vmax.f32 %v5847, %v5848
    %v5850 = vrot.slane %v5849, 1
    %v5851 = vmax.f32 %v5849, %v5850
    %v5852 = vrot.slane %v5224, 4
    %v5853 = vmax.f32 %v5224, %v5852
    %v5854 = vrot.slane %v5853, 2
    %v5855 = vmax.f32 %v5853, %v5854
    %v5856 = vrot.slane %v5855, 1
    %v5857 = vmax.f32 %v5855, %v5856
    %v5858 = vrot.slane %v5225, 4
    %v5859 = vmax.f32 %v5225, %v5858
    %v5860 = vrot.slane %v5859, 2
    %v5861 = vmax.f32 %v5859, %v5860
    %v5862 = vrot.slane %v5861, 1
    %v5863 = vmax.f32 %v5861, %v5862
    %v5864 = vrot.slane %v5226, 4
    %v5865 = vmax.f32 %v5226, %v5864
    %v5866 = vrot.slane %v5865, 2
    %v5867 = vmax.f32 %v5865, %v5866
    %v5868 = vrot.slane %v5867, 1
    %v5869 = vmax.f32 %v5867, %v5868
    %v5870 = vrot.slane %v5227, 4
    %v5871 = vmax.f32 %v5227, %v5870
    %v5872 = vrot.slane %v5871, 2
    %v5873 = vmax.f32 %v5871, %v5872
    %v5874 = vrot.slane %v5873, 1
    %v5875 = vmax.f32 %v5873, %v5874
    %v5876 = vrot.slane %v5228, 4
    %v5877 = vmax.f32 %v5228, %v5876
    %v5878 = vrot.slane %v5877, 2
    %v5879 = vmax.f32 %v5877, %v5878
    %v5880 = vrot.slane %v5879, 1
    %v5881 = vmax.f32 %v5879, %v5880
    %v5882 = vrot.slane %v5229, 4
    %v5883 = vmax.f32 %v5229, %v5882
    %v5884 = vrot.slane %v5883, 2
    %v5885 = vmax.f32 %v5883, %v5884
    %v5886 = vrot.slane %v5885, 1
    %v5887 = vmax.f32 %v5885, %v5886
    %v5888 = vrot.slane %v5230, 4
    %v5889 = vmax.f32 %v5230, %v5888
    %v5890 = vrot.slane %v5889, 2
    %v5891 = vmax.f32 %v5889, %v5890
    %v5892 = vrot.slane %v5891, 1
    %v5893 = vmax.f32 %v5891, %v5892
    %v5894 = vrot.slane %v5231, 4
    %v5895 = vmax.f32 %v5231, %v5894
    %v5896 = vrot.slane %v5895, 2
    %v5897 = vmax.f32 %v5895, %v5896
    %v5898 = vrot.slane %v5897, 1
    %v5899 = vmax.f32 %v5897, %v5898
    %v5900 = vrot.slane %v5232, 4
    %v5901 = vmax.f32 %v5232, %v5900
    %v5902 = vrot.slane %v5901, 2
    %v5903 = vmax.f32 %v5901, %v5902
    %v5904 = vrot.slane %v5903, 1
    %v5905 = vmax.f32 %v5903, %v5904
    %v5906 = vrot.slane %v5233, 4
    %v5907 = vmax.f32 %v5233, %v5906
    %v5908 = vrot.slane %v5907, 2
    %v5909 = vmax.f32 %v5907, %v5908
    %v5910 = vrot.slane %v5909, 1
    %v5911 = vmax.f32 %v5909, %v5910
    %v5912 = vrot.slane %v5234, 4
    %v5913 = vmax.f32 %v5234, %v5912
    %v5914 = vrot.slane %v5913, 2
    %v5915 = vmax.f32 %v5913, %v5914
    %v5916 = vrot.slane %v5915, 1
    %v5917 = vmax.f32 %v5915, %v5916
    %v5918 = vrot.slane %v5235, 4
    %v5919 = vmax.f32 %v5235, %v5918
    %v5920 = vrot.slane %v5919, 2
    %v5921 = vmax.f32 %v5919, %v5920
    %v5922 = vrot.slane %v5921, 1
    %v5923 = vmax.f32 %v5921, %v5922
    %v5924 = vrot.slane %v5236, 4
    %v5925 = vmax.f32 %v5236, %v5924
    %v5926 = vrot.slane %v5925, 2
    %v5927 = vmax.f32 %v5925, %v5926
    %v5928 = vrot.slane %v5927, 1
    %v5929 = vmax.f32 %v5927, %v5928
    %v5930 = vrot.slane %v5237, 4
    %v5931 = vmax.f32 %v5237, %v5930
    %v5932 = vrot.slane %v5931, 2
    %v5933 = vmax.f32 %v5931, %v5932
    %v5934 = vrot.slane %v5933, 1
    %v5935 = vmax.f32 %v5933, %v5934
    %v5936 = vrot.slane %v5238, 4
    %v5937 = vmax.f32 %v5238, %v5936
    %v5938 = vrot.slane %v5937, 2
    %v5939 = vmax.f32 %v5937, %v5938
    %v5940 = vrot.slane %v5939, 1
    %v5941 = vmax.f32 %v5939, %v5940
    %v5942 = vrot.slane %v5239, 4
    %v5943 = vmax.f32 %v5239, %v5942
    %v5944 = vrot.slane %v5943, 2
    %v5945 = vmax.f32 %v5943, %v5944
    %v5946 = vrot.slane %v5945, 1
    %v5947 = vmax.f32 %v5945, %v5946
    %v5948 = vrot.slane %v5240, 4
    %v5949 = vmax.f32 %v5240, %v5948
    %v5950 = vrot.slane %v5949, 2
    %v5951 = vmax.f32 %v5949, %v5950
    %v5952 = vrot.slane %v5951, 1
    %v5953 = vmax.f32 %v5951, %v5952
    %v5954 = vrot.slane %v5241, 4
    %v5955 = vmax.f32 %v5241, %v5954
    %v5956 = vrot.slane %v5955, 2
    %v5957 = vmax.f32 %v5955, %v5956
    %v5958 = vrot.slane %v5957, 1
    %v5959 = vmax.f32 %v5957, %v5958
    %v5960 = vrot.slane %v5242, 4
    %v5961 = vmax.f32 %v5242, %v5960
    %v5962 = vrot.slane %v5961, 2
    %v5963 = vmax.f32 %v5961, %v5962
    %v5964 = vrot.slane %v5963, 1
    %v5965 = vmax.f32 %v5963, %v5964
    %v5966 = vrot.slane %v5243, 4
    %v5967 = vmax.f32 %v5243, %v5966
    %v5968 = vrot.slane %v5967, 2
    %v5969 = vmax.f32 %v5967, %v5968
    %v5970 = vrot.slane %v5969, 1
    %v5971 = vmax.f32 %v5969, %v5970
    %v5972 = vrot.slane %v5244, 4
    %v5973 = vmax.f32 %v5244, %v5972
    %v5974 = vrot.slane %v5973, 2
    %v5975 = vmax.f32 %v5973, %v5974
    %v5976 = vrot.slane %v5975, 1
    %v5977 = vmax.f32 %v5975, %v5976
    %v5978 = vrot.slane %v5245, 4
    %v5979 = vmax.f32 %v5245, %v5978
    %v5980 = vrot.slane %v5979, 2
    %v5981 = vmax.f32 %v5979, %v5980
    %v5982 = vrot.slane %v5981, 1
    %v5983 = vmax.f32 %v5981, %v5982
    %v5984 = vrot.slane %v5246, 4
    %v5985 = vmax.f32 %v5246, %v5984
    %v5986 = vrot.slane %v5985, 2
    %v5987 = vmax.f32 %v5985, %v5986
    %v5988 = vrot.slane %v5987, 1
    %v5989 = vmax.f32 %v5987, %v5988
    %v5990 = vrot.slane %v5247, 4
    %v5991 = vmax.f32 %v5247, %v5990
    %v5992 = vrot.slane %v5991, 2
    %v5993 = vmax.f32 %v5991, %v5992
    %v5994 = vrot.slane %v5993, 1
    %v5995 = vmax.f32 %v5993, %v5994
    %v5996 = vrot.slane %v5248, 4
    %v5997 = vmax.f32 %v5248, %v5996
    %v5998 = vrot.slane %v5997, 2
    %v5999 = vmax.f32 %v5997, %v5998
    %v6000 = vrot.slane %v5999, 1
    %v6001 = vmax.f32 %v5999, %v6000
    %v6002 = vrot.slane %v5249, 4
    %v6003 = vmax.f32 %v5249, %v6002
    %v6004 = vrot.slane %v6003, 2
    %v6005 = vmax.f32 %v6003, %v6004
    %v6006 = vrot.slane %v6005, 1
    %v6007 = vmax.f32 %v6005, %v6006
    %v6008 = vrot.slane %v5250, 4
    %v6009 = vmax.f32 %v5250, %v6008
    %v6010 = vrot.slane %v6009, 2
    %v6011 = vmax.f32 %v6009, %v6010
    %v6012 = vrot.slane %v6011, 1
    %v6013 = vmax.f32 %v6011, %v6012
    %v6014 = vrot.slane %v5251, 4
    %v6015 = vmax.f32 %v5251, %v6014
    %v6016 = vrot.slane %v6015, 2
    %v6017 = vmax.f32 %v6015, %v6016
    %v6018 = vrot.slane %v6017, 1
    %v6019 = vmax.f32 %v6017, %v6018
    %v6020 = vld [vmem:[%s10] sm:$0xff]
    %v6021 = vld [vmem:[%s10 + $0x8] sm:$0xff]
    %v6022 = vld [vmem:[%s10 + $0x10] sm:$0xff]
    %v6023 = vld [vmem:[%s10 + $0x18] sm:$0xff]
    %v6024 = vld [vmem:[%s10 + $0x20] sm:$0xff]
    %v6025 = vld [vmem:[%s10 + $0x28] sm:$0xff]
    %v6026 = vld [vmem:[%s10 + $0x30] sm:$0xff]
    %v6027 = vld [vmem:[%s10 + $0x38] sm:$0xff]
    %v6028 = vld [vmem:[%s10 + $0x40] sm:$0xff]
    %v6029 = vld [vmem:[%s10 + $0x48] sm:$0xff]
    %v6030 = vld [vmem:[%s10 + $0x50] sm:$0xff]
    %v6031 = vld [vmem:[%s10 + $0x58] sm:$0xff]
    %v6032 = vld [vmem:[%s10 + $0x60] sm:$0xff]
    %v6033 = vld [vmem:[%s10 + $0x68] sm:$0xff]
    %v6034 = vld [vmem:[%s10 + $0x70] sm:$0xff]
    %v6035 = vld [vmem:[%s10 + $0x78] sm:$0xff]
    %v6036 = vld [vmem:[%s11] sm:$0x1]
    %v6038 = vlaneseq
    %v6039 = vshrl.u32 %v6038, 7
    %v6040 = vsub.s32 0, %v6039
    %v6041 = vrot.slane %v6036, %v6040
    %vm6171 = vcmask 1041409
    %v6172 = vsel %vm6171, %v5263, %v5257
    %vm6173 = vcmask 1042434
    %v6174 = vsel %vm6173, %v5269, %v6172
    %vm6175 = vcmask 1043459
    %v6176 = vsel %vm6175, %v5275, %v6174
    %vm6177 = vcmask 1044484
    %v6178 = vsel %vm6177, %v5281, %v6176
    %vm6179 = vcmask 1045509
    %v6180 = vsel %vm6179, %v5287, %v6178
    %vm6181 = vcmask 1046534
    %v6182 = vsel %vm6181, %v5293, %v6180
    %vm6183 = vcmask 1047559
    %v6184 = vsel %vm6183, %v5299, %v6182
    %v6185 = vsel %vm6171, %v5311, %v5305
    %v6186 = vsel %vm6173, %v5317, %v6185
    %v6187 = vsel %vm6175, %v5323, %v6186
    %v6188 = vsel %vm6177, %v5329, %v6187
    %v6189 = vsel %vm6179, %v5335, %v6188
    %v6190 = vsel %vm6181, %v5341, %v6189
    %v6191 = vsel %vm6183, %v5347, %v6190
    %v6192 = vsel %vm6171, %v5359, %v5353
    %v6193 = vsel %vm6173, %v5365, %v6192
    %v6194 = vsel %vm6175, %v5371, %v6193
    %v6195 = vsel %vm6177, %v5377, %v6194
    %v6196 = vsel %vm6179, %v5383, %v6195
    %v6197 = vsel %vm6181, %v5389, %v6196
    %v6198 = vsel %vm6183, %v5395, %v6197
    %v6199 = vsel %vm6171, %v5407, %v5401
    %v6200 = vsel %vm6173, %v5413, %v6199
    %v6201 = vsel %vm6175, %v5419, %v6200
    %v6202 = vsel %vm6177, %v5425, %v6201
    %v6203 = vsel %vm6179, %v5431, %v6202
    %v6204 = vsel %vm6181, %v5437, %v6203
    %v6205 = vsel %vm6183, %v5443, %v6204
    %v6206 = vsel %vm6171, %v5455, %v5449
    %v6207 = vsel %vm6173, %v5461, %v6206
    %v6208 = vsel %vm6175, %v5467, %v6207
    %v6209 = vsel %vm6177, %v5473, %v6208
    %v6210 = vsel %vm6179, %v5479, %v6209
    %v6211 = vsel %vm6181, %v5485, %v6210
    %v6212 = vsel %vm6183, %v5491, %v6211
    %v6213 = vsel %vm6171, %v5503, %v5497
    %v6214 = vsel %vm6173, %v5509, %v6213
    %v6215 = vsel %vm6175, %v5515, %v6214
    %v6216 = vsel %vm6177, %v5521, %v6215
    %v6217 = vsel %vm6179, %v5527, %v6216
    %v6218 = vsel %vm6181, %v5533, %v6217
    %v6219 = vsel %vm6183, %v5539, %v6218
    %v6220 = vsel %vm6171, %v5551, %v5545
    %v6221 = vsel %vm6173, %v5557, %v6220
    %v6222 = vsel %vm6175, %v5563, %v6221
    %v6223 = vsel %vm6177, %v5569, %v6222
    %v6224 = vsel %vm6179, %v5575, %v6223
    %v6225 = vsel %vm6181, %v5581, %v6224
    %v6226 = vsel %vm6183, %v5587, %v6225
    %v6227 = vsel %vm6171, %v5599, %v5593
    %v6228 = vsel %vm6173, %v5605, %v6227
    %v6229 = vsel %vm6175, %v5611, %v6228
    %v6230 = vsel %vm6177, %v5617, %v6229
    %v6231 = vsel %vm6179, %v5623, %v6230
    %v6232 = vsel %vm6181, %v5629, %v6231
    %v6233 = vsel %vm6183, %v5635, %v6232
    %v6234 = vsel %vm6171, %v5647, %v5641
    %v6235 = vsel %vm6173, %v5653, %v6234
    %v6236 = vsel %vm6175, %v5659, %v6235
    %v6237 = vsel %vm6177, %v5665, %v6236
    %v6238 = vsel %vm6179, %v5671, %v6237
    %v6239 = vsel %vm6181, %v5677, %v6238
    %v6240 = vsel %vm6183, %v5683, %v6239
    %v6241 = vsel %vm6171, %v5695, %v5689
    %v6242 = vsel %vm6173, %v5701, %v6241
    %v6243 = vsel %vm6175, %v5707, %v6242
    %v6244 = vsel %vm6177, %v5713, %v6243
    %v6245 = vsel %vm6179, %v5719, %v6244
    %v6246 = vsel %vm6181, %v5725, %v6245
    %v6247 = vsel %vm6183, %v5731, %v6246
    %v6248 = vsel %vm6171, %v5743, %v5737
    %v6249 = vsel %vm6173, %v5749, %v6248
    %v6250 = vsel %vm6175, %v5755, %v6249
    %v6251 = vsel %vm6177, %v5761, %v6250
    %v6252 = vsel %vm6179, %v5767, %v6251
    %v6253 = vsel %vm6181, %v5773, %v6252
    %v6254 = vsel %vm6183, %v5779, %v6253
    %v6255 = vsel %vm6171, %v5791, %v5785
    %v6256 = vsel %vm6173, %v5797, %v6255
    %v6257 = vsel %vm6175, %v5803, %v6256
    %v6258 = vsel %vm6177, %v5809, %v6257
    %v6259 = vsel %vm6179, %v5815, %v6258
    %v6260 = vsel %vm6181, %v5821, %v6259
    %v6261 = vsel %vm6183, %v5827, %v6260
    %v6262 = vsel %vm6171, %v5839, %v5833
    %v6263 = vsel %vm6173, %v5845, %v6262
    %v6264 = vsel %vm6175, %v5851, %v6263
    %v6265 = vsel %vm6177, %v5857, %v6264
    %v6266 = vsel %vm6179, %v5863, %v6265
    %v6267 = vsel %vm6181, %v5869, %v6266
    %v6268 = vsel %vm6183, %v5875, %v6267
    %v6269 = vsel %vm6171, %v5887, %v5881
    %v6270 = vsel %vm6173, %v5893, %v6269
    %v6271 = vsel %vm6175, %v5899, %v6270
    %v6272 = vsel %vm6177, %v5905, %v6271
    %v6273 = vsel %vm6179, %v5911, %v6272
    %v6274 = vsel %vm6181, %v5917, %v6273
    %v6275 = vsel %vm6183, %v5923, %v6274
    %v6276 = vsel %vm6171, %v5935, %v5929
    %v6277 = vsel %vm6173, %v5941, %v6276
    %v6278 = vsel %vm6175, %v5947, %v6277
    %v6279 = vsel %vm6177, %v5953, %v6278
    %v6280 = vsel %vm6179, %v5959, %v6279
    %v6281 = vsel %vm6181, %v5965, %v6280
    %v6282 = vsel %vm6183, %v5971, %v6281
    %v6283 = vsel %vm6171, %v5983, %v5977
    %v6284 = vsel %vm6173, %v5989, %v6283
    %v6285 = vsel %vm6175, %v5995, %v6284
    %v6286 = vsel %vm6177, %v6001, %v6285
    %v6287 = vsel %vm6179, %v6007, %v6286
    %v6288 = vsel %vm6181, %v6013, %v6287
    %v6289 = vsel %vm6183, %v6019, %v6288
    %6306 = vmatprep.subr.mxu0 0.0
    %6307 = vmatpush1.msra.mxu0 %v6035
    %6308 = vmatprep.subr.mxu0 0.0
    %6309 = vmatpush1.msra.mxu0 %v6034
    %6310 = vmatprep.subr.mxu0 0.0
    %6311 = vmatpush1.msra.mxu0 %v6033
    %6312 = vmatprep.subr.mxu0 0.0
    %6313 = vmatpush1.msra.mxu0 %v6032
    %6314 = vmatprep.subr.mxu0 0.0
    %6315 = vmatpush1.msra.mxu0 %v6031
    %6316 = vmatprep.subr.mxu0 0.0
    %6317 = vmatpush1.msra.mxu0 %v6030
    %6318 = vmatprep.subr.mxu0 0.0
    %6319 = vmatpush1.msra.mxu0 %v6029
    %6320 = vmatprep.subr.mxu0 0.0
    %6321 = vmatpush1.msra.mxu0 %v6028
    %6322 = vmatprep.subr.mxu0 0.0
    %6323 = vmatpush1.msra.mxu0 %v6027
    %6324 = vmatprep.subr.mxu0 0.0
    %6325 = vmatpush1.msra.mxu0 %v6026
    %6326 = vmatprep.subr.mxu0 0.0
    %6327 = vmatpush1.msra.mxu0 %v6025
    %6328 = vmatprep.subr.mxu0 0.0
    %6329 = vmatpush1.msra.mxu0 %v6024
    %6330 = vmatprep.subr.mxu0 0.0
    %6331 = vmatpush1.msra.mxu0 %v6023
    %6332 = vmatprep.subr.mxu0 0.0
    %6333 = vmatpush1.msra.mxu0 %v6022
    %6334 = vmatprep.subr.mxu0 0.0
    %6335 = vmatpush1.msra.mxu0 %v6021
    %6336 = vmatprep.subr.mxu0 0.0
    %6337 = vmatpush1.msra.mxu0 %v6020
    %6338 = vmatprep.subr.mxu0 0.0
    %6339 = vmatpush2.msra.mxu0 0.0
    %6340 = vmatprep.subr.mxu0 0.0
    %6341 = vmatpush2.msra.mxu0 0.0
    %6342 = vmatprep.subr.mxu0 0.0
    %6343 = vmatpush2.msra.mxu0 0.0
    %6344 = vmatprep.subr.mxu0 0.0
    %6345 = vmatpush2.msra.mxu0 0.0
    %6346 = vmatprep.subr.mxu0 0.0
    %6347 = vmatpush2.msra.mxu0 0.0
    %6348 = vmatprep.subr.mxu0 0.0
    %6349 = vmatpush2.msra.mxu0 0.0
    %6350 = vmatprep.subr.mxu0 0.0
    %6351 = vmatpush2.msra.mxu0 0.0
    %6352 = vmatprep.subr.mxu0 0.0
    %6353 = vmatpush2.msra.mxu0 0.0
    %6354 = vmatprep.subr.mxu0 0.0
    %6355 = vmatpush2.msra.mxu0 0.0
    %6356 = vmatprep.subr.mxu0 0.0
    %6357 = vmatpush2.msra.mxu0 0.0
    %6358 = vmatprep.subr.mxu0 0.0
    %6359 = vmatpush2.msra.mxu0 0.0
    %6360 = vmatprep.subr.mxu0 0.0
    %6361 = vmatpush2.msra.mxu0 0.0
    %6362 = vmatprep.subr.mxu0 0.0
    %6363 = vmatpush2.msra.mxu0 0.0
    %6364 = vmatprep.subr.mxu0 0.0
    %6365 = vmatpush2.msra.mxu0 0.0
    %6366 = vmatprep.subr.mxu0 0.0
    %6367 = vmatpush2.msra.mxu0 0.0
    %6368 = vmatprep.subr.mxu0 0.0
    %6369 = vmatpush2.msra.mxu0 0.0
    %6370 = vmatprep.mubr.f32.mxu0 0.0
    %6371 = vmatmul.mubr.f32.gmra.mxu0 %v6184
    %v6372 = vpop.f32.mrf.mxu0
    %v6373 = vadd.f32 %v6041, %v6372
    %v6374 = vpop.f32.mrf.mxu0
    %6375 = vmatprep.mubr.f32.mxu0 0.0
    %6376 = vmatmul.mubr.f32.gmra.mxu0 %v6191
    %v6377 = vpop.f32.mrf.mxu0
    %v6378 = vadd.f32 %v6041, %v6377
    %v6379 = vpop.f32.mrf.mxu0
    %6380 = vmatprep.mubr.f32.mxu0 0.0
    %6381 = vmatmul.mubr.f32.gmra.mxu0 %v6198
    %v6382 = vpop.f32.mrf.mxu0
    %v6383 = vadd.f32 %v6041, %v6382
    %v6384 = vpop.f32.mrf.mxu0
    %6385 = vmatprep.mubr.f32.mxu0 0.0
    %6386 = vmatmul.mubr.f32.gmra.mxu0 %v6205
    %v6387 = vpop.f32.mrf.mxu0
    %v6388 = vadd.f32 %v6041, %v6387
    %v6389 = vpop.f32.mrf.mxu0
    %6390 = vmatprep.mubr.f32.mxu0 0.0
    %6391 = vmatmul.mubr.f32.gmra.mxu0 %v6212
    %v6392 = vpop.f32.mrf.mxu0
    %v6393 = vadd.f32 %v6041, %v6392
    %v6394 = vpop.f32.mrf.mxu0
    %6395 = vmatprep.mubr.f32.mxu0 0.0
    %6396 = vmatmul.mubr.f32.gmra.mxu0 %v6219
    %v6397 = vpop.f32.mrf.mxu0
    %v6398 = vadd.f32 %v6041, %v6397
    %v6399 = vpop.f32.mrf.mxu0
    %6400 = vmatprep.mubr.f32.mxu0 0.0
    %6401 = vmatmul.mubr.f32.gmra.mxu0 %v6226
    %v6402 = vpop.f32.mrf.mxu0
    %v6403 = vadd.f32 %v6041, %v6402
    %v6404 = vpop.f32.mrf.mxu0
    %6405 = vmatprep.mubr.f32.mxu0 0.0
    %6406 = vmatmul.mubr.f32.gmra.mxu0 %v6233
    %v6407 = vpop.f32.mrf.mxu0
    %v6408 = vadd.f32 %v6041, %v6407
    %v6409 = vpop.f32.mrf.mxu0
    %6410 = vmatprep.mubr.f32.mxu0 0.0
    %6411 = vmatmul.mubr.f32.gmra.mxu0 %v6240
    %v6412 = vpop.f32.mrf.mxu0
    %v6413 = vadd.f32 %v6041, %v6412
    %v6414 = vpop.f32.mrf.mxu0
    %6415 = vmatprep.mubr.f32.mxu0 0.0
    %6416 = vmatmul.mubr.f32.gmra.mxu0 %v6247
    %v6417 = vpop.f32.mrf.mxu0
    %v6418 = vadd.f32 %v6041, %v6417
    %v6419 = vpop.f32.mrf.mxu0
    %6420 = vmatprep.mubr.f32.mxu0 0.0
    %6421 = vmatmul.mubr.f32.gmra.mxu0 %v6254
    %v6422 = vpop.f32.mrf.mxu0
    %v6423 = vadd.f32 %v6041, %v6422
    %v6424 = vpop.f32.mrf.mxu0
    %6425 = vmatprep.mubr.f32.mxu0 0.0
    %6426 = vmatmul.mubr.f32.gmra.mxu0 %v6261
    %v6427 = vpop.f32.mrf.mxu0
    %v6428 = vadd.f32 %v6041, %v6427
    %v6429 = vpop.f32.mrf.mxu0
    %6430 = vmatprep.mubr.f32.mxu0 0.0
    %6431 = vmatmul.mubr.f32.gmra.mxu0 %v6268
    %v6432 = vpop.f32.mrf.mxu0
    %v6433 = vadd.f32 %v6041, %v6432
    %v6434 = vpop.f32.mrf.mxu0
    %6435 = vmatprep.mubr.f32.mxu0 0.0
    %6436 = vmatmul.mubr.f32.gmra.mxu0 %v6275
    %v6437 = vpop.f32.mrf.mxu0
    %v6438 = vadd.f32 %v6041, %v6437
    %v6439 = vpop.f32.mrf.mxu0
    %6440 = vmatprep.mubr.f32.mxu0 0.0
    %6441 = vmatmul.mubr.f32.gmra.mxu0 %v6282
    %v6442 = vpop.f32.mrf.mxu0
    %v6443 = vadd.f32 %v6041, %v6442
    %v6444 = vpop.f32.mrf.mxu0
    %6445 = vmatprep.mubr.f32.mxu0 0.0
    %6446 = vmatmul.mubr.f32.gmra.mxu0 %v6289
    %v6447 = vpop.f32.mrf.mxu0
    %v6448 = vadd.f32 %v6041, %v6447
    %v6449 = vpop.f32.mrf.mxu0
    %6450 = vdwg.mxu0
    %v6451 = vadd.f32 %v6373, %v6378
    %v6452 = vadd.f32 %v6451, %v6383
    %v6453 = vadd.f32 %v6452, %v6388
    %v6454 = vadd.f32 %v6453, %v6393
    %v6455 = vadd.f32 %v6454, %v6398
    %v6456 = vadd.f32 %v6455, %v6403
    %v6457 = vadd.f32 %v6456, %v6408
    %v6458 = vrot.slane %v6457, 4
    %v6459 = vadd.f32 %v6457, %v6458
    %v6460 = vrot.slane %v6459, 2
    %v6461 = vadd.f32 %v6459, %v6460
    %v6462 = vrot.slane %v6461, 1
    %v6463 = vadd.f32 %v6461, %v6462
    %v6464 = vadd.f32 %v6413, %v6418
    %v6465 = vadd.f32 %v6464, %v6423
    %v6466 = vadd.f32 %v6465, %v6428
    %v6467 = vadd.f32 %v6466, %v6433
    %v6468 = vadd.f32 %v6467, %v6438
    %v6469 = vadd.f32 %v6468, %v6443
    %v6470 = vadd.f32 %v6469, %v6448
    %v6471 = vrot.slane %v6470, 4
    %v6472 = vadd.f32 %v6470, %v6471
    %v6473 = vrot.slane %v6472, 2
    %v6474 = vadd.f32 %v6472, %v6473
    %v6475 = vrot.slane %v6474, 1
    %v6476 = vadd.f32 %v6474, %v6475
    %v6477 = vrcp.pop 64.0
    %v6478 = vmul.f32 %v6463, %v6477
    %v6479 = vmul.f32 %v6476, %v6477
    %v6480 = vmul.f32 %v6373, %v6373
    %v6481 = vmul.f32 %v6378, %v6378
    %v6482 = vmul.f32 %v6383, %v6383
    %v6483 = vmul.f32 %v6388, %v6388
    %v6484 = vmul.f32 %v6393, %v6393
    %v6485 = vmul.f32 %v6398, %v6398
    %v6486 = vmul.f32 %v6403, %v6403
    %v6487 = vmul.f32 %v6408, %v6408
    %v6488 = vmul.f32 %v6413, %v6413
    %v6489 = vmul.f32 %v6418, %v6418
    %v6490 = vmul.f32 %v6423, %v6423
    %v6491 = vmul.f32 %v6428, %v6428
    %v6492 = vmul.f32 %v6433, %v6433
    %v6493 = vmul.f32 %v6438, %v6438
    %v6494 = vmul.f32 %v6443, %v6443
    %v6495 = vmul.f32 %v6448, %v6448
    %v6496 = vadd.f32 %v6480, %v6481
    %v6497 = vadd.f32 %v6496, %v6482
    %v6498 = vadd.f32 %v6497, %v6483
    %v6499 = vadd.f32 %v6498, %v6484
    %v6500 = vadd.f32 %v6499, %v6485
    %v6501 = vadd.f32 %v6500, %v6486
    %v6502 = vadd.f32 %v6501, %v6487
    %v6503 = vrot.slane %v6502, 4
    %v6504 = vadd.f32 %v6502, %v6503
    %v6505 = vrot.slane %v6504, 2
    %v6506 = vadd.f32 %v6504, %v6505
    %v6507 = vrot.slane %v6506, 1
    %v6508 = vadd.f32 %v6506, %v6507
    %v6509 = vadd.f32 %v6488, %v6489
    %v6510 = vadd.f32 %v6509, %v6490
    %v6511 = vadd.f32 %v6510, %v6491
    %v6512 = vadd.f32 %v6511, %v6492
    %v6513 = vadd.f32 %v6512, %v6493
    %v6514 = vadd.f32 %v6513, %v6494
    %v6515 = vadd.f32 %v6514, %v6495
    %v6516 = vrot.slane %v6515, 4
    %v6517 = vadd.f32 %v6515, %v6516
    %v6518 = vrot.slane %v6517, 2
    %v6519 = vadd.f32 %v6517, %v6518
    %v6520 = vrot.slane %v6519, 1
    %v6521 = vadd.f32 %v6519, %v6520
    %v6522 = vmul.f32 %v6508, %v6477
    %v6523 = vmul.f32 %v6521, %v6477
    %v6524 = vmul.f32 %v6478, %v6478
    %v6525 = vmul.f32 %v6479, %v6479
    %v6526 = vsub.f32 %v6522, %v6524
    %v6527 = vsub.f32 %v6523, %v6525
    %v6528 = vmax.f32 %v6526, 0.0
    %v6529 = vmax.f32 %v6527, 0.0
    %v6530 = vsub.f32 %v6373, %v6478
    %v6531 = vsub.f32 %v6378, %v6478
    %v6532 = vsub.f32 %v6383, %v6478
    %v6533 = vsub.f32 %v6388, %v6478
    %v6534 = vsub.f32 %v6393, %v6478
    %v6535 = vsub.f32 %v6398, %v6478
    %v6536 = vsub.f32 %v6403, %v6478
    %v6537 = vsub.f32 %v6408, %v6478
    %v6538 = vsub.f32 %v6413, %v6479
    %v6539 = vsub.f32 %v6418, %v6479
    %v6540 = vsub.f32 %v6423, %v6479
    %v6541 = vsub.f32 %v6428, %v6479
    %v6542 = vsub.f32 %v6433, %v6479
    %v6543 = vsub.f32 %v6438, %v6479
    %v6544 = vsub.f32 %v6443, %v6479
    %v6545 = vsub.f32 %v6448, %v6479
    %v6546 = vadd.f32 %v6528, 1e-05
    %v6547 = vadd.f32 %v6529, 1e-05
    %v6548 = vrsqrt.pop %v6546
    %v6549 = vrsqrt.pop %v6547
    %v6550 = vmul.f32 %v6530, %v6548
    %v6551 = vmul.f32 %v6531, %v6548
    %v6552 = vmul.f32 %v6532, %v6548
    %v6553 = vmul.f32 %v6533, %v6548
    %v6554 = vmul.f32 %v6534, %v6548
    %v6555 = vmul.f32 %v6535, %v6548
    %v6556 = vmul.f32 %v6536, %v6548
    %v6557 = vmul.f32 %v6537, %v6548
    %v6558 = vmul.f32 %v6538, %v6549
    %v6559 = vmul.f32 %v6539, %v6549
    %v6560 = vmul.f32 %v6540, %v6549
    %v6561 = vmul.f32 %v6541, %v6549
    %v6562 = vmul.f32 %v6542, %v6549
    %v6563 = vmul.f32 %v6543, %v6549
    %v6564 = vmul.f32 %v6544, %v6549
    %v6565 = vmul.f32 %v6545, %v6549
    %v6566 = vld [vmem:[%s12] sm:$0x1]
    %v6567 = vld [vmem:[%s13] sm:$0x1]
    %v6568 = vadd.f32 %v6550, %v6551
    %v6569 = vadd.f32 %v6568, %v6552
    %v6570 = vadd.f32 %v6569, %v6553
    %v6571 = vadd.f32 %v6570, %v6554
    %v6572 = vadd.f32 %v6571, %v6555
    %v6573 = vadd.f32 %v6572, %v6556
    %v6574 = vadd.f32 %v6573, %v6557
    %v6575 = vadd.f32 %v6574, %v6558
    %v6576 = vadd.f32 %v6575, %v6559
    %v6577 = vadd.f32 %v6576, %v6560
    %v6578 = vadd.f32 %v6577, %v6561
    %v6579 = vadd.f32 %v6578, %v6562
    %v6580 = vadd.f32 %v6579, %v6563
    %v6581 = vadd.f32 %v6580, %v6564
    %v6582 = vadd.f32 %v6581, %v6565
    %v6583 = vrot.slane %v6582, 4
    %v6584 = vadd.f32 %v6582, %v6583
    %v6585 = vrot.slane %v6584, 2
    %v6586 = vadd.f32 %v6584, %v6585
    %v6587 = vrot.slane %v6586, 1
    %v6588 = vadd.f32 %v6586, %v6587
    %v6589 = vrcp.pop 128.0
    %v6590 = vmul.f32 %v6588, %v6589
    %v6591 = vmul.f32 %v6550, %v6550
    %v6592 = vmul.f32 %v6551, %v6551
    %v6593 = vmul.f32 %v6552, %v6552
    %v6594 = vmul.f32 %v6553, %v6553
    %v6595 = vmul.f32 %v6554, %v6554
    %v6596 = vmul.f32 %v6555, %v6555
    %v6597 = vmul.f32 %v6556, %v6556
    %v6598 = vmul.f32 %v6557, %v6557
    %v6599 = vmul.f32 %v6558, %v6558
    %v6600 = vmul.f32 %v6559, %v6559
    %v6601 = vmul.f32 %v6560, %v6560
    %v6602 = vmul.f32 %v6561, %v6561
    %v6603 = vmul.f32 %v6562, %v6562
    %v6604 = vmul.f32 %v6563, %v6563
    %v6605 = vmul.f32 %v6564, %v6564
    %v6606 = vmul.f32 %v6565, %v6565
    %v6607 = vadd.f32 %v6591, %v6592
    %v6608 = vadd.f32 %v6607, %v6593
    %v6609 = vadd.f32 %v6608, %v6594
    %v6610 = vadd.f32 %v6609, %v6595
    %v6611 = vadd.f32 %v6610, %v6596
    %v6612 = vadd.f32 %v6611, %v6597
    %v6613 = vadd.f32 %v6612, %v6598
    %v6614 = vadd.f32 %v6613, %v6599
    %v6615 = vadd.f32 %v6614, %v6600
    %v6616 = vadd.f32 %v6615, %v6601
    %v6617 = vadd.f32 %v6616, %v6602
    %v6618 = vadd.f32 %v6617, %v6603
    %v6619 = vadd.f32 %v6618, %v6604
    %v6620 = vadd.f32 %v6619, %v6605
    %v6621 = vadd.f32 %v6620, %v6606
    %v6622 = vrot.slane %v6621, 4
    %v6623 = vadd.f32 %v6621, %v6622
    %v6624 = vrot.slane %v6623, 2
    %v6625 = vadd.f32 %v6623, %v6624
    %v6626 = vrot.slane %v6625, 1
    %v6627 = vadd.f32 %v6625, %v6626
    %v6628 = vmul.f32 %v6627, %v6589
    %v6629 = vmul.f32 %v6590, %v6590
    %v6630 = vsub.f32 %v6628, %v6629
    %v6631 = vmax.f32 %v6630, 0.0
    %v6632 = vsub.f32 %v6550, %v6590
    %v6633 = vsub.f32 %v6551, %v6590
    %v6634 = vsub.f32 %v6552, %v6590
    %v6635 = vsub.f32 %v6553, %v6590
    %v6636 = vsub.f32 %v6554, %v6590
    %v6637 = vsub.f32 %v6555, %v6590
    %v6638 = vsub.f32 %v6556, %v6590
    %v6639 = vsub.f32 %v6557, %v6590
    %v6640 = vsub.f32 %v6558, %v6590
    %v6641 = vsub.f32 %v6559, %v6590
    %v6642 = vsub.f32 %v6560, %v6590
    %v6643 = vsub.f32 %v6561, %v6590
    %v6644 = vsub.f32 %v6562, %v6590
    %v6645 = vsub.f32 %v6563, %v6590
    %v6646 = vsub.f32 %v6564, %v6590
    %v6647 = vsub.f32 %v6565, %v6590
    %v6648 = vadd.f32 %v6631, 1e-05
    %v6649 = vrsqrt.pop %v6648
    %v6650 = vmul.f32 %v6632, %v6649
    %v6651 = vmul.f32 %v6633, %v6649
    %v6652 = vmul.f32 %v6634, %v6649
    %v6653 = vmul.f32 %v6635, %v6649
    %v6654 = vmul.f32 %v6636, %v6649
    %v6655 = vmul.f32 %v6637, %v6649
    %v6656 = vmul.f32 %v6638, %v6649
    %v6657 = vmul.f32 %v6639, %v6649
    %v6658 = vmul.f32 %v6640, %v6649
    %v6659 = vmul.f32 %v6641, %v6649
    %v6660 = vmul.f32 %v6642, %v6649
    %v6661 = vmul.f32 %v6643, %v6649
    %v6662 = vmul.f32 %v6644, %v6649
    %v6663 = vmul.f32 %v6645, %v6649
    %v6664 = vmul.f32 %v6646, %v6649
    %v6665 = vmul.f32 %v6647, %v6649
    %v6667 = vlaneseq
    %v6668 = vshrl.u32 %v6667, 7
    %v6669 = vsub.s32 0, %v6668
    %v6670 = vrot.slane %v6566, %v6669
    %v6672 = vmul.f32 %v6650, %v6670
    %v6673 = vmul.f32 %v6651, %v6670
    %v6674 = vmul.f32 %v6652, %v6670
    %v6675 = vmul.f32 %v6653, %v6670
    %v6676 = vmul.f32 %v6654, %v6670
    %v6677 = vmul.f32 %v6655, %v6670
    %v6678 = vmul.f32 %v6656, %v6670
    %v6679 = vmul.f32 %v6657, %v6670
    %v6680 = vmul.f32 %v6658, %v6670
    %v6681 = vmul.f32 %v6659, %v6670
    %v6682 = vmul.f32 %v6660, %v6670
    %v6683 = vmul.f32 %v6661, %v6670
    %v6684 = vmul.f32 %v6662, %v6670
    %v6685 = vmul.f32 %v6663, %v6670
    %v6686 = vmul.f32 %v6664, %v6670
    %v6687 = vmul.f32 %v6665, %v6670
    %v6689 = vlaneseq
    %v6690 = vshrl.u32 %v6689, 7
    %v6691 = vsub.s32 0, %v6690
    %v6692 = vrot.slane %v6567, %v6691
    %v6694 = vadd.f32 %v6672, %v6692
    %v6695 = vadd.f32 %v6673, %v6692
    %v6696 = vadd.f32 %v6674, %v6692
    %v6697 = vadd.f32 %v6675, %v6692
    %v6698 = vadd.f32 %v6676, %v6692
    %v6699 = vadd.f32 %v6677, %v6692
    %v6700 = vadd.f32 %v6678, %v6692
    %v6701 = vadd.f32 %v6679, %v6692
    %v6702 = vadd.f32 %v6680, %v6692
    %v6703 = vadd.f32 %v6681, %v6692
    %v6704 = vadd.f32 %v6682, %v6692
    %v6705 = vadd.f32 %v6683, %v6692
    %v6706 = vadd.f32 %v6684, %v6692
    %v6707 = vadd.f32 %v6685, %v6692
    %v6708 = vadd.f32 %v6686, %v6692
    %v6709 = vadd.f32 %v6687, %v6692
    %v6710 = vmax.f32 %v6694, 0.0
    %v6711 = vmax.f32 %v6695, 0.0
    %v6712 = vmax.f32 %v6696, 0.0
    %v6713 = vmax.f32 %v6697, 0.0
    %v6714 = vmax.f32 %v6698, 0.0
    %v6715 = vmax.f32 %v6699, 0.0
    %v6716 = vmax.f32 %v6700, 0.0
    %v6717 = vmax.f32 %v6701, 0.0
    %v6718 = vmax.f32 %v6702, 0.0
    %v6719 = vmax.f32 %v6703, 0.0
    %v6720 = vmax.f32 %v6704, 0.0
    %v6721 = vmax.f32 %v6705, 0.0
    %v6722 = vmax.f32 %v6706, 0.0
    %v6723 = vmax.f32 %v6707, 0.0
    %v6724 = vmax.f32 %v6708, 0.0
    %v6725 = vmax.f32 %v6709, 0.0
    %s6726 = scalar_lea.vmem %s10, 128
    %v6727 = vld [vmem:[%s6726] sm:$0xff]
    %v6728 = vld [vmem:[%s6726 + $0x8] sm:$0xff]
    %v6729 = vld [vmem:[%s6726 + $0x10] sm:$0xff]
    %v6730 = vld [vmem:[%s6726 + $0x18] sm:$0xff]
    %v6731 = vld [vmem:[%s6726 + $0x20] sm:$0xff]
    %v6732 = vld [vmem:[%s6726 + $0x28] sm:$0xff]
    %v6733 = vld [vmem:[%s6726 + $0x30] sm:$0xff]
    %v6734 = vld [vmem:[%s6726 + $0x38] sm:$0xff]
    %v6735 = vld [vmem:[%s6726 + $0x40] sm:$0xff]
    %v6736 = vld [vmem:[%s6726 + $0x48] sm:$0xff]
    %v6737 = vld [vmem:[%s6726 + $0x50] sm:$0xff]
    %v6738 = vld [vmem:[%s6726 + $0x58] sm:$0xff]
    %v6739 = vld [vmem:[%s6726 + $0x60] sm:$0xff]
    %v6740 = vld [vmem:[%s6726 + $0x68] sm:$0xff]
    %v6741 = vld [vmem:[%s6726 + $0x70] sm:$0xff]
    %v6742 = vld [vmem:[%s6726 + $0x78] sm:$0xff]
    %s6743 = scalar_lea.vmem %s11, 1
    %v6744 = vld [vmem:[%s6743] sm:$0x1]
    %v6746 = vlaneseq
    %v6747 = vshrl.u32 %v6746, 7
    %v6748 = vsub.s32 0, %v6747
    %v6749 = vrot.slane %v6744, %v6748
    %6751 = vmatprep.subr.mxu0 0.0
    %6752 = vmatpush1.msra.mxu0 %v6742
    %6753 = vmatprep.subr.mxu0 0.0
    %6754 = vmatpush1.msra.mxu0 %v6741
    %6755 = vmatprep.subr.mxu0 0.0
    %6756 = vmatpush1.msra.mxu0 %v6740
    %6757 = vmatprep.subr.mxu0 0.0
    %6758 = vmatpush1.msra.mxu0 %v6739
    %6759 = vmatprep.subr.mxu0 0.0
    %6760 = vmatpush1.msra.mxu0 %v6738
    %6761 = vmatprep.subr.mxu0 0.0
    %6762 = vmatpush1.msra.mxu0 %v6737
    %6763 = vmatprep.subr.mxu0 0.0
    %6764 = vmatpush1.msra.mxu0 %v6736
    %6765 = vmatprep.subr.mxu0 0.0
    %6766 = vmatpush1.msra.mxu0 %v6735
    %6767 = vmatprep.subr.mxu0 0.0
    %6768 = vmatpush1.msra.mxu0 %v6734
    %6769 = vmatprep.subr.mxu0 0.0
    %6770 = vmatpush1.msra.mxu0 %v6733
    %6771 = vmatprep.subr.mxu0 0.0
    %6772 = vmatpush1.msra.mxu0 %v6732
    %6773 = vmatprep.subr.mxu0 0.0
    %6774 = vmatpush1.msra.mxu0 %v6731
    %6775 = vmatprep.subr.mxu0 0.0
    %6776 = vmatpush1.msra.mxu0 %v6730
    %6777 = vmatprep.subr.mxu0 0.0
    %6778 = vmatpush1.msra.mxu0 %v6729
    %6779 = vmatprep.subr.mxu0 0.0
    %6780 = vmatpush1.msra.mxu0 %v6728
    %6781 = vmatprep.subr.mxu0 0.0
    %6782 = vmatpush1.msra.mxu0 %v6727
    %6783 = vmatprep.subr.mxu0 0.0
    %6784 = vmatpush2.msra.mxu0 0.0
    %6785 = vmatprep.subr.mxu0 0.0
    %6786 = vmatpush2.msra.mxu0 0.0
    %6787 = vmatprep.subr.mxu0 0.0
    %6788 = vmatpush2.msra.mxu0 0.0
    %6789 = vmatprep.subr.mxu0 0.0
    %6790 = vmatpush2.msra.mxu0 0.0
    %6791 = vmatprep.subr.mxu0 0.0
    %6792 = vmatpush2.msra.mxu0 0.0
    %6793 = vmatprep.subr.mxu0 0.0
    %6794 = vmatpush2.msra.mxu0 0.0
    %6795 = vmatprep.subr.mxu0 0.0
    %6796 = vmatpush2.msra.mxu0 0.0
    %6797 = vmatprep.subr.mxu0 0.0
    %6798 = vmatpush2.msra.mxu0 0.0
    %6799 = vmatprep.subr.mxu0 0.0
    %6800 = vmatpush2.msra.mxu0 0.0
    %6801 = vmatprep.subr.mxu0 0.0
    %6802 = vmatpush2.msra.mxu0 0.0
    %6803 = vmatprep.subr.mxu0 0.0
    %6804 = vmatpush2.msra.mxu0 0.0
    %6805 = vmatprep.subr.mxu0 0.0
    %6806 = vmatpush2.msra.mxu0 0.0
    %6807 = vmatprep.subr.mxu0 0.0
    %6808 = vmatpush2.msra.mxu0 0.0
    %6809 = vmatprep.subr.mxu0 0.0
    %6810 = vmatpush2.msra.mxu0 0.0
    %6811 = vmatprep.subr.mxu0 0.0
    %6812 = vmatpush2.msra.mxu0 0.0
    %6813 = vmatprep.subr.mxu0 0.0
    %6814 = vmatpush2.msra.mxu0 0.0
    %6815 = vmatprep.mubr.f32.mxu0 0.0
    %6816 = vmatmul.mubr.f32.gmra.mxu0 %v6710
    %v6817 = vpop.f32.mrf.mxu0
    %v6818 = vadd.f32 %v6749, %v6817
    %v6819 = vpop.f32.mrf.mxu0
    %6820 = vmatprep.mubr.f32.mxu0 0.0
    %6821 = vmatmul.mubr.f32.gmra.mxu0 %v6711
    %v6822 = vpop.f32.mrf.mxu0
    %v6823 = vadd.f32 %v6749, %v6822
    %v6824 = vpop.f32.mrf.mxu0
    %6825 = vmatprep.mubr.f32.mxu0 0.0
    %6826 = vmatmul.mubr.f32.gmra.mxu0 %v6712
    %v6827 = vpop.f32.mrf.mxu0
    %v6828 = vadd.f32 %v6749, %v6827
    %v6829 = vpop.f32.mrf.mxu0
    %6830 = vmatprep.mubr.f32.mxu0 0.0
    %6831 = vmatmul.mubr.f32.gmra.mxu0 %v6713
    %v6832 = vpop.f32.mrf.mxu0
    %v6833 = vadd.f32 %v6749, %v6832
    %v6834 = vpop.f32.mrf.mxu0
    %6835 = vmatprep.mubr.f32.mxu0 0.0
    %6836 = vmatmul.mubr.f32.gmra.mxu0 %v6714
    %v6837 = vpop.f32.mrf.mxu0
    %v6838 = vadd.f32 %v6749, %v6837
    %v6839 = vpop.f32.mrf.mxu0
    %6840 = vmatprep.mubr.f32.mxu0 0.0
    %6841 = vmatmul.mubr.f32.gmra.mxu0 %v6715
    %v6842 = vpop.f32.mrf.mxu0
    %v6843 = vadd.f32 %v6749, %v6842
    %v6844 = vpop.f32.mrf.mxu0
    %6845 = vmatprep.mubr.f32.mxu0 0.0
    %6846 = vmatmul.mubr.f32.gmra.mxu0 %v6716
    %v6847 = vpop.f32.mrf.mxu0
    %v6848 = vadd.f32 %v6749, %v6847
    %v6849 = vpop.f32.mrf.mxu0
    %6850 = vmatprep.mubr.f32.mxu0 0.0
    %6851 = vmatmul.mubr.f32.gmra.mxu0 %v6717
    %v6852 = vpop.f32.mrf.mxu0
    %v6853 = vadd.f32 %v6749, %v6852
    %v6854 = vpop.f32.mrf.mxu0
    %6855 = vmatprep.mubr.f32.mxu0 0.0
    %6856 = vmatmul.mubr.f32.gmra.mxu0 %v6718
    %v6857 = vpop.f32.mrf.mxu0
    %v6858 = vadd.f32 %v6749, %v6857
    %v6859 = vpop.f32.mrf.mxu0
    %6860 = vmatprep.mubr.f32.mxu0 0.0
    %6861 = vmatmul.mubr.f32.gmra.mxu0 %v6719
    %v6862 = vpop.f32.mrf.mxu0
    %v6863 = vadd.f32 %v6749, %v6862
    %v6864 = vpop.f32.mrf.mxu0
    %6865 = vmatprep.mubr.f32.mxu0 0.0
    %6866 = vmatmul.mubr.f32.gmra.mxu0 %v6720
    %v6867 = vpop.f32.mrf.mxu0
    %v6868 = vadd.f32 %v6749, %v6867
    %v6869 = vpop.f32.mrf.mxu0
    %6870 = vmatprep.mubr.f32.mxu0 0.0
    %6871 = vmatmul.mubr.f32.gmra.mxu0 %v6721
    %v6872 = vpop.f32.mrf.mxu0
    %v6873 = vadd.f32 %v6749, %v6872
    %v6874 = vpop.f32.mrf.mxu0
    %6875 = vmatprep.mubr.f32.mxu0 0.0
    %6876 = vmatmul.mubr.f32.gmra.mxu0 %v6722
    %v6877 = vpop.f32.mrf.mxu0
    %v6878 = vadd.f32 %v6749, %v6877
    %v6879 = vpop.f32.mrf.mxu0
    %6880 = vmatprep.mubr.f32.mxu0 0.0
    %6881 = vmatmul.mubr.f32.gmra.mxu0 %v6723
    %v6882 = vpop.f32.mrf.mxu0
    %v6883 = vadd.f32 %v6749, %v6882
    %v6884 = vpop.f32.mrf.mxu0
    %6885 = vmatprep.mubr.f32.mxu0 0.0
    %6886 = vmatmul.mubr.f32.gmra.mxu0 %v6724
    %v6887 = vpop.f32.mrf.mxu0
    %v6888 = vadd.f32 %v6749, %v6887
    %v6889 = vpop.f32.mrf.mxu0
    %6890 = vmatprep.mubr.f32.mxu0 0.0
    %6891 = vmatmul.mubr.f32.gmra.mxu0 %v6725
    %v6892 = vpop.f32.mrf.mxu0
    %v6893 = vadd.f32 %v6749, %v6892
    %v6894 = vpop.f32.mrf.mxu0
    %6895 = vdwg.mxu0
    %v6896 = vadd.f32 %v6818, %v6823
    %v6897 = vadd.f32 %v6896, %v6828
    %v6898 = vadd.f32 %v6897, %v6833
    %v6899 = vadd.f32 %v6898, %v6838
    %v6900 = vadd.f32 %v6899, %v6843
    %v6901 = vadd.f32 %v6900, %v6848
    %v6902 = vadd.f32 %v6901, %v6853
    %v6903 = vrot.slane %v6902, 4
    %v6904 = vadd.f32 %v6902, %v6903
    %v6905 = vrot.slane %v6904, 2
    %v6906 = vadd.f32 %v6904, %v6905
    %v6907 = vrot.slane %v6906, 1
    %v6908 = vadd.f32 %v6906, %v6907
    %v6909 = vadd.f32 %v6858, %v6863
    %v6910 = vadd.f32 %v6909, %v6868
    %v6911 = vadd.f32 %v6910, %v6873
    %v6912 = vadd.f32 %v6911, %v6878
    %v6913 = vadd.f32 %v6912, %v6883
    %v6914 = vadd.f32 %v6913, %v6888
    %v6915 = vadd.f32 %v6914, %v6893
    %v6916 = vrot.slane %v6915, 4
    %v6917 = vadd.f32 %v6915, %v6916
    %v6918 = vrot.slane %v6917, 2
    %v6919 = vadd.f32 %v6917, %v6918
    %v6920 = vrot.slane %v6919, 1
    %v6921 = vadd.f32 %v6919, %v6920
    %v6922 = vmul.f32 %v6908, %v6477
    %v6923 = vmul.f32 %v6921, %v6477
    %v6924 = vmul.f32 %v6818, %v6818
    %v6925 = vmul.f32 %v6823, %v6823
    %v6926 = vmul.f32 %v6828, %v6828
    %v6927 = vmul.f32 %v6833, %v6833
    %v6928 = vmul.f32 %v6838, %v6838
    %v6929 = vmul.f32 %v6843, %v6843
    %v6930 = vmul.f32 %v6848, %v6848
    %v6931 = vmul.f32 %v6853, %v6853
    %v6932 = vmul.f32 %v6858, %v6858
    %v6933 = vmul.f32 %v6863, %v6863
    %v6934 = vmul.f32 %v6868, %v6868
    %v6935 = vmul.f32 %v6873, %v6873
    %v6936 = vmul.f32 %v6878, %v6878
    %v6937 = vmul.f32 %v6883, %v6883
    %v6938 = vmul.f32 %v6888, %v6888
    %v6939 = vmul.f32 %v6893, %v6893
    %v6940 = vadd.f32 %v6924, %v6925
    %v6941 = vadd.f32 %v6940, %v6926
    %v6942 = vadd.f32 %v6941, %v6927
    %v6943 = vadd.f32 %v6942, %v6928
    %v6944 = vadd.f32 %v6943, %v6929
    %v6945 = vadd.f32 %v6944, %v6930
    %v6946 = vadd.f32 %v6945, %v6931
    %v6947 = vrot.slane %v6946, 4
    %v6948 = vadd.f32 %v6946, %v6947
    %v6949 = vrot.slane %v6948, 2
    %v6950 = vadd.f32 %v6948, %v6949
    %v6951 = vrot.slane %v6950, 1
    %v6952 = vadd.f32 %v6950, %v6951
    %v6953 = vadd.f32 %v6932, %v6933
    %v6954 = vadd.f32 %v6953, %v6934
    %v6955 = vadd.f32 %v6954, %v6935
    %v6956 = vadd.f32 %v6955, %v6936
    %v6957 = vadd.f32 %v6956, %v6937
    %v6958 = vadd.f32 %v6957, %v6938
    %v6959 = vadd.f32 %v6958, %v6939
    %v6960 = vrot.slane %v6959, 4
    %v6961 = vadd.f32 %v6959, %v6960
    %v6962 = vrot.slane %v6961, 2
    %v6963 = vadd.f32 %v6961, %v6962
    %v6964 = vrot.slane %v6963, 1
    %v6965 = vadd.f32 %v6963, %v6964
    %v6966 = vmul.f32 %v6952, %v6477
    %v6967 = vmul.f32 %v6965, %v6477
    %v6968 = vmul.f32 %v6922, %v6922
    %v6969 = vmul.f32 %v6923, %v6923
    %v6970 = vsub.f32 %v6966, %v6968
    %v6971 = vsub.f32 %v6967, %v6969
    %v6972 = vmax.f32 %v6970, 0.0
    %v6973 = vmax.f32 %v6971, 0.0
    %v6974 = vsub.f32 %v6818, %v6922
    %v6975 = vsub.f32 %v6823, %v6922
    %v6976 = vsub.f32 %v6828, %v6922
    %v6977 = vsub.f32 %v6833, %v6922
    %v6978 = vsub.f32 %v6838, %v6922
    %v6979 = vsub.f32 %v6843, %v6922
    %v6980 = vsub.f32 %v6848, %v6922
    %v6981 = vsub.f32 %v6853, %v6922
    %v6982 = vsub.f32 %v6858, %v6923
    %v6983 = vsub.f32 %v6863, %v6923
    %v6984 = vsub.f32 %v6868, %v6923
    %v6985 = vsub.f32 %v6873, %v6923
    %v6986 = vsub.f32 %v6878, %v6923
    %v6987 = vsub.f32 %v6883, %v6923
    %v6988 = vsub.f32 %v6888, %v6923
    %v6989 = vsub.f32 %v6893, %v6923
    %v6990 = vadd.f32 %v6972, 1e-05
    %v6991 = vadd.f32 %v6973, 1e-05
    %v6992 = vrsqrt.pop %v6990
    %v6993 = vrsqrt.pop %v6991
    %v6994 = vmul.f32 %v6974, %v6992
    %v6995 = vmul.f32 %v6975, %v6992
    %v6996 = vmul.f32 %v6976, %v6992
    %v6997 = vmul.f32 %v6977, %v6992
    %v6998 = vmul.f32 %v6978, %v6992
    %v6999 = vmul.f32 %v6979, %v6992
    %v7000 = vmul.f32 %v6980, %v6992
    %v7001 = vmul.f32 %v6981, %v6992
    %v7002 = vmul.f32 %v6982, %v6993
    %v7003 = vmul.f32 %v6983, %v6993
    %v7004 = vmul.f32 %v6984, %v6993
    %v7005 = vmul.f32 %v6985, %v6993
    %v7006 = vmul.f32 %v6986, %v6993
    %v7007 = vmul.f32 %v6987, %v6993
    %v7008 = vmul.f32 %v6988, %v6993
    %v7009 = vmul.f32 %v6989, %v6993
    %s7010 = scalar_lea.vmem %s12, 1
    %v7011 = vld [vmem:[%s7010] sm:$0x1]
    %s7012 = scalar_lea.vmem %s13, 1
    %v7013 = vld [vmem:[%s7012] sm:$0x1]
    %v7014 = vadd.f32 %v6994, %v6995
    %v7015 = vadd.f32 %v7014, %v6996
    %v7016 = vadd.f32 %v7015, %v6997
    %v7017 = vadd.f32 %v7016, %v6998
    %v7018 = vadd.f32 %v7017, %v6999
    %v7019 = vadd.f32 %v7018, %v7000
    %v7020 = vadd.f32 %v7019, %v7001
    %v7021 = vadd.f32 %v7020, %v7002
    %v7022 = vadd.f32 %v7021, %v7003
    %v7023 = vadd.f32 %v7022, %v7004
    %v7024 = vadd.f32 %v7023, %v7005
    %v7025 = vadd.f32 %v7024, %v7006
    %v7026 = vadd.f32 %v7025, %v7007
    %v7027 = vadd.f32 %v7026, %v7008
    %v7028 = vadd.f32 %v7027, %v7009
    %v7029 = vrot.slane %v7028, 4
    %v7030 = vadd.f32 %v7028, %v7029
    %v7031 = vrot.slane %v7030, 2
    %v7032 = vadd.f32 %v7030, %v7031
    %v7033 = vrot.slane %v7032, 1
    %v7034 = vadd.f32 %v7032, %v7033
    %v7035 = vmul.f32 %v7034, %v6589
    %v7036 = vmul.f32 %v6994, %v6994
    %v7037 = vmul.f32 %v6995, %v6995
    %v7038 = vmul.f32 %v6996, %v6996
    %v7039 = vmul.f32 %v6997, %v6997
    %v7040 = vmul.f32 %v6998, %v6998
    %v7041 = vmul.f32 %v6999, %v6999
    %v7042 = vmul.f32 %v7000, %v7000
    %v7043 = vmul.f32 %v7001, %v7001
    %v7044 = vmul.f32 %v7002, %v7002
    %v7045 = vmul.f32 %v7003, %v7003
    %v7046 = vmul.f32 %v7004, %v7004
    %v7047 = vmul.f32 %v7005, %v7005
    %v7048 = vmul.f32 %v7006, %v7006
    %v7049 = vmul.f32 %v7007, %v7007
    %v7050 = vmul.f32 %v7008, %v7008
    %v7051 = vmul.f32 %v7009, %v7009
    %v7052 = vadd.f32 %v7036, %v7037
    %v7053 = vadd.f32 %v7052, %v7038
    %v7054 = vadd.f32 %v7053, %v7039
    %v7055 = vadd.f32 %v7054, %v7040
    %v7056 = vadd.f32 %v7055, %v7041
    %v7057 = vadd.f32 %v7056, %v7042
    %v7058 = vadd.f32 %v7057, %v7043
    %v7059 = vadd.f32 %v7058, %v7044
    %v7060 = vadd.f32 %v7059, %v7045
    %v7061 = vadd.f32 %v7060, %v7046
    %v7062 = vadd.f32 %v7061, %v7047
    %v7063 = vadd.f32 %v7062, %v7048
    %v7064 = vadd.f32 %v7063, %v7049
    %v7065 = vadd.f32 %v7064, %v7050
    %v7066 = vadd.f32 %v7065, %v7051
    %v7067 = vrot.slane %v7066, 4
    %v7068 = vadd.f32 %v7066, %v7067
    %v7069 = vrot.slane %v7068, 2
    %v7070 = vadd.f32 %v7068, %v7069
    %v7071 = vrot.slane %v7070, 1
    %v7072 = vadd.f32 %v7070, %v7071
    %v7073 = vmul.f32 %v7072, %v6589
    %v7074 = vmul.f32 %v7035, %v7035
    %v7075 = vsub.f32 %v7073, %v7074
    %v7076 = vmax.f32 %v7075, 0.0
    %v7077 = vsub.f32 %v6994, %v7035
    %v7078 = vsub.f32 %v6995, %v7035
    %v7079 = vsub.f32 %v6996, %v7035
    %v7080 = vsub.f32 %v6997, %v7035
    %v7081 = vsub.f32 %v6998, %v7035
    %v7082 = vsub.f32 %v6999, %v7035
    %v7083 = vsub.f32 %v7000, %v7035
    %v7084 = vsub.f32 %v7001, %v7035
    %v7085 = vsub.f32 %v7002, %v7035
    %v7086 = vsub.f32 %v7003, %v7035
    %v7087 = vsub.f32 %v7004, %v7035
    %v7088 = vsub.f32 %v7005, %v7035
    %v7089 = vsub.f32 %v7006, %v7035
    %v7090 = vsub.f32 %v7007, %v7035
    %v7091 = vsub.f32 %v7008, %v7035
    %v7092 = vsub.f32 %v7009, %v7035
    %v7093 = vadd.f32 %v7076, 1e-05
    %v7094 = vrsqrt.pop %v7093
    %v7095 = vmul.f32 %v7077, %v7094
    %v7096 = vmul.f32 %v7078, %v7094
    %v7097 = vmul.f32 %v7079, %v7094
    %v7098 = vmul.f32 %v7080, %v7094
    %v7099 = vmul.f32 %v7081, %v7094
    %v7100 = vmul.f32 %v7082, %v7094
    %v7101 = vmul.f32 %v7083, %v7094
    %v7102 = vmul.f32 %v7084, %v7094
    %v7103 = vmul.f32 %v7085, %v7094
    %v7104 = vmul.f32 %v7086, %v7094
    %v7105 = vmul.f32 %v7087, %v7094
    %v7106 = vmul.f32 %v7088, %v7094
    %v7107 = vmul.f32 %v7089, %v7094
    %v7108 = vmul.f32 %v7090, %v7094
    %v7109 = vmul.f32 %v7091, %v7094
    %v7110 = vmul.f32 %v7092, %v7094
    %v7112 = vlaneseq
    %v7113 = vshrl.u32 %v7112, 7
    %v7114 = vsub.s32 0, %v7113
    %v7115 = vrot.slane %v7011, %v7114
    %v7117 = vmul.f32 %v7095, %v7115
    %v7118 = vmul.f32 %v7096, %v7115
    %v7119 = vmul.f32 %v7097, %v7115
    %v7120 = vmul.f32 %v7098, %v7115
    %v7121 = vmul.f32 %v7099, %v7115
    %v7122 = vmul.f32 %v7100, %v7115
    %v7123 = vmul.f32 %v7101, %v7115
    %v7124 = vmul.f32 %v7102, %v7115
    %v7125 = vmul.f32 %v7103, %v7115
    %v7126 = vmul.f32 %v7104, %v7115
    %v7127 = vmul.f32 %v7105, %v7115
    %v7128 = vmul.f32 %v7106, %v7115
    %v7129 = vmul.f32 %v7107, %v7115
    %v7130 = vmul.f32 %v7108, %v7115
    %v7131 = vmul.f32 %v7109, %v7115
    %v7132 = vmul.f32 %v7110, %v7115
    %v7134 = vlaneseq
    %v7135 = vshrl.u32 %v7134, 7
    %v7136 = vsub.s32 0, %v7135
    %v7137 = vrot.slane %v7013, %v7136
    %v7139 = vadd.f32 %v7117, %v7137
    %v7140 = vadd.f32 %v7118, %v7137
    %v7141 = vadd.f32 %v7119, %v7137
    %v7142 = vadd.f32 %v7120, %v7137
    %v7143 = vadd.f32 %v7121, %v7137
    %v7144 = vadd.f32 %v7122, %v7137
    %v7145 = vadd.f32 %v7123, %v7137
    %v7146 = vadd.f32 %v7124, %v7137
    %v7147 = vadd.f32 %v7125, %v7137
    %v7148 = vadd.f32 %v7126, %v7137
    %v7149 = vadd.f32 %v7127, %v7137
    %v7150 = vadd.f32 %v7128, %v7137
    %v7151 = vadd.f32 %v7129, %v7137
    %v7152 = vadd.f32 %v7130, %v7137
    %v7153 = vadd.f32 %v7131, %v7137
    %v7154 = vadd.f32 %v7132, %v7137
    %v7155 = vadd.f32 %v7139, %v6184
    %v7156 = vadd.f32 %v7140, %v6191
    %v7157 = vadd.f32 %v7141, %v6198
    %v7158 = vadd.f32 %v7142, %v6205
    %v7159 = vadd.f32 %v7143, %v6212
    %v7160 = vadd.f32 %v7144, %v6219
    %v7161 = vadd.f32 %v7145, %v6226
    %v7162 = vadd.f32 %v7146, %v6233
    %v7163 = vadd.f32 %v7147, %v6240
    %v7164 = vadd.f32 %v7148, %v6247
    %v7165 = vadd.f32 %v7149, %v6254
    %v7166 = vadd.f32 %v7150, %v6261
    %v7167 = vadd.f32 %v7151, %v6268
    %v7168 = vadd.f32 %v7152, %v6275
    %v7169 = vadd.f32 %v7153, %v6282
    %v7170 = vadd.f32 %v7154, %v6289
    %v7171 = vmax.f32 %v7155, 0.0
    %v7172 = vmax.f32 %v7156, 0.0
    %v7173 = vmax.f32 %v7157, 0.0
    %v7174 = vmax.f32 %v7158, 0.0
    %v7175 = vmax.f32 %v7159, 0.0
    %v7176 = vmax.f32 %v7160, 0.0
    %v7177 = vmax.f32 %v7161, 0.0
    %v7178 = vmax.f32 %v7162, 0.0
    %v7179 = vmax.f32 %v7163, 0.0
    %v7180 = vmax.f32 %v7164, 0.0
    %v7181 = vmax.f32 %v7165, 0.0
    %v7182 = vmax.f32 %v7166, 0.0
    %v7183 = vmax.f32 %v7167, 0.0
    %v7184 = vmax.f32 %v7168, 0.0
    %v7185 = vmax.f32 %v7169, 0.0
    %v7186 = vmax.f32 %v7170, 0.0
    %s7187 = scalar_lea.vmem %s10, 256
    %v7188 = vld [vmem:[%s7187] sm:$0xff]
    %v7189 = vld [vmem:[%s7187 + $0x8] sm:$0xff]
    %v7190 = vld [vmem:[%s7187 + $0x10] sm:$0xff]
    %v7191 = vld [vmem:[%s7187 + $0x18] sm:$0xff]
    %v7192 = vld [vmem:[%s7187 + $0x20] sm:$0xff]
    %v7193 = vld [vmem:[%s7187 + $0x28] sm:$0xff]
    %v7194 = vld [vmem:[%s7187 + $0x30] sm:$0xff]
    %v7195 = vld [vmem:[%s7187 + $0x38] sm:$0xff]
    %v7196 = vld [vmem:[%s7187 + $0x40] sm:$0xff]
    %v7197 = vld [vmem:[%s7187 + $0x48] sm:$0xff]
    %v7198 = vld [vmem:[%s7187 + $0x50] sm:$0xff]
    %v7199 = vld [vmem:[%s7187 + $0x58] sm:$0xff]
    %v7200 = vld [vmem:[%s7187 + $0x60] sm:$0xff]
    %v7201 = vld [vmem:[%s7187 + $0x68] sm:$0xff]
    %v7202 = vld [vmem:[%s7187 + $0x70] sm:$0xff]
    %v7203 = vld [vmem:[%s7187 + $0x78] sm:$0xff]
    %s7204 = scalar_lea.vmem %s11, 2
    %v7205 = vld [vmem:[%s7204] sm:$0x1]
    %v7207 = vlaneseq
    %v7208 = vshrl.u32 %v7207, 7
    %v7209 = vsub.s32 0, %v7208
    %v7210 = vrot.slane %v7205, %v7209
    %7212 = vmatprep.subr.mxu0 0.0
    %7213 = vmatpush1.msra.mxu0 %v7203
    %7214 = vmatprep.subr.mxu0 0.0
    %7215 = vmatpush1.msra.mxu0 %v7202
    %7216 = vmatprep.subr.mxu0 0.0
    %7217 = vmatpush1.msra.mxu0 %v7201
    %7218 = vmatprep.subr.mxu0 0.0
    %7219 = vmatpush1.msra.mxu0 %v7200
    %7220 = vmatprep.subr.mxu0 0.0
    %7221 = vmatpush1.msra.mxu0 %v7199
    %7222 = vmatprep.subr.mxu0 0.0
    %7223 = vmatpush1.msra.mxu0 %v7198
    %7224 = vmatprep.subr.mxu0 0.0
    %7225 = vmatpush1.msra.mxu0 %v7197
    %7226 = vmatprep.subr.mxu0 0.0
    %7227 = vmatpush1.msra.mxu0 %v7196
    %7228 = vmatprep.subr.mxu0 0.0
    %7229 = vmatpush1.msra.mxu0 %v7195
    %7230 = vmatprep.subr.mxu0 0.0
    %7231 = vmatpush1.msra.mxu0 %v7194
    %7232 = vmatprep.subr.mxu0 0.0
    %7233 = vmatpush1.msra.mxu0 %v7193
    %7234 = vmatprep.subr.mxu0 0.0
    %7235 = vmatpush1.msra.mxu0 %v7192
    %7236 = vmatprep.subr.mxu0 0.0
    %7237 = vmatpush1.msra.mxu0 %v7191
    %7238 = vmatprep.subr.mxu0 0.0
    %7239 = vmatpush1.msra.mxu0 %v7190
    %7240 = vmatprep.subr.mxu0 0.0
    %7241 = vmatpush1.msra.mxu0 %v7189
    %7242 = vmatprep.subr.mxu0 0.0
    %7243 = vmatpush1.msra.mxu0 %v7188
    %7244 = vmatprep.subr.mxu0 0.0
    %7245 = vmatpush2.msra.mxu0 0.0
    %7246 = vmatprep.subr.mxu0 0.0
    %7247 = vmatpush2.msra.mxu0 0.0
    %7248 = vmatprep.subr.mxu0 0.0
    %7249 = vmatpush2.msra.mxu0 0.0
    %7250 = vmatprep.subr.mxu0 0.0
    %7251 = vmatpush2.msra.mxu0 0.0
    %7252 = vmatprep.subr.mxu0 0.0
    %7253 = vmatpush2.msra.mxu0 0.0
    %7254 = vmatprep.subr.mxu0 0.0
    %7255 = vmatpush2.msra.mxu0 0.0
    %7256 = vmatprep.subr.mxu0 0.0
    %7257 = vmatpush2.msra.mxu0 0.0
    %7258 = vmatprep.subr.mxu0 0.0
    %7259 = vmatpush2.msra.mxu0 0.0
    %7260 = vmatprep.subr.mxu0 0.0
    %7261 = vmatpush2.msra.mxu0 0.0
    %7262 = vmatprep.subr.mxu0 0.0
    %7263 = vmatpush2.msra.mxu0 0.0
    %7264 = vmatprep.subr.mxu0 0.0
    %7265 = vmatpush2.msra.mxu0 0.0
    %7266 = vmatprep.subr.mxu0 0.0
    %7267 = vmatpush2.msra.mxu0 0.0
    %7268 = vmatprep.subr.mxu0 0.0
    %7269 = vmatpush2.msra.mxu0 0.0
    %7270 = vmatprep.subr.mxu0 0.0
    %7271 = vmatpush2.msra.mxu0 0.0
    %7272 = vmatprep.subr.mxu0 0.0
    %7273 = vmatpush2.msra.mxu0 0.0
    %7274 = vmatprep.subr.mxu0 0.0
    %7275 = vmatpush2.msra.mxu0 0.0
    %7276 = vmatprep.mubr.f32.mxu0 0.0
    %7277 = vmatmul.mubr.f32.gmra.mxu0 %v7171
    %v7278 = vpop.f32.mrf.mxu0
    %v7279 = vadd.f32 %v7210, %v7278
    %v7280 = vpop.f32.mrf.mxu0
    %7281 = vmatprep.mubr.f32.mxu0 0.0
    %7282 = vmatmul.mubr.f32.gmra.mxu0 %v7172
    %v7283 = vpop.f32.mrf.mxu0
    %v7284 = vadd.f32 %v7210, %v7283
    %v7285 = vpop.f32.mrf.mxu0
    %7286 = vmatprep.mubr.f32.mxu0 0.0
    %7287 = vmatmul.mubr.f32.gmra.mxu0 %v7173
    %v7288 = vpop.f32.mrf.mxu0
    %v7289 = vadd.f32 %v7210, %v7288
    %v7290 = vpop.f32.mrf.mxu0
    %7291 = vmatprep.mubr.f32.mxu0 0.0
    %7292 = vmatmul.mubr.f32.gmra.mxu0 %v7174
    %v7293 = vpop.f32.mrf.mxu0
    %v7294 = vadd.f32 %v7210, %v7293
    %v7295 = vpop.f32.mrf.mxu0
    %7296 = vmatprep.mubr.f32.mxu0 0.0
    %7297 = vmatmul.mubr.f32.gmra.mxu0 %v7175
    %v7298 = vpop.f32.mrf.mxu0
    %v7299 = vadd.f32 %v7210, %v7298
    %v7300 = vpop.f32.mrf.mxu0
    %7301 = vmatprep.mubr.f32.mxu0 0.0
    %7302 = vmatmul.mubr.f32.gmra.mxu0 %v7176
    %v7303 = vpop.f32.mrf.mxu0
    %v7304 = vadd.f32 %v7210, %v7303
    %v7305 = vpop.f32.mrf.mxu0
    %7306 = vmatprep.mubr.f32.mxu0 0.0
    %7307 = vmatmul.mubr.f32.gmra.mxu0 %v7177
    %v7308 = vpop.f32.mrf.mxu0
    %v7309 = vadd.f32 %v7210, %v7308
    %v7310 = vpop.f32.mrf.mxu0
    %7311 = vmatprep.mubr.f32.mxu0 0.0
    %7312 = vmatmul.mubr.f32.gmra.mxu0 %v7178
    %v7313 = vpop.f32.mrf.mxu0
    %v7314 = vadd.f32 %v7210, %v7313
    %v7315 = vpop.f32.mrf.mxu0
    %7316 = vmatprep.mubr.f32.mxu0 0.0
    %7317 = vmatmul.mubr.f32.gmra.mxu0 %v7179
    %v7318 = vpop.f32.mrf.mxu0
    %v7319 = vadd.f32 %v7210, %v7318
    %v7320 = vpop.f32.mrf.mxu0
    %7321 = vmatprep.mubr.f32.mxu0 0.0
    %7322 = vmatmul.mubr.f32.gmra.mxu0 %v7180
    %v7323 = vpop.f32.mrf.mxu0
    %v7324 = vadd.f32 %v7210, %v7323
    %v7325 = vpop.f32.mrf.mxu0
    %7326 = vmatprep.mubr.f32.mxu0 0.0
    %7327 = vmatmul.mubr.f32.gmra.mxu0 %v7181
    %v7328 = vpop.f32.mrf.mxu0
    %v7329 = vadd.f32 %v7210, %v7328
    %v7330 = vpop.f32.mrf.mxu0
    %7331 = vmatprep.mubr.f32.mxu0 0.0
    %7332 = vmatmul.mubr.f32.gmra.mxu0 %v7182
    %v7333 = vpop.f32.mrf.mxu0
    %v7334 = vadd.f32 %v7210, %v7333
    %v7335 = vpop.f32.mrf.mxu0
    %7336 = vmatprep.mubr.f32.mxu0 0.0
    %7337 = vmatmul.mubr.f32.gmra.mxu0 %v7183
    %v7338 = vpop.f32.mrf.mxu0
    %v7339 = vadd.f32 %v7210, %v7338
    %v7340 = vpop.f32.mrf.mxu0
    %7341 = vmatprep.mubr.f32.mxu0 0.0
    %7342 = vmatmul.mubr.f32.gmra.mxu0 %v7184
    %v7343 = vpop.f32.mrf.mxu0
    %v7344 = vadd.f32 %v7210, %v7343
    %v7345 = vpop.f32.mrf.mxu0
    %7346 = vmatprep.mubr.f32.mxu0 0.0
    %7347 = vmatmul.mubr.f32.gmra.mxu0 %v7185
    %v7348 = vpop.f32.mrf.mxu0
    %v7349 = vadd.f32 %v7210, %v7348
    %v7350 = vpop.f32.mrf.mxu0
    %7351 = vmatprep.mubr.f32.mxu0 0.0
    %7352 = vmatmul.mubr.f32.gmra.mxu0 %v7186
    %v7353 = vpop.f32.mrf.mxu0
    %v7354 = vadd.f32 %v7210, %v7353
    %v7355 = vpop.f32.mrf.mxu0
    %7356 = vdwg.mxu0
    %v7357 = vadd.f32 %v7279, %v7284
    %v7358 = vadd.f32 %v7357, %v7289
    %v7359 = vadd.f32 %v7358, %v7294
    %v7360 = vadd.f32 %v7359, %v7299
    %v7361 = vadd.f32 %v7360, %v7304
    %v7362 = vadd.f32 %v7361, %v7309
    %v7363 = vadd.f32 %v7362, %v7314
    %v7364 = vrot.slane %v7363, 4
    %v7365 = vadd.f32 %v7363, %v7364
    %v7366 = vrot.slane %v7365, 2
    %v7367 = vadd.f32 %v7365, %v7366
    %v7368 = vrot.slane %v7367, 1
    %v7369 = vadd.f32 %v7367, %v7368
    %v7370 = vadd.f32 %v7319, %v7324
    %v7371 = vadd.f32 %v7370, %v7329
    %v7372 = vadd.f32 %v7371, %v7334
    %v7373 = vadd.f32 %v7372, %v7339
    %v7374 = vadd.f32 %v7373, %v7344
    %v7375 = vadd.f32 %v7374, %v7349
    %v7376 = vadd.f32 %v7375, %v7354
    %v7377 = vrot.slane %v7376, 4
    %v7378 = vadd.f32 %v7376, %v7377
    %v7379 = vrot.slane %v7378, 2
    %v7380 = vadd.f32 %v7378, %v7379
    %v7381 = vrot.slane %v7380, 1
    %v7382 = vadd.f32 %v7380, %v7381
    %v7383 = vmul.f32 %v7369, %v6477
    %v7384 = vmul.f32 %v7382, %v6477
    %v7385 = vmul.f32 %v7279, %v7279
    %v7386 = vmul.f32 %v7284, %v7284
    %v7387 = vmul.f32 %v7289, %v7289
    %v7388 = vmul.f32 %v7294, %v7294
    %v7389 = vmul.f32 %v7299, %v7299
    %v7390 = vmul.f32 %v7304, %v7304
    %v7391 = vmul.f32 %v7309, %v7309
    %v7392 = vmul.f32 %v7314, %v7314
    %v7393 = vmul.f32 %v7319, %v7319
    %v7394 = vmul.f32 %v7324, %v7324
    %v7395 = vmul.f32 %v7329, %v7329
    %v7396 = vmul.f32 %v7334, %v7334
    %v7397 = vmul.f32 %v7339, %v7339
    %v7398 = vmul.f32 %v7344, %v7344
    %v7399 = vmul.f32 %v7349, %v7349
    %v7400 = vmul.f32 %v7354, %v7354
    %v7401 = vadd.f32 %v7385, %v7386
    %v7402 = vadd.f32 %v7401, %v7387
    %v7403 = vadd.f32 %v7402, %v7388
    %v7404 = vadd.f32 %v7403, %v7389
    %v7405 = vadd.f32 %v7404, %v7390
    %v7406 = vadd.f32 %v7405, %v7391
    %v7407 = vadd.f32 %v7406, %v7392
    %v7408 = vrot.slane %v7407, 4
    %v7409 = vadd.f32 %v7407, %v7408
    %v7410 = vrot.slane %v7409, 2
    %v7411 = vadd.f32 %v7409, %v7410
    %v7412 = vrot.slane %v7411, 1
    %v7413 = vadd.f32 %v7411, %v7412
    %v7414 = vadd.f32 %v7393, %v7394
    %v7415 = vadd.f32 %v7414, %v7395
    %v7416 = vadd.f32 %v7415, %v7396
    %v7417 = vadd.f32 %v7416, %v7397
    %v7418 = vadd.f32 %v7417, %v7398
    %v7419 = vadd.f32 %v7418, %v7399
    %v7420 = vadd.f32 %v7419, %v7400
    %v7421 = vrot.slane %v7420, 4
    %v7422 = vadd.f32 %v7420, %v7421
    %v7423 = vrot.slane %v7422, 2
    %v7424 = vadd.f32 %v7422, %v7423
    %v7425 = vrot.slane %v7424, 1
    %v7426 = vadd.f32 %v7424, %v7425
    %v7427 = vmul.f32 %v7413, %v6477
    %v7428 = vmul.f32 %v7426, %v6477
    %v7429 = vmul.f32 %v7383, %v7383
    %v7430 = vmul.f32 %v7384, %v7384
    %v7431 = vsub.f32 %v7427, %v7429
    %v7432 = vsub.f32 %v7428, %v7430
    %v7433 = vmax.f32 %v7431, 0.0
    %v7434 = vmax.f32 %v7432, 0.0
    %v7435 = vsub.f32 %v7279, %v7383
    %v7436 = vsub.f32 %v7284, %v7383
    %v7437 = vsub.f32 %v7289, %v7383
    %v7438 = vsub.f32 %v7294, %v7383
    %v7439 = vsub.f32 %v7299, %v7383
    %v7440 = vsub.f32 %v7304, %v7383
    %v7441 = vsub.f32 %v7309, %v7383
    %v7442 = vsub.f32 %v7314, %v7383
    %v7443 = vsub.f32 %v7319, %v7384
    %v7444 = vsub.f32 %v7324, %v7384
    %v7445 = vsub.f32 %v7329, %v7384
    %v7446 = vsub.f32 %v7334, %v7384
    %v7447 = vsub.f32 %v7339, %v7384
    %v7448 = vsub.f32 %v7344, %v7384
    %v7449 = vsub.f32 %v7349, %v7384
    %v7450 = vsub.f32 %v7354, %v7384
    %v7451 = vadd.f32 %v7433, 1e-05
    %v7452 = vadd.f32 %v7434, 1e-05
    %v7453 = vrsqrt.pop %v7451
    %v7454 = vrsqrt.pop %v7452
    %v7455 = vmul.f32 %v7435, %v7453
    %v7456 = vmul.f32 %v7436, %v7453
    %v7457 = vmul.f32 %v7437, %v7453
    %v7458 = vmul.f32 %v7438, %v7453
    %v7459 = vmul.f32 %v7439, %v7453
    %v7460 = vmul.f32 %v7440, %v7453
    %v7461 = vmul.f32 %v7441, %v7453
    %v7462 = vmul.f32 %v7442, %v7453
    %v7463 = vmul.f32 %v7443, %v7454
    %v7464 = vmul.f32 %v7444, %v7454
    %v7465 = vmul.f32 %v7445, %v7454
    %v7466 = vmul.f32 %v7446, %v7454
    %v7467 = vmul.f32 %v7447, %v7454
    %v7468 = vmul.f32 %v7448, %v7454
    %v7469 = vmul.f32 %v7449, %v7454
    %v7470 = vmul.f32 %v7450, %v7454
    %s7471 = scalar_lea.vmem %s12, 2
    %v7472 = vld [vmem:[%s7471] sm:$0x1]
    %s7473 = scalar_lea.vmem %s13, 2
    %v7474 = vld [vmem:[%s7473] sm:$0x1]
    %v7475 = vadd.f32 %v7455, %v7456
    %v7476 = vadd.f32 %v7475, %v7457
    %v7477 = vadd.f32 %v7476, %v7458
    %v7478 = vadd.f32 %v7477, %v7459
    %v7479 = vadd.f32 %v7478, %v7460
    %v7480 = vadd.f32 %v7479, %v7461
    %v7481 = vadd.f32 %v7480, %v7462
    %v7482 = vadd.f32 %v7481, %v7463
    %v7483 = vadd.f32 %v7482, %v7464
    %v7484 = vadd.f32 %v7483, %v7465
    %v7485 = vadd.f32 %v7484, %v7466
    %v7486 = vadd.f32 %v7485, %v7467
    %v7487 = vadd.f32 %v7486, %v7468
    %v7488 = vadd.f32 %v7487, %v7469
    %v7489 = vadd.f32 %v7488, %v7470
    %v7490 = vrot.slane %v7489, 4
    %v7491 = vadd.f32 %v7489, %v7490
    %v7492 = vrot.slane %v7491, 2
    %v7493 = vadd.f32 %v7491, %v7492
    %v7494 = vrot.slane %v7493, 1
    %v7495 = vadd.f32 %v7493, %v7494
    %v7496 = vmul.f32 %v7495, %v6589
    %v7497 = vmul.f32 %v7455, %v7455
    %v7498 = vmul.f32 %v7456, %v7456
    %v7499 = vmul.f32 %v7457, %v7457
    %v7500 = vmul.f32 %v7458, %v7458
    %v7501 = vmul.f32 %v7459, %v7459
    %v7502 = vmul.f32 %v7460, %v7460
    %v7503 = vmul.f32 %v7461, %v7461
    %v7504 = vmul.f32 %v7462, %v7462
    %v7505 = vmul.f32 %v7463, %v7463
    %v7506 = vmul.f32 %v7464, %v7464
    %v7507 = vmul.f32 %v7465, %v7465
    %v7508 = vmul.f32 %v7466, %v7466
    %v7509 = vmul.f32 %v7467, %v7467
    %v7510 = vmul.f32 %v7468, %v7468
    %v7511 = vmul.f32 %v7469, %v7469
    %v7512 = vmul.f32 %v7470, %v7470
    %v7513 = vadd.f32 %v7497, %v7498
    %v7514 = vadd.f32 %v7513, %v7499
    %v7515 = vadd.f32 %v7514, %v7500
    %v7516 = vadd.f32 %v7515, %v7501
    %v7517 = vadd.f32 %v7516, %v7502
    %v7518 = vadd.f32 %v7517, %v7503
    %v7519 = vadd.f32 %v7518, %v7504
    %v7520 = vadd.f32 %v7519, %v7505
    %v7521 = vadd.f32 %v7520, %v7506
    %v7522 = vadd.f32 %v7521, %v7507
    %v7523 = vadd.f32 %v7522, %v7508
    %v7524 = vadd.f32 %v7523, %v7509
    %v7525 = vadd.f32 %v7524, %v7510
    %v7526 = vadd.f32 %v7525, %v7511
    %v7527 = vadd.f32 %v7526, %v7512
    %v7528 = vrot.slane %v7527, 4
    %v7529 = vadd.f32 %v7527, %v7528
    %v7530 = vrot.slane %v7529, 2
    %v7531 = vadd.f32 %v7529, %v7530
    %v7532 = vrot.slane %v7531, 1
    %v7533 = vadd.f32 %v7531, %v7532
    %v7534 = vmul.f32 %v7533, %v6589
    %v7535 = vmul.f32 %v7496, %v7496
    %v7536 = vsub.f32 %v7534, %v7535
    %v7537 = vmax.f32 %v7536, 0.0
    %v7538 = vsub.f32 %v7455, %v7496
    %v7539 = vsub.f32 %v7456, %v7496
    %v7540 = vsub.f32 %v7457, %v7496
    %v7541 = vsub.f32 %v7458, %v7496
    %v7542 = vsub.f32 %v7459, %v7496
    %v7543 = vsub.f32 %v7460, %v7496
    %v7544 = vsub.f32 %v7461, %v7496
    %v7545 = vsub.f32 %v7462, %v7496
    %v7546 = vsub.f32 %v7463, %v7496
    %v7547 = vsub.f32 %v7464, %v7496
    %v7548 = vsub.f32 %v7465, %v7496
    %v7549 = vsub.f32 %v7466, %v7496
    %v7550 = vsub.f32 %v7467, %v7496
    %v7551 = vsub.f32 %v7468, %v7496
    %v7552 = vsub.f32 %v7469, %v7496
    %v7553 = vsub.f32 %v7470, %v7496
    %v7554 = vadd.f32 %v7537, 1e-05
    %v7555 = vrsqrt.pop %v7554
    %v7556 = vmul.f32 %v7538, %v7555
    %v7557 = vmul.f32 %v7539, %v7555
    %v7558 = vmul.f32 %v7540, %v7555
    %v7559 = vmul.f32 %v7541, %v7555
    %v7560 = vmul.f32 %v7542, %v7555
    %v7561 = vmul.f32 %v7543, %v7555
    %v7562 = vmul.f32 %v7544, %v7555
    %v7563 = vmul.f32 %v7545, %v7555
    %v7564 = vmul.f32 %v7546, %v7555
    %v7565 = vmul.f32 %v7547, %v7555
    %v7566 = vmul.f32 %v7548, %v7555
    %v7567 = vmul.f32 %v7549, %v7555
    %v7568 = vmul.f32 %v7550, %v7555
    %v7569 = vmul.f32 %v7551, %v7555
    %v7570 = vmul.f32 %v7552, %v7555
    %v7571 = vmul.f32 %v7553, %v7555
    %v7573 = vlaneseq
    %v7574 = vshrl.u32 %v7573, 7
    %v7575 = vsub.s32 0, %v7574
    %v7576 = vrot.slane %v7472, %v7575
    %v7578 = vmul.f32 %v7556, %v7576
    %v7579 = vmul.f32 %v7557, %v7576
    %v7580 = vmul.f32 %v7558, %v7576
    %v7581 = vmul.f32 %v7559, %v7576
    %v7582 = vmul.f32 %v7560, %v7576
    %v7583 = vmul.f32 %v7561, %v7576
    %v7584 = vmul.f32 %v7562, %v7576
    %v7585 = vmul.f32 %v7563, %v7576
    %v7586 = vmul.f32 %v7564, %v7576
    %v7587 = vmul.f32 %v7565, %v7576
    %v7588 = vmul.f32 %v7566, %v7576
    %v7589 = vmul.f32 %v7567, %v7576
    %v7590 = vmul.f32 %v7568, %v7576
    %v7591 = vmul.f32 %v7569, %v7576
    %v7592 = vmul.f32 %v7570, %v7576
    %v7593 = vmul.f32 %v7571, %v7576
    %v7595 = vlaneseq
    %v7596 = vshrl.u32 %v7595, 7
    %v7597 = vsub.s32 0, %v7596
    %v7598 = vrot.slane %v7474, %v7597
    %v7600 = vadd.f32 %v7578, %v7598
    %v7601 = vadd.f32 %v7579, %v7598
    %v7602 = vadd.f32 %v7580, %v7598
    %v7603 = vadd.f32 %v7581, %v7598
    %v7604 = vadd.f32 %v7582, %v7598
    %v7605 = vadd.f32 %v7583, %v7598
    %v7606 = vadd.f32 %v7584, %v7598
    %v7607 = vadd.f32 %v7585, %v7598
    %v7608 = vadd.f32 %v7586, %v7598
    %v7609 = vadd.f32 %v7587, %v7598
    %v7610 = vadd.f32 %v7588, %v7598
    %v7611 = vadd.f32 %v7589, %v7598
    %v7612 = vadd.f32 %v7590, %v7598
    %v7613 = vadd.f32 %v7591, %v7598
    %v7614 = vadd.f32 %v7592, %v7598
    %v7615 = vadd.f32 %v7593, %v7598
    %v7616 = vmax.f32 %v7600, 0.0
    %v7617 = vmax.f32 %v7601, 0.0
    %v7618 = vmax.f32 %v7602, 0.0
    %v7619 = vmax.f32 %v7603, 0.0
    %v7620 = vmax.f32 %v7604, 0.0
    %v7621 = vmax.f32 %v7605, 0.0
    %v7622 = vmax.f32 %v7606, 0.0
    %v7623 = vmax.f32 %v7607, 0.0
    %v7624 = vmax.f32 %v7608, 0.0
    %v7625 = vmax.f32 %v7609, 0.0
    %v7626 = vmax.f32 %v7610, 0.0
    %v7627 = vmax.f32 %v7611, 0.0
    %v7628 = vmax.f32 %v7612, 0.0
    %v7629 = vmax.f32 %v7613, 0.0
    %v7630 = vmax.f32 %v7614, 0.0
    %v7631 = vmax.f32 %v7615, 0.0
    %s7632 = scalar_lea.vmem %s10, 384
    %v7633 = vld [vmem:[%s7632] sm:$0xff]
    %v7634 = vld [vmem:[%s7632 + $0x8] sm:$0xff]
    %v7635 = vld [vmem:[%s7632 + $0x10] sm:$0xff]
    %v7636 = vld [vmem:[%s7632 + $0x18] sm:$0xff]
    %v7637 = vld [vmem:[%s7632 + $0x20] sm:$0xff]
    %v7638 = vld [vmem:[%s7632 + $0x28] sm:$0xff]
    %v7639 = vld [vmem:[%s7632 + $0x30] sm:$0xff]
    %v7640 = vld [vmem:[%s7632 + $0x38] sm:$0xff]
    %v7641 = vld [vmem:[%s7632 + $0x40] sm:$0xff]
    %v7642 = vld [vmem:[%s7632 + $0x48] sm:$0xff]
    %v7643 = vld [vmem:[%s7632 + $0x50] sm:$0xff]
    %v7644 = vld [vmem:[%s7632 + $0x58] sm:$0xff]
    %v7645 = vld [vmem:[%s7632 + $0x60] sm:$0xff]
    %v7646 = vld [vmem:[%s7632 + $0x68] sm:$0xff]
    %v7647 = vld [vmem:[%s7632 + $0x70] sm:$0xff]
    %v7648 = vld [vmem:[%s7632 + $0x78] sm:$0xff]
    %s7649 = scalar_lea.vmem %s11, 3
    %v7650 = vld [vmem:[%s7649] sm:$0x1]
    %v7652 = vlaneseq
    %v7653 = vshrl.u32 %v7652, 7
    %v7654 = vsub.s32 0, %v7653
    %v7655 = vrot.slane %v7650, %v7654
    %7657 = vmatprep.subr.mxu0 0.0
    %7658 = vmatpush1.msra.mxu0 %v7648
    %7659 = vmatprep.subr.mxu0 0.0
    %7660 = vmatpush1.msra.mxu0 %v7647
    %7661 = vmatprep.subr.mxu0 0.0
    %7662 = vmatpush1.msra.mxu0 %v7646
    %7663 = vmatprep.subr.mxu0 0.0
    %7664 = vmatpush1.msra.mxu0 %v7645
    %7665 = vmatprep.subr.mxu0 0.0
    %7666 = vmatpush1.msra.mxu0 %v7644
    %7667 = vmatprep.subr.mxu0 0.0
    %7668 = vmatpush1.msra.mxu0 %v7643
    %7669 = vmatprep.subr.mxu0 0.0
    %7670 = vmatpush1.msra.mxu0 %v7642
    %7671 = vmatprep.subr.mxu0 0.0
    %7672 = vmatpush1.msra.mxu0 %v7641
    %7673 = vmatprep.subr.mxu0 0.0
    %7674 = vmatpush1.msra.mxu0 %v7640
    %7675 = vmatprep.subr.mxu0 0.0
    %7676 = vmatpush1.msra.mxu0 %v7639
    %7677 = vmatprep.subr.mxu0 0.0
    %7678 = vmatpush1.msra.mxu0 %v7638
    %7679 = vmatprep.subr.mxu0 0.0
    %7680 = vmatpush1.msra.mxu0 %v7637
    %7681 = vmatprep.subr.mxu0 0.0
    %7682 = vmatpush1.msra.mxu0 %v7636
    %7683 = vmatprep.subr.mxu0 0.0
    %7684 = vmatpush1.msra.mxu0 %v7635
    %7685 = vmatprep.subr.mxu0 0.0
    %7686 = vmatpush1.msra.mxu0 %v7634
    %7687 = vmatprep.subr.mxu0 0.0
    %7688 = vmatpush1.msra.mxu0 %v7633
    %7689 = vmatprep.subr.mxu0 0.0
    %7690 = vmatpush2.msra.mxu0 0.0
    %7691 = vmatprep.subr.mxu0 0.0
    %7692 = vmatpush2.msra.mxu0 0.0
    %7693 = vmatprep.subr.mxu0 0.0
    %7694 = vmatpush2.msra.mxu0 0.0
    %7695 = vmatprep.subr.mxu0 0.0
    %7696 = vmatpush2.msra.mxu0 0.0
    %7697 = vmatprep.subr.mxu0 0.0
    %7698 = vmatpush2.msra.mxu0 0.0
    %7699 = vmatprep.subr.mxu0 0.0
    %7700 = vmatpush2.msra.mxu0 0.0
    %7701 = vmatprep.subr.mxu0 0.0
    %7702 = vmatpush2.msra.mxu0 0.0
    %7703 = vmatprep.subr.mxu0 0.0
    %7704 = vmatpush2.msra.mxu0 0.0
    %7705 = vmatprep.subr.mxu0 0.0
    %7706 = vmatpush2.msra.mxu0 0.0
    %7707 = vmatprep.subr.mxu0 0.0
    %7708 = vmatpush2.msra.mxu0 0.0
    %7709 = vmatprep.subr.mxu0 0.0
    %7710 = vmatpush2.msra.mxu0 0.0
    %7711 = vmatprep.subr.mxu0 0.0
    %7712 = vmatpush2.msra.mxu0 0.0
    %7713 = vmatprep.subr.mxu0 0.0
    %7714 = vmatpush2.msra.mxu0 0.0
    %7715 = vmatprep.subr.mxu0 0.0
    %7716 = vmatpush2.msra.mxu0 0.0
    %7717 = vmatprep.subr.mxu0 0.0
    %7718 = vmatpush2.msra.mxu0 0.0
    %7719 = vmatprep.subr.mxu0 0.0
    %7720 = vmatpush2.msra.mxu0 0.0
    %7721 = vmatprep.mubr.f32.mxu0 0.0
    %7722 = vmatmul.mubr.f32.gmra.mxu0 %v7616
    %v7723 = vpop.f32.mrf.mxu0
    %v7724 = vadd.f32 %v7655, %v7723
    %v7725 = vpop.f32.mrf.mxu0
    %7726 = vmatprep.mubr.f32.mxu0 0.0
    %7727 = vmatmul.mubr.f32.gmra.mxu0 %v7617
    %v7728 = vpop.f32.mrf.mxu0
    %v7729 = vadd.f32 %v7655, %v7728
    %v7730 = vpop.f32.mrf.mxu0
    %7731 = vmatprep.mubr.f32.mxu0 0.0
    %7732 = vmatmul.mubr.f32.gmra.mxu0 %v7618
    %v7733 = vpop.f32.mrf.mxu0
    %v7734 = vadd.f32 %v7655, %v7733
    %v7735 = vpop.f32.mrf.mxu0
    %7736 = vmatprep.mubr.f32.mxu0 0.0
    %7737 = vmatmul.mubr.f32.gmra.mxu0 %v7619
    %v7738 = vpop.f32.mrf.mxu0
    %v7739 = vadd.f32 %v7655, %v7738
    %v7740 = vpop.f32.mrf.mxu0
    %7741 = vmatprep.mubr.f32.mxu0 0.0
    %7742 = vmatmul.mubr.f32.gmra.mxu0 %v7620
    %v7743 = vpop.f32.mrf.mxu0
    %v7744 = vadd.f32 %v7655, %v7743
    %v7745 = vpop.f32.mrf.mxu0
    %7746 = vmatprep.mubr.f32.mxu0 0.0
    %7747 = vmatmul.mubr.f32.gmra.mxu0 %v7621
    %v7748 = vpop.f32.mrf.mxu0
    %v7749 = vadd.f32 %v7655, %v7748
    %v7750 = vpop.f32.mrf.mxu0
    %7751 = vmatprep.mubr.f32.mxu0 0.0
    %7752 = vmatmul.mubr.f32.gmra.mxu0 %v7622
    %v7753 = vpop.f32.mrf.mxu0
    %v7754 = vadd.f32 %v7655, %v7753
    %v7755 = vpop.f32.mrf.mxu0
    %7756 = vmatprep.mubr.f32.mxu0 0.0
    %7757 = vmatmul.mubr.f32.gmra.mxu0 %v7623
    %v7758 = vpop.f32.mrf.mxu0
    %v7759 = vadd.f32 %v7655, %v7758
    %v7760 = vpop.f32.mrf.mxu0
    %7761 = vmatprep.mubr.f32.mxu0 0.0
    %7762 = vmatmul.mubr.f32.gmra.mxu0 %v7624
    %v7763 = vpop.f32.mrf.mxu0
    %v7764 = vadd.f32 %v7655, %v7763
    %v7765 = vpop.f32.mrf.mxu0
    %7766 = vmatprep.mubr.f32.mxu0 0.0
    %7767 = vmatmul.mubr.f32.gmra.mxu0 %v7625
    %v7768 = vpop.f32.mrf.mxu0
    %v7769 = vadd.f32 %v7655, %v7768
    %v7770 = vpop.f32.mrf.mxu0
    %7771 = vmatprep.mubr.f32.mxu0 0.0
    %7772 = vmatmul.mubr.f32.gmra.mxu0 %v7626
    %v7773 = vpop.f32.mrf.mxu0
    %v7774 = vadd.f32 %v7655, %v7773
    %v7775 = vpop.f32.mrf.mxu0
    %7776 = vmatprep.mubr.f32.mxu0 0.0
    %7777 = vmatmul.mubr.f32.gmra.mxu0 %v7627
    %v7778 = vpop.f32.mrf.mxu0
    %v7779 = vadd.f32 %v7655, %v7778
    %v7780 = vpop.f32.mrf.mxu0
    %7781 = vmatprep.mubr.f32.mxu0 0.0
    %7782 = vmatmul.mubr.f32.gmra.mxu0 %v7628
    %v7783 = vpop.f32.mrf.mxu0
    %v7784 = vadd.f32 %v7655, %v7783
    %v7785 = vpop.f32.mrf.mxu0
    %7786 = vmatprep.mubr.f32.mxu0 0.0
    %7787 = vmatmul.mubr.f32.gmra.mxu0 %v7629
    %v7788 = vpop.f32.mrf.mxu0
    %v7789 = vadd.f32 %v7655, %v7788
    %v7790 = vpop.f32.mrf.mxu0
    %7791 = vmatprep.mubr.f32.mxu0 0.0
    %7792 = vmatmul.mubr.f32.gmra.mxu0 %v7630
    %v7793 = vpop.f32.mrf.mxu0
    %v7794 = vadd.f32 %v7655, %v7793
    %v7795 = vpop.f32.mrf.mxu0
    %7796 = vmatprep.mubr.f32.mxu0 0.0
    %7797 = vmatmul.mubr.f32.gmra.mxu0 %v7631
    %v7798 = vpop.f32.mrf.mxu0
    %v7799 = vadd.f32 %v7655, %v7798
    %v7800 = vpop.f32.mrf.mxu0
    %7801 = vdwg.mxu0
    %v7802 = vadd.f32 %v7724, %v7729
    %v7803 = vadd.f32 %v7802, %v7734
    %v7804 = vadd.f32 %v7803, %v7739
    %v7805 = vadd.f32 %v7804, %v7744
    %v7806 = vadd.f32 %v7805, %v7749
    %v7807 = vadd.f32 %v7806, %v7754
    %v7808 = vadd.f32 %v7807, %v7759
    %v7809 = vrot.slane %v7808, 4
    %v7810 = vadd.f32 %v7808, %v7809
    %v7811 = vrot.slane %v7810, 2
    %v7812 = vadd.f32 %v7810, %v7811
    %v7813 = vrot.slane %v7812, 1
    %v7814 = vadd.f32 %v7812, %v7813
    %v7815 = vadd.f32 %v7764, %v7769
    %v7816 = vadd.f32 %v7815, %v7774
    %v7817 = vadd.f32 %v7816, %v7779
    %v7818 = vadd.f32 %v7817, %v7784
    %v7819 = vadd.f32 %v7818, %v7789
    %v7820 = vadd.f32 %v7819, %v7794
    %v7821 = vadd.f32 %v7820, %v7799
    %v7822 = vrot.slane %v7821, 4
    %v7823 = vadd.f32 %v7821, %v7822
    %v7824 = vrot.slane %v7823, 2
    %v7825 = vadd.f32 %v7823, %v7824
    %v7826 = vrot.slane %v7825, 1
    %v7827 = vadd.f32 %v7825, %v7826
    %v7828 = vmul.f32 %v7814, %v6477
    %v7829 = vmul.f32 %v7827, %v6477
    %v7830 = vmul.f32 %v7724, %v7724
    %v7831 = vmul.f32 %v7729, %v7729
    %v7832 = vmul.f32 %v7734, %v7734
    %v7833 = vmul.f32 %v7739, %v7739
    %v7834 = vmul.f32 %v7744, %v7744
    %v7835 = vmul.f32 %v7749, %v7749
    %v7836 = vmul.f32 %v7754, %v7754
    %v7837 = vmul.f32 %v7759, %v7759
    %v7838 = vmul.f32 %v7764, %v7764
    %v7839 = vmul.f32 %v7769, %v7769
    %v7840 = vmul.f32 %v7774, %v7774
    %v7841 = vmul.f32 %v7779, %v7779
    %v7842 = vmul.f32 %v7784, %v7784
    %v7843 = vmul.f32 %v7789, %v7789
    %v7844 = vmul.f32 %v7794, %v7794
    %v7845 = vmul.f32 %v7799, %v7799
    %v7846 = vadd.f32 %v7830, %v7831
    %v7847 = vadd.f32 %v7846, %v7832
    %v7848 = vadd.f32 %v7847, %v7833
    %v7849 = vadd.f32 %v7848, %v7834
    %v7850 = vadd.f32 %v7849, %v7835
    %v7851 = vadd.f32 %v7850, %v7836
    %v7852 = vadd.f32 %v7851, %v7837
    %v7853 = vrot.slane %v7852, 4
    %v7854 = vadd.f32 %v7852, %v7853
    %v7855 = vrot.slane %v7854, 2
    %v7856 = vadd.f32 %v7854, %v7855
    %v7857 = vrot.slane %v7856, 1
    %v7858 = vadd.f32 %v7856, %v7857
    %v7859 = vadd.f32 %v7838, %v7839
    %v7860 = vadd.f32 %v7859, %v7840
    %v7861 = vadd.f32 %v7860, %v7841
    %v7862 = vadd.f32 %v7861, %v7842
    %v7863 = vadd.f32 %v7862, %v7843
    %v7864 = vadd.f32 %v7863, %v7844
    %v7865 = vadd.f32 %v7864, %v7845
    %v7866 = vrot.slane %v7865, 4
    %v7867 = vadd.f32 %v7865, %v7866
    %v7868 = vrot.slane %v7867, 2
    %v7869 = vadd.f32 %v7867, %v7868
    %v7870 = vrot.slane %v7869, 1
    %v7871 = vadd.f32 %v7869, %v7870
    %v7872 = vmul.f32 %v7858, %v6477
    %v7873 = vmul.f32 %v7871, %v6477
    %v7874 = vmul.f32 %v7828, %v7828
    %v7875 = vmul.f32 %v7829, %v7829
    %v7876 = vsub.f32 %v7872, %v7874
    %v7877 = vsub.f32 %v7873, %v7875
    %v7878 = vmax.f32 %v7876, 0.0
    %v7879 = vmax.f32 %v7877, 0.0
    %v7880 = vsub.f32 %v7724, %v7828
    %v7881 = vsub.f32 %v7729, %v7828
    %v7882 = vsub.f32 %v7734, %v7828
    %v7883 = vsub.f32 %v7739, %v7828
    %v7884 = vsub.f32 %v7744, %v7828
    %v7885 = vsub.f32 %v7749, %v7828
    %v7886 = vsub.f32 %v7754, %v7828
    %v7887 = vsub.f32 %v7759, %v7828
    %v7888 = vsub.f32 %v7764, %v7829
    %v7889 = vsub.f32 %v7769, %v7829
    %v7890 = vsub.f32 %v7774, %v7829
    %v7891 = vsub.f32 %v7779, %v7829
    %v7892 = vsub.f32 %v7784, %v7829
    %v7893 = vsub.f32 %v7789, %v7829
    %v7894 = vsub.f32 %v7794, %v7829
    %v7895 = vsub.f32 %v7799, %v7829
    %v7896 = vadd.f32 %v7878, 1e-05
    %v7897 = vadd.f32 %v7879, 1e-05
    %v7898 = vrsqrt.pop %v7896
    %v7899 = vrsqrt.pop %v7897
    %v7900 = vmul.f32 %v7880, %v7898
    %v7901 = vmul.f32 %v7881, %v7898
    %v7902 = vmul.f32 %v7882, %v7898
    %v7903 = vmul.f32 %v7883, %v7898
    %v7904 = vmul.f32 %v7884, %v7898
    %v7905 = vmul.f32 %v7885, %v7898
    %v7906 = vmul.f32 %v7886, %v7898
    %v7907 = vmul.f32 %v7887, %v7898
    %v7908 = vmul.f32 %v7888, %v7899
    %v7909 = vmul.f32 %v7889, %v7899
    %v7910 = vmul.f32 %v7890, %v7899
    %v7911 = vmul.f32 %v7891, %v7899
    %v7912 = vmul.f32 %v7892, %v7899
    %v7913 = vmul.f32 %v7893, %v7899
    %v7914 = vmul.f32 %v7894, %v7899
    %v7915 = vmul.f32 %v7895, %v7899
    %s7916 = scalar_lea.vmem %s12, 3
    %v7917 = vld [vmem:[%s7916] sm:$0x1]
    %s7918 = scalar_lea.vmem %s13, 3
    %v7919 = vld [vmem:[%s7918] sm:$0x1]
    %v7920 = vadd.f32 %v7900, %v7901
    %v7921 = vadd.f32 %v7920, %v7902
    %v7922 = vadd.f32 %v7921, %v7903
    %v7923 = vadd.f32 %v7922, %v7904
    %v7924 = vadd.f32 %v7923, %v7905
    %v7925 = vadd.f32 %v7924, %v7906
    %v7926 = vadd.f32 %v7925, %v7907
    %v7927 = vadd.f32 %v7926, %v7908
    %v7928 = vadd.f32 %v7927, %v7909
    %v7929 = vadd.f32 %v7928, %v7910
    %v7930 = vadd.f32 %v7929, %v7911
    %v7931 = vadd.f32 %v7930, %v7912
    %v7932 = vadd.f32 %v7931, %v7913
    %v7933 = vadd.f32 %v7932, %v7914
    %v7934 = vadd.f32 %v7933, %v7915
    %v7935 = vrot.slane %v7934, 4
    %v7936 = vadd.f32 %v7934, %v7935
    %v7937 = vrot.slane %v7936, 2
    %v7938 = vadd.f32 %v7936, %v7937
    %v7939 = vrot.slane %v7938, 1
    %v7940 = vadd.f32 %v7938, %v7939
    %v7941 = vmul.f32 %v7940, %v6589
    %v7942 = vmul.f32 %v7900, %v7900
    %v7943 = vmul.f32 %v7901, %v7901
    %v7944 = vmul.f32 %v7902, %v7902
    %v7945 = vmul.f32 %v7903, %v7903
    %v7946 = vmul.f32 %v7904, %v7904
    %v7947 = vmul.f32 %v7905, %v7905
    %v7948 = vmul.f32 %v7906, %v7906
    %v7949 = vmul.f32 %v7907, %v7907
    %v7950 = vmul.f32 %v7908, %v7908
    %v7951 = vmul.f32 %v7909, %v7909
    %v7952 = vmul.f32 %v7910, %v7910
    %v7953 = vmul.f32 %v7911, %v7911
    %v7954 = vmul.f32 %v7912, %v7912
    %v7955 = vmul.f32 %v7913, %v7913
    %v7956 = vmul.f32 %v7914, %v7914
    %v7957 = vmul.f32 %v7915, %v7915
    %v7958 = vadd.f32 %v7942, %v7943
    %v7959 = vadd.f32 %v7958, %v7944
    %v7960 = vadd.f32 %v7959, %v7945
    %v7961 = vadd.f32 %v7960, %v7946
    %v7962 = vadd.f32 %v7961, %v7947
    %v7963 = vadd.f32 %v7962, %v7948
    %v7964 = vadd.f32 %v7963, %v7949
    %v7965 = vadd.f32 %v7964, %v7950
    %v7966 = vadd.f32 %v7965, %v7951
    %v7967 = vadd.f32 %v7966, %v7952
    %v7968 = vadd.f32 %v7967, %v7953
    %v7969 = vadd.f32 %v7968, %v7954
    %v7970 = vadd.f32 %v7969, %v7955
    %v7971 = vadd.f32 %v7970, %v7956
    %v7972 = vadd.f32 %v7971, %v7957
    %v7973 = vrot.slane %v7972, 4
    %v7974 = vadd.f32 %v7972, %v7973
    %v7975 = vrot.slane %v7974, 2
    %v7976 = vadd.f32 %v7974, %v7975
    %v7977 = vrot.slane %v7976, 1
    %v7978 = vadd.f32 %v7976, %v7977
    %v7979 = vmul.f32 %v7978, %v6589
    %v7980 = vmul.f32 %v7941, %v7941
    %v7981 = vsub.f32 %v7979, %v7980
    %v7982 = vmax.f32 %v7981, 0.0
    %v7983 = vsub.f32 %v7900, %v7941
    %v7984 = vsub.f32 %v7901, %v7941
    %v7985 = vsub.f32 %v7902, %v7941
    %v7986 = vsub.f32 %v7903, %v7941
    %v7987 = vsub.f32 %v7904, %v7941
    %v7988 = vsub.f32 %v7905, %v7941
    %v7989 = vsub.f32 %v7906, %v7941
    %v7990 = vsub.f32 %v7907, %v7941
    %v7991 = vsub.f32 %v7908, %v7941
    %v7992 = vsub.f32 %v7909, %v7941
    %v7993 = vsub.f32 %v7910, %v7941
    %v7994 = vsub.f32 %v7911, %v7941
    %v7995 = vsub.f32 %v7912, %v7941
    %v7996 = vsub.f32 %v7913, %v7941
    %v7997 = vsub.f32 %v7914, %v7941
    %v7998 = vsub.f32 %v7915, %v7941
    %v7999 = vadd.f32 %v7982, 1e-05
    %v8000 = vrsqrt.pop %v7999
    %v8001 = vmul.f32 %v7983, %v8000
    %v8002 = vmul.f32 %v7984, %v8000
    %v8003 = vmul.f32 %v7985, %v8000
    %v8004 = vmul.f32 %v7986, %v8000
    %v8005 = vmul.f32 %v7987, %v8000
    %v8006 = vmul.f32 %v7988, %v8000
    %v8007 = vmul.f32 %v7989, %v8000
    %v8008 = vmul.f32 %v7990, %v8000
    %v8009 = vmul.f32 %v7991, %v8000
    %v8010 = vmul.f32 %v7992, %v8000
    %v8011 = vmul.f32 %v7993, %v8000
    %v8012 = vmul.f32 %v7994, %v8000
    %v8013 = vmul.f32 %v7995, %v8000
    %v8014 = vmul.f32 %v7996, %v8000
    %v8015 = vmul.f32 %v7997, %v8000
    %v8016 = vmul.f32 %v7998, %v8000
    %v8018 = vlaneseq
    %v8019 = vshrl.u32 %v8018, 7
    %v8020 = vsub.s32 0, %v8019
    %v8021 = vrot.slane %v7917, %v8020
    %v8023 = vmul.f32 %v8001, %v8021
    %v8024 = vmul.f32 %v8002, %v8021
    %v8025 = vmul.f32 %v8003, %v8021
    %v8026 = vmul.f32 %v8004, %v8021
    %v8027 = vmul.f32 %v8005, %v8021
    %v8028 = vmul.f32 %v8006, %v8021
    %v8029 = vmul.f32 %v8007, %v8021
    %v8030 = vmul.f32 %v8008, %v8021
    %v8031 = vmul.f32 %v8009, %v8021
    %v8032 = vmul.f32 %v8010, %v8021
    %v8033 = vmul.f32 %v8011, %v8021
    %v8034 = vmul.f32 %v8012, %v8021
    %v8035 = vmul.f32 %v8013, %v8021
    %v8036 = vmul.f32 %v8014, %v8021
    %v8037 = vmul.f32 %v8015, %v8021
    %v8038 = vmul.f32 %v8016, %v8021
    %v8040 = vlaneseq
    %v8041 = vshrl.u32 %v8040, 7
    %v8042 = vsub.s32 0, %v8041
    %v8043 = vrot.slane %v7919, %v8042
    %v8045 = vadd.f32 %v8023, %v8043
    %v8046 = vadd.f32 %v8024, %v8043
    %v8047 = vadd.f32 %v8025, %v8043
    %v8048 = vadd.f32 %v8026, %v8043
    %v8049 = vadd.f32 %v8027, %v8043
    %v8050 = vadd.f32 %v8028, %v8043
    %v8051 = vadd.f32 %v8029, %v8043
    %v8052 = vadd.f32 %v8030, %v8043
    %v8053 = vadd.f32 %v8031, %v8043
    %v8054 = vadd.f32 %v8032, %v8043
    %v8055 = vadd.f32 %v8033, %v8043
    %v8056 = vadd.f32 %v8034, %v8043
    %v8057 = vadd.f32 %v8035, %v8043
    %v8058 = vadd.f32 %v8036, %v8043
    %v8059 = vadd.f32 %v8037, %v8043
    %v8060 = vadd.f32 %v8038, %v8043
    %v8061 = vadd.f32 %v8045, %v7171
    %v8062 = vadd.f32 %v8046, %v7172
    %v8063 = vadd.f32 %v8047, %v7173
    %v8064 = vadd.f32 %v8048, %v7174
    %v8065 = vadd.f32 %v8049, %v7175
    %v8066 = vadd.f32 %v8050, %v7176
    %v8067 = vadd.f32 %v8051, %v7177
    %v8068 = vadd.f32 %v8052, %v7178
    %v8069 = vadd.f32 %v8053, %v7179
    %v8070 = vadd.f32 %v8054, %v7180
    %v8071 = vadd.f32 %v8055, %v7181
    %v8072 = vadd.f32 %v8056, %v7182
    %v8073 = vadd.f32 %v8057, %v7183
    %v8074 = vadd.f32 %v8058, %v7184
    %v8075 = vadd.f32 %v8059, %v7185
    %v8076 = vadd.f32 %v8060, %v7186
    %v8077 = vmax.f32 %v8061, 0.0
    %v8078 = vmax.f32 %v8062, 0.0
    %v8079 = vmax.f32 %v8063, 0.0
    %v8080 = vmax.f32 %v8064, 0.0
    %v8081 = vmax.f32 %v8065, 0.0
    %v8082 = vmax.f32 %v8066, 0.0
    %v8083 = vmax.f32 %v8067, 0.0
    %v8084 = vmax.f32 %v8068, 0.0
    %v8085 = vmax.f32 %v8069, 0.0
    %v8086 = vmax.f32 %v8070, 0.0
    %v8087 = vmax.f32 %v8071, 0.0
    %v8088 = vmax.f32 %v8072, 0.0
    %v8089 = vmax.f32 %v8073, 0.0
    %v8090 = vmax.f32 %v8074, 0.0
    %v8091 = vmax.f32 %v8075, 0.0
    %v8092 = vmax.f32 %v8076, 0.0
    %s8093 = scalar_lea.vmem %s10, 512
    %v8094 = vld [vmem:[%s8093] sm:$0xff]
    %v8095 = vld [vmem:[%s8093 + $0x8] sm:$0xff]
    %v8096 = vld [vmem:[%s8093 + $0x10] sm:$0xff]
    %v8097 = vld [vmem:[%s8093 + $0x18] sm:$0xff]
    %v8098 = vld [vmem:[%s8093 + $0x20] sm:$0xff]
    %v8099 = vld [vmem:[%s8093 + $0x28] sm:$0xff]
    %v8100 = vld [vmem:[%s8093 + $0x30] sm:$0xff]
    %v8101 = vld [vmem:[%s8093 + $0x38] sm:$0xff]
    %v8102 = vld [vmem:[%s8093 + $0x40] sm:$0xff]
    %v8103 = vld [vmem:[%s8093 + $0x48] sm:$0xff]
    %v8104 = vld [vmem:[%s8093 + $0x50] sm:$0xff]
    %v8105 = vld [vmem:[%s8093 + $0x58] sm:$0xff]
    %v8106 = vld [vmem:[%s8093 + $0x60] sm:$0xff]
    %v8107 = vld [vmem:[%s8093 + $0x68] sm:$0xff]
    %v8108 = vld [vmem:[%s8093 + $0x70] sm:$0xff]
    %v8109 = vld [vmem:[%s8093 + $0x78] sm:$0xff]
    %s8110 = scalar_lea.vmem %s11, 4
    %v8111 = vld [vmem:[%s8110] sm:$0x1]
    %v8113 = vlaneseq
    %v8114 = vshrl.u32 %v8113, 7
    %v8115 = vsub.s32 0, %v8114
    %v8116 = vrot.slane %v8111, %v8115
    %8118 = vmatprep.subr.mxu0 0.0
    %8119 = vmatpush1.msra.mxu0 %v8109
    %8120 = vmatprep.subr.mxu0 0.0
    %8121 = vmatpush1.msra.mxu0 %v8108
    %8122 = vmatprep.subr.mxu0 0.0
    %8123 = vmatpush1.msra.mxu0 %v8107
    %8124 = vmatprep.subr.mxu0 0.0
    %8125 = vmatpush1.msra.mxu0 %v8106
    %8126 = vmatprep.subr.mxu0 0.0
    %8127 = vmatpush1.msra.mxu0 %v8105
    %8128 = vmatprep.subr.mxu0 0.0
    %8129 = vmatpush1.msra.mxu0 %v8104
    %8130 = vmatprep.subr.mxu0 0.0
    %8131 = vmatpush1.msra.mxu0 %v8103
    %8132 = vmatprep.subr.mxu0 0.0
    %8133 = vmatpush1.msra.mxu0 %v8102
    %8134 = vmatprep.subr.mxu0 0.0
    %8135 = vmatpush1.msra.mxu0 %v8101
    %8136 = vmatprep.subr.mxu0 0.0
    %8137 = vmatpush1.msra.mxu0 %v8100
    %8138 = vmatprep.subr.mxu0 0.0
    %8139 = vmatpush1.msra.mxu0 %v8099
    %8140 = vmatprep.subr.mxu0 0.0
    %8141 = vmatpush1.msra.mxu0 %v8098
    %8142 = vmatprep.subr.mxu0 0.0
    %8143 = vmatpush1.msra.mxu0 %v8097
    %8144 = vmatprep.subr.mxu0 0.0
    %8145 = vmatpush1.msra.mxu0 %v8096
    %8146 = vmatprep.subr.mxu0 0.0
    %8147 = vmatpush1.msra.mxu0 %v8095
    %8148 = vmatprep.subr.mxu0 0.0
    %8149 = vmatpush1.msra.mxu0 %v8094
    %8150 = vmatprep.subr.mxu0 0.0
    %8151 = vmatpush2.msra.mxu0 0.0
    %8152 = vmatprep.subr.mxu0 0.0
    %8153 = vmatpush2.msra.mxu0 0.0
    %8154 = vmatprep.subr.mxu0 0.0
    %8155 = vmatpush2.msra.mxu0 0.0
    %8156 = vmatprep.subr.mxu0 0.0
    %8157 = vmatpush2.msra.mxu0 0.0
    %8158 = vmatprep.subr.mxu0 0.0
    %8159 = vmatpush2.msra.mxu0 0.0
    %8160 = vmatprep.subr.mxu0 0.0
    %8161 = vmatpush2.msra.mxu0 0.0
    %8162 = vmatprep.subr.mxu0 0.0
    %8163 = vmatpush2.msra.mxu0 0.0
    %8164 = vmatprep.subr.mxu0 0.0
    %8165 = vmatpush2.msra.mxu0 0.0
    %8166 = vmatprep.subr.mxu0 0.0
    %8167 = vmatpush2.msra.mxu0 0.0
    %8168 = vmatprep.subr.mxu0 0.0
    %8169 = vmatpush2.msra.mxu0 0.0
    %8170 = vmatprep.subr.mxu0 0.0
    %8171 = vmatpush2.msra.mxu0 0.0
    %8172 = vmatprep.subr.mxu0 0.0
    %8173 = vmatpush2.msra.mxu0 0.0
    %8174 = vmatprep.subr.mxu0 0.0
    %8175 = vmatpush2.msra.mxu0 0.0
    %8176 = vmatprep.subr.mxu0 0.0
    %8177 = vmatpush2.msra.mxu0 0.0
    %8178 = vmatprep.subr.mxu0 0.0
    %8179 = vmatpush2.msra.mxu0 0.0
    %8180 = vmatprep.subr.mxu0 0.0
    %8181 = vmatpush2.msra.mxu0 0.0
    %8182 = vmatprep.mubr.f32.mxu0 0.0
    %8183 = vmatmul.mubr.f32.gmra.mxu0 %v8077
    %v8184 = vpop.f32.mrf.mxu0
    %v8185 = vadd.f32 %v8116, %v8184
    %v8186 = vpop.f32.mrf.mxu0
    %8187 = vmatprep.mubr.f32.mxu0 0.0
    %8188 = vmatmul.mubr.f32.gmra.mxu0 %v8078
    %v8189 = vpop.f32.mrf.mxu0
    %v8190 = vadd.f32 %v8116, %v8189
    %v8191 = vpop.f32.mrf.mxu0
    %8192 = vmatprep.mubr.f32.mxu0 0.0
    %8193 = vmatmul.mubr.f32.gmra.mxu0 %v8079
    %v8194 = vpop.f32.mrf.mxu0
    %v8195 = vadd.f32 %v8116, %v8194
    %v8196 = vpop.f32.mrf.mxu0
    %8197 = vmatprep.mubr.f32.mxu0 0.0
    %8198 = vmatmul.mubr.f32.gmra.mxu0 %v8080
    %v8199 = vpop.f32.mrf.mxu0
    %v8200 = vadd.f32 %v8116, %v8199
    %v8201 = vpop.f32.mrf.mxu0
    %8202 = vmatprep.mubr.f32.mxu0 0.0
    %8203 = vmatmul.mubr.f32.gmra.mxu0 %v8081
    %v8204 = vpop.f32.mrf.mxu0
    %v8205 = vadd.f32 %v8116, %v8204
    %v8206 = vpop.f32.mrf.mxu0
    %8207 = vmatprep.mubr.f32.mxu0 0.0
    %8208 = vmatmul.mubr.f32.gmra.mxu0 %v8082
    %v8209 = vpop.f32.mrf.mxu0
    %v8210 = vadd.f32 %v8116, %v8209
    %v8211 = vpop.f32.mrf.mxu0
    %8212 = vmatprep.mubr.f32.mxu0 0.0
    %8213 = vmatmul.mubr.f32.gmra.mxu0 %v8083
    %v8214 = vpop.f32.mrf.mxu0
    %v8215 = vadd.f32 %v8116, %v8214
    %v8216 = vpop.f32.mrf.mxu0
    %8217 = vmatprep.mubr.f32.mxu0 0.0
    %8218 = vmatmul.mubr.f32.gmra.mxu0 %v8084
    %v8219 = vpop.f32.mrf.mxu0
    %v8220 = vadd.f32 %v8116, %v8219
    %v8221 = vpop.f32.mrf.mxu0
    %8222 = vmatprep.mubr.f32.mxu0 0.0
    %8223 = vmatmul.mubr.f32.gmra.mxu0 %v8085
    %v8224 = vpop.f32.mrf.mxu0
    %v8225 = vadd.f32 %v8116, %v8224
    %v8226 = vpop.f32.mrf.mxu0
    %8227 = vmatprep.mubr.f32.mxu0 0.0
    %8228 = vmatmul.mubr.f32.gmra.mxu0 %v8086
    %v8229 = vpop.f32.mrf.mxu0
    %v8230 = vadd.f32 %v8116, %v8229
    %v8231 = vpop.f32.mrf.mxu0
    %8232 = vmatprep.mubr.f32.mxu0 0.0
    %8233 = vmatmul.mubr.f32.gmra.mxu0 %v8087
    %v8234 = vpop.f32.mrf.mxu0
    %v8235 = vadd.f32 %v8116, %v8234
    %v8236 = vpop.f32.mrf.mxu0
    %8237 = vmatprep.mubr.f32.mxu0 0.0
    %8238 = vmatmul.mubr.f32.gmra.mxu0 %v8088
    %v8239 = vpop.f32.mrf.mxu0
    %v8240 = vadd.f32 %v8116, %v8239
    %v8241 = vpop.f32.mrf.mxu0
    %8242 = vmatprep.mubr.f32.mxu0 0.0
    %8243 = vmatmul.mubr.f32.gmra.mxu0 %v8089
    %v8244 = vpop.f32.mrf.mxu0
    %v8245 = vadd.f32 %v8116, %v8244
    %v8246 = vpop.f32.mrf.mxu0
    %8247 = vmatprep.mubr.f32.mxu0 0.0
    %8248 = vmatmul.mubr.f32.gmra.mxu0 %v8090
    %v8249 = vpop.f32.mrf.mxu0
    %v8250 = vadd.f32 %v8116, %v8249
    %v8251 = vpop.f32.mrf.mxu0
    %8252 = vmatprep.mubr.f32.mxu0 0.0
    %8253 = vmatmul.mubr.f32.gmra.mxu0 %v8091
    %v8254 = vpop.f32.mrf.mxu0
    %v8255 = vadd.f32 %v8116, %v8254
    %v8256 = vpop.f32.mrf.mxu0
    %8257 = vmatprep.mubr.f32.mxu0 0.0
    %8258 = vmatmul.mubr.f32.gmra.mxu0 %v8092
    %v8259 = vpop.f32.mrf.mxu0
    %v8260 = vadd.f32 %v8116, %v8259
    %v8261 = vpop.f32.mrf.mxu0
    %8262 = vdwg.mxu0
    %v8263 = vadd.f32 %v8185, %v8190
    %v8264 = vadd.f32 %v8263, %v8195
    %v8265 = vadd.f32 %v8264, %v8200
    %v8266 = vadd.f32 %v8265, %v8205
    %v8267 = vadd.f32 %v8266, %v8210
    %v8268 = vadd.f32 %v8267, %v8215
    %v8269 = vadd.f32 %v8268, %v8220
    %v8270 = vrot.slane %v8269, 4
    %v8271 = vadd.f32 %v8269, %v8270
    %v8272 = vrot.slane %v8271, 2
    %v8273 = vadd.f32 %v8271, %v8272
    %v8274 = vrot.slane %v8273, 1
    %v8275 = vadd.f32 %v8273, %v8274
    %v8276 = vadd.f32 %v8225, %v8230
    %v8277 = vadd.f32 %v8276, %v8235
    %v8278 = vadd.f32 %v8277, %v8240
    %v8279 = vadd.f32 %v8278, %v8245
    %v8280 = vadd.f32 %v8279, %v8250
    %v8281 = vadd.f32 %v8280, %v8255
    %v8282 = vadd.f32 %v8281, %v8260
    %v8283 = vrot.slane %v8282, 4
    %v8284 = vadd.f32 %v8282, %v8283
    %v8285 = vrot.slane %v8284, 2
    %v8286 = vadd.f32 %v8284, %v8285
    %v8287 = vrot.slane %v8286, 1
    %v8288 = vadd.f32 %v8286, %v8287
    %v8289 = vmul.f32 %v8275, %v6477
    %v8290 = vmul.f32 %v8288, %v6477
    %v8291 = vmul.f32 %v8185, %v8185
    %v8292 = vmul.f32 %v8190, %v8190
    %v8293 = vmul.f32 %v8195, %v8195
    %v8294 = vmul.f32 %v8200, %v8200
    %v8295 = vmul.f32 %v8205, %v8205
    %v8296 = vmul.f32 %v8210, %v8210
    %v8297 = vmul.f32 %v8215, %v8215
    %v8298 = vmul.f32 %v8220, %v8220
    %v8299 = vmul.f32 %v8225, %v8225
    %v8300 = vmul.f32 %v8230, %v8230
    %v8301 = vmul.f32 %v8235, %v8235
    %v8302 = vmul.f32 %v8240, %v8240
    %v8303 = vmul.f32 %v8245, %v8245
    %v8304 = vmul.f32 %v8250, %v8250
    %v8305 = vmul.f32 %v8255, %v8255
    %v8306 = vmul.f32 %v8260, %v8260
    %v8307 = vadd.f32 %v8291, %v8292
    %v8308 = vadd.f32 %v8307, %v8293
    %v8309 = vadd.f32 %v8308, %v8294
    %v8310 = vadd.f32 %v8309, %v8295
    %v8311 = vadd.f32 %v8310, %v8296
    %v8312 = vadd.f32 %v8311, %v8297
    %v8313 = vadd.f32 %v8312, %v8298
    %v8314 = vrot.slane %v8313, 4
    %v8315 = vadd.f32 %v8313, %v8314
    %v8316 = vrot.slane %v8315, 2
    %v8317 = vadd.f32 %v8315, %v8316
    %v8318 = vrot.slane %v8317, 1
    %v8319 = vadd.f32 %v8317, %v8318
    %v8320 = vadd.f32 %v8299, %v8300
    %v8321 = vadd.f32 %v8320, %v8301
    %v8322 = vadd.f32 %v8321, %v8302
    %v8323 = vadd.f32 %v8322, %v8303
    %v8324 = vadd.f32 %v8323, %v8304
    %v8325 = vadd.f32 %v8324, %v8305
    %v8326 = vadd.f32 %v8325, %v8306
    %v8327 = vrot.slane %v8326, 4
    %v8328 = vadd.f32 %v8326, %v8327
    %v8329 = vrot.slane %v8328, 2
    %v8330 = vadd.f32 %v8328, %v8329
    %v8331 = vrot.slane %v8330, 1
    %v8332 = vadd.f32 %v8330, %v8331
    %v8333 = vmul.f32 %v8319, %v6477
    %v8334 = vmul.f32 %v8332, %v6477
    %v8335 = vmul.f32 %v8289, %v8289
    %v8336 = vmul.f32 %v8290, %v8290
    %v8337 = vsub.f32 %v8333, %v8335
    %v8338 = vsub.f32 %v8334, %v8336
    %v8339 = vmax.f32 %v8337, 0.0
    %v8340 = vmax.f32 %v8338, 0.0
    %v8341 = vsub.f32 %v8185, %v8289
    %v8342 = vsub.f32 %v8190, %v8289
    %v8343 = vsub.f32 %v8195, %v8289
    %v8344 = vsub.f32 %v8200, %v8289
    %v8345 = vsub.f32 %v8205, %v8289
    %v8346 = vsub.f32 %v8210, %v8289
    %v8347 = vsub.f32 %v8215, %v8289
    %v8348 = vsub.f32 %v8220, %v8289
    %v8349 = vsub.f32 %v8225, %v8290
    %v8350 = vsub.f32 %v8230, %v8290
    %v8351 = vsub.f32 %v8235, %v8290
    %v8352 = vsub.f32 %v8240, %v8290
    %v8353 = vsub.f32 %v8245, %v8290
    %v8354 = vsub.f32 %v8250, %v8290
    %v8355 = vsub.f32 %v8255, %v8290
    %v8356 = vsub.f32 %v8260, %v8290
    %v8357 = vadd.f32 %v8339, 1e-05
    %v8358 = vadd.f32 %v8340, 1e-05
    %v8359 = vrsqrt.pop %v8357
    %v8360 = vrsqrt.pop %v8358
    %v8361 = vmul.f32 %v8341, %v8359
    %v8362 = vmul.f32 %v8342, %v8359
    %v8363 = vmul.f32 %v8343, %v8359
    %v8364 = vmul.f32 %v8344, %v8359
    %v8365 = vmul.f32 %v8345, %v8359
    %v8366 = vmul.f32 %v8346, %v8359
    %v8367 = vmul.f32 %v8347, %v8359
    %v8368 = vmul.f32 %v8348, %v8359
    %v8369 = vmul.f32 %v8349, %v8360
    %v8370 = vmul.f32 %v8350, %v8360
    %v8371 = vmul.f32 %v8351, %v8360
    %v8372 = vmul.f32 %v8352, %v8360
    %v8373 = vmul.f32 %v8353, %v8360
    %v8374 = vmul.f32 %v8354, %v8360
    %v8375 = vmul.f32 %v8355, %v8360
    %v8376 = vmul.f32 %v8356, %v8360
    %s8377 = scalar_lea.vmem %s12, 4
    %v8378 = vld [vmem:[%s8377] sm:$0x1]
    %s8379 = scalar_lea.vmem %s13, 4
    %v8380 = vld [vmem:[%s8379] sm:$0x1]
    %v8381 = vadd.f32 %v8361, %v8362
    %v8382 = vadd.f32 %v8381, %v8363
    %v8383 = vadd.f32 %v8382, %v8364
    %v8384 = vadd.f32 %v8383, %v8365
    %v8385 = vadd.f32 %v8384, %v8366
    %v8386 = vadd.f32 %v8385, %v8367
    %v8387 = vadd.f32 %v8386, %v8368
    %v8388 = vadd.f32 %v8387, %v8369
    %v8389 = vadd.f32 %v8388, %v8370
    %v8390 = vadd.f32 %v8389, %v8371
    %v8391 = vadd.f32 %v8390, %v8372
    %v8392 = vadd.f32 %v8391, %v8373
    %v8393 = vadd.f32 %v8392, %v8374
    %v8394 = vadd.f32 %v8393, %v8375
    %v8395 = vadd.f32 %v8394, %v8376
    %v8396 = vrot.slane %v8395, 4
    %v8397 = vadd.f32 %v8395, %v8396
    %v8398 = vrot.slane %v8397, 2
    %v8399 = vadd.f32 %v8397, %v8398
    %v8400 = vrot.slane %v8399, 1
    %v8401 = vadd.f32 %v8399, %v8400
    %v8402 = vmul.f32 %v8401, %v6589
    %v8403 = vmul.f32 %v8361, %v8361
    %v8404 = vmul.f32 %v8362, %v8362
    %v8405 = vmul.f32 %v8363, %v8363
    %v8406 = vmul.f32 %v8364, %v8364
    %v8407 = vmul.f32 %v8365, %v8365
    %v8408 = vmul.f32 %v8366, %v8366
    %v8409 = vmul.f32 %v8367, %v8367
    %v8410 = vmul.f32 %v8368, %v8368
    %v8411 = vmul.f32 %v8369, %v8369
    %v8412 = vmul.f32 %v8370, %v8370
    %v8413 = vmul.f32 %v8371, %v8371
    %v8414 = vmul.f32 %v8372, %v8372
    %v8415 = vmul.f32 %v8373, %v8373
    %v8416 = vmul.f32 %v8374, %v8374
    %v8417 = vmul.f32 %v8375, %v8375
    %v8418 = vmul.f32 %v8376, %v8376
    %v8419 = vadd.f32 %v8403, %v8404
    %v8420 = vadd.f32 %v8419, %v8405
    %v8421 = vadd.f32 %v8420, %v8406
    %v8422 = vadd.f32 %v8421, %v8407
    %v8423 = vadd.f32 %v8422, %v8408
    %v8424 = vadd.f32 %v8423, %v8409
    %v8425 = vadd.f32 %v8424, %v8410
    %v8426 = vadd.f32 %v8425, %v8411
    %v8427 = vadd.f32 %v8426, %v8412
    %v8428 = vadd.f32 %v8427, %v8413
    %v8429 = vadd.f32 %v8428, %v8414
    %v8430 = vadd.f32 %v8429, %v8415
    %v8431 = vadd.f32 %v8430, %v8416
    %v8432 = vadd.f32 %v8431, %v8417
    %v8433 = vadd.f32 %v8432, %v8418
    %v8434 = vrot.slane %v8433, 4
    %v8435 = vadd.f32 %v8433, %v8434
    %v8436 = vrot.slane %v8435, 2
    %v8437 = vadd.f32 %v8435, %v8436
    %v8438 = vrot.slane %v8437, 1
    %v8439 = vadd.f32 %v8437, %v8438
    %v8440 = vmul.f32 %v8439, %v6589
    %v8441 = vmul.f32 %v8402, %v8402
    %v8442 = vsub.f32 %v8440, %v8441
    %v8443 = vmax.f32 %v8442, 0.0
    %v8444 = vsub.f32 %v8361, %v8402
    %v8445 = vsub.f32 %v8362, %v8402
    %v8446 = vsub.f32 %v8363, %v8402
    %v8447 = vsub.f32 %v8364, %v8402
    %v8448 = vsub.f32 %v8365, %v8402
    %v8449 = vsub.f32 %v8366, %v8402
    %v8450 = vsub.f32 %v8367, %v8402
    %v8451 = vsub.f32 %v8368, %v8402
    %v8452 = vsub.f32 %v8369, %v8402
    %v8453 = vsub.f32 %v8370, %v8402
    %v8454 = vsub.f32 %v8371, %v8402
    %v8455 = vsub.f32 %v8372, %v8402
    %v8456 = vsub.f32 %v8373, %v8402
    %v8457 = vsub.f32 %v8374, %v8402
    %v8458 = vsub.f32 %v8375, %v8402
    %v8459 = vsub.f32 %v8376, %v8402
    %v8460 = vadd.f32 %v8443, 1e-05
    %v8461 = vrsqrt.pop %v8460
    %v8462 = vmul.f32 %v8444, %v8461
    %v8463 = vmul.f32 %v8445, %v8461
    %v8464 = vmul.f32 %v8446, %v8461
    %v8465 = vmul.f32 %v8447, %v8461
    %v8466 = vmul.f32 %v8448, %v8461
    %v8467 = vmul.f32 %v8449, %v8461
    %v8468 = vmul.f32 %v8450, %v8461
    %v8469 = vmul.f32 %v8451, %v8461
    %v8470 = vmul.f32 %v8452, %v8461
    %v8471 = vmul.f32 %v8453, %v8461
    %v8472 = vmul.f32 %v8454, %v8461
    %v8473 = vmul.f32 %v8455, %v8461
    %v8474 = vmul.f32 %v8456, %v8461
    %v8475 = vmul.f32 %v8457, %v8461
    %v8476 = vmul.f32 %v8458, %v8461
    %v8477 = vmul.f32 %v8459, %v8461
    %v8479 = vlaneseq
    %v8480 = vshrl.u32 %v8479, 7
    %v8481 = vsub.s32 0, %v8480
    %v8482 = vrot.slane %v8378, %v8481
    %v8484 = vmul.f32 %v8462, %v8482
    %v8485 = vmul.f32 %v8463, %v8482
    %v8486 = vmul.f32 %v8464, %v8482
    %v8487 = vmul.f32 %v8465, %v8482
    %v8488 = vmul.f32 %v8466, %v8482
    %v8489 = vmul.f32 %v8467, %v8482
    %v8490 = vmul.f32 %v8468, %v8482
    %v8491 = vmul.f32 %v8469, %v8482
    %v8492 = vmul.f32 %v8470, %v8482
    %v8493 = vmul.f32 %v8471, %v8482
    %v8494 = vmul.f32 %v8472, %v8482
    %v8495 = vmul.f32 %v8473, %v8482
    %v8496 = vmul.f32 %v8474, %v8482
    %v8497 = vmul.f32 %v8475, %v8482
    %v8498 = vmul.f32 %v8476, %v8482
    %v8499 = vmul.f32 %v8477, %v8482
    %v8501 = vlaneseq
    %v8502 = vshrl.u32 %v8501, 7
    %v8503 = vsub.s32 0, %v8502
    %v8504 = vrot.slane %v8380, %v8503
    %v8506 = vadd.f32 %v8484, %v8504
    %v8507 = vadd.f32 %v8485, %v8504
    %v8508 = vadd.f32 %v8486, %v8504
    %v8509 = vadd.f32 %v8487, %v8504
    %v8510 = vadd.f32 %v8488, %v8504
    %v8511 = vadd.f32 %v8489, %v8504
    %v8512 = vadd.f32 %v8490, %v8504
    %v8513 = vadd.f32 %v8491, %v8504
    %v8514 = vadd.f32 %v8492, %v8504
    %v8515 = vadd.f32 %v8493, %v8504
    %v8516 = vadd.f32 %v8494, %v8504
    %v8517 = vadd.f32 %v8495, %v8504
    %v8518 = vadd.f32 %v8496, %v8504
    %v8519 = vadd.f32 %v8497, %v8504
    %v8520 = vadd.f32 %v8498, %v8504
    %v8521 = vadd.f32 %v8499, %v8504
    %v8522 = vmax.f32 %v8506, 0.0
    %v8523 = vmax.f32 %v8507, 0.0
    %v8524 = vmax.f32 %v8508, 0.0
    %v8525 = vmax.f32 %v8509, 0.0
    %v8526 = vmax.f32 %v8510, 0.0
    %v8527 = vmax.f32 %v8511, 0.0
    %v8528 = vmax.f32 %v8512, 0.0
    %v8529 = vmax.f32 %v8513, 0.0
    %v8530 = vmax.f32 %v8514, 0.0
    %v8531 = vmax.f32 %v8515, 0.0
    %v8532 = vmax.f32 %v8516, 0.0
    %v8533 = vmax.f32 %v8517, 0.0
    %v8534 = vmax.f32 %v8518, 0.0
    %v8535 = vmax.f32 %v8519, 0.0
    %v8536 = vmax.f32 %v8520, 0.0
    %v8537 = vmax.f32 %v8521, 0.0
    %s8538 = scalar_lea.vmem %s10, 640
    %v8539 = vld [vmem:[%s8538] sm:$0xff]
    %v8540 = vld [vmem:[%s8538 + $0x8] sm:$0xff]
    %v8541 = vld [vmem:[%s8538 + $0x10] sm:$0xff]
    %v8542 = vld [vmem:[%s8538 + $0x18] sm:$0xff]
    %v8543 = vld [vmem:[%s8538 + $0x20] sm:$0xff]
    %v8544 = vld [vmem:[%s8538 + $0x28] sm:$0xff]
    %v8545 = vld [vmem:[%s8538 + $0x30] sm:$0xff]
    %v8546 = vld [vmem:[%s8538 + $0x38] sm:$0xff]
    %v8547 = vld [vmem:[%s8538 + $0x40] sm:$0xff]
    %v8548 = vld [vmem:[%s8538 + $0x48] sm:$0xff]
    %v8549 = vld [vmem:[%s8538 + $0x50] sm:$0xff]
    %v8550 = vld [vmem:[%s8538 + $0x58] sm:$0xff]
    %v8551 = vld [vmem:[%s8538 + $0x60] sm:$0xff]
    %v8552 = vld [vmem:[%s8538 + $0x68] sm:$0xff]
    %v8553 = vld [vmem:[%s8538 + $0x70] sm:$0xff]
    %v8554 = vld [vmem:[%s8538 + $0x78] sm:$0xff]
    %s8555 = scalar_lea.vmem %s11, 5
    %v8556 = vld [vmem:[%s8555] sm:$0x1]
    %v8558 = vlaneseq
    %v8559 = vshrl.u32 %v8558, 7
    %v8560 = vsub.s32 0, %v8559
    %v8561 = vrot.slane %v8556, %v8560
    %8563 = vmatprep.subr.mxu0 0.0
    %8564 = vmatpush1.msra.mxu0 %v8554
    %8565 = vmatprep.subr.mxu0 0.0
    %8566 = vmatpush1.msra.mxu0 %v8553
    %8567 = vmatprep.subr.mxu0 0.0
    %8568 = vmatpush1.msra.mxu0 %v8552
    %8569 = vmatprep.subr.mxu0 0.0
    %8570 = vmatpush1.msra.mxu0 %v8551
    %8571 = vmatprep.subr.mxu0 0.0
    %8572 = vmatpush1.msra.mxu0 %v8550
    %8573 = vmatprep.subr.mxu0 0.0
    %8574 = vmatpush1.msra.mxu0 %v8549
    %8575 = vmatprep.subr.mxu0 0.0
    %8576 = vmatpush1.msra.mxu0 %v8548
    %8577 = vmatprep.subr.mxu0 0.0
    %8578 = vmatpush1.msra.mxu0 %v8547
    %8579 = vmatprep.subr.mxu0 0.0
    %8580 = vmatpush1.msra.mxu0 %v8546
    %8581 = vmatprep.subr.mxu0 0.0
    %8582 = vmatpush1.msra.mxu0 %v8545
    %8583 = vmatprep.subr.mxu0 0.0
    %8584 = vmatpush1.msra.mxu0 %v8544
    %8585 = vmatprep.subr.mxu0 0.0
    %8586 = vmatpush1.msra.mxu0 %v8543
    %8587 = vmatprep.subr.mxu0 0.0
    %8588 = vmatpush1.msra.mxu0 %v8542
    %8589 = vmatprep.subr.mxu0 0.0
    %8590 = vmatpush1.msra.mxu0 %v8541
    %8591 = vmatprep.subr.mxu0 0.0
    %8592 = vmatpush1.msra.mxu0 %v8540
    %8593 = vmatprep.subr.mxu0 0.0
    %8594 = vmatpush1.msra.mxu0 %v8539
    %8595 = vmatprep.subr.mxu0 0.0
    %8596 = vmatpush2.msra.mxu0 0.0
    %8597 = vmatprep.subr.mxu0 0.0
    %8598 = vmatpush2.msra.mxu0 0.0
    %8599 = vmatprep.subr.mxu0 0.0
    %8600 = vmatpush2.msra.mxu0 0.0
    %8601 = vmatprep.subr.mxu0 0.0
    %8602 = vmatpush2.msra.mxu0 0.0
    %8603 = vmatprep.subr.mxu0 0.0
    %8604 = vmatpush2.msra.mxu0 0.0
    %8605 = vmatprep.subr.mxu0 0.0
    %8606 = vmatpush2.msra.mxu0 0.0
    %8607 = vmatprep.subr.mxu0 0.0
    %8608 = vmatpush2.msra.mxu0 0.0
    %8609 = vmatprep.subr.mxu0 0.0
    %8610 = vmatpush2.msra.mxu0 0.0
    %8611 = vmatprep.subr.mxu0 0.0
    %8612 = vmatpush2.msra.mxu0 0.0
    %8613 = vmatprep.subr.mxu0 0.0
    %8614 = vmatpush2.msra.mxu0 0.0
    %8615 = vmatprep.subr.mxu0 0.0
    %8616 = vmatpush2.msra.mxu0 0.0
    %8617 = vmatprep.subr.mxu0 0.0
    %8618 = vmatpush2.msra.mxu0 0.0
    %8619 = vmatprep.subr.mxu0 0.0
    %8620 = vmatpush2.msra.mxu0 0.0
    %8621 = vmatprep.subr.mxu0 0.0
    %8622 = vmatpush2.msra.mxu0 0.0
    %8623 = vmatprep.subr.mxu0 0.0
    %8624 = vmatpush2.msra.mxu0 0.0
    %8625 = vmatprep.subr.mxu0 0.0
    %8626 = vmatpush2.msra.mxu0 0.0
    %8627 = vmatprep.mubr.f32.mxu0 0.0
    %8628 = vmatmul.mubr.f32.gmra.mxu0 %v8522
    %v8629 = vpop.f32.mrf.mxu0
    %v8630 = vadd.f32 %v8561, %v8629
    %v8631 = vpop.f32.mrf.mxu0
    %8632 = vmatprep.mubr.f32.mxu0 0.0
    %8633 = vmatmul.mubr.f32.gmra.mxu0 %v8523
    %v8634 = vpop.f32.mrf.mxu0
    %v8635 = vadd.f32 %v8561, %v8634
    %v8636 = vpop.f32.mrf.mxu0
    %8637 = vmatprep.mubr.f32.mxu0 0.0
    %8638 = vmatmul.mubr.f32.gmra.mxu0 %v8524
    %v8639 = vpop.f32.mrf.mxu0
    %v8640 = vadd.f32 %v8561, %v8639
    %v8641 = vpop.f32.mrf.mxu0
    %8642 = vmatprep.mubr.f32.mxu0 0.0
    %8643 = vmatmul.mubr.f32.gmra.mxu0 %v8525
    %v8644 = vpop.f32.mrf.mxu0
    %v8645 = vadd.f32 %v8561, %v8644
    %v8646 = vpop.f32.mrf.mxu0
    %8647 = vmatprep.mubr.f32.mxu0 0.0
    %8648 = vmatmul.mubr.f32.gmra.mxu0 %v8526
    %v8649 = vpop.f32.mrf.mxu0
    %v8650 = vadd.f32 %v8561, %v8649
    %v8651 = vpop.f32.mrf.mxu0
    %8652 = vmatprep.mubr.f32.mxu0 0.0
    %8653 = vmatmul.mubr.f32.gmra.mxu0 %v8527
    %v8654 = vpop.f32.mrf.mxu0
    %v8655 = vadd.f32 %v8561, %v8654
    %v8656 = vpop.f32.mrf.mxu0
    %8657 = vmatprep.mubr.f32.mxu0 0.0
    %8658 = vmatmul.mubr.f32.gmra.mxu0 %v8528
    %v8659 = vpop.f32.mrf.mxu0
    %v8660 = vadd.f32 %v8561, %v8659
    %v8661 = vpop.f32.mrf.mxu0
    %8662 = vmatprep.mubr.f32.mxu0 0.0
    %8663 = vmatmul.mubr.f32.gmra.mxu0 %v8529
    %v8664 = vpop.f32.mrf.mxu0
    %v8665 = vadd.f32 %v8561, %v8664
    %v8666 = vpop.f32.mrf.mxu0
    %8667 = vmatprep.mubr.f32.mxu0 0.0
    %8668 = vmatmul.mubr.f32.gmra.mxu0 %v8530
    %v8669 = vpop.f32.mrf.mxu0
    %v8670 = vadd.f32 %v8561, %v8669
    %v8671 = vpop.f32.mrf.mxu0
    %8672 = vmatprep.mubr.f32.mxu0 0.0
    %8673 = vmatmul.mubr.f32.gmra.mxu0 %v8531
    %v8674 = vpop.f32.mrf.mxu0
    %v8675 = vadd.f32 %v8561, %v8674
    %v8676 = vpop.f32.mrf.mxu0
    %8677 = vmatprep.mubr.f32.mxu0 0.0
    %8678 = vmatmul.mubr.f32.gmra.mxu0 %v8532
    %v8679 = vpop.f32.mrf.mxu0
    %v8680 = vadd.f32 %v8561, %v8679
    %v8681 = vpop.f32.mrf.mxu0
    %8682 = vmatprep.mubr.f32.mxu0 0.0
    %8683 = vmatmul.mubr.f32.gmra.mxu0 %v8533
    %v8684 = vpop.f32.mrf.mxu0
    %v8685 = vadd.f32 %v8561, %v8684
    %v8686 = vpop.f32.mrf.mxu0
    %8687 = vmatprep.mubr.f32.mxu0 0.0
    %8688 = vmatmul.mubr.f32.gmra.mxu0 %v8534
    %v8689 = vpop.f32.mrf.mxu0
    %v8690 = vadd.f32 %v8561, %v8689
    %v8691 = vpop.f32.mrf.mxu0
    %8692 = vmatprep.mubr.f32.mxu0 0.0
    %8693 = vmatmul.mubr.f32.gmra.mxu0 %v8535
    %v8694 = vpop.f32.mrf.mxu0
    %v8695 = vadd.f32 %v8561, %v8694
    %v8696 = vpop.f32.mrf.mxu0
    %8697 = vmatprep.mubr.f32.mxu0 0.0
    %8698 = vmatmul.mubr.f32.gmra.mxu0 %v8536
    %v8699 = vpop.f32.mrf.mxu0
    %v8700 = vadd.f32 %v8561, %v8699
    %v8701 = vpop.f32.mrf.mxu0
    %8702 = vmatprep.mubr.f32.mxu0 0.0
    %8703 = vmatmul.mubr.f32.gmra.mxu0 %v8537
    %v8704 = vpop.f32.mrf.mxu0
    %v8705 = vadd.f32 %v8561, %v8704
    %v8706 = vpop.f32.mrf.mxu0
    %8707 = vdwg.mxu0
    %v8708 = vadd.f32 %v8630, %v8635
    %v8709 = vadd.f32 %v8708, %v8640
    %v8710 = vadd.f32 %v8709, %v8645
    %v8711 = vadd.f32 %v8710, %v8650
    %v8712 = vadd.f32 %v8711, %v8655
    %v8713 = vadd.f32 %v8712, %v8660
    %v8714 = vadd.f32 %v8713, %v8665
    %v8715 = vrot.slane %v8714, 4
    %v8716 = vadd.f32 %v8714, %v8715
    %v8717 = vrot.slane %v8716, 2
    %v8718 = vadd.f32 %v8716, %v8717
    %v8719 = vrot.slane %v8718, 1
    %v8720 = vadd.f32 %v8718, %v8719
    %v8721 = vadd.f32 %v8670, %v8675
    %v8722 = vadd.f32 %v8721, %v8680
    %v8723 = vadd.f32 %v8722, %v8685
    %v8724 = vadd.f32 %v8723, %v8690
    %v8725 = vadd.f32 %v8724, %v8695
    %v8726 = vadd.f32 %v8725, %v8700
    %v8727 = vadd.f32 %v8726, %v8705
    %v8728 = vrot.slane %v8727, 4
    %v8729 = vadd.f32 %v8727, %v8728
    %v8730 = vrot.slane %v8729, 2
    %v8731 = vadd.f32 %v8729, %v8730
    %v8732 = vrot.slane %v8731, 1
    %v8733 = vadd.f32 %v8731, %v8732
    %v8734 = vmul.f32 %v8720, %v6477
    %v8735 = vmul.f32 %v8733, %v6477
    %v8736 = vmul.f32 %v8630, %v8630
    %v8737 = vmul.f32 %v8635, %v8635
    %v8738 = vmul.f32 %v8640, %v8640
    %v8739 = vmul.f32 %v8645, %v8645
    %v8740 = vmul.f32 %v8650, %v8650
    %v8741 = vmul.f32 %v8655, %v8655
    %v8742 = vmul.f32 %v8660, %v8660
    %v8743 = vmul.f32 %v8665, %v8665
    %v8744 = vmul.f32 %v8670, %v8670
    %v8745 = vmul.f32 %v8675, %v8675
    %v8746 = vmul.f32 %v8680, %v8680
    %v8747 = vmul.f32 %v8685, %v8685
    %v8748 = vmul.f32 %v8690, %v8690
    %v8749 = vmul.f32 %v8695, %v8695
    %v8750 = vmul.f32 %v8700, %v8700
    %v8751 = vmul.f32 %v8705, %v8705
    %v8752 = vadd.f32 %v8736, %v8737
    %v8753 = vadd.f32 %v8752, %v8738
    %v8754 = vadd.f32 %v8753, %v8739
    %v8755 = vadd.f32 %v8754, %v8740
    %v8756 = vadd.f32 %v8755, %v8741
    %v8757 = vadd.f32 %v8756, %v8742
    %v8758 = vadd.f32 %v8757, %v8743
    %v8759 = vrot.slane %v8758, 4
    %v8760 = vadd.f32 %v8758, %v8759
    %v8761 = vrot.slane %v8760, 2
    %v8762 = vadd.f32 %v8760, %v8761
    %v8763 = vrot.slane %v8762, 1
    %v8764 = vadd.f32 %v8762, %v8763
    %v8765 = vadd.f32 %v8744, %v8745
    %v8766 = vadd.f32 %v8765, %v8746
    %v8767 = vadd.f32 %v8766, %v8747
    %v8768 = vadd.f32 %v8767, %v8748
    %v8769 = vadd.f32 %v8768, %v8749
    %v8770 = vadd.f32 %v8769, %v8750
    %v8771 = vadd.f32 %v8770, %v8751
    %v8772 = vrot.slane %v8771, 4
    %v8773 = vadd.f32 %v8771, %v8772
    %v8774 = vrot.slane %v8773, 2
    %v8775 = vadd.f32 %v8773, %v8774
    %v8776 = vrot.slane %v8775, 1
    %v8777 = vadd.f32 %v8775, %v8776
    %v8778 = vmul.f32 %v8764, %v6477
    %v8779 = vmul.f32 %v8777, %v6477
    %v8780 = vmul.f32 %v8734, %v8734
    %v8781 = vmul.f32 %v8735, %v8735
    %v8782 = vsub.f32 %v8778, %v8780
    %v8783 = vsub.f32 %v8779, %v8781
    %v8784 = vmax.f32 %v8782, 0.0
    %v8785 = vmax.f32 %v8783, 0.0
    %v8786 = vsub.f32 %v8630, %v8734
    %v8787 = vsub.f32 %v8635, %v8734
    %v8788 = vsub.f32 %v8640, %v8734
    %v8789 = vsub.f32 %v8645, %v8734
    %v8790 = vsub.f32 %v8650, %v8734
    %v8791 = vsub.f32 %v8655, %v8734
    %v8792 = vsub.f32 %v8660, %v8734
    %v8793 = vsub.f32 %v8665, %v8734
    %v8794 = vsub.f32 %v8670, %v8735
    %v8795 = vsub.f32 %v8675, %v8735
    %v8796 = vsub.f32 %v8680, %v8735
    %v8797 = vsub.f32 %v8685, %v8735
    %v8798 = vsub.f32 %v8690, %v8735
    %v8799 = vsub.f32 %v8695, %v8735
    %v8800 = vsub.f32 %v8700, %v8735
    %v8801 = vsub.f32 %v8705, %v8735
    %v8802 = vadd.f32 %v8784, 1e-05
    %v8803 = vadd.f32 %v8785, 1e-05
    %v8804 = vrsqrt.pop %v8802
    %v8805 = vrsqrt.pop %v8803
    %v8806 = vmul.f32 %v8786, %v8804
    %v8807 = vmul.f32 %v8787, %v8804
    %v8808 = vmul.f32 %v8788, %v8804
    %v8809 = vmul.f32 %v8789, %v8804
    %v8810 = vmul.f32 %v8790, %v8804
    %v8811 = vmul.f32 %v8791, %v8804
    %v8812 = vmul.f32 %v8792, %v8804
    %v8813 = vmul.f32 %v8793, %v8804
    %v8814 = vmul.f32 %v8794, %v8805
    %v8815 = vmul.f32 %v8795, %v8805
    %v8816 = vmul.f32 %v8796, %v8805
    %v8817 = vmul.f32 %v8797, %v8805
    %v8818 = vmul.f32 %v8798, %v8805
    %v8819 = vmul.f32 %v8799, %v8805
    %v8820 = vmul.f32 %v8800, %v8805
    %v8821 = vmul.f32 %v8801, %v8805
    %s8822 = scalar_lea.vmem %s12, 5
    %v8823 = vld [vmem:[%s8822] sm:$0x1]
    %s8824 = scalar_lea.vmem %s13, 5
    %v8825 = vld [vmem:[%s8824] sm:$0x1]
    %v8826 = vadd.f32 %v8806, %v8807
    %v8827 = vadd.f32 %v8826, %v8808
    %v8828 = vadd.f32 %v8827, %v8809
    %v8829 = vadd.f32 %v8828, %v8810
    %v8830 = vadd.f32 %v8829, %v8811
    %v8831 = vadd.f32 %v8830, %v8812
    %v8832 = vadd.f32 %v8831, %v8813
    %v8833 = vadd.f32 %v8832, %v8814
    %v8834 = vadd.f32 %v8833, %v8815
    %v8835 = vadd.f32 %v8834, %v8816
    %v8836 = vadd.f32 %v8835, %v8817
    %v8837 = vadd.f32 %v8836, %v8818
    %v8838 = vadd.f32 %v8837, %v8819
    %v8839 = vadd.f32 %v8838, %v8820
    %v8840 = vadd.f32 %v8839, %v8821
    %v8841 = vrot.slane %v8840, 4
    %v8842 = vadd.f32 %v8840, %v8841
    %v8843 = vrot.slane %v8842, 2
    %v8844 = vadd.f32 %v8842, %v8843
    %v8845 = vrot.slane %v8844, 1
    %v8846 = vadd.f32 %v8844, %v8845
    %v8847 = vmul.f32 %v8846, %v6589
    %v8848 = vmul.f32 %v8806, %v8806
    %v8849 = vmul.f32 %v8807, %v8807
    %v8850 = vmul.f32 %v8808, %v8808
    %v8851 = vmul.f32 %v8809, %v8809
    %v8852 = vmul.f32 %v8810, %v8810
    %v8853 = vmul.f32 %v8811, %v8811
    %v8854 = vmul.f32 %v8812, %v8812
    %v8855 = vmul.f32 %v8813, %v8813
    %v8856 = vmul.f32 %v8814, %v8814
    %v8857 = vmul.f32 %v8815, %v8815
    %v8858 = vmul.f32 %v8816, %v8816
    %v8859 = vmul.f32 %v8817, %v8817
    %v8860 = vmul.f32 %v8818, %v8818
    %v8861 = vmul.f32 %v8819, %v8819
    %v8862 = vmul.f32 %v8820, %v8820
    %v8863 = vmul.f32 %v8821, %v8821
    %v8864 = vadd.f32 %v8848, %v8849
    %v8865 = vadd.f32 %v8864, %v8850
    %v8866 = vadd.f32 %v8865, %v8851
    %v8867 = vadd.f32 %v8866, %v8852
    %v8868 = vadd.f32 %v8867, %v8853
    %v8869 = vadd.f32 %v8868, %v8854
    %v8870 = vadd.f32 %v8869, %v8855
    %v8871 = vadd.f32 %v8870, %v8856
    %v8872 = vadd.f32 %v8871, %v8857
    %v8873 = vadd.f32 %v8872, %v8858
    %v8874 = vadd.f32 %v8873, %v8859
    %v8875 = vadd.f32 %v8874, %v8860
    %v8876 = vadd.f32 %v8875, %v8861
    %v8877 = vadd.f32 %v8876, %v8862
    %v8878 = vadd.f32 %v8877, %v8863
    %v8879 = vrot.slane %v8878, 4
    %v8880 = vadd.f32 %v8878, %v8879
    %v8881 = vrot.slane %v8880, 2
    %v8882 = vadd.f32 %v8880, %v8881
    %v8883 = vrot.slane %v8882, 1
    %v8884 = vadd.f32 %v8882, %v8883
    %v8885 = vmul.f32 %v8884, %v6589
    %v8886 = vmul.f32 %v8847, %v8847
    %v8887 = vsub.f32 %v8885, %v8886
    %v8888 = vmax.f32 %v8887, 0.0
    %v8889 = vsub.f32 %v8806, %v8847
    %v8890 = vsub.f32 %v8807, %v8847
    %v8891 = vsub.f32 %v8808, %v8847
    %v8892 = vsub.f32 %v8809, %v8847
    %v8893 = vsub.f32 %v8810, %v8847
    %v8894 = vsub.f32 %v8811, %v8847
    %v8895 = vsub.f32 %v8812, %v8847
    %v8896 = vsub.f32 %v8813, %v8847
    %v8897 = vsub.f32 %v8814, %v8847
    %v8898 = vsub.f32 %v8815, %v8847
    %v8899 = vsub.f32 %v8816, %v8847
    %v8900 = vsub.f32 %v8817, %v8847
    %v8901 = vsub.f32 %v8818, %v8847
    %v8902 = vsub.f32 %v8819, %v8847
    %v8903 = vsub.f32 %v8820, %v8847
    %v8904 = vsub.f32 %v8821, %v8847
    %v8905 = vadd.f32 %v8888, 1e-05
    %v8906 = vrsqrt.pop %v8905
    %v8907 = vmul.f32 %v8889, %v8906
    %v8908 = vmul.f32 %v8890, %v8906
    %v8909 = vmul.f32 %v8891, %v8906
    %v8910 = vmul.f32 %v8892, %v8906
    %v8911 = vmul.f32 %v8893, %v8906
    %v8912 = vmul.f32 %v8894, %v8906
    %v8913 = vmul.f32 %v8895, %v8906
    %v8914 = vmul.f32 %v8896, %v8906
    %v8915 = vmul.f32 %v8897, %v8906
    %v8916 = vmul.f32 %v8898, %v8906
    %v8917 = vmul.f32 %v8899, %v8906
    %v8918 = vmul.f32 %v8900, %v8906
    %v8919 = vmul.f32 %v8901, %v8906
    %v8920 = vmul.f32 %v8902, %v8906
    %v8921 = vmul.f32 %v8903, %v8906
    %v8922 = vmul.f32 %v8904, %v8906
    %v8924 = vlaneseq
    %v8925 = vshrl.u32 %v8924, 7
    %v8926 = vsub.s32 0, %v8925
    %v8927 = vrot.slane %v8823, %v8926
    %v8929 = vmul.f32 %v8907, %v8927
    %v8930 = vmul.f32 %v8908, %v8927
    %v8931 = vmul.f32 %v8909, %v8927
    %v8932 = vmul.f32 %v8910, %v8927
    %v8933 = vmul.f32 %v8911, %v8927
    %v8934 = vmul.f32 %v8912, %v8927
    %v8935 = vmul.f32 %v8913, %v8927
    %v8936 = vmul.f32 %v8914, %v8927
    %v8937 = vmul.f32 %v8915, %v8927
    %v8938 = vmul.f32 %v8916, %v8927
    %v8939 = vmul.f32 %v8917, %v8927
    %v8940 = vmul.f32 %v8918, %v8927
    %v8941 = vmul.f32 %v8919, %v8927
    %v8942 = vmul.f32 %v8920, %v8927
    %v8943 = vmul.f32 %v8921, %v8927
    %v8944 = vmul.f32 %v8922, %v8927
    %v8946 = vlaneseq
    %v8947 = vshrl.u32 %v8946, 7
    %v8948 = vsub.s32 0, %v8947
    %v8949 = vrot.slane %v8825, %v8948
    %v8951 = vadd.f32 %v8929, %v8949
    %v8952 = vadd.f32 %v8930, %v8949
    %v8953 = vadd.f32 %v8931, %v8949
    %v8954 = vadd.f32 %v8932, %v8949
    %v8955 = vadd.f32 %v8933, %v8949
    %v8956 = vadd.f32 %v8934, %v8949
    %v8957 = vadd.f32 %v8935, %v8949
    %v8958 = vadd.f32 %v8936, %v8949
    %v8959 = vadd.f32 %v8937, %v8949
    %v8960 = vadd.f32 %v8938, %v8949
    %v8961 = vadd.f32 %v8939, %v8949
    %v8962 = vadd.f32 %v8940, %v8949
    %v8963 = vadd.f32 %v8941, %v8949
    %v8964 = vadd.f32 %v8942, %v8949
    %v8965 = vadd.f32 %v8943, %v8949
    %v8966 = vadd.f32 %v8944, %v8949
    %v8967 = vadd.f32 %v8951, %v8077
    %v8968 = vadd.f32 %v8952, %v8078
    %v8969 = vadd.f32 %v8953, %v8079
    %v8970 = vadd.f32 %v8954, %v8080
    %v8971 = vadd.f32 %v8955, %v8081
    %v8972 = vadd.f32 %v8956, %v8082
    %v8973 = vadd.f32 %v8957, %v8083
    %v8974 = vadd.f32 %v8958, %v8084
    %v8975 = vadd.f32 %v8959, %v8085
    %v8976 = vadd.f32 %v8960, %v8086
    %v8977 = vadd.f32 %v8961, %v8087
    %v8978 = vadd.f32 %v8962, %v8088
    %v8979 = vadd.f32 %v8963, %v8089
    %v8980 = vadd.f32 %v8964, %v8090
    %v8981 = vadd.f32 %v8965, %v8091
    %v8982 = vadd.f32 %v8966, %v8092
    %v8983 = vmax.f32 %v8967, 0.0
    %v8984 = vmax.f32 %v8968, 0.0
    %v8985 = vmax.f32 %v8969, 0.0
    %v8986 = vmax.f32 %v8970, 0.0
    %v8987 = vmax.f32 %v8971, 0.0
    %v8988 = vmax.f32 %v8972, 0.0
    %v8989 = vmax.f32 %v8973, 0.0
    %v8990 = vmax.f32 %v8974, 0.0
    %v8991 = vmax.f32 %v8975, 0.0
    %v8992 = vmax.f32 %v8976, 0.0
    %v8993 = vmax.f32 %v8977, 0.0
    %v8994 = vmax.f32 %v8978, 0.0
    %v8995 = vmax.f32 %v8979, 0.0
    %v8996 = vmax.f32 %v8980, 0.0
    %v8997 = vmax.f32 %v8981, 0.0
    %v8998 = vmax.f32 %v8982, 0.0
    %s8999 = scalar_lea.vmem %s10, 768
    %v9000 = vld [vmem:[%s8999] sm:$0xff]
    %v9001 = vld [vmem:[%s8999 + $0x8] sm:$0xff]
    %v9002 = vld [vmem:[%s8999 + $0x10] sm:$0xff]
    %v9003 = vld [vmem:[%s8999 + $0x18] sm:$0xff]
    %v9004 = vld [vmem:[%s8999 + $0x20] sm:$0xff]
    %v9005 = vld [vmem:[%s8999 + $0x28] sm:$0xff]
    %v9006 = vld [vmem:[%s8999 + $0x30] sm:$0xff]
    %v9007 = vld [vmem:[%s8999 + $0x38] sm:$0xff]
    %v9008 = vld [vmem:[%s8999 + $0x40] sm:$0xff]
    %v9009 = vld [vmem:[%s8999 + $0x48] sm:$0xff]
    %v9010 = vld [vmem:[%s8999 + $0x50] sm:$0xff]
    %v9011 = vld [vmem:[%s8999 + $0x58] sm:$0xff]
    %v9012 = vld [vmem:[%s8999 + $0x60] sm:$0xff]
    %v9013 = vld [vmem:[%s8999 + $0x68] sm:$0xff]
    %v9014 = vld [vmem:[%s8999 + $0x70] sm:$0xff]
    %v9015 = vld [vmem:[%s8999 + $0x78] sm:$0xff]
    %s9016 = scalar_lea.vmem %s11, 6
    %v9017 = vld [vmem:[%s9016] sm:$0x1]
    %v9019 = vlaneseq
    %v9020 = vshrl.u32 %v9019, 7
    %v9021 = vsub.s32 0, %v9020
    %v9022 = vrot.slane %v9017, %v9021
    %9024 = vmatprep.subr.mxu0 0.0
    %9025 = vmatpush1.msra.mxu0 %v9015
    %9026 = vmatprep.subr.mxu0 0.0
    %9027 = vmatpush1.msra.mxu0 %v9014
    %9028 = vmatprep.subr.mxu0 0.0
    %9029 = vmatpush1.msra.mxu0 %v9013
    %9030 = vmatprep.subr.mxu0 0.0
    %9031 = vmatpush1.msra.mxu0 %v9012
    %9032 = vmatprep.subr.mxu0 0.0
    %9033 = vmatpush1.msra.mxu0 %v9011
    %9034 = vmatprep.subr.mxu0 0.0
    %9035 = vmatpush1.msra.mxu0 %v9010
    %9036 = vmatprep.subr.mxu0 0.0
    %9037 = vmatpush1.msra.mxu0 %v9009
    %9038 = vmatprep.subr.mxu0 0.0
    %9039 = vmatpush1.msra.mxu0 %v9008
    %9040 = vmatprep.subr.mxu0 0.0
    %9041 = vmatpush1.msra.mxu0 %v9007
    %9042 = vmatprep.subr.mxu0 0.0
    %9043 = vmatpush1.msra.mxu0 %v9006
    %9044 = vmatprep.subr.mxu0 0.0
    %9045 = vmatpush1.msra.mxu0 %v9005
    %9046 = vmatprep.subr.mxu0 0.0
    %9047 = vmatpush1.msra.mxu0 %v9004
    %9048 = vmatprep.subr.mxu0 0.0
    %9049 = vmatpush1.msra.mxu0 %v9003
    %9050 = vmatprep.subr.mxu0 0.0
    %9051 = vmatpush1.msra.mxu0 %v9002
    %9052 = vmatprep.subr.mxu0 0.0
    %9053 = vmatpush1.msra.mxu0 %v9001
    %9054 = vmatprep.subr.mxu0 0.0
    %9055 = vmatpush1.msra.mxu0 %v9000
    %9056 = vmatprep.subr.mxu0 0.0
    %9057 = vmatpush2.msra.mxu0 0.0
    %9058 = vmatprep.subr.mxu0 0.0
    %9059 = vmatpush2.msra.mxu0 0.0
    %9060 = vmatprep.subr.mxu0 0.0
    %9061 = vmatpush2.msra.mxu0 0.0
    %9062 = vmatprep.subr.mxu0 0.0
    %9063 = vmatpush2.msra.mxu0 0.0
    %9064 = vmatprep.subr.mxu0 0.0
    %9065 = vmatpush2.msra.mxu0 0.0
    %9066 = vmatprep.subr.mxu0 0.0
    %9067 = vmatpush2.msra.mxu0 0.0
    %9068 = vmatprep.subr.mxu0 0.0
    %9069 = vmatpush2.msra.mxu0 0.0
    %9070 = vmatprep.subr.mxu0 0.0
    %9071 = vmatpush2.msra.mxu0 0.0
    %9072 = vmatprep.subr.mxu0 0.0
    %9073 = vmatpush2.msra.mxu0 0.0
    %9074 = vmatprep.subr.mxu0 0.0
    %9075 = vmatpush2.msra.mxu0 0.0
    %9076 = vmatprep.subr.mxu0 0.0
    %9077 = vmatpush2.msra.mxu0 0.0
    %9078 = vmatprep.subr.mxu0 0.0
    %9079 = vmatpush2.msra.mxu0 0.0
    %9080 = vmatprep.subr.mxu0 0.0
    %9081 = vmatpush2.msra.mxu0 0.0
    %9082 = vmatprep.subr.mxu0 0.0
    %9083 = vmatpush2.msra.mxu0 0.0
    %9084 = vmatprep.subr.mxu0 0.0
    %9085 = vmatpush2.msra.mxu0 0.0
    %9086 = vmatprep.subr.mxu0 0.0
    %9087 = vmatpush2.msra.mxu0 0.0
    %9088 = vmatprep.mubr.f32.mxu0 0.0
    %9089 = vmatmul.mubr.f32.gmra.mxu0 %v8983
    %v9090 = vpop.f32.mrf.mxu0
    %v9091 = vadd.f32 %v9022, %v9090
    %v9092 = vpop.f32.mrf.mxu0
    %9093 = vmatprep.mubr.f32.mxu0 0.0
    %9094 = vmatmul.mubr.f32.gmra.mxu0 %v8984
    %v9095 = vpop.f32.mrf.mxu0
    %v9096 = vadd.f32 %v9022, %v9095
    %v9097 = vpop.f32.mrf.mxu0
    %9098 = vmatprep.mubr.f32.mxu0 0.0
    %9099 = vmatmul.mubr.f32.gmra.mxu0 %v8985
    %v9100 = vpop.f32.mrf.mxu0
    %v9101 = vadd.f32 %v9022, %v9100
    %v9102 = vpop.f32.mrf.mxu0
    %9103 = vmatprep.mubr.f32.mxu0 0.0
    %9104 = vmatmul.mubr.f32.gmra.mxu0 %v8986
    %v9105 = vpop.f32.mrf.mxu0
    %v9106 = vadd.f32 %v9022, %v9105
    %v9107 = vpop.f32.mrf.mxu0
    %9108 = vmatprep.mubr.f32.mxu0 0.0
    %9109 = vmatmul.mubr.f32.gmra.mxu0 %v8987
    %v9110 = vpop.f32.mrf.mxu0
    %v9111 = vadd.f32 %v9022, %v9110
    %v9112 = vpop.f32.mrf.mxu0
    %9113 = vmatprep.mubr.f32.mxu0 0.0
    %9114 = vmatmul.mubr.f32.gmra.mxu0 %v8988
    %v9115 = vpop.f32.mrf.mxu0
    %v9116 = vadd.f32 %v9022, %v9115
    %v9117 = vpop.f32.mrf.mxu0
    %9118 = vmatprep.mubr.f32.mxu0 0.0
    %9119 = vmatmul.mubr.f32.gmra.mxu0 %v8989
    %v9120 = vpop.f32.mrf.mxu0
    %v9121 = vadd.f32 %v9022, %v9120
    %v9122 = vpop.f32.mrf.mxu0
    %9123 = vmatprep.mubr.f32.mxu0 0.0
    %9124 = vmatmul.mubr.f32.gmra.mxu0 %v8990
    %v9125 = vpop.f32.mrf.mxu0
    %v9126 = vadd.f32 %v9022, %v9125
    %v9127 = vpop.f32.mrf.mxu0
    %9128 = vmatprep.mubr.f32.mxu0 0.0
    %9129 = vmatmul.mubr.f32.gmra.mxu0 %v8991
    %v9130 = vpop.f32.mrf.mxu0
    %v9131 = vadd.f32 %v9022, %v9130
    %v9132 = vpop.f32.mrf.mxu0
    %9133 = vmatprep.mubr.f32.mxu0 0.0
    %9134 = vmatmul.mubr.f32.gmra.mxu0 %v8992
    %v9135 = vpop.f32.mrf.mxu0
    %v9136 = vadd.f32 %v9022, %v9135
    %v9137 = vpop.f32.mrf.mxu0
    %9138 = vmatprep.mubr.f32.mxu0 0.0
    %9139 = vmatmul.mubr.f32.gmra.mxu0 %v8993
    %v9140 = vpop.f32.mrf.mxu0
    %v9141 = vadd.f32 %v9022, %v9140
    %v9142 = vpop.f32.mrf.mxu0
    %9143 = vmatprep.mubr.f32.mxu0 0.0
    %9144 = vmatmul.mubr.f32.gmra.mxu0 %v8994
    %v9145 = vpop.f32.mrf.mxu0
    %v9146 = vadd.f32 %v9022, %v9145
    %v9147 = vpop.f32.mrf.mxu0
    %9148 = vmatprep.mubr.f32.mxu0 0.0
    %9149 = vmatmul.mubr.f32.gmra.mxu0 %v8995
    %v9150 = vpop.f32.mrf.mxu0
    %v9151 = vadd.f32 %v9022, %v9150
    %v9152 = vpop.f32.mrf.mxu0
    %9153 = vmatprep.mubr.f32.mxu0 0.0
    %9154 = vmatmul.mubr.f32.gmra.mxu0 %v8996
    %v9155 = vpop.f32.mrf.mxu0
    %v9156 = vadd.f32 %v9022, %v9155
    %v9157 = vpop.f32.mrf.mxu0
    %9158 = vmatprep.mubr.f32.mxu0 0.0
    %9159 = vmatmul.mubr.f32.gmra.mxu0 %v8997
    %v9160 = vpop.f32.mrf.mxu0
    %v9161 = vadd.f32 %v9022, %v9160
    %v9162 = vpop.f32.mrf.mxu0
    %9163 = vmatprep.mubr.f32.mxu0 0.0
    %9164 = vmatmul.mubr.f32.gmra.mxu0 %v8998
    %v9165 = vpop.f32.mrf.mxu0
    %v9166 = vadd.f32 %v9022, %v9165
    %v9167 = vpop.f32.mrf.mxu0
    %9168 = vdwg.mxu0
    %v9169 = vadd.f32 %v9091, %v9096
    %v9170 = vadd.f32 %v9169, %v9101
    %v9171 = vadd.f32 %v9170, %v9106
    %v9172 = vadd.f32 %v9171, %v9111
    %v9173 = vadd.f32 %v9172, %v9116
    %v9174 = vadd.f32 %v9173, %v9121
    %v9175 = vadd.f32 %v9174, %v9126
    %v9176 = vrot.slane %v9175, 4
    %v9177 = vadd.f32 %v9175, %v9176
    %v9178 = vrot.slane %v9177, 2
    %v9179 = vadd.f32 %v9177, %v9178
    %v9180 = vrot.slane %v9179, 1
    %v9181 = vadd.f32 %v9179, %v9180
    %v9182 = vadd.f32 %v9131, %v9136
    %v9183 = vadd.f32 %v9182, %v9141
    %v9184 = vadd.f32 %v9183, %v9146
    %v9185 = vadd.f32 %v9184, %v9151
    %v9186 = vadd.f32 %v9185, %v9156
    %v9187 = vadd.f32 %v9186, %v9161
    %v9188 = vadd.f32 %v9187, %v9166
    %v9189 = vrot.slane %v9188, 4
    %v9190 = vadd.f32 %v9188, %v9189
    %v9191 = vrot.slane %v9190, 2
    %v9192 = vadd.f32 %v9190, %v9191
    %v9193 = vrot.slane %v9192, 1
    %v9194 = vadd.f32 %v9192, %v9193
    %v9195 = vmul.f32 %v9181, %v6477
    %v9196 = vmul.f32 %v9194, %v6477
    %v9197 = vmul.f32 %v9091, %v9091
    %v9198 = vmul.f32 %v9096, %v9096
    %v9199 = vmul.f32 %v9101, %v9101
    %v9200 = vmul.f32 %v9106, %v9106
    %v9201 = vmul.f32 %v9111, %v9111
    %v9202 = vmul.f32 %v9116, %v9116
    %v9203 = vmul.f32 %v9121, %v9121
    %v9204 = vmul.f32 %v9126, %v9126
    %v9205 = vmul.f32 %v9131, %v9131
    %v9206 = vmul.f32 %v9136, %v9136
    %v9207 = vmul.f32 %v9141, %v9141
    %v9208 = vmul.f32 %v9146, %v9146
    %v9209 = vmul.f32 %v9151, %v9151
    %v9210 = vmul.f32 %v9156, %v9156
    %v9211 = vmul.f32 %v9161, %v9161
    %v9212 = vmul.f32 %v9166, %v9166
    %v9213 = vadd.f32 %v9197, %v9198
    %v9214 = vadd.f32 %v9213, %v9199
    %v9215 = vadd.f32 %v9214, %v9200
    %v9216 = vadd.f32 %v9215, %v9201
    %v9217 = vadd.f32 %v9216, %v9202
    %v9218 = vadd.f32 %v9217, %v9203
    %v9219 = vadd.f32 %v9218, %v9204
    %v9220 = vrot.slane %v9219, 4
    %v9221 = vadd.f32 %v9219, %v9220
    %v9222 = vrot.slane %v9221, 2
    %v9223 = vadd.f32 %v9221, %v9222
    %v9224 = vrot.slane %v9223, 1
    %v9225 = vadd.f32 %v9223, %v9224
    %v9226 = vadd.f32 %v9205, %v9206
    %v9227 = vadd.f32 %v9226, %v9207
    %v9228 = vadd.f32 %v9227, %v9208
    %v9229 = vadd.f32 %v9228, %v9209
    %v9230 = vadd.f32 %v9229, %v9210
    %v9231 = vadd.f32 %v9230, %v9211
    %v9232 = vadd.f32 %v9231, %v9212
    %v9233 = vrot.slane %v9232, 4
    %v9234 = vadd.f32 %v9232, %v9233
    %v9235 = vrot.slane %v9234, 2
    %v9236 = vadd.f32 %v9234, %v9235
    %v9237 = vrot.slane %v9236, 1
    %v9238 = vadd.f32 %v9236, %v9237
    %v9239 = vmul.f32 %v9225, %v6477
    %v9240 = vmul.f32 %v9238, %v6477
    %v9241 = vmul.f32 %v9195, %v9195
    %v9242 = vmul.f32 %v9196, %v9196
    %v9243 = vsub.f32 %v9239, %v9241
    %v9244 = vsub.f32 %v9240, %v9242
    %v9245 = vmax.f32 %v9243, 0.0
    %v9246 = vmax.f32 %v9244, 0.0
    %v9247 = vsub.f32 %v9091, %v9195
    %v9248 = vsub.f32 %v9096, %v9195
    %v9249 = vsub.f32 %v9101, %v9195
    %v9250 = vsub.f32 %v9106, %v9195
    %v9251 = vsub.f32 %v9111, %v9195
    %v9252 = vsub.f32 %v9116, %v9195
    %v9253 = vsub.f32 %v9121, %v9195
    %v9254 = vsub.f32 %v9126, %v9195
    %v9255 = vsub.f32 %v9131, %v9196
    %v9256 = vsub.f32 %v9136, %v9196
    %v9257 = vsub.f32 %v9141, %v9196
    %v9258 = vsub.f32 %v9146, %v9196
    %v9259 = vsub.f32 %v9151, %v9196
    %v9260 = vsub.f32 %v9156, %v9196
    %v9261 = vsub.f32 %v9161, %v9196
    %v9262 = vsub.f32 %v9166, %v9196
    %v9263 = vadd.f32 %v9245, 1e-05
    %v9264 = vadd.f32 %v9246, 1e-05
    %v9265 = vrsqrt.pop %v9263
    %v9266 = vrsqrt.pop %v9264
    %v9267 = vmul.f32 %v9247, %v9265
    %v9268 = vmul.f32 %v9248, %v9265
    %v9269 = vmul.f32 %v9249, %v9265
    %v9270 = vmul.f32 %v9250, %v9265
    %v9271 = vmul.f32 %v9251, %v9265
    %v9272 = vmul.f32 %v9252, %v9265
    %v9273 = vmul.f32 %v9253, %v9265
    %v9274 = vmul.f32 %v9254, %v9265
    %v9275 = vmul.f32 %v9255, %v9266
    %v9276 = vmul.f32 %v9256, %v9266
    %v9277 = vmul.f32 %v9257, %v9266
    %v9278 = vmul.f32 %v9258, %v9266
    %v9279 = vmul.f32 %v9259, %v9266
    %v9280 = vmul.f32 %v9260, %v9266
    %v9281 = vmul.f32 %v9261, %v9266
    %v9282 = vmul.f32 %v9262, %v9266
    %s9283 = scalar_lea.vmem %s12, 6
    %v9284 = vld [vmem:[%s9283] sm:$0x1]
    %s9285 = scalar_lea.vmem %s13, 6
    %v9286 = vld [vmem:[%s9285] sm:$0x1]
    %v9287 = vadd.f32 %v9267, %v9268
    %v9288 = vadd.f32 %v9287, %v9269
    %v9289 = vadd.f32 %v9288, %v9270
    %v9290 = vadd.f32 %v9289, %v9271
    %v9291 = vadd.f32 %v9290, %v9272
    %v9292 = vadd.f32 %v9291, %v9273
    %v9293 = vadd.f32 %v9292, %v9274
    %v9294 = vadd.f32 %v9293, %v9275
    %v9295 = vadd.f32 %v9294, %v9276
    %v9296 = vadd.f32 %v9295, %v9277
    %v9297 = vadd.f32 %v9296, %v9278
    %v9298 = vadd.f32 %v9297, %v9279
    %v9299 = vadd.f32 %v9298, %v9280
    %v9300 = vadd.f32 %v9299, %v9281
    %v9301 = vadd.f32 %v9300, %v9282
    %v9302 = vrot.slane %v9301, 4
    %v9303 = vadd.f32 %v9301, %v9302
    %v9304 = vrot.slane %v9303, 2
    %v9305 = vadd.f32 %v9303, %v9304
    %v9306 = vrot.slane %v9305, 1
    %v9307 = vadd.f32 %v9305, %v9306
    %v9308 = vmul.f32 %v9307, %v6589
    %v9309 = vmul.f32 %v9267, %v9267
    %v9310 = vmul.f32 %v9268, %v9268
    %v9311 = vmul.f32 %v9269, %v9269
    %v9312 = vmul.f32 %v9270, %v9270
    %v9313 = vmul.f32 %v9271, %v9271
    %v9314 = vmul.f32 %v9272, %v9272
    %v9315 = vmul.f32 %v9273, %v9273
    %v9316 = vmul.f32 %v9274, %v9274
    %v9317 = vmul.f32 %v9275, %v9275
    %v9318 = vmul.f32 %v9276, %v9276
    %v9319 = vmul.f32 %v9277, %v9277
    %v9320 = vmul.f32 %v9278, %v9278
    %v9321 = vmul.f32 %v9279, %v9279
    %v9322 = vmul.f32 %v9280, %v9280
    %v9323 = vmul.f32 %v9281, %v9281
    %v9324 = vmul.f32 %v9282, %v9282
    %v9325 = vadd.f32 %v9309, %v9310
    %v9326 = vadd.f32 %v9325, %v9311
    %v9327 = vadd.f32 %v9326, %v9312
    %v9328 = vadd.f32 %v9327, %v9313
    %v9329 = vadd.f32 %v9328, %v9314
    %v9330 = vadd.f32 %v9329, %v9315
    %v9331 = vadd.f32 %v9330, %v9316
    %v9332 = vadd.f32 %v9331, %v9317
    %v9333 = vadd.f32 %v9332, %v9318
    %v9334 = vadd.f32 %v9333, %v9319
    %v9335 = vadd.f32 %v9334, %v9320
    %v9336 = vadd.f32 %v9335, %v9321
    %v9337 = vadd.f32 %v9336, %v9322
    %v9338 = vadd.f32 %v9337, %v9323
    %v9339 = vadd.f32 %v9338, %v9324
    %v9340 = vrot.slane %v9339, 4
    %v9341 = vadd.f32 %v9339, %v9340
    %v9342 = vrot.slane %v9341, 2
    %v9343 = vadd.f32 %v9341, %v9342
    %v9344 = vrot.slane %v9343, 1
    %v9345 = vadd.f32 %v9343, %v9344
    %v9346 = vmul.f32 %v9345, %v6589
    %v9347 = vmul.f32 %v9308, %v9308
    %v9348 = vsub.f32 %v9346, %v9347
    %v9349 = vmax.f32 %v9348, 0.0
    %v9350 = vsub.f32 %v9267, %v9308
    %v9351 = vsub.f32 %v9268, %v9308
    %v9352 = vsub.f32 %v9269, %v9308
    %v9353 = vsub.f32 %v9270, %v9308
    %v9354 = vsub.f32 %v9271, %v9308
    %v9355 = vsub.f32 %v9272, %v9308
    %v9356 = vsub.f32 %v9273, %v9308
    %v9357 = vsub.f32 %v9274, %v9308
    %v9358 = vsub.f32 %v9275, %v9308
    %v9359 = vsub.f32 %v9276, %v9308
    %v9360 = vsub.f32 %v9277, %v9308
    %v9361 = vsub.f32 %v9278, %v9308
    %v9362 = vsub.f32 %v9279, %v9308
    %v9363 = vsub.f32 %v9280, %v9308
    %v9364 = vsub.f32 %v9281, %v9308
    %v9365 = vsub.f32 %v9282, %v9308
    %v9366 = vadd.f32 %v9349, 1e-05
    %v9367 = vrsqrt.pop %v9366
    %v9368 = vmul.f32 %v9350, %v9367
    %v9369 = vmul.f32 %v9351, %v9367
    %v9370 = vmul.f32 %v9352, %v9367
    %v9371 = vmul.f32 %v9353, %v9367
    %v9372 = vmul.f32 %v9354, %v9367
    %v9373 = vmul.f32 %v9355, %v9367
    %v9374 = vmul.f32 %v9356, %v9367
    %v9375 = vmul.f32 %v9357, %v9367
    %v9376 = vmul.f32 %v9358, %v9367
    %v9377 = vmul.f32 %v9359, %v9367
    %v9378 = vmul.f32 %v9360, %v9367
    %v9379 = vmul.f32 %v9361, %v9367
    %v9380 = vmul.f32 %v9362, %v9367
    %v9381 = vmul.f32 %v9363, %v9367
    %v9382 = vmul.f32 %v9364, %v9367
    %v9383 = vmul.f32 %v9365, %v9367
    %v9385 = vlaneseq
    %v9386 = vshrl.u32 %v9385, 7
    %v9387 = vsub.s32 0, %v9386
    %v9388 = vrot.slane %v9284, %v9387
    %v9390 = vmul.f32 %v9368, %v9388
    %v9391 = vmul.f32 %v9369, %v9388
    %v9392 = vmul.f32 %v9370, %v9388
    %v9393 = vmul.f32 %v9371, %v9388
    %v9394 = vmul.f32 %v9372, %v9388
    %v9395 = vmul.f32 %v9373, %v9388
    %v9396 = vmul.f32 %v9374, %v9388
    %v9397 = vmul.f32 %v9375, %v9388
    %v9398 = vmul.f32 %v9376, %v9388
    %v9399 = vmul.f32 %v9377, %v9388
    %v9400 = vmul.f32 %v9378, %v9388
    %v9401 = vmul.f32 %v9379, %v9388
    %v9402 = vmul.f32 %v9380, %v9388
    %v9403 = vmul.f32 %v9381, %v9388
    %v9404 = vmul.f32 %v9382, %v9388
    %v9405 = vmul.f32 %v9383, %v9388
    %v9407 = vlaneseq
    %v9408 = vshrl.u32 %v9407, 7
    %v9409 = vsub.s32 0, %v9408
    %v9410 = vrot.slane %v9286, %v9409
    %v9412 = vadd.f32 %v9390, %v9410
    %v9413 = vadd.f32 %v9391, %v9410
    %v9414 = vadd.f32 %v9392, %v9410
    %v9415 = vadd.f32 %v9393, %v9410
    %v9416 = vadd.f32 %v9394, %v9410
    %v9417 = vadd.f32 %v9395, %v9410
    %v9418 = vadd.f32 %v9396, %v9410
    %v9419 = vadd.f32 %v9397, %v9410
    %v9420 = vadd.f32 %v9398, %v9410
    %v9421 = vadd.f32 %v9399, %v9410
    %v9422 = vadd.f32 %v9400, %v9410
    %v9423 = vadd.f32 %v9401, %v9410
    %v9424 = vadd.f32 %v9402, %v9410
    %v9425 = vadd.f32 %v9403, %v9410
    %v9426 = vadd.f32 %v9404, %v9410
    %v9427 = vadd.f32 %v9405, %v9410
    %v9428 = vmax.f32 %v9412, 0.0
    %v9429 = vmax.f32 %v9413, 0.0
    %v9430 = vmax.f32 %v9414, 0.0
    %v9431 = vmax.f32 %v9415, 0.0
    %v9432 = vmax.f32 %v9416, 0.0
    %v9433 = vmax.f32 %v9417, 0.0
    %v9434 = vmax.f32 %v9418, 0.0
    %v9435 = vmax.f32 %v9419, 0.0
    %v9436 = vmax.f32 %v9420, 0.0
    %v9437 = vmax.f32 %v9421, 0.0
    %v9438 = vmax.f32 %v9422, 0.0
    %v9439 = vmax.f32 %v9423, 0.0
    %v9440 = vmax.f32 %v9424, 0.0
    %v9441 = vmax.f32 %v9425, 0.0
    %v9442 = vmax.f32 %v9426, 0.0
    %v9443 = vmax.f32 %v9427, 0.0
    %s9444 = scalar_lea.vmem %s10, 896
    %v9445 = vld [vmem:[%s9444] sm:$0xff]
    %v9446 = vld [vmem:[%s9444 + $0x8] sm:$0xff]
    %v9447 = vld [vmem:[%s9444 + $0x10] sm:$0xff]
    %v9448 = vld [vmem:[%s9444 + $0x18] sm:$0xff]
    %v9449 = vld [vmem:[%s9444 + $0x20] sm:$0xff]
    %v9450 = vld [vmem:[%s9444 + $0x28] sm:$0xff]
    %v9451 = vld [vmem:[%s9444 + $0x30] sm:$0xff]
    %v9452 = vld [vmem:[%s9444 + $0x38] sm:$0xff]
    %v9453 = vld [vmem:[%s9444 + $0x40] sm:$0xff]
    %v9454 = vld [vmem:[%s9444 + $0x48] sm:$0xff]
    %v9455 = vld [vmem:[%s9444 + $0x50] sm:$0xff]
    %v9456 = vld [vmem:[%s9444 + $0x58] sm:$0xff]
    %v9457 = vld [vmem:[%s9444 + $0x60] sm:$0xff]
    %v9458 = vld [vmem:[%s9444 + $0x68] sm:$0xff]
    %v9459 = vld [vmem:[%s9444 + $0x70] sm:$0xff]
    %v9460 = vld [vmem:[%s9444 + $0x78] sm:$0xff]
    %s9461 = scalar_lea.vmem %s11, 7
    %v9462 = vld [vmem:[%s9461] sm:$0x1]
    %v9464 = vlaneseq
    %v9465 = vshrl.u32 %v9464, 7
    %v9466 = vsub.s32 0, %v9465
    %v9467 = vrot.slane %v9462, %v9466
    %9469 = vmatprep.subr.mxu0 0.0
    %9470 = vmatpush1.msra.mxu0 %v9460
    %9471 = vmatprep.subr.mxu0 0.0
    %9472 = vmatpush1.msra.mxu0 %v9459
    %9473 = vmatprep.subr.mxu0 0.0
    %9474 = vmatpush1.msra.mxu0 %v9458
    %9475 = vmatprep.subr.mxu0 0.0
    %9476 = vmatpush1.msra.mxu0 %v9457
    %9477 = vmatprep.subr.mxu0 0.0
    %9478 = vmatpush1.msra.mxu0 %v9456
    %9479 = vmatprep.subr.mxu0 0.0
    %9480 = vmatpush1.msra.mxu0 %v9455
    %9481 = vmatprep.subr.mxu0 0.0
    %9482 = vmatpush1.msra.mxu0 %v9454
    %9483 = vmatprep.subr.mxu0 0.0
    %9484 = vmatpush1.msra.mxu0 %v9453
    %9485 = vmatprep.subr.mxu0 0.0
    %9486 = vmatpush1.msra.mxu0 %v9452
    %9487 = vmatprep.subr.mxu0 0.0
    %9488 = vmatpush1.msra.mxu0 %v9451
    %9489 = vmatprep.subr.mxu0 0.0
    %9490 = vmatpush1.msra.mxu0 %v9450
    %9491 = vmatprep.subr.mxu0 0.0
    %9492 = vmatpush1.msra.mxu0 %v9449
    %9493 = vmatprep.subr.mxu0 0.0
    %9494 = vmatpush1.msra.mxu0 %v9448
    %9495 = vmatprep.subr.mxu0 0.0
    %9496 = vmatpush1.msra.mxu0 %v9447
    %9497 = vmatprep.subr.mxu0 0.0
    %9498 = vmatpush1.msra.mxu0 %v9446
    %9499 = vmatprep.subr.mxu0 0.0
    %9500 = vmatpush1.msra.mxu0 %v9445
    %9501 = vmatprep.subr.mxu0 0.0
    %9502 = vmatpush2.msra.mxu0 0.0
    %9503 = vmatprep.subr.mxu0 0.0
    %9504 = vmatpush2.msra.mxu0 0.0
    %9505 = vmatprep.subr.mxu0 0.0
    %9506 = vmatpush2.msra.mxu0 0.0
    %9507 = vmatprep.subr.mxu0 0.0
    %9508 = vmatpush2.msra.mxu0 0.0
    %9509 = vmatprep.subr.mxu0 0.0
    %9510 = vmatpush2.msra.mxu0 0.0
    %9511 = vmatprep.subr.mxu0 0.0
    %9512 = vmatpush2.msra.mxu0 0.0
    %9513 = vmatprep.subr.mxu0 0.0
    %9514 = vmatpush2.msra.mxu0 0.0
    %9515 = vmatprep.subr.mxu0 0.0
    %9516 = vmatpush2.msra.mxu0 0.0
    %9517 = vmatprep.subr.mxu0 0.0
    %9518 = vmatpush2.msra.mxu0 0.0
    %9519 = vmatprep.subr.mxu0 0.0
    %9520 = vmatpush2.msra.mxu0 0.0
    %9521 = vmatprep.subr.mxu0 0.0
    %9522 = vmatpush2.msra.mxu0 0.0
    %9523 = vmatprep.subr.mxu0 0.0
    %9524 = vmatpush2.msra.mxu0 0.0
    %9525 = vmatprep.subr.mxu0 0.0
    %9526 = vmatpush2.msra.mxu0 0.0
    %9527 = vmatprep.subr.mxu0 0.0
    %9528 = vmatpush2.msra.mxu0 0.0
    %9529 = vmatprep.subr.mxu0 0.0
    %9530 = vmatpush2.msra.mxu0 0.0
    %9531 = vmatprep.subr.mxu0 0.0
    %9532 = vmatpush2.msra.mxu0 0.0
    %9533 = vmatprep.mubr.f32.mxu0 0.0
    %9534 = vmatmul.mubr.f32.gmra.mxu0 %v9428
    %v9535 = vpop.f32.mrf.mxu0
    %v9536 = vadd.f32 %v9467, %v9535
    %v9537 = vpop.f32.mrf.mxu0
    %9538 = vmatprep.mubr.f32.mxu0 0.0
    %9539 = vmatmul.mubr.f32.gmra.mxu0 %v9429
    %v9540 = vpop.f32.mrf.mxu0
    %v9541 = vadd.f32 %v9467, %v9540
    %v9542 = vpop.f32.mrf.mxu0
    %9543 = vmatprep.mubr.f32.mxu0 0.0
    %9544 = vmatmul.mubr.f32.gmra.mxu0 %v9430
    %v9545 = vpop.f32.mrf.mxu0
    %v9546 = vadd.f32 %v9467, %v9545
    %v9547 = vpop.f32.mrf.mxu0
    %9548 = vmatprep.mubr.f32.mxu0 0.0
    %9549 = vmatmul.mubr.f32.gmra.mxu0 %v9431
    %v9550 = vpop.f32.mrf.mxu0
    %v9551 = vadd.f32 %v9467, %v9550
    %v9552 = vpop.f32.mrf.mxu0
    %9553 = vmatprep.mubr.f32.mxu0 0.0
    %9554 = vmatmul.mubr.f32.gmra.mxu0 %v9432
    %v9555 = vpop.f32.mrf.mxu0
    %v9556 = vadd.f32 %v9467, %v9555
    %v9557 = vpop.f32.mrf.mxu0
    %9558 = vmatprep.mubr.f32.mxu0 0.0
    %9559 = vmatmul.mubr.f32.gmra.mxu0 %v9433
    %v9560 = vpop.f32.mrf.mxu0
    %v9561 = vadd.f32 %v9467, %v9560
    %v9562 = vpop.f32.mrf.mxu0
    %9563 = vmatprep.mubr.f32.mxu0 0.0
    %9564 = vmatmul.mubr.f32.gmra.mxu0 %v9434
    %v9565 = vpop.f32.mrf.mxu0
    %v9566 = vadd.f32 %v9467, %v9565
    %v9567 = vpop.f32.mrf.mxu0
    %9568 = vmatprep.mubr.f32.mxu0 0.0
    %9569 = vmatmul.mubr.f32.gmra.mxu0 %v9435
    %v9570 = vpop.f32.mrf.mxu0
    %v9571 = vadd.f32 %v9467, %v9570
    %v9572 = vpop.f32.mrf.mxu0
    %9573 = vmatprep.mubr.f32.mxu0 0.0
    %9574 = vmatmul.mubr.f32.gmra.mxu0 %v9436
    %v9575 = vpop.f32.mrf.mxu0
    %v9576 = vadd.f32 %v9467, %v9575
    %v9577 = vpop.f32.mrf.mxu0
    %9578 = vmatprep.mubr.f32.mxu0 0.0
    %9579 = vmatmul.mubr.f32.gmra.mxu0 %v9437
    %v9580 = vpop.f32.mrf.mxu0
    %v9581 = vadd.f32 %v9467, %v9580
    %v9582 = vpop.f32.mrf.mxu0
    %9583 = vmatprep.mubr.f32.mxu0 0.0
    %9584 = vmatmul.mubr.f32.gmra.mxu0 %v9438
    %v9585 = vpop.f32.mrf.mxu0
    %v9586 = vadd.f32 %v9467, %v9585
    %v9587 = vpop.f32.mrf.mxu0
    %9588 = vmatprep.mubr.f32.mxu0 0.0
    %9589 = vmatmul.mubr.f32.gmra.mxu0 %v9439
    %v9590 = vpop.f32.mrf.mxu0
    %v9591 = vadd.f32 %v9467, %v9590
    %v9592 = vpop.f32.mrf.mxu0
    %9593 = vmatprep.mubr.f32.mxu0 0.0
    %9594 = vmatmul.mubr.f32.gmra.mxu0 %v9440
    %v9595 = vpop.f32.mrf.mxu0
    %v9596 = vadd.f32 %v9467, %v9595
    %v9597 = vpop.f32.mrf.mxu0
    %9598 = vmatprep.mubr.f32.mxu0 0.0
    %9599 = vmatmul.mubr.f32.gmra.mxu0 %v9441
    %v9600 = vpop.f32.mrf.mxu0
    %v9601 = vadd.f32 %v9467, %v9600
    %v9602 = vpop.f32.mrf.mxu0
    %9603 = vmatprep.mubr.f32.mxu0 0.0
    %9604 = vmatmul.mubr.f32.gmra.mxu0 %v9442
    %v9605 = vpop.f32.mrf.mxu0
    %v9606 = vadd.f32 %v9467, %v9605
    %v9607 = vpop.f32.mrf.mxu0
    %9608 = vmatprep.mubr.f32.mxu0 0.0
    %9609 = vmatmul.mubr.f32.gmra.mxu0 %v9443
    %v9610 = vpop.f32.mrf.mxu0
    %v9611 = vadd.f32 %v9467, %v9610
    %v9612 = vpop.f32.mrf.mxu0
    %9613 = vdwg.mxu0
    %v9614 = vadd.f32 %v9536, %v9541
    %v9615 = vadd.f32 %v9614, %v9546
    %v9616 = vadd.f32 %v9615, %v9551
    %v9617 = vadd.f32 %v9616, %v9556
    %v9618 = vadd.f32 %v9617, %v9561
    %v9619 = vadd.f32 %v9618, %v9566
    %v9620 = vadd.f32 %v9619, %v9571
    %v9621 = vrot.slane %v9620, 4
    %v9622 = vadd.f32 %v9620, %v9621
    %v9623 = vrot.slane %v9622, 2
    %v9624 = vadd.f32 %v9622, %v9623
    %v9625 = vrot.slane %v9624, 1
    %v9626 = vadd.f32 %v9624, %v9625
    %v9627 = vadd.f32 %v9576, %v9581
    %v9628 = vadd.f32 %v9627, %v9586
    %v9629 = vadd.f32 %v9628, %v9591
    %v9630 = vadd.f32 %v9629, %v9596
    %v9631 = vadd.f32 %v9630, %v9601
    %v9632 = vadd.f32 %v9631, %v9606
    %v9633 = vadd.f32 %v9632, %v9611
    %v9634 = vrot.slane %v9633, 4
    %v9635 = vadd.f32 %v9633, %v9634
    %v9636 = vrot.slane %v9635, 2
    %v9637 = vadd.f32 %v9635, %v9636
    %v9638 = vrot.slane %v9637, 1
    %v9639 = vadd.f32 %v9637, %v9638
    %v9640 = vmul.f32 %v9626, %v6477
    %v9641 = vmul.f32 %v9639, %v6477
    %v9642 = vmul.f32 %v9536, %v9536
    %v9643 = vmul.f32 %v9541, %v9541
    %v9644 = vmul.f32 %v9546, %v9546
    %v9645 = vmul.f32 %v9551, %v9551
    %v9646 = vmul.f32 %v9556, %v9556
    %v9647 = vmul.f32 %v9561, %v9561
    %v9648 = vmul.f32 %v9566, %v9566
    %v9649 = vmul.f32 %v9571, %v9571
    %v9650 = vmul.f32 %v9576, %v9576
    %v9651 = vmul.f32 %v9581, %v9581
    %v9652 = vmul.f32 %v9586, %v9586
    %v9653 = vmul.f32 %v9591, %v9591
    %v9654 = vmul.f32 %v9596, %v9596
    %v9655 = vmul.f32 %v9601, %v9601
    %v9656 = vmul.f32 %v9606, %v9606
    %v9657 = vmul.f32 %v9611, %v9611
    %v9658 = vadd.f32 %v9642, %v9643
    %v9659 = vadd.f32 %v9658, %v9644
    %v9660 = vadd.f32 %v9659, %v9645
    %v9661 = vadd.f32 %v9660, %v9646
    %v9662 = vadd.f32 %v9661, %v9647
    %v9663 = vadd.f32 %v9662, %v9648
    %v9664 = vadd.f32 %v9663, %v9649
    %v9665 = vrot.slane %v9664, 4
    %v9666 = vadd.f32 %v9664, %v9665
    %v9667 = vrot.slane %v9666, 2
    %v9668 = vadd.f32 %v9666, %v9667
    %v9669 = vrot.slane %v9668, 1
    %v9670 = vadd.f32 %v9668, %v9669
    %v9671 = vadd.f32 %v9650, %v9651
    %v9672 = vadd.f32 %v9671, %v9652
    %v9673 = vadd.f32 %v9672, %v9653
    %v9674 = vadd.f32 %v9673, %v9654
    %v9675 = vadd.f32 %v9674, %v9655
    %v9676 = vadd.f32 %v9675, %v9656
    %v9677 = vadd.f32 %v9676, %v9657
    %v9678 = vrot.slane %v9677, 4
    %v9679 = vadd.f32 %v9677, %v9678
    %v9680 = vrot.slane %v9679, 2
    %v9681 = vadd.f32 %v9679, %v9680
    %v9682 = vrot.slane %v9681, 1
    %v9683 = vadd.f32 %v9681, %v9682
    %v9684 = vmul.f32 %v9670, %v6477
    %v9685 = vmul.f32 %v9683, %v6477
    %v9686 = vmul.f32 %v9640, %v9640
    %v9687 = vmul.f32 %v9641, %v9641
    %v9688 = vsub.f32 %v9684, %v9686
    %v9689 = vsub.f32 %v9685, %v9687
    %v9690 = vmax.f32 %v9688, 0.0
    %v9691 = vmax.f32 %v9689, 0.0
    %v9692 = vsub.f32 %v9536, %v9640
    %v9693 = vsub.f32 %v9541, %v9640
    %v9694 = vsub.f32 %v9546, %v9640
    %v9695 = vsub.f32 %v9551, %v9640
    %v9696 = vsub.f32 %v9556, %v9640
    %v9697 = vsub.f32 %v9561, %v9640
    %v9698 = vsub.f32 %v9566, %v9640
    %v9699 = vsub.f32 %v9571, %v9640
    %v9700 = vsub.f32 %v9576, %v9641
    %v9701 = vsub.f32 %v9581, %v9641
    %v9702 = vsub.f32 %v9586, %v9641
    %v9703 = vsub.f32 %v9591, %v9641
    %v9704 = vsub.f32 %v9596, %v9641
    %v9705 = vsub.f32 %v9601, %v9641
    %v9706 = vsub.f32 %v9606, %v9641
    %v9707 = vsub.f32 %v9611, %v9641
    %v9708 = vadd.f32 %v9690, 1e-05
    %v9709 = vadd.f32 %v9691, 1e-05
    %v9710 = vrsqrt.pop %v9708
    %v9711 = vrsqrt.pop %v9709
    %v9712 = vmul.f32 %v9692, %v9710
    %v9713 = vmul.f32 %v9693, %v9710
    %v9714 = vmul.f32 %v9694, %v9710
    %v9715 = vmul.f32 %v9695, %v9710
    %v9716 = vmul.f32 %v9696, %v9710
    %v9717 = vmul.f32 %v9697, %v9710
    %v9718 = vmul.f32 %v9698, %v9710
    %v9719 = vmul.f32 %v9699, %v9710
    %v9720 = vmul.f32 %v9700, %v9711
    %v9721 = vmul.f32 %v9701, %v9711
    %v9722 = vmul.f32 %v9702, %v9711
    %v9723 = vmul.f32 %v9703, %v9711
    %v9724 = vmul.f32 %v9704, %v9711
    %v9725 = vmul.f32 %v9705, %v9711
    %v9726 = vmul.f32 %v9706, %v9711
    %v9727 = vmul.f32 %v9707, %v9711
    %s9728 = scalar_lea.vmem %s12, 7
    %v9729 = vld [vmem:[%s9728] sm:$0x1]
    %s9730 = scalar_lea.vmem %s13, 7
    %v9731 = vld [vmem:[%s9730] sm:$0x1]
    %v9732 = vadd.f32 %v9712, %v9713
    %v9733 = vadd.f32 %v9732, %v9714
    %v9734 = vadd.f32 %v9733, %v9715
    %v9735 = vadd.f32 %v9734, %v9716
    %v9736 = vadd.f32 %v9735, %v9717
    %v9737 = vadd.f32 %v9736, %v9718
    %v9738 = vadd.f32 %v9737, %v9719
    %v9739 = vadd.f32 %v9738, %v9720
    %v9740 = vadd.f32 %v9739, %v9721
    %v9741 = vadd.f32 %v9740, %v9722
    %v9742 = vadd.f32 %v9741, %v9723
    %v9743 = vadd.f32 %v9742, %v9724
    %v9744 = vadd.f32 %v9743, %v9725
    %v9745 = vadd.f32 %v9744, %v9726
    %v9746 = vadd.f32 %v9745, %v9727
    %v9747 = vrot.slane %v9746, 4
    %v9748 = vadd.f32 %v9746, %v9747
    %v9749 = vrot.slane %v9748, 2
    %v9750 = vadd.f32 %v9748, %v9749
    %v9751 = vrot.slane %v9750, 1
    %v9752 = vadd.f32 %v9750, %v9751
    %v9753 = vmul.f32 %v9752, %v6589
    %v9754 = vmul.f32 %v9712, %v9712
    %v9755 = vmul.f32 %v9713, %v9713
    %v9756 = vmul.f32 %v9714, %v9714
    %v9757 = vmul.f32 %v9715, %v9715
    %v9758 = vmul.f32 %v9716, %v9716
    %v9759 = vmul.f32 %v9717, %v9717
    %v9760 = vmul.f32 %v9718, %v9718
    %v9761 = vmul.f32 %v9719, %v9719
    %v9762 = vmul.f32 %v9720, %v9720
    %v9763 = vmul.f32 %v9721, %v9721
    %v9764 = vmul.f32 %v9722, %v9722
    %v9765 = vmul.f32 %v9723, %v9723
    %v9766 = vmul.f32 %v9724, %v9724
    %v9767 = vmul.f32 %v9725, %v9725
    %v9768 = vmul.f32 %v9726, %v9726
    %v9769 = vmul.f32 %v9727, %v9727
    %v9770 = vadd.f32 %v9754, %v9755
    %v9771 = vadd.f32 %v9770, %v9756
    %v9772 = vadd.f32 %v9771, %v9757
    %v9773 = vadd.f32 %v9772, %v9758
    %v9774 = vadd.f32 %v9773, %v9759
    %v9775 = vadd.f32 %v9774, %v9760
    %v9776 = vadd.f32 %v9775, %v9761
    %v9777 = vadd.f32 %v9776, %v9762
    %v9778 = vadd.f32 %v9777, %v9763
    %v9779 = vadd.f32 %v9778, %v9764
    %v9780 = vadd.f32 %v9779, %v9765
    %v9781 = vadd.f32 %v9780, %v9766
    %v9782 = vadd.f32 %v9781, %v9767
    %v9783 = vadd.f32 %v9782, %v9768
    %v9784 = vadd.f32 %v9783, %v9769
    %v9785 = vrot.slane %v9784, 4
    %v9786 = vadd.f32 %v9784, %v9785
    %v9787 = vrot.slane %v9786, 2
    %v9788 = vadd.f32 %v9786, %v9787
    %v9789 = vrot.slane %v9788, 1
    %v9790 = vadd.f32 %v9788, %v9789
    %v9791 = vmul.f32 %v9790, %v6589
    %v9792 = vmul.f32 %v9753, %v9753
    %v9793 = vsub.f32 %v9791, %v9792
    %v9794 = vmax.f32 %v9793, 0.0
    %v9795 = vsub.f32 %v9712, %v9753
    %v9796 = vsub.f32 %v9713, %v9753
    %v9797 = vsub.f32 %v9714, %v9753
    %v9798 = vsub.f32 %v9715, %v9753
    %v9799 = vsub.f32 %v9716, %v9753
    %v9800 = vsub.f32 %v9717, %v9753
    %v9801 = vsub.f32 %v9718, %v9753
    %v9802 = vsub.f32 %v9719, %v9753
    %v9803 = vsub.f32 %v9720, %v9753
    %v9804 = vsub.f32 %v9721, %v9753
    %v9805 = vsub.f32 %v9722, %v9753
    %v9806 = vsub.f32 %v9723, %v9753
    %v9807 = vsub.f32 %v9724, %v9753
    %v9808 = vsub.f32 %v9725, %v9753
    %v9809 = vsub.f32 %v9726, %v9753
    %v9810 = vsub.f32 %v9727, %v9753
    %v9811 = vadd.f32 %v9794, 1e-05
    %v9812 = vrsqrt.pop %v9811
    %v9813 = vmul.f32 %v9795, %v9812
    %v9814 = vmul.f32 %v9796, %v9812
    %v9815 = vmul.f32 %v9797, %v9812
    %v9816 = vmul.f32 %v9798, %v9812
    %v9817 = vmul.f32 %v9799, %v9812
    %v9818 = vmul.f32 %v9800, %v9812
    %v9819 = vmul.f32 %v9801, %v9812
    %v9820 = vmul.f32 %v9802, %v9812
    %v9821 = vmul.f32 %v9803, %v9812
    %v9822 = vmul.f32 %v9804, %v9812
    %v9823 = vmul.f32 %v9805, %v9812
    %v9824 = vmul.f32 %v9806, %v9812
    %v9825 = vmul.f32 %v9807, %v9812
    %v9826 = vmul.f32 %v9808, %v9812
    %v9827 = vmul.f32 %v9809, %v9812
    %v9828 = vmul.f32 %v9810, %v9812
    %v9830 = vlaneseq
    %v9831 = vshrl.u32 %v9830, 7
    %v9832 = vsub.s32 0, %v9831
    %v9833 = vrot.slane %v9729, %v9832
    %v9835 = vmul.f32 %v9813, %v9833
    %v9836 = vmul.f32 %v9814, %v9833
    %v9837 = vmul.f32 %v9815, %v9833
    %v9838 = vmul.f32 %v9816, %v9833
    %v9839 = vmul.f32 %v9817, %v9833
    %v9840 = vmul.f32 %v9818, %v9833
    %v9841 = vmul.f32 %v9819, %v9833
    %v9842 = vmul.f32 %v9820, %v9833
    %v9843 = vmul.f32 %v9821, %v9833
    %v9844 = vmul.f32 %v9822, %v9833
    %v9845 = vmul.f32 %v9823, %v9833
    %v9846 = vmul.f32 %v9824, %v9833
    %v9847 = vmul.f32 %v9825, %v9833
    %v9848 = vmul.f32 %v9826, %v9833
    %v9849 = vmul.f32 %v9827, %v9833
    %v9850 = vmul.f32 %v9828, %v9833
    %v9852 = vlaneseq
    %v9853 = vshrl.u32 %v9852, 7
    %v9854 = vsub.s32 0, %v9853
    %v9855 = vrot.slane %v9731, %v9854
    %v9857 = vadd.f32 %v9835, %v9855
    %v9858 = vadd.f32 %v9836, %v9855
    %v9859 = vadd.f32 %v9837, %v9855
    %v9860 = vadd.f32 %v9838, %v9855
    %v9861 = vadd.f32 %v9839, %v9855
    %v9862 = vadd.f32 %v9840, %v9855
    %v9863 = vadd.f32 %v9841, %v9855
    %v9864 = vadd.f32 %v9842, %v9855
    %v9865 = vadd.f32 %v9843, %v9855
    %v9866 = vadd.f32 %v9844, %v9855
    %v9867 = vadd.f32 %v9845, %v9855
    %v9868 = vadd.f32 %v9846, %v9855
    %v9869 = vadd.f32 %v9847, %v9855
    %v9870 = vadd.f32 %v9848, %v9855
    %v9871 = vadd.f32 %v9849, %v9855
    %v9872 = vadd.f32 %v9850, %v9855
    %v9873 = vadd.f32 %v9857, %v8983
    %v9874 = vadd.f32 %v9858, %v8984
    %v9875 = vadd.f32 %v9859, %v8985
    %v9876 = vadd.f32 %v9860, %v8986
    %v9877 = vadd.f32 %v9861, %v8987
    %v9878 = vadd.f32 %v9862, %v8988
    %v9879 = vadd.f32 %v9863, %v8989
    %v9880 = vadd.f32 %v9864, %v8990
    %v9881 = vadd.f32 %v9865, %v8991
    %v9882 = vadd.f32 %v9866, %v8992
    %v9883 = vadd.f32 %v9867, %v8993
    %v9884 = vadd.f32 %v9868, %v8994
    %v9885 = vadd.f32 %v9869, %v8995
    %v9886 = vadd.f32 %v9870, %v8996
    %v9887 = vadd.f32 %v9871, %v8997
    %v9888 = vadd.f32 %v9872, %v8998
    %v9889 = vmax.f32 %v9873, 0.0
    %v9890 = vmax.f32 %v9874, 0.0
    %v9891 = vmax.f32 %v9875, 0.0
    %v9892 = vmax.f32 %v9876, 0.0
    %v9893 = vmax.f32 %v9877, 0.0
    %v9894 = vmax.f32 %v9878, 0.0
    %v9895 = vmax.f32 %v9879, 0.0
    %v9896 = vmax.f32 %v9880, 0.0
    %v9897 = vmax.f32 %v9881, 0.0
    %v9898 = vmax.f32 %v9882, 0.0
    %v9899 = vmax.f32 %v9883, 0.0
    %v9900 = vmax.f32 %v9884, 0.0
    %v9901 = vmax.f32 %v9885, 0.0
    %v9902 = vmax.f32 %v9886, 0.0
    %v9903 = vmax.f32 %v9887, 0.0
    %v9904 = vmax.f32 %v9888, 0.0
    %v9905 = vld [vmem:[%s14] sm:$0x1]
    %v9907 = vlaneseq
    %v9908 = vshrl.u32 %v9907, 7
    %v9909 = vsub.s32 0, %v9908
    %v9910 = vrot.slane %v9905, %v9909
    %v9912 = vmul.f32 %v9889, %v9910
    %v9913 = vmul.f32 %v9890, %v9910
    %v9914 = vmul.f32 %v9891, %v9910
    %v9915 = vmul.f32 %v9892, %v9910
    %v9916 = vmul.f32 %v9893, %v9910
    %v9917 = vmul.f32 %v9894, %v9910
    %v9918 = vmul.f32 %v9895, %v9910
    %v9919 = vmul.f32 %v9896, %v9910
    %v9920 = vmul.f32 %v9897, %v9910
    %v9921 = vmul.f32 %v9898, %v9910
    %v9922 = vmul.f32 %v9899, %v9910
    %v9923 = vmul.f32 %v9900, %v9910
    %v9924 = vmul.f32 %v9901, %v9910
    %v9925 = vmul.f32 %v9902, %v9910
    %v9926 = vmul.f32 %v9903, %v9910
    %v9927 = vmul.f32 %v9904, %v9910
    %9928 = vadd.xlane.f32.xlu0 %v9912
    %v9929 = vpop.xlane.xlu0 %9928
    %9930 = vadd.xlane.f32.xlu0 %v9913
    %v9931 = vpop.xlane.xlu0 %9930
    %9932 = vadd.xlane.f32.xlu0 %v9914
    %v9933 = vpop.xlane.xlu0 %9932
    %9934 = vadd.xlane.f32.xlu0 %v9915
    %v9935 = vpop.xlane.xlu0 %9934
    %9936 = vadd.xlane.f32.xlu0 %v9916
    %v9937 = vpop.xlane.xlu0 %9936
    %9938 = vadd.xlane.f32.xlu0 %v9917
    %v9939 = vpop.xlane.xlu0 %9938
    %9940 = vadd.xlane.f32.xlu0 %v9918
    %v9941 = vpop.xlane.xlu0 %9940
    %9942 = vadd.xlane.f32.xlu0 %v9919
    %v9943 = vpop.xlane.xlu0 %9942
    %9944 = vadd.xlane.f32.xlu0 %v9920
    %v9945 = vpop.xlane.xlu0 %9944
    %9946 = vadd.xlane.f32.xlu0 %v9921
    %v9947 = vpop.xlane.xlu0 %9946
    %9948 = vadd.xlane.f32.xlu0 %v9922
    %v9949 = vpop.xlane.xlu0 %9948
    %9950 = vadd.xlane.f32.xlu0 %v9923
    %v9951 = vpop.xlane.xlu0 %9950
    %9952 = vadd.xlane.f32.xlu0 %v9924
    %v9953 = vpop.xlane.xlu0 %9952
    %9954 = vadd.xlane.f32.xlu0 %v9925
    %v9955 = vpop.xlane.xlu0 %9954
    %9956 = vadd.xlane.f32.xlu0 %v9926
    %v9957 = vpop.xlane.xlu0 %9956
    %9958 = vadd.xlane.f32.xlu0 %v9927
    %v9959 = vpop.xlane.xlu0 %9958
    %v9960 = vld [vmem:[#allocation2] sm:$0x1]
    %v9962 = vlaneseq
    %v9963 = vshrl.u32 %v9962, 7
    %v9964 = vsub.s32 0, %v9963
    %v9965 = vrot.slane %v9960, %v9964
    %9966 = vset.pattern.permute.xlu0 0
    %9967 = vperm.xlu0 %9966, %v9965
    %v9968 = vpop.permute.xlu0 %9967
    %v9970 = vadd.f32 %v9929, %v9968
    %v9971 = vadd.f32 %v9931, %v9968
    %v9972 = vadd.f32 %v9933, %v9968
    %v9973 = vadd.f32 %v9935, %v9968
    %v9974 = vadd.f32 %v9937, %v9968
    %v9975 = vadd.f32 %v9939, %v9968
    %v9976 = vadd.f32 %v9941, %v9968
    %v9977 = vadd.f32 %v9943, %v9968
    %v9978 = vadd.f32 %v9945, %v9968
    %v9979 = vadd.f32 %v9947, %v9968
    %v9980 = vadd.f32 %v9949, %v9968
    %v9981 = vadd.f32 %v9951, %v9968
    %v9982 = vadd.f32 %v9953, %v9968
    %v9983 = vadd.f32 %v9955, %v9968
    %v9984 = vadd.f32 %v9957, %v9968
    %v9985 = vadd.f32 %v9959, %v9968
    %v10002 = vlaneseq
    %v10003 = vshrl.u32 %v10002, 7
    %v10004 = vsub.s32 %v704, %v10003
    %v10005 = vrot.slane %v9970, %v10004
    %v10006 = vadd.s32 %v704, 4294967288
    %v10007 = vlaneseq
    %v10008 = vshrl.u32 %v10007, 7
    %v10009 = vsub.s32 %v10006, %v10008
    %v10010 = vrot.slane %v9971, %v10009
    %vm10011 = vcmask 130112
    %v10012 = vsel %vm10011, %v10010, %v10005
    %v10013 = vadd.s32 %v704, 4294967280
    %v10014 = vlaneseq
    %v10015 = vshrl.u32 %v10014, 7
    %v10016 = vsub.s32 %v10013, %v10015
    %v10017 = vrot.slane %v9972, %v10016
    %vm10018 = vcmask 195712
    %v10019 = vsel %vm10018, %v10017, %v10012
    %v10020 = vadd.s32 %v704, 4294967272
    %v10021 = vlaneseq
    %v10022 = vshrl.u32 %v10021, 7
    %v10023 = vsub.s32 %v10020, %v10022
    %v10024 = vrot.slane %v9973, %v10023
    %vm10025 = vcmask 261312
    %v10026 = vsel %vm10025, %v10024, %v10019
    %v10027 = vadd.s32 %v704, 4294967264
    %v10028 = vlaneseq
    %v10029 = vshrl.u32 %v10028, 7
    %v10030 = vsub.s32 %v10027, %v10029
    %v10031 = vrot.slane %v9974, %v10030
    %vm10032 = vcmask 326912
    %v10033 = vsel %vm10032, %v10031, %v10026
    %v10034 = vadd.s32 %v704, 4294967256
    %v10035 = vlaneseq
    %v10036 = vshrl.u32 %v10035, 7
    %v10037 = vsub.s32 %v10034, %v10036
    %v10038 = vrot.slane %v9975, %v10037
    %vm10039 = vcmask 392512
    %v10040 = vsel %vm10039, %v10038, %v10033
    %v10041 = vadd.s32 %v704, 4294967248
    %v10042 = vlaneseq
    %v10043 = vshrl.u32 %v10042, 7
    %v10044 = vsub.s32 %v10041, %v10043
    %v10045 = vrot.slane %v9976, %v10044
    %vm10046 = vcmask 458112
    %v10047 = vsel %vm10046, %v10045, %v10040
    %v10048 = vadd.s32 %v704, 4294967240
    %v10049 = vlaneseq
    %v10050 = vshrl.u32 %v10049, 7
    %v10051 = vsub.s32 %v10048, %v10050
    %v10052 = vrot.slane %v9977, %v10051
    %vm10053 = vcmask 523712
    %v10054 = vsel %vm10053, %v10052, %v10047
    %v10055 = vlaneseq
    %v10056 = vshrl.u32 %v10055, 7
    %v10057 = vsub.s32 %v704, %v10056
    %v10058 = vrot.slane %v9978, %v10057
    %v10059 = vlaneseq
    %v10060 = vshrl.u32 %v10059, 7
    %v10061 = vsub.s32 %v10006, %v10060
    %v10062 = vrot.slane %v9979, %v10061
    %v10063 = vsel %vm10011, %v10062, %v10058
    %v10064 = vlaneseq
    %v10065 = vshrl.u32 %v10064, 7
    %v10066 = vsub.s32 %v10013, %v10065
    %v10067 = vrot.slane %v9980, %v10066
    %v10068 = vsel %vm10018, %v10067, %v10063
    %v10069 = vlaneseq
    %v10070 = vshrl.u32 %v10069, 7
    %v10071 = vsub.s32 %v10020, %v10070
    %v10072 = vrot.slane %v9981, %v10071
    %v10073 = vsel %vm10025, %v10072, %v10068
    %v10074 = vlaneseq
    %v10075 = vshrl.u32 %v10074, 7
    %v10076 = vsub.s32 %v10027, %v10075
    %v10077 = vrot.slane %v9982, %v10076
    %v10078 = vsel %vm10032, %v10077, %v10073
    %v10079 = vlaneseq
    %v10080 = vshrl.u32 %v10079, 7
    %v10081 = vsub.s32 %v10034, %v10080
    %v10082 = vrot.slane %v9983, %v10081
    %v10083 = vsel %vm10039, %v10082, %v10078
    %v10084 = vlaneseq
    %v10085 = vshrl.u32 %v10084, 7
    %v10086 = vsub.s32 %v10041, %v10085
    %v10087 = vrot.slane %v9984, %v10086
    %v10088 = vsel %vm10046, %v10087, %v10083
    %v10089 = vlaneseq
    %v10090 = vshrl.u32 %v10089, 7
    %v10091 = vsub.s32 %v10048, %v10090
    %v10092 = vrot.slane %v9985, %v10091
    %v10093 = vsel %vm10053, %v10092, %v10088
    %v10094 = vsel %vm6171, %v10093, %v10054
    %vm10096 = vcmask 517120
    %10097 = vst.msk [vmem:[#allocation3] sm:$0x3] %vm10096, %v10094
    // Predicated region
    $region66: #{_lambda_.3} parent=1 // pred_check
      _
    $region67: #{_lambda_.3} parent=1 // pred_check_branch
      %10099 = sbr.rel (0) target = $region69
    $region68: #{_lambda_.3} parent=1 // pred_region
      %s10101 = ssub.s32 32, 32
      %10102 = vsyncadd [#allocation4], %s10101
      %s10104 = sshll.u32 [#allocation3], 4
      %s10105 = int_to_ptr.vmem [resolvable:$true] %s10104
      %10107 = dma.vmem_to_hbm [thread:$0]  %s10105, 32, %s16, [#allocation4]
    $region69: #{_lambda_.3} parent=1 // pred_fallthru
      _
    // Predicated region
    $region70: #{_lambda_.3} parent=1 // pred_check
      _
    $region71: #{_lambda_.3} parent=1 // pred_check_branch
      %10109 = sbr.rel (0) target = $region73
    $region72: #{_lambda_.3} parent=1 // pred_region
      %10110 = dma.done [#allocation4], 32
    $region73: #{_lambda_.3} parent=1 // pred_fallthru
      _
    %10111 = vsyncpa [#allocation4], 1

</llo_original>
